<compile_context>
chip_gen: v6e
topology: v6e:2x2x1
jax: 0.10.0
libtpu: 0.0.40
codegen_flags: <defaults>
</compile_context>

<pallas_src>
import functools

import jax
import jax.numpy as jnp
from jax.experimental import pallas as pl
from jax.experimental.pallas import tpu as pltpu

C_FEATURES = 256
XFORMER_D_MODEL = 128
XFORMER_N_HEADS = 4
HEAD_DIM = XFORMER_D_MODEL // XFORMER_N_HEADS
LN_EPS = 1e-5


# --------------------------------------------------------------------------
# Fused kernel: one grid step == BBLK batch elements (both branches inside).
# --------------------------------------------------------------------------
def _xformer_fusion_kernel(fb_ref, fw_ref, wqb_ref, wqw_ref,
                           wb1_ref, wb2_ref, ww1_ref, ww2_ref, vec_ref,
                           o_ref,
                           qkvb_s, qkvw_s, *, scale, exp_dtype):
    D, HD, NH = XFORMER_D_MODEL, HEAD_DIM, XFORMER_N_HEADS
    bblk, C, S = fb_ref.shape

    # ---- NCHW (C, S) blocks -> one token-major (bblk*S, C) bf16 slab --------
    # (in-kernel XLU transpose; transposing the lane-concatenated (C, bblk*S)
    # slab keeps both dims (8,128)-aligned when bblk*S is a lane multiple)
    def to_tok(ref):
        cm = (ref[0] if bblk == 1
              else jnp.concatenate([ref[b] for b in range(bblk)], axis=1))
        return jnp.transpose(cm, (1, 0)).astype(jnp.bfloat16)   # (bblk*S, C)

    fb = to_tok(fb_ref)
    fw = to_tok(fw_ref)

    # ---- QKV 1x1 convs: bf16 MXU operands, f32 accumulation -----------------
    qkvb_s[...] = jnp.dot(fb, wqb_ref[...],
                          preferred_element_type=jnp.float32).astype(jnp.bfloat16)
    qkvw_s[...] = jnp.dot(fw, wqw_ref[...],
                          preferred_element_type=jnp.float32).astype(jnp.bfloat16)

    # NOTE: pl.reciprocal(approx=True) -> softmax rows sum to 1 only to ~2^-12.
    def softmax_rows(s):
        s = s - jnp.max(s, axis=-1, keepdims=True)
        p = jnp.exp(s.astype(exp_dtype))
        inv = pl.reciprocal(jnp.sum(p.astype(jnp.float32), axis=-1, keepdims=True),
                            approx=True)
        return (p.astype(jnp.float32) * inv).astype(jnp.bfloat16)

    # ---- bidirectional multi-head cross attention ---------------------------
    # Both branches' head-h work is issued back-to-back so one branch's MXU
    # matmuls overlap the other branch's softmax; head outputs are kept as f32
    # values and concatenated into a lane-dense (S, 128) slab.
    # TODO(synk): for large S (esp. v7x, 64 MiB VMEM) switch to a flash-style
    # KV-tiled lax.fori_loop so only one (S, S) score tile is live at a time.
    attn_b, attn_w = [], []
    for b in range(bblk):
        qkvb = qkvb_s[b * S:(b + 1) * S, :]          # (S, 3D) bf16
        qkvw = qkvw_s[b * S:(b + 1) * S, :]
        hb, hw = [], []
        for h in range(NH):
            qb = qkvb[:, h * HD:(h + 1) * HD]
            kb = qkvb[:, D + h * HD:D + (h + 1) * HD]
            vb = qkvb[:, 2 * D + h * HD:2 * D + (h + 1) * HD]
            qw = qkvw[:, h * HD:(h + 1) * HD]
            kw = qkvw[:, D + h * HD:D + (h + 1) * HD]
            vw = qkvw[:, 2 * D + h * HD:2 * D + (h + 1) * HD]
            # q @ k^T without materializing k^T (contract the last dims).
            sb = jax.lax.dot_general(qb, kw, (((1,), (1,)), ((), ())),
                                     preferred_element_type=jnp.float32) * scale
            sw = jax.lax.dot_general(qw, kb, (((1,), (1,)), ((), ())),
                                     preferred_element_type=jnp.float32) * scale
            pb = softmax_rows(sb)
            pw = softmax_rows(sw)
            hb.append(jnp.dot(pb, vw, preferred_element_type=jnp.float32))
            # Intentional: the w-branch uses v_b (matches the PyTorch module's
            # final `f_w_arrow_b = matmul(attn_w_b, v_b)` assignment).
            hw.append(jnp.dot(pw, vb, preferred_element_type=jnp.float32))
        attn_b.append(jnp.concatenate(hb, axis=-1))   # (S, D) f32, lane dense
        attn_w.append(jnp.concatenate(hw, axis=-1))
    a_b = attn_b[0] if bblk == 1 else jnp.concatenate(attn_b, axis=0)
    a_w = attn_w[0] if bblk == 1 else jnp.concatenate(attn_w, axis=0)

    # ---- phi 1x1 conv (f-part + attn-part) + LayerNorm (f32) ----------------
    vec = vec_ref[...]      # (8, C) f32: b_b, g_b, be_b, b_w, g_w, be_w, 0, 0

    def branch(f, a, w1_ref, w2_ref, bias, gamma, beta):
        y = (jnp.dot(f, w1_ref[...], preferred_element_type=jnp.float32)
             + jnp.dot(a.astype(jnp.bfloat16), w2_ref[...],
                       preferred_element_type=jnp.float32)
             + bias)
        mu = jnp.mean(y, axis=-1, keepdims=True)
        d = y - mu
        var = jnp.mean(d * d, axis=-1, keepdims=True)
        return d * jax.lax.rsqrt(var + LN_EPS) * gamma + beta

    yb = branch(fb, a_b, wb1_ref, wb2_ref, vec[0:1], vec[1:2], vec[2:3])
    yw = branch(fw, a_w, ww1_ref, ww2_ref, vec[3:4], vec[4:5], vec[5:6])

    # token-major -> NCHW (C, S) blocks (in-kernel XLU transpose, then store).
    y_t = jnp.transpose(yb + yw, (1, 0))               # (C, bblk*S) f32
    for b in range(bblk):
        o_ref[b] = y_t[:, b * S:(b + 1) * S].astype(o_ref.dtype)


# --------------------------------------------------------------------------
# Wrapper: free reshapes only (no HBM transpose passes) + single pallas_call
# --------------------------------------------------------------------------
def _pick_batch_block(batch, seq):
    # Fold several batch elements into one grid step when S is small so the
    # projection matmuls see M = bblk*S rows and per-step overhead amortizes.
    bblk = max(1, min(batch, 256 // max(seq, 1)))
    while batch % bblk:
        bblk -= 1
    return bblk


def xformer_fusion(f_b, f_w, params, out_dtype=jnp.float32):
    B, C, H, W = f_b.shape
    D = XFORMER_D_MODEL
    S = H * W
    BBLK = _pick_batch_block(B, S)
    # TODO(synk): for batch-1 inference on v7x (2 TensorCores) add a second
    # "parallel" grid axis over query-row tiles so both cores get work.

    f32 = jnp.float32
    bf16 = lambda a: a.astype(jnp.bfloat16)

    # NCHW -> (B, C, S) is a free reshape; channel->token transpose is in-kernel.
    fb_cs = f_b.reshape(B, C, S).astype(f32)
    fw_cs = f_w.reshape(B, C, S).astype(f32)

    # Pack bias/gamma/beta for both branches into one (8, C) f32 slab.
    vec = jnp.concatenate(
        [params["b_phi_b"].reshape(1, C), params["gamma_b"].reshape(1, C),
         params["beta_b"].reshape(1, C), params["b_phi_w"].reshape(1, C),
         params["gamma_w"].reshape(1, C), params["beta_w"].reshape(1, C),
         jnp.zeros((2, C), f32)], axis=0)

    # exp in bf16 where the EUP supports it (v6e/v7x); keep f32 on v5*.
    try:
        kind = jax.devices()[0].device_kind.lower()
    except Exception:
        kind = ""
    exp_dtype = jnp.float32 if "v5" in kind else jnp.bfloat16

    tok_spec = pl.BlockSpec((BBLK, C, S), lambda i: (i, 0, 0))
    # TODO(synk): pipeline_mode=pl.Buffered(1) on the constant weight specs
    # would save ~0.8 MiB of double-buffered VMEM (only matters at large S on v7x).
    wq_spec = pl.BlockSpec((C, 3 * D), lambda i: (0, 0))    # VMEM-resident
    w1_spec = pl.BlockSpec((C, C), lambda i: (0, 0))
    w2_spec = pl.BlockSpec((D, C), lambda i: (0, 0))
    vec_spec = pl.BlockSpec((8, C), lambda i: (0, 0))

    out_bytes = jnp.dtype(out_dtype).itemsize
    vmem_est = (2 * 2 * BBLK * C * S * 4                       # f32 inputs, dbl-buffered
                + 2 * BBLK * C * S * out_bytes                 # output, dbl-buffered
                + 2 * BBLK * S * 3 * D * 2                     # qkv scratch (bf16)
                + 2 * 2 * (C * 3 * D + C * C + D * C) * 2      # weights (bf16, x2 buf)
                + 8 * C * 4
                + 4 * BBLK * S * C * 4                         # live token/attn/y temps
                + 8 * S * S * 4                                # live score/exp tiles
                + (4 << 20))
    vmem_limit = int(min(128 << 20, max(32 << 20, vmem_est)))

    out_cs = pl.pallas_call(
        functools.partial(_xformer_fusion_kernel,
                          scale=HEAD_DIM ** (-0.5), exp_dtype=exp_dtype),
        out_shape=jax.ShapeDtypeStruct((B, C, S), out_dtype),
        grid_spec=pltpu.PrefetchScalarGridSpec(
            num_scalar_prefetch=0,
            grid=(B // BBLK,),
            in_specs=[tok_spec, tok_spec, wq_spec, wq_spec,
                      w1_spec, w2_spec, w1_spec, w2_spec, vec_spec],
            out_specs=pl.BlockSpec((BBLK, C, S), lambda i: (i, 0, 0)),
            scratch_shapes=[pltpu.VMEM((BBLK * S, 3 * D), jnp.bfloat16),
                            pltpu.VMEM((BBLK * S, 3 * D), jnp.bfloat16)]),
        compiler_params=pltpu.CompilerParams(
            dimension_semantics=("parallel",),
            vmem_limit_bytes=vmem_limit),
    )(fb_cs, fw_cs,
      bf16(params["w_qkv_b"]), bf16(params["w_qkv_w"]),
      bf16(params["w_phi_b1"]), bf16(params["w_phi_b2"]),
      bf16(params["w_phi_w1"]), bf16(params["w_phi_w2"]),
      vec)

    return out_cs.reshape(B, C, H, W)


# --------------------------------------------------------------------------
# Pure-JAX f32 reference (same semantics as the PyTorch module, incl. the
# v_b assignment quirk) for a correctness check.
# --------------------------------------------------------------------------
def xformer_fusion_ref(f_b, f_w, params):
    B, C, H, W = f_b.shape
    D, NH, HD = XFORMER_D_MODEL, XFORMER_N_HEADS, HEAD_DIM
    S, N = H * W, B * H * W
    scale = HD ** (-0.5)

    def to_tok(x):
        return jnp.transpose(x, (0, 2, 3, 1)).reshape(N, C)

    def split(qkv):
        def r(t):
            return jnp.transpose(t.reshape(B, S, NH, HD), (0, 2, 1, 3))
        return r(qkv[:, :D]), r(qkv[:, D:2 * D]), r(qkv[:, 2 * D:])

    fb_tok, fw_tok = to_tok(f_b), to_tok(f_w)
    q_b, k_b, v_b = split(fb_tok @ params["w_qkv_b"])
    q_w, k_w, v_w = split(fw_tok @ params["w_qkv_w"])

    def attn(q, k, v):
        s = jnp.einsum("bhsd,bhtd->bhst", q, k) * scale
        p = jax.nn.softmax(s, axis=-1)
        return jnp.einsum("bhst,bhtd->bhsd", p, v)

    ab = jnp.transpose(attn(q_b, k_w, v_w), (0, 2, 1, 3)).reshape(N, D)
    aw = jnp.transpose(attn(q_w, k_b, v_b), (0, 2, 1, 3)).reshape(N, D)

    def branch(f, a, w1, w2, b, g, be):
        y = f @ w1 + a @ w2 + b
        mu = jnp.mean(y, axis=-1, keepdims=True)
        var = jnp.mean((y - mu) ** 2, axis=-1, keepdims=True)
        return (y - mu) * jax.lax.rsqrt(var + LN_EPS) * g + be

    yb = branch(fb_tok, ab, params["w_phi_b1"], params["w_phi_b2"],
                params["b_phi_b"], params["gamma_b"], params["beta_b"])
    yw = branch(fw_tok, aw, params["w_phi_w1"], params["w_phi_w2"],
                params["b_phi_w"], params["gamma_w"], params["beta_w"])
    out = yb + yw
    return jnp.transpose(out.reshape(B, H, W, C), (0, 3, 1, 2))


# --------------------------------------------------------------------------
if __name__ == "__main__":
    B, C, H, W = 2, C_FEATURES, 8, 8
    D = XFORMER_D_MODEL

    key = jax.random.PRNGKey(0)
    keys = jax.random.split(key, 14)

    params = {
        # to_qkv 1x1 convs (no bias), stored as (C, 3D) matmul weights
        "w_qkv_b": jax.random.normal(keys[0], (C, 3 * D), jnp.float32) * 0.02,
        "w_qkv_w": jax.random.normal(keys[1], (C, 3 * D), jnp.float32) * 0.02,
        # phi 1x1 convs: (C+D, C) split into the f-part (C, C) and attn-part (D, C)
        "w_phi_b1": jax.random.normal(keys[2], (C, C), jnp.float32) * 0.02,
        "w_phi_b2": jax.random.normal(keys[3], (D, C), jnp.float32) * 0.02,
        "b_phi_b": jax.random.normal(keys[4], (1, C), jnp.float32) * 0.02,
        "w_phi_w1": jax.random.normal(keys[5], (C, C), jnp.float32) * 0.02,
        "w_phi_w2": jax.random.normal(keys[6], (D, C), jnp.float32) * 0.02,
        "b_phi_w": jax.random.normal(keys[7], (1, C), jnp.float32) * 0.02,
        # LayerNorm affine params
        "gamma_b": 1.0 + jax.random.normal(keys[8], (1, C), jnp.float32) * 0.01,
        "beta_b": jax.random.normal(keys[9], (1, C), jnp.float32) * 0.01,
        "gamma_w": 1.0 + jax.random.normal(keys[10], (1, C), jnp.float32) * 0.01,
        "beta_w": jax.random.normal(keys[11], (1, C), jnp.float32) * 0.01,
    }

    f_b = jax.random.normal(keys[12], (B, C, H, W), jnp.float32)
    f_w = jax.random.normal(keys[13], (B, C, H, W), jnp.float32)

    out = jax.block_until_ready(xformer_fusion(f_b, f_w, params))
    ref = jax.block_until_ready(xformer_fusion_ref(f_b, f_w, params))

    assert out.shape == (B, C, H, W), out.shape
    max_err = float(jnp.max(jnp.abs(out - ref)))
    # bf16 MXU operands (+ bf16 exp on v6e/v7x) + approx reciprocal vs f32
    # reference -> 3e-2 tolerance.
    assert jnp.allclose(out, ref, rtol=3e-2, atol=3e-2), max_err
    print("KERNEL_OK")
</pallas_src>

<mosaic_0001>
module attributes {stable_mosaic.version = 11 : i64} {
  func.func @_xformer_fusion_kernel(%arg0: i32, %arg1: memref<2x256x64xf32, #tpu.memory_space<vmem>>, %arg2: memref<2x256x64xf32, #tpu.memory_space<vmem>>, %arg3: memref<256x384xbf16, #tpu.memory_space<vmem>>, %arg4: memref<256x384xbf16, #tpu.memory_space<vmem>>, %arg5: memref<256x256xbf16, #tpu.memory_space<vmem>>, %arg6: memref<128x256xbf16, #tpu.memory_space<vmem>>, %arg7: memref<256x256xbf16, #tpu.memory_space<vmem>>, %arg8: memref<128x256xbf16, #tpu.memory_space<vmem>>, %arg9: memref<8x256xf32, #tpu.memory_space<vmem>>, %arg10: memref<2x256x64xf32, #tpu.memory_space<vmem>>, %arg11: memref<128x384xbf16, #tpu.memory_space<vmem>>, %arg12: memref<128x384xbf16, #tpu.memory_space<vmem>>) attributes {dimension_semantics = [#tpu.dimension_semantics<parallel>], iteration_bounds = array<i64: 1>, scalar_prefetch = 0 : i64, scratch_operands = 2 : i64, tpu.core_type = #tpu.core_type<tc>, window_params = [{transform_indices = @transform_0, window_bounds = array<i64: 2, 256, 64>}, {transform_indices = @transform_1, window_bounds = array<i64: 2, 256, 64>}, {pipeline_mode = #tpu.pipeline_mode<synchronous>, transform_indices = @transform_2, window_bounds = array<i64: 256, 384>}, {pipeline_mode = #tpu.pipeline_mode<synchronous>, transform_indices = @transform_3, window_bounds = array<i64: 256, 384>}, {pipeline_mode = #tpu.pipeline_mode<synchronous>, transform_indices = @transform_4, window_bounds = array<i64: 256, 256>}, {pipeline_mode = #tpu.pipeline_mode<synchronous>, transform_indices = @transform_5, window_bounds = array<i64: 128, 256>}, {pipeline_mode = #tpu.pipeline_mode<synchronous>, transform_indices = @transform_6, window_bounds = array<i64: 256, 256>}, {pipeline_mode = #tpu.pipeline_mode<synchronous>, transform_indices = @transform_7, window_bounds = array<i64: 128, 256>}, {pipeline_mode = #tpu.pipeline_mode<synchronous>, transform_indices = @transform_8, window_bounds = array<i64: 8, 256>}, {transform_indices = @transform_9, window_bounds = array<i64: 2, 256, 64>}]} {
    %c0 = arith.constant 0 : index
    %c0_0 = arith.constant 0 : index
    %c0_1 = arith.constant 0 : index
    %0 = vector.load %arg1[%c0, %c0_0, %c0_1] : memref<2x256x64xf32, #tpu.memory_space<vmem>>, vector<1x256x64xf32>
    %1 = vector.shape_cast %0 : vector<1x256x64xf32> to vector<256x64xf32>
    %c1 = arith.constant 1 : index
    %c0_2 = arith.constant 0 : index
    %c0_3 = arith.constant 0 : index
    %2 = vector.load %arg1[%c1, %c0_2, %c0_3] : memref<2x256x64xf32, #tpu.memory_space<vmem>>, vector<1x256x64xf32>
    %3 = vector.shape_cast %2 : vector<1x256x64xf32> to vector<256x64xf32>
    %4 = tpu.concatenate %1, %3 in 1 : vector<256x64xf32>, vector<256x64xf32> -> vector<256x128xf32>
    %5 = tpu.transpose %4, [1, 0] : vector<256x128xf32> -> vector<128x256xf32>
    %6 = arith.truncf %5 : vector<128x256xf32> to vector<128x256xbf16>
    %c0_4 = arith.constant 0 : index
    %c0_5 = arith.constant 0 : index
    %c0_6 = arith.constant 0 : index
    %7 = vector.load %arg2[%c0_4, %c0_5, %c0_6] : memref<2x256x64xf32, #tpu.memory_space<vmem>>, vector<1x256x64xf32>
    %8 = vector.shape_cast %7 : vector<1x256x64xf32> to vector<256x64xf32>
    %c1_7 = arith.constant 1 : index
    %c0_8 = arith.constant 0 : index
    %c0_9 = arith.constant 0 : index
    %9 = vector.load %arg2[%c1_7, %c0_8, %c0_9] : memref<2x256x64xf32, #tpu.memory_space<vmem>>, vector<1x256x64xf32>
    %10 = vector.shape_cast %9 : vector<1x256x64xf32> to vector<256x64xf32>
    %11 = tpu.concatenate %8, %10 in 1 : vector<256x64xf32>, vector<256x64xf32> -> vector<256x128xf32>
    %12 = tpu.transpose %11, [1, 0] : vector<256x128xf32> -> vector<128x256xf32>
    %13 = arith.truncf %12 : vector<128x256xf32> to vector<128x256xbf16>
    %c0_10 = arith.constant 0 : index
    %c0_11 = arith.constant 0 : index
    %14 = vector.load %arg3[%c0_10, %c0_11] : memref<256x384xbf16, #tpu.memory_space<vmem>>, vector<256x384xbf16>
    %cst = arith.constant dense<0.000000e+00> : vector<128x384xf32>
    %15 = tpu.matmul %6, %14, %cst {dimension_numbers = #tpu.dot_dimension_numbers<[1], [0], [0], [1], [0, 0, 1, 1], [], []>} : vector<128x256xbf16>, vector<256x384xbf16>, vector<128x384xf32> -> vector<128x384xf32>
    %16 = arith.truncf %15 : vector<128x384xf32> to vector<128x384xbf16>
    %c0_12 = arith.constant 0 : index
    %c0_13 = arith.constant 0 : index
    %17 = vector.load %arg11[%c0_12, %c0_13] : memref<128x384xbf16, #tpu.memory_space<vmem>>, vector<128x384xbf16>
    tpu.vector_store %arg11[%c0_12, %c0_13], %16 {strides = array<i32>} : memref<128x384xbf16, #tpu.memory_space<vmem>>, vector<128x384xbf16>,
    %c0_14 = arith.constant 0 : index
    %c0_15 = arith.constant 0 : index
    %18 = vector.load %arg4[%c0_14, %c0_15] : memref<256x384xbf16, #tpu.memory_space<vmem>>, vector<256x384xbf16>
    %cst_16 = arith.constant dense<0.000000e+00> : vector<128x384xf32>
    %19 = tpu.matmul %13, %18, %cst_16 {dimension_numbers = #tpu.dot_dimension_numbers<[1], [0], [0], [1], [0, 0, 1, 1], [], []>} : vector<128x256xbf16>, vector<256x384xbf16>, vector<128x384xf32> -> vector<128x384xf32>
    %20 = arith.truncf %19 : vector<128x384xf32> to vector<128x384xbf16>
    %c0_17 = arith.constant 0 : index
    %c0_18 = arith.constant 0 : index
    %21 = vector.load %arg12[%c0_17, %c0_18] : memref<128x384xbf16, #tpu.memory_space<vmem>>, vector<128x384xbf16>
    tpu.vector_store %arg12[%c0_17, %c0_18], %20 {strides = array<i32>} : memref<128x384xbf16, #tpu.memory_space<vmem>>, vector<128x384xbf16>,
    %c0_19 = arith.constant 0 : index
    %c0_20 = arith.constant 0 : index
    %22 = vector.load %arg11[%c0_19, %c0_20] : memref<128x384xbf16, #tpu.memory_space<vmem>>, vector<64x384xbf16>
    %c0_21 = arith.constant 0 : index
    %c0_22 = arith.constant 0 : index
    %23 = vector.load %arg12[%c0_21, %c0_22] : memref<128x384xbf16, #tpu.memory_space<vmem>>, vector<64x384xbf16>
    %24 = vector.extract_strided_slice %22 {offsets = [0, 0], sizes = [64, 32], strides = [1, 1]} : vector<64x384xbf16> to vector<64x32xbf16>
    %25 = vector.extract_strided_slice %22 {offsets = [0, 128], sizes = [64, 32], strides = [1, 1]} : vector<64x384xbf16> to vector<64x32xbf16>
    %26 = vector.extract_strided_slice %22 {offsets = [0, 256], sizes = [64, 32], strides = [1, 1]} : vector<64x384xbf16> to vector<64x32xbf16>
    %27 = vector.extract_strided_slice %23 {offsets = [0, 0], sizes = [64, 32], strides = [1, 1]} : vector<64x384xbf16> to vector<64x32xbf16>
    %28 = vector.extract_strided_slice %23 {offsets = [0, 128], sizes = [64, 32], strides = [1, 1]} : vector<64x384xbf16> to vector<64x32xbf16>
    %29 = vector.extract_strided_slice %23 {offsets = [0, 256], sizes = [64, 32], strides = [1, 1]} : vector<64x384xbf16> to vector<64x32xbf16>
    %cst_23 = arith.constant dense<0.000000e+00> : vector<64x64xf32>
    %30 = tpu.matmul %24, %28, %cst_23 {dimension_numbers = #tpu.dot_dimension_numbers<[1], [1], [0], [0], [0, 0, 1, 0], [], []>} : vector<64x32xbf16>, vector<64x32xbf16>, vector<64x64xf32> -> vector<64x64xf32>
    %cst_24 = arith.constant 0.176776692 : f32
    %31 = vector.broadcast %cst_24 : f32 to vector<64x64xf32>
    %32 = arith.mulf %30, %31 : vector<64x64xf32>
    %cst_25 = arith.constant dense<0.000000e+00> : vector<64x64xf32>
    %33 = tpu.matmul %27, %25, %cst_25 {dimension_numbers = #tpu.dot_dimension_numbers<[1], [1], [0], [0], [0, 0, 1, 0], [], []>} : vector<64x32xbf16>, vector<64x32xbf16>, vector<64x64xf32> -> vector<64x64xf32>
    %cst_26 = arith.constant 0.176776692 : f32
    %34 = vector.broadcast %cst_26 : f32 to vector<64x64xf32>
    %35 = arith.mulf %33, %34 : vector<64x64xf32>
    %cst_27 = arith.constant dense<0xFF800000> : vector<64xf32>
    %36 = vector.multi_reduction <maximumf>, %32, %cst_27 [1] : vector<64x64xf32> to vector<64xf32>
    %37 = vector.shape_cast %36 : vector<64xf32> to vector<64x1xf32>
    %38 = vector.broadcast %37 : vector<64x1xf32> to vector<64x64xf32>
    %39 = arith.subf %32, %38 : vector<64x64xf32>
    %40 = arith.truncf %39 : vector<64x64xf32> to vector<64x64xbf16>
    %41 = math.exp %40 : vector<64x64xbf16>
    %42 = arith.extf %41 : vector<64x64xbf16> to vector<64x64xf32>
    %cst_28 = arith.constant dense<0.000000e+00> : vector<64xf32>
    %43 = vector.multi_reduction <add>, %42, %cst_28 [1] : vector<64x64xf32> to vector<64xf32>
    %44 = vector.shape_cast %43 : vector<64xf32> to vector<64x1xf32>
    %45 = tpu.reciprocal %44 {approx = true} : vector<64x1xf32> -> vector<64x1xf32>
    %46 = arith.extf %41 : vector<64x64xbf16> to vector<64x64xf32>
    %47 = vector.broadcast %45 : vector<64x1xf32> to vector<64x64xf32>
    %48 = arith.mulf %46, %47 : vector<64x64xf32>
    %49 = arith.truncf %48 : vector<64x64xf32> to vector<64x64xbf16>
    %cst_29 = arith.constant dense<0xFF800000> : vector<64xf32>
    %50 = vector.multi_reduction <maximumf>, %35, %cst_29 [1] : vector<64x64xf32> to vector<64xf32>
    %51 = vector.shape_cast %50 : vector<64xf32> to vector<64x1xf32>
    %52 = vector.broadcast %51 : vector<64x1xf32> to vector<64x64xf32>
    %53 = arith.subf %35, %52 : vector<64x64xf32>
    %54 = arith.truncf %53 : vector<64x64xf32> to vector<64x64xbf16>
    %55 = math.exp %54 : vector<64x64xbf16>
    %56 = arith.extf %55 : vector<64x64xbf16> to vector<64x64xf32>
    %cst_30 = arith.constant dense<0.000000e+00> : vector<64xf32>
    %57 = vector.multi_reduction <add>, %56, %cst_30 [1] : vector<64x64xf32> to vector<64xf32>
    %58 = vector.shape_cast %57 : vector<64xf32> to vector<64x1xf32>
    %59 = tpu.reciprocal %58 {approx = true} : vector<64x1xf32> -> vector<64x1xf32>
    %60 = arith.extf %55 : vector<64x64xbf16> to vector<64x64xf32>
    %61 = vector.broadcast %59 : vector<64x1xf32> to vector<64x64xf32>
    %62 = arith.mulf %60, %61 : vector<64x64xf32>
    %63 = arith.truncf %62 : vector<64x64xf32> to vector<64x64xbf16>
    %cst_31 = arith.constant dense<0.000000e+00> : vector<64x32xf32>
    %64 = tpu.matmul %49, %29, %cst_31 {dimension_numbers = #tpu.dot_dimension_numbers<[1], [0], [0], [1], [0, 0, 1, 1], [], []>} : vector<64x64xbf16>, vector<64x32xbf16>, vector<64x32xf32> -> vector<64x32xf32>
    %cst_32 = arith.constant dense<0.000000e+00> : vector<64x32xf32>
    %65 = tpu.matmul %63, %26, %cst_32 {dimension_numbers = #tpu.dot_dimension_numbers<[1], [0], [0], [1], [0, 0, 1, 1], [], []>} : vector<64x64xbf16>, vector<64x32xbf16>, vector<64x32xf32> -> vector<64x32xf32>
    %66 = vector.extract_strided_slice %22 {offsets = [0, 32], sizes = [64, 32], strides = [1, 1]} : vector<64x384xbf16> to vector<64x32xbf16>
    %67 = vector.extract_strided_slice %22 {offsets = [0, 160], sizes = [64, 32], strides = [1, 1]} : vector<64x384xbf16> to vector<64x32xbf16>
    %68 = vector.extract_strided_slice %22 {offsets = [0, 288], sizes = [64, 32], strides = [1, 1]} : vector<64x384xbf16> to vector<64x32xbf16>
    %69 = vector.extract_strided_slice %23 {offsets = [0, 32], sizes = [64, 32], strides = [1, 1]} : vector<64x384xbf16> to vector<64x32xbf16>
    %70 = vector.extract_strided_slice %23 {offsets = [0, 160], sizes = [64, 32], strides = [1, 1]} : vector<64x384xbf16> to vector<64x32xbf16>
    %71 = vector.extract_strided_slice %23 {offsets = [0, 288], sizes = [64, 32], strides = [1, 1]} : vector<64x384xbf16> to vector<64x32xbf16>
    %cst_33 = arith.constant dense<0.000000e+00> : vector<64x64xf32>
    %72 = tpu.matmul %66, %70, %cst_33 {dimension_numbers = #tpu.dot_dimension_numbers<[1], [1], [0], [0], [0, 0, 1, 0], [], []>} : vector<64x32xbf16>, vector<64x32xbf16>, vector<64x64xf32> -> vector<64x64xf32>
    %cst_34 = arith.constant 0.176776692 : f32
    %73 = vector.broadcast %cst_34 : f32 to vector<64x64xf32>
    %74 = arith.mulf %72, %73 : vector<64x64xf32>
    %cst_35 = arith.constant dense<0.000000e+00> : vector<64x64xf32>
    %75 = tpu.matmul %69, %67, %cst_35 {dimension_numbers = #tpu.dot_dimension_numbers<[1], [1], [0], [0], [0, 0, 1, 0], [], []>} : vector<64x32xbf16>, vector<64x32xbf16>, vector<64x64xf32> -> vector<64x64xf32>
    %cst_36 = arith.constant 0.176776692 : f32
    %76 = vector.broadcast %cst_36 : f32 to vector<64x64xf32>
    %77 = arith.mulf %75, %76 : vector<64x64xf32>
    %cst_37 = arith.constant dense<0xFF800000> : vector<64xf32>
    %78 = vector.multi_reduction <maximumf>, %74, %cst_37 [1] : vector<64x64xf32> to vector<64xf32>
    %79 = vector.shape_cast %78 : vector<64xf32> to vector<64x1xf32>
    %80 = vector.broadcast %79 : vector<64x1xf32> to vector<64x64xf32>
    %81 = arith.subf %74, %80 : vector<64x64xf32>
    %82 = arith.truncf %81 : vector<64x64xf32> to vector<64x64xbf16>
    %83 = math.exp %82 : vector<64x64xbf16>
    %84 = arith.extf %83 : vector<64x64xbf16> to vector<64x64xf32>
    %cst_38 = arith.constant dense<0.000000e+00> : vector<64xf32>
    %85 = vector.multi_reduction <add>, %84, %cst_38 [1] : vector<64x64xf32> to vector<64xf32>
    %86 = vector.shape_cast %85 : vector<64xf32> to vector<64x1xf32>
    %87 = tpu.reciprocal %86 {approx = true} : vector<64x1xf32> -> vector<64x1xf32>
    %88 = arith.extf %83 : vector<64x64xbf16> to vector<64x64xf32>
    %89 = vector.broadcast %87 : vector<64x1xf32> to vector<64x64xf32>
    %90 = arith.mulf %88, %89 : vector<64x64xf32>
    %91 = arith.truncf %90 : vector<64x64xf32> to vector<64x64xbf16>
    %cst_39 = arith.constant dense<0xFF800000> : vector<64xf32>
    %92 = vector.multi_reduction <maximumf>, %77, %cst_39 [1] : vector<64x64xf32> to vector<64xf32>
    %93 = vector.shape_cast %92 : vector<64xf32> to vector<64x1xf32>
    %94 = vector.broadcast %93 : vector<64x1xf32> to vector<64x64xf32>
    %95 = arith.subf %77, %94 : vector<64x64xf32>
    %96 = arith.truncf %95 : vector<64x64xf32> to vector<64x64xbf16>
    %97 = math.exp %96 : vector<64x64xbf16>
    %98 = arith.extf %97 : vector<64x64xbf16> to vector<64x64xf32>
    %cst_40 = arith.constant dense<0.000000e+00> : vector<64xf32>
    %99 = vector.multi_reduction <add>, %98, %cst_40 [1] : vector<64x64xf32> to vector<64xf32>
    %100 = vector.shape_cast %99 : vector<64xf32> to vector<64x1xf32>
    %101 = tpu.reciprocal %100 {approx = true} : vector<64x1xf32> -> vector<64x1xf32>
    %102 = arith.extf %97 : vector<64x64xbf16> to vector<64x64xf32>
    %103 = vector.broadcast %101 : vector<64x1xf32> to vector<64x64xf32>
    %104 = arith.mulf %102, %103 : vector<64x64xf32>
    %105 = arith.truncf %104 : vector<64x64xf32> to vector<64x64xbf16>
    %cst_41 = arith.constant dense<0.000000e+00> : vector<64x32xf32>
    %106 = tpu.matmul %91, %71, %cst_41 {dimension_numbers = #tpu.dot_dimension_numbers<[1], [0], [0], [1], [0, 0, 1, 1], [], []>} : vector<64x64xbf16>, vector<64x32xbf16>, vector<64x32xf32> -> vector<64x32xf32>
    %cst_42 = arith.constant dense<0.000000e+00> : vector<64x32xf32>
    %107 = tpu.matmul %105, %68, %cst_42 {dimension_numbers = #tpu.dot_dimension_numbers<[1], [0], [0], [1], [0, 0, 1, 1], [], []>} : vector<64x64xbf16>, vector<64x32xbf16>, vector<64x32xf32> -> vector<64x32xf32>
    %108 = vector.extract_strided_slice %22 {offsets = [0, 64], sizes = [64, 32], strides = [1, 1]} : vector<64x384xbf16> to vector<64x32xbf16>
    %109 = vector.extract_strided_slice %22 {offsets = [0, 192], sizes = [64, 32], strides = [1, 1]} : vector<64x384xbf16> to vector<64x32xbf16>
    %110 = vector.extract_strided_slice %22 {offsets = [0, 320], sizes = [64, 32], strides = [1, 1]} : vector<64x384xbf16> to vector<64x32xbf16>
    %111 = vector.extract_strided_slice %23 {offsets = [0, 64], sizes = [64, 32], strides = [1, 1]} : vector<64x384xbf16> to vector<64x32xbf16>
    %112 = vector.extract_strided_slice %23 {offsets = [0, 192], sizes = [64, 32], strides = [1, 1]} : vector<64x384xbf16> to vector<64x32xbf16>
    %113 = vector.extract_strided_slice %23 {offsets = [0, 320], sizes = [64, 32], strides = [1, 1]} : vector<64x384xbf16> to vector<64x32xbf16>
    %cst_43 = arith.constant dense<0.000000e+00> : vector<64x64xf32>
    %114 = tpu.matmul %108, %112, %cst_43 {dimension_numbers = #tpu.dot_dimension_numbers<[1], [1], [0], [0], [0, 0, 1, 0], [], []>} : vector<64x32xbf16>, vector<64x32xbf16>, vector<64x64xf32> -> vector<64x64xf32>
    %cst_44 = arith.constant 0.176776692 : f32
    %115 = vector.broadcast %cst_44 : f32 to vector<64x64xf32>
    %116 = arith.mulf %114, %115 : vector<64x64xf32>
    %cst_45 = arith.constant dense<0.000000e+00> : vector<64x64xf32>
    %117 = tpu.matmul %111, %109, %cst_45 {dimension_numbers = #tpu.dot_dimension_numbers<[1], [1], [0], [0], [0, 0, 1, 0], [], []>} : vector<64x32xbf16>, vector<64x32xbf16>, vector<64x64xf32> -> vector<64x64xf32>
    %cst_46 = arith.constant 0.176776692 : f32
    %118 = vector.broadcast %cst_46 : f32 to vector<64x64xf32>
    %119 = arith.mulf %117, %118 : vector<64x64xf32>
    %cst_47 = arith.constant dense<0xFF800000> : vector<64xf32>
    %120 = vector.multi_reduction <maximumf>, %116, %cst_47 [1] : vector<64x64xf32> to vector<64xf32>
    %121 = vector.shape_cast %120 : vector<64xf32> to vector<64x1xf32>
    %122 = vector.broadcast %121 : vector<64x1xf32> to vector<64x64xf32>
    %123 = arith.subf %116, %122 : vector<64x64xf32>
    %124 = arith.truncf %123 : vector<64x64xf32> to vector<64x64xbf16>
    %125 = math.exp %124 : vector<64x64xbf16>
    %126 = arith.extf %125 : vector<64x64xbf16> to vector<64x64xf32>
    %cst_48 = arith.constant dense<0.000000e+00> : vector<64xf32>
    %127 = vector.multi_reduction <add>, %126, %cst_48 [1] : vector<64x64xf32> to vector<64xf32>
    %128 = vector.shape_cast %127 : vector<64xf32> to vector<64x1xf32>
    %129 = tpu.reciprocal %128 {approx = true} : vector<64x1xf32> -> vector<64x1xf32>
    %130 = arith.extf %125 : vector<64x64xbf16> to vector<64x64xf32>
    %131 = vector.broadcast %129 : vector<64x1xf32> to vector<64x64xf32>
    %132 = arith.mulf %130, %131 : vector<64x64xf32>
    %133 = arith.truncf %132 : vector<64x64xf32> to vector<64x64xbf16>
    %cst_49 = arith.constant dense<0xFF800000> : vector<64xf32>
    %134 = vector.multi_reduction <maximumf>, %119, %cst_49 [1] : vector<64x64xf32> to vector<64xf32>
    %135 = vector.shape_cast %134 : vector<64xf32> to vector<64x1xf32>
    %136 = vector.broadcast %135 : vector<64x1xf32> to vector<64x64xf32>
    %137 = arith.subf %119, %136 : vector<64x64xf32>
    %138 = arith.truncf %137 : vector<64x64xf32> to vector<64x64xbf16>
    %139 = math.exp %138 : vector<64x64xbf16>
    %140 = arith.extf %139 : vector<64x64xbf16> to vector<64x64xf32>
    %cst_50 = arith.constant dense<0.000000e+00> : vector<64xf32>
    %141 = vector.multi_reduction <add>, %140, %cst_50 [1] : vector<64x64xf32> to vector<64xf32>
    %142 = vector.shape_cast %141 : vector<64xf32> to vector<64x1xf32>
    %143 = tpu.reciprocal %142 {approx = true} : vector<64x1xf32> -> vector<64x1xf32>
    %144 = arith.extf %139 : vector<64x64xbf16> to vector<64x64xf32>
    %145 = vector.broadcast %143 : vector<64x1xf32> to vector<64x64xf32>
    %146 = arith.mulf %144, %145 : vector<64x64xf32>
    %147 = arith.truncf %146 : vector<64x64xf32> to vector<64x64xbf16>
    %cst_51 = arith.constant dense<0.000000e+00> : vector<64x32xf32>
    %148 = tpu.matmul %133, %113, %cst_51 {dimension_numbers = #tpu.dot_dimension_numbers<[1], [0], [0], [1], [0, 0, 1, 1], [], []>} : vector<64x64xbf16>, vector<64x32xbf16>, vector<64x32xf32> -> vector<64x32xf32>
    %cst_52 = arith.constant dense<0.000000e+00> : vector<64x32xf32>
    %149 = tpu.matmul %147, %110, %cst_52 {dimension_numbers = #tpu.dot_dimension_numbers<[1], [0], [0], [1], [0, 0, 1, 1], [], []>} : vector<64x64xbf16>, vector<64x32xbf16>, vector<64x32xf32> -> vector<64x32xf32>
    %150 = vector.extract_strided_slice %22 {offsets = [0, 96], sizes = [64, 32], strides = [1, 1]} : vector<64x384xbf16> to vector<64x32xbf16>
    %151 = vector.extract_strided_slice %22 {offsets = [0, 224], sizes = [64, 32], strides = [1, 1]} : vector<64x384xbf16> to vector<64x32xbf16>
    %152 = vector.extract_strided_slice %22 {offsets = [0, 352], sizes = [64, 32], strides = [1, 1]} : vector<64x384xbf16> to vector<64x32xbf16>
    %153 = vector.extract_strided_slice %23 {offsets = [0, 96], sizes = [64, 32], strides = [1, 1]} : vector<64x384xbf16> to vector<64x32xbf16>
    %154 = vector.extract_strided_slice %23 {offsets = [0, 224], sizes = [64, 32], strides = [1, 1]} : vector<64x384xbf16> to vector<64x32xbf16>
    %155 = vector.extract_strided_slice %23 {offsets = [0, 352], sizes = [64, 32], strides = [1, 1]} : vector<64x384xbf16> to vector<64x32xbf16>
    %cst_53 = arith.constant dense<0.000000e+00> : vector<64x64xf32>
    %156 = tpu.matmul %150, %154, %cst_53 {dimension_numbers = #tpu.dot_dimension_numbers<[1], [1], [0], [0], [0, 0, 1, 0], [], []>} : vector<64x32xbf16>, vector<64x32xbf16>, vector<64x64xf32> -> vector<64x64xf32>
    %cst_54 = arith.constant 0.176776692 : f32
    %157 = vector.broadcast %cst_54 : f32 to vector<64x64xf32>
    %158 = arith.mulf %156, %157 : vector<64x64xf32>
    %cst_55 = arith.constant dense<0.000000e+00> : vector<64x64xf32>
    %159 = tpu.matmul %153, %151, %cst_55 {dimension_numbers = #tpu.dot_dimension_numbers<[1], [1], [0], [0], [0, 0, 1, 0], [], []>} : vector<64x32xbf16>, vector<64x32xbf16>, vector<64x64xf32> -> vector<64x64xf32>
    %cst_56 = arith.constant 0.176776692 : f32
    %160 = vector.broadcast %cst_56 : f32 to vector<64x64xf32>
    %161 = arith.mulf %159, %160 : vector<64x64xf32>
    %cst_57 = arith.constant dense<0xFF800000> : vector<64xf32>
    %162 = vector.multi_reduction <maximumf>, %158, %cst_57 [1] : vector<64x64xf32> to vector<64xf32>
    %163 = vector.shape_cast %162 : vector<64xf32> to vector<64x1xf32>
    %164 = vector.broadcast %163 : vector<64x1xf32> to vector<64x64xf32>
    %165 = arith.subf %158, %164 : vector<64x64xf32>
    %166 = arith.truncf %165 : vector<64x64xf32> to vector<64x64xbf16>
    %167 = math.exp %166 : vector<64x64xbf16>
    %168 = arith.extf %167 : vector<64x64xbf16> to vector<64x64xf32>
    %cst_58 = arith.constant dense<0.000000e+00> : vector<64xf32>
    %169 = vector.multi_reduction <add>, %168, %cst_58 [1] : vector<64x64xf32> to vector<64xf32>
    %170 = vector.shape_cast %169 : vector<64xf32> to vector<64x1xf32>
    %171 = tpu.reciprocal %170 {approx = true} : vector<64x1xf32> -> vector<64x1xf32>
    %172 = arith.extf %167 : vector<64x64xbf16> to vector<64x64xf32>
    %173 = vector.broadcast %171 : vector<64x1xf32> to vector<64x64xf32>
    %174 = arith.mulf %172, %173 : vector<64x64xf32>
    %175 = arith.truncf %174 : vector<64x64xf32> to vector<64x64xbf16>
    %cst_59 = arith.constant dense<0xFF800000> : vector<64xf32>
    %176 = vector.multi_reduction <maximumf>, %161, %cst_59 [1] : vector<64x64xf32> to vector<64xf32>
    %177 = vector.shape_cast %176 : vector<64xf32> to vector<64x1xf32>
    %178 = vector.broadcast %177 : vector<64x1xf32> to vector<64x64xf32>
    %179 = arith.subf %161, %178 : vector<64x64xf32>
    %180 = arith.truncf %179 : vector<64x64xf32> to vector<64x64xbf16>
    %181 = math.exp %180 : vector<64x64xbf16>
    %182 = arith.extf %181 : vector<64x64xbf16> to vector<64x64xf32>
    %cst_60 = arith.constant dense<0.000000e+00> : vector<64xf32>
    %183 = vector.multi_reduction <add>, %182, %cst_60 [1] : vector<64x64xf32> to vector<64xf32>
    %184 = vector.shape_cast %183 : vector<64xf32> to vector<64x1xf32>
    %185 = tpu.reciprocal %184 {approx = true} : vector<64x1xf32> -> vector<64x1xf32>
    %186 = arith.extf %181 : vector<64x64xbf16> to vector<64x64xf32>
    %187 = vector.broadcast %185 : vector<64x1xf32> to vector<64x64xf32>
    %188 = arith.mulf %186, %187 : vector<64x64xf32>
    %189 = arith.truncf %188 : vector<64x64xf32> to vector<64x64xbf16>
    %cst_61 = arith.constant dense<0.000000e+00> : vector<64x32xf32>
    %190 = tpu.matmul %175, %155, %cst_61 {dimension_numbers = #tpu.dot_dimension_numbers<[1], [0], [0], [1], [0, 0, 1, 1], [], []>} : vector<64x64xbf16>, vector<64x32xbf16>, vector<64x32xf32> -> vector<64x32xf32>
    %cst_62 = arith.constant dense<0.000000e+00> : vector<64x32xf32>
    %191 = tpu.matmul %189, %152, %cst_62 {dimension_numbers = #tpu.dot_dimension_numbers<[1], [0], [0], [1], [0, 0, 1, 1], [], []>} : vector<64x64xbf16>, vector<64x32xbf16>, vector<64x32xf32> -> vector<64x32xf32>
    %192 = tpu.concatenate %64, %106, %148, %190 in 1 : vector<64x32xf32>, vector<64x32xf32>, vector<64x32xf32>, vector<64x32xf32> -> vector<64x128xf32>
    %193 = tpu.concatenate %65, %107, %149, %191 in 1 : vector<64x32xf32>, vector<64x32xf32>, vector<64x32xf32>, vector<64x32xf32> -> vector<64x128xf32>
    %c64 = arith.constant 64 : index
    %c0_63 = arith.constant 0 : index
    %194 = vector.load %arg11[%c64, %c0_63] : memref<128x384xbf16, #tpu.memory_space<vmem>>, vector<64x384xbf16>
    %c64_64 = arith.constant 64 : index
    %c0_65 = arith.constant 0 : index
    %195 = vector.load %arg12[%c64_64, %c0_65] : memref<128x384xbf16, #tpu.memory_space<vmem>>, vector<64x384xbf16>
    %196 = vector.extract_strided_slice %194 {offsets = [0, 0], sizes = [64, 32], strides = [1, 1]} : vector<64x384xbf16> to vector<64x32xbf16>
    %197 = vector.extract_strided_slice %194 {offsets = [0, 128], sizes = [64, 32], strides = [1, 1]} : vector<64x384xbf16> to vector<64x32xbf16>
    %198 = vector.extract_strided_slice %194 {offsets = [0, 256], sizes = [64, 32], strides = [1, 1]} : vector<64x384xbf16> to vector<64x32xbf16>
    %199 = vector.extract_strided_slice %195 {offsets = [0, 0], sizes = [64, 32], strides = [1, 1]} : vector<64x384xbf16> to vector<64x32xbf16>
    %200 = vector.extract_strided_slice %195 {offsets = [0, 128], sizes = [64, 32], strides = [1, 1]} : vector<64x384xbf16> to vector<64x32xbf16>
    %201 = vector.extract_strided_slice %195 {offsets = [0, 256], sizes = [64, 32], strides = [1, 1]} : vector<64x384xbf16> to vector<64x32xbf16>
    %cst_66 = arith.constant dense<0.000000e+00> : vector<64x64xf32>
    %202 = tpu.matmul %196, %200, %cst_66 {dimension_numbers = #tpu.dot_dimension_numbers<[1], [1], [0], [0], [0, 0, 1, 0], [], []>} : vector<64x32xbf16>, vector<64x32xbf16>, vector<64x64xf32> -> vector<64x64xf32>
    %cst_67 = arith.constant 0.176776692 : f32
    %203 = vector.broadcast %cst_67 : f32 to vector<64x64xf32>
    %204 = arith.mulf %202, %203 : vector<64x64xf32>
    %cst_68 = arith.constant dense<0.000000e+00> : vector<64x64xf32>
    %205 = tpu.matmul %199, %197, %cst_68 {dimension_numbers = #tpu.dot_dimension_numbers<[1], [1], [0], [0], [0, 0, 1, 0], [], []>} : vector<64x32xbf16>, vector<64x32xbf16>, vector<64x64xf32> -> vector<64x64xf32>
    %cst_69 = arith.constant 0.176776692 : f32
    %206 = vector.broadcast %cst_69 : f32 to vector<64x64xf32>
    %207 = arith.mulf %205, %206 : vector<64x64xf32>
    %cst_70 = arith.constant dense<0xFF800000> : vector<64xf32>
    %208 = vector.multi_reduction <maximumf>, %204, %cst_70 [1] : vector<64x64xf32> to vector<64xf32>
    %209 = vector.shape_cast %208 : vector<64xf32> to vector<64x1xf32>
    %210 = vector.broadcast %209 : vector<64x1xf32> to vector<64x64xf32>
    %211 = arith.subf %204, %210 : vector<64x64xf32>
    %212 = arith.truncf %211 : vector<64x64xf32> to vector<64x64xbf16>
    %213 = math.exp %212 : vector<64x64xbf16>
    %214 = arith.extf %213 : vector<64x64xbf16> to vector<64x64xf32>
    %cst_71 = arith.constant dense<0.000000e+00> : vector<64xf32>
    %215 = vector.multi_reduction <add>, %214, %cst_71 [1] : vector<64x64xf32> to vector<64xf32>
    %216 = vector.shape_cast %215 : vector<64xf32> to vector<64x1xf32>
    %217 = tpu.reciprocal %216 {approx = true} : vector<64x1xf32> -> vector<64x1xf32>
    %218 = arith.extf %213 : vector<64x64xbf16> to vector<64x64xf32>
    %219 = vector.broadcast %217 : vector<64x1xf32> to vector<64x64xf32>
    %220 = arith.mulf %218, %219 : vector<64x64xf32>
    %221 = arith.truncf %220 : vector<64x64xf32> to vector<64x64xbf16>
    %cst_72 = arith.constant dense<0xFF800000> : vector<64xf32>
    %222 = vector.multi_reduction <maximumf>, %207, %cst_72 [1] : vector<64x64xf32> to vector<64xf32>
    %223 = vector.shape_cast %222 : vector<64xf32> to vector<64x1xf32>
    %224 = vector.broadcast %223 : vector<64x1xf32> to vector<64x64xf32>
    %225 = arith.subf %207, %224 : vector<64x64xf32>
    %226 = arith.truncf %225 : vector<64x64xf32> to vector<64x64xbf16>
    %227 = math.exp %226 : vector<64x64xbf16>
    %228 = arith.extf %227 : vector<64x64xbf16> to vector<64x64xf32>
    %cst_73 = arith.constant dense<0.000000e+00> : vector<64xf32>
    %229 = vector.multi_reduction <add>, %228, %cst_73 [1] : vector<64x64xf32> to vector<64xf32>
    %230 = vector.shape_cast %229 : vector<64xf32> to vector<64x1xf32>
    %231 = tpu.reciprocal %230 {approx = true} : vector<64x1xf32> -> vector<64x1xf32>
    %232 = arith.extf %227 : vector<64x64xbf16> to vector<64x64xf32>
    %233 = vector.broadcast %231 : vector<64x1xf32> to vector<64x64xf32>
    %234 = arith.mulf %232, %233 : vector<64x64xf32>
    %235 = arith.truncf %234 : vector<64x64xf32> to vector<64x64xbf16>
    %cst_74 = arith.constant dense<0.000000e+00> : vector<64x32xf32>
    %236 = tpu.matmul %221, %201, %cst_74 {dimension_numbers = #tpu.dot_dimension_numbers<[1], [0], [0], [1], [0, 0, 1, 1], [], []>} : vector<64x64xbf16>, vector<64x32xbf16>, vector<64x32xf32> -> vector<64x32xf32>
    %cst_75 = arith.constant dense<0.000000e+00> : vector<64x32xf32>
    %237 = tpu.matmul %235, %198, %cst_75 {dimension_numbers = #tpu.dot_dimension_numbers<[1], [0], [0], [1], [0, 0, 1, 1], [], []>} : vector<64x64xbf16>, vector<64x32xbf16>, vector<64x32xf32> -> vector<64x32xf32>
    %238 = vector.extract_strided_slice %194 {offsets = [0, 32], sizes = [64, 32], strides = [1, 1]} : vector<64x384xbf16> to vector<64x32xbf16>
    %239 = vector.extract_strided_slice %194 {offsets = [0, 160], sizes = [64, 32], strides = [1, 1]} : vector<64x384xbf16> to vector<64x32xbf16>
    %240 = vector.extract_strided_slice %194 {offsets = [0, 288], sizes = [64, 32], strides = [1, 1]} : vector<64x384xbf16> to vector<64x32xbf16>
    %241 = vector.extract_strided_slice %195 {offsets = [0, 32], sizes = [64, 32], strides = [1, 1]} : vector<64x384xbf16> to vector<64x32xbf16>
    %242 = vector.extract_strided_slice %195 {offsets = [0, 160], sizes = [64, 32], strides = [1, 1]} : vector<64x384xbf16> to vector<64x32xbf16>
    %243 = vector.extract_strided_slice %195 {offsets = [0, 288], sizes = [64, 32], strides = [1, 1]} : vector<64x384xbf16> to vector<64x32xbf16>
    %cst_76 = arith.constant dense<0.000000e+00> : vector<64x64xf32>
    %244 = tpu.matmul %238, %242, %cst_76 {dimension_numbers = #tpu.dot_dimension_numbers<[1], [1], [0], [0], [0, 0, 1, 0], [], []>} : vector<64x32xbf16>, vector<64x32xbf16>, vector<64x64xf32> -> vector<64x64xf32>
    %cst_77 = arith.constant 0.176776692 : f32
    %245 = vector.broadcast %cst_77 : f32 to vector<64x64xf32>
    %246 = arith.mulf %244, %245 : vector<64x64xf32>
    %cst_78 = arith.constant dense<0.000000e+00> : vector<64x64xf32>
    %247 = tpu.matmul %241, %239, %cst_78 {dimension_numbers = #tpu.dot_dimension_numbers<[1], [1], [0], [0], [0, 0, 1, 0], [], []>} : vector<64x32xbf16>, vector<64x32xbf16>, vector<64x64xf32> -> vector<64x64xf32>
    %cst_79 = arith.constant 0.176776692 : f32
    %248 = vector.broadcast %cst_79 : f32 to vector<64x64xf32>
    %249 = arith.mulf %247, %248 : vector<64x64xf32>
    %cst_80 = arith.constant dense<0xFF800000> : vector<64xf32>
    %250 = vector.multi_reduction <maximumf>, %246, %cst_80 [1] : vector<64x64xf32> to vector<64xf32>
    %251 = vector.shape_cast %250 : vector<64xf32> to vector<64x1xf32>
    %252 = vector.broadcast %251 : vector<64x1xf32> to vector<64x64xf32>
    %253 = arith.subf %246, %252 : vector<64x64xf32>
    %254 = arith.truncf %253 : vector<64x64xf32> to vector<64x64xbf16>
    %255 = math.exp %254 : vector<64x64xbf16>
    %256 = arith.extf %255 : vector<64x64xbf16> to vector<64x64xf32>
    %cst_81 = arith.constant dense<0.000000e+00> : vector<64xf32>
    %257 = vector.multi_reduction <add>, %256, %cst_81 [1] : vector<64x64xf32> to vector<64xf32>
    %258 = vector.shape_cast %257 : vector<64xf32> to vector<64x1xf32>
    %259 = tpu.reciprocal %258 {approx = true} : vector<64x1xf32> -> vector<64x1xf32>
    %260 = arith.extf %255 : vector<64x64xbf16> to vector<64x64xf32>
    %261 = vector.broadcast %259 : vector<64x1xf32> to vector<64x64xf32>
    %262 = arith.mulf %260, %261 : vector<64x64xf32>
    %263 = arith.truncf %262 : vector<64x64xf32> to vector<64x64xbf16>
    %cst_82 = arith.constant dense<0xFF800000> : vector<64xf32>
    %264 = vector.multi_reduction <maximumf>, %249, %cst_82 [1] : vector<64x64xf32> to vector<64xf32>
    %265 = vector.shape_cast %264 : vector<64xf32> to vector<64x1xf32>
    %266 = vector.broadcast %265 : vector<64x1xf32> to vector<64x64xf32>
    %267 = arith.subf %249, %266 : vector<64x64xf32>
    %268 = arith.truncf %267 : vector<64x64xf32> to vector<64x64xbf16>
    %269 = math.exp %268 : vector<64x64xbf16>
    %270 = arith.extf %269 : vector<64x64xbf16> to vector<64x64xf32>
    %cst_83 = arith.constant dense<0.000000e+00> : vector<64xf32>
    %271 = vector.multi_reduction <add>, %270, %cst_83 [1] : vector<64x64xf32> to vector<64xf32>
    %272 = vector.shape_cast %271 : vector<64xf32> to vector<64x1xf32>
    %273 = tpu.reciprocal %272 {approx = true} : vector<64x1xf32> -> vector<64x1xf32>
    %274 = arith.extf %269 : vector<64x64xbf16> to vector<64x64xf32>
    %275 = vector.broadcast %273 : vector<64x1xf32> to vector<64x64xf32>
    %276 = arith.mulf %274, %275 : vector<64x64xf32>
    %277 = arith.truncf %276 : vector<64x64xf32> to vector<64x64xbf16>
    %cst_84 = arith.constant dense<0.000000e+00> : vector<64x32xf32>
    %278 = tpu.matmul %263, %243, %cst_84 {dimension_numbers = #tpu.dot_dimension_numbers<[1], [0], [0], [1], [0, 0, 1, 1], [], []>} : vector<64x64xbf16>, vector<64x32xbf16>, vector<64x32xf32> -> vector<64x32xf32>
    %cst_85 = arith.constant dense<0.000000e+00> : vector<64x32xf32>
    %279 = tpu.matmul %277, %240, %cst_85 {dimension_numbers = #tpu.dot_dimension_numbers<[1], [0], [0], [1], [0, 0, 1, 1], [], []>} : vector<64x64xbf16>, vector<64x32xbf16>, vector<64x32xf32> -> vector<64x32xf32>
    %280 = vector.extract_strided_slice %194 {offsets = [0, 64], sizes = [64, 32], strides = [1, 1]} : vector<64x384xbf16> to vector<64x32xbf16>
    %281 = vector.extract_strided_slice %194 {offsets = [0, 192], sizes = [64, 32], strides = [1, 1]} : vector<64x384xbf16> to vector<64x32xbf16>
    %282 = vector.extract_strided_slice %194 {offsets = [0, 320], sizes = [64, 32], strides = [1, 1]} : vector<64x384xbf16> to vector<64x32xbf16>
    %283 = vector.extract_strided_slice %195 {offsets = [0, 64], sizes = [64, 32], strides = [1, 1]} : vector<64x384xbf16> to vector<64x32xbf16>
    %284 = vector.extract_strided_slice %195 {offsets = [0, 192], sizes = [64, 32], strides = [1, 1]} : vector<64x384xbf16> to vector<64x32xbf16>
    %285 = vector.extract_strided_slice %195 {offsets = [0, 320], sizes = [64, 32], strides = [1, 1]} : vector<64x384xbf16> to vector<64x32xbf16>
    %cst_86 = arith.constant dense<0.000000e+00> : vector<64x64xf32>
    %286 = tpu.matmul %280, %284, %cst_86 {dimension_numbers = #tpu.dot_dimension_numbers<[1], [1], [0], [0], [0, 0, 1, 0], [], []>} : vector<64x32xbf16>, vector<64x32xbf16>, vector<64x64xf32> -> vector<64x64xf32>
    %cst_87 = arith.constant 0.176776692 : f32
    %287 = vector.broadcast %cst_87 : f32 to vector<64x64xf32>
    %288 = arith.mulf %286, %287 : vector<64x64xf32>
    %cst_88 = arith.constant dense<0.000000e+00> : vector<64x64xf32>
    %289 = tpu.matmul %283, %281, %cst_88 {dimension_numbers = #tpu.dot_dimension_numbers<[1], [1], [0], [0], [0, 0, 1, 0], [], []>} : vector<64x32xbf16>, vector<64x32xbf16>, vector<64x64xf32> -> vector<64x64xf32>
    %cst_89 = arith.constant 0.176776692 : f32
    %290 = vector.broadcast %cst_89 : f32 to vector<64x64xf32>
    %291 = arith.mulf %289, %290 : vector<64x64xf32>
    %cst_90 = arith.constant dense<0xFF800000> : vector<64xf32>
    %292 = vector.multi_reduction <maximumf>, %288, %cst_90 [1] : vector<64x64xf32> to vector<64xf32>
    %293 = vector.shape_cast %292 : vector<64xf32> to vector<64x1xf32>
    %294 = vector.broadcast %293 : vector<64x1xf32> to vector<64x64xf32>
    %295 = arith.subf %288, %294 : vector<64x64xf32>
    %296 = arith.truncf %295 : vector<64x64xf32> to vector<64x64xbf16>
    %297 = math.exp %296 : vector<64x64xbf16>
    %298 = arith.extf %297 : vector<64x64xbf16> to vector<64x64xf32>
    %cst_91 = arith.constant dense<0.000000e+00> : vector<64xf32>
    %299 = vector.multi_reduction <add>, %298, %cst_91 [1] : vector<64x64xf32> to vector<64xf32>
    %300 = vector.shape_cast %299 : vector<64xf32> to vector<64x1xf32>
    %301 = tpu.reciprocal %300 {approx = true} : vector<64x1xf32> -> vector<64x1xf32>
    %302 = arith.extf %297 : vector<64x64xbf16> to vector<64x64xf32>
    %303 = vector.broadcast %301 : vector<64x1xf32> to vector<64x64xf32>
    %304 = arith.mulf %302, %303 : vector<64x64xf32>
    %305 = arith.truncf %304 : vector<64x64xf32> to vector<64x64xbf16>
    %cst_92 = arith.constant dense<0xFF800000> : vector<64xf32>
    %306 = vector.multi_reduction <maximumf>, %291, %cst_92 [1] : vector<64x64xf32> to vector<64xf32>
    %307 = vector.shape_cast %306 : vector<64xf32> to vector<64x1xf32>
    %308 = vector.broadcast %307 : vector<64x1xf32> to vector<64x64xf32>
    %309 = arith.subf %291, %308 : vector<64x64xf32>
    %310 = arith.truncf %309 : vector<64x64xf32> to vector<64x64xbf16>
    %311 = math.exp %310 : vector<64x64xbf16>
    %312 = arith.extf %311 : vector<64x64xbf16> to vector<64x64xf32>
    %cst_93 = arith.constant dense<0.000000e+00> : vector<64xf32>
    %313 = vector.multi_reduction <add>, %312, %cst_93 [1] : vector<64x64xf32> to vector<64xf32>
    %314 = vector.shape_cast %313 : vector<64xf32> to vector<64x1xf32>
    %315 = tpu.reciprocal %314 {approx = true} : vector<64x1xf32> -> vector<64x1xf32>
    %316 = arith.extf %311 : vector<64x64xbf16> to vector<64x64xf32>
    %317 = vector.broadcast %315 : vector<64x1xf32> to vector<64x64xf32>
    %318 = arith.mulf %316, %317 : vector<64x64xf32>
    %319 = arith.truncf %318 : vector<64x64xf32> to vector<64x64xbf16>
    %cst_94 = arith.constant dense<0.000000e+00> : vector<64x32xf32>
    %320 = tpu.matmul %305, %285, %cst_94 {dimension_numbers = #tpu.dot_dimension_numbers<[1], [0], [0], [1], [0, 0, 1, 1], [], []>} : vector<64x64xbf16>, vector<64x32xbf16>, vector<64x32xf32> -> vector<64x32xf32>
    %cst_95 = arith.constant dense<0.000000e+00> : vector<64x32xf32>
    %321 = tpu.matmul %319, %282, %cst_95 {dimension_numbers = #tpu.dot_dimension_numbers<[1], [0], [0], [1], [0, 0, 1, 1], [], []>} : vector<64x64xbf16>, vector<64x32xbf16>, vector<64x32xf32> -> vector<64x32xf32>
    %322 = vector.extract_strided_slice %194 {offsets = [0, 96], sizes = [64, 32], strides = [1, 1]} : vector<64x384xbf16> to vector<64x32xbf16>
    %323 = vector.extract_strided_slice %194 {offsets = [0, 224], sizes = [64, 32], strides = [1, 1]} : vector<64x384xbf16> to vector<64x32xbf16>
    %324 = vector.extract_strided_slice %194 {offsets = [0, 352], sizes = [64, 32], strides = [1, 1]} : vector<64x384xbf16> to vector<64x32xbf16>
    %325 = vector.extract_strided_slice %195 {offsets = [0, 96], sizes = [64, 32], strides = [1, 1]} : vector<64x384xbf16> to vector<64x32xbf16>
    %326 = vector.extract_strided_slice %195 {offsets = [0, 224], sizes = [64, 32], strides = [1, 1]} : vector<64x384xbf16> to vector<64x32xbf16>
    %327 = vector.extract_strided_slice %195 {offsets = [0, 352], sizes = [64, 32], strides = [1, 1]} : vector<64x384xbf16> to vector<64x32xbf16>
    %cst_96 = arith.constant dense<0.000000e+00> : vector<64x64xf32>
    %328 = tpu.matmul %322, %326, %cst_96 {dimension_numbers = #tpu.dot_dimension_numbers<[1], [1], [0], [0], [0, 0, 1, 0], [], []>} : vector<64x32xbf16>, vector<64x32xbf16>, vector<64x64xf32> -> vector<64x64xf32>
    %cst_97 = arith.constant 0.176776692 : f32
    %329 = vector.broadcast %cst_97 : f32 to vector<64x64xf32>
    %330 = arith.mulf %328, %329 : vector<64x64xf32>
    %cst_98 = arith.constant dense<0.000000e+00> : vector<64x64xf32>
    %331 = tpu.matmul %325, %323, %cst_98 {dimension_numbers = #tpu.dot_dimension_numbers<[1], [1], [0], [0], [0, 0, 1, 0], [], []>} : vector<64x32xbf16>, vector<64x32xbf16>, vector<64x64xf32> -> vector<64x64xf32>
    %cst_99 = arith.constant 0.176776692 : f32
    %332 = vector.broadcast %cst_99 : f32 to vector<64x64xf32>
    %333 = arith.mulf %331, %332 : vector<64x64xf32>
    %cst_100 = arith.constant dense<0xFF800000> : vector<64xf32>
    %334 = vector.multi_reduction <maximumf>, %330, %cst_100 [1] : vector<64x64xf32> to vector<64xf32>
    %335 = vector.shape_cast %334 : vector<64xf32> to vector<64x1xf32>
    %336 = vector.broadcast %335 : vector<64x1xf32> to vector<64x64xf32>
    %337 = arith.subf %330, %336 : vector<64x64xf32>
    %338 = arith.truncf %337 : vector<64x64xf32> to vector<64x64xbf16>
    %339 = math.exp %338 : vector<64x64xbf16>
    %340 = arith.extf %339 : vector<64x64xbf16> to vector<64x64xf32>
    %cst_101 = arith.constant dense<0.000000e+00> : vector<64xf32>
    %341 = vector.multi_reduction <add>, %340, %cst_101 [1] : vector<64x64xf32> to vector<64xf32>
    %342 = vector.shape_cast %341 : vector<64xf32> to vector<64x1xf32>
    %343 = tpu.reciprocal %342 {approx = true} : vector<64x1xf32> -> vector<64x1xf32>
    %344 = arith.extf %339 : vector<64x64xbf16> to vector<64x64xf32>
    %345 = vector.broadcast %343 : vector<64x1xf32> to vector<64x64xf32>
    %346 = arith.mulf %344, %345 : vector<64x64xf32>
    %347 = arith.truncf %346 : vector<64x64xf32> to vector<64x64xbf16>
    %cst_102 = arith.constant dense<0xFF800000> : vector<64xf32>
    %348 = vector.multi_reduction <maximumf>, %333, %cst_102 [1] : vector<64x64xf32> to vector<64xf32>
    %349 = vector.shape_cast %348 : vector<64xf32> to vector<64x1xf32>
    %350 = vector.broadcast %349 : vector<64x1xf32> to vector<64x64xf32>
    %351 = arith.subf %333, %350 : vector<64x64xf32>
    %352 = arith.truncf %351 : vector<64x64xf32> to vector<64x64xbf16>
    %353 = math.exp %352 : vector<64x64xbf16>
    %354 = arith.extf %353 : vector<64x64xbf16> to vector<64x64xf32>
    %cst_103 = arith.constant dense<0.000000e+00> : vector<64xf32>
    %355 = vector.multi_reduction <add>, %354, %cst_103 [1] : vector<64x64xf32> to vector<64xf32>
    %356 = vector.shape_cast %355 : vector<64xf32> to vector<64x1xf32>
    %357 = tpu.reciprocal %356 {approx = true} : vector<64x1xf32> -> vector<64x1xf32>
    %358 = arith.extf %353 : vector<64x64xbf16> to vector<64x64xf32>
    %359 = vector.broadcast %357 : vector<64x1xf32> to vector<64x64xf32>
    %360 = arith.mulf %358, %359 : vector<64x64xf32>
    %361 = arith.truncf %360 : vector<64x64xf32> to vector<64x64xbf16>
    %cst_104 = arith.constant dense<0.000000e+00> : vector<64x32xf32>
    %362 = tpu.matmul %347, %327, %cst_104 {dimension_numbers = #tpu.dot_dimension_numbers<[1], [0], [0], [1], [0, 0, 1, 1], [], []>} : vector<64x64xbf16>, vector<64x32xbf16>, vector<64x32xf32> -> vector<64x32xf32>
    %cst_105 = arith.constant dense<0.000000e+00> : vector<64x32xf32>
    %363 = tpu.matmul %361, %324, %cst_105 {dimension_numbers = #tpu.dot_dimension_numbers<[1], [0], [0], [1], [0, 0, 1, 1], [], []>} : vector<64x64xbf16>, vector<64x32xbf16>, vector<64x32xf32> -> vector<64x32xf32>
    %364 = tpu.concatenate %236, %278, %320, %362 in 1 : vector<64x32xf32>, vector<64x32xf32>, vector<64x32xf32>, vector<64x32xf32> -> vector<64x128xf32>
    %365 = tpu.concatenate %237, %279, %321, %363 in 1 : vector<64x32xf32>, vector<64x32xf32>, vector<64x32xf32>, vector<64x32xf32> -> vector<64x128xf32>
    %366 = tpu.concatenate %192, %364 in 0 : vector<64x128xf32>, vector<64x128xf32> -> vector<128x128xf32>
    %367 = tpu.concatenate %193, %365 in 0 : vector<64x128xf32>, vector<64x128xf32> -> vector<128x128xf32>
    %c0_106 = arith.constant 0 : index
    %c0_107 = arith.constant 0 : index
    %368 = vector.load %arg9[%c0_106, %c0_107] : memref<8x256xf32, #tpu.memory_space<vmem>>, vector<8x256xf32>
    %369 = vector.extract_strided_slice %368 {offsets = [0, 0], sizes = [1, 256], strides = [1, 1]} : vector<8x256xf32> to vector<1x256xf32>
    %370 = vector.extract_strided_slice %368 {offsets = [1, 0], sizes = [1, 256], strides = [1, 1]} : vector<8x256xf32> to vector<1x256xf32>
    %371 = vector.extract_strided_slice %368 {offsets = [2, 0], sizes = [1, 256], strides = [1, 1]} : vector<8x256xf32> to vector<1x256xf32>
    %c0_108 = arith.constant 0 : index
    %c0_109 = arith.constant 0 : index
    %372 = vector.load %arg5[%c0_108, %c0_109] : memref<256x256xbf16, #tpu.memory_space<vmem>>, vector<256x256xbf16>
    %cst_110 = arith.constant dense<0.000000e+00> : vector<128x256xf32>
    %373 = tpu.matmul %6, %372, %cst_110 {dimension_numbers = #tpu.dot_dimension_numbers<[1], [0], [0], [1], [0, 0, 1, 1], [], []>} : vector<128x256xbf16>, vector<256x256xbf16>, vector<128x256xf32> -> vector<128x256xf32>
    %374 = arith.truncf %366 : vector<128x128xf32> to vector<128x128xbf16>
    %c0_111 = arith.constant 0 : index
    %c0_112 = arith.constant 0 : index
    %375 = vector.load %arg6[%c0_111, %c0_112] : memref<128x256xbf16, #tpu.memory_space<vmem>>, vector<128x256xbf16>
    %cst_113 = arith.constant dense<0.000000e+00> : vector<128x256xf32>
    %376 = tpu.matmul %374, %375, %cst_113 {dimension_numbers = #tpu.dot_dimension_numbers<[1], [0], [0], [1], [0, 0, 1, 1], [], []>} : vector<128x128xbf16>, vector<128x256xbf16>, vector<128x256xf32> -> vector<128x256xf32>
    %377 = arith.addf %373, %376 : vector<128x256xf32>
    %378 = vector.broadcast %369 : vector<1x256xf32> to vector<128x256xf32>
    %379 = arith.addf %377, %378 : vector<128x256xf32>
    %cst_114 = arith.constant dense<0.000000e+00> : vector<128xf32>
    %380 = vector.multi_reduction <add>, %379, %cst_114 [1] : vector<128x256xf32> to vector<128xf32>
    %381 = vector.shape_cast %380 : vector<128xf32> to vector<128x1xf32>
    %cst_115 = arith.constant 2.560000e+02 : f32
    %382 = vector.broadcast %cst_115 : f32 to vector<128x1xf32>
    %383 = arith.divf %381, %382 : vector<128x1xf32>
    %384 = vector.broadcast %383 : vector<128x1xf32> to vector<128x256xf32>
    %385 = arith.subf %379, %384 : vector<128x256xf32>
    %386 = arith.mulf %385, %385 : vector<128x256xf32>
    %cst_116 = arith.constant dense<0.000000e+00> : vector<128xf32>
    %387 = vector.multi_reduction <add>, %386, %cst_116 [1] : vector<128x256xf32> to vector<128xf32>
    %388 = vector.shape_cast %387 : vector<128xf32> to vector<128x1xf32>
    %cst_117 = arith.constant 2.560000e+02 : f32
    %389 = vector.broadcast %cst_117 : f32 to vector<128x1xf32>
    %390 = arith.divf %388, %389 : vector<128x1xf32>
    %cst_118 = arith.constant 9.99999974E-6 : f32
    %391 = vector.broadcast %cst_118 : f32 to vector<128x1xf32>
    %392 = arith.addf %390, %391 : vector<128x1xf32>
    %393 = math.rsqrt %392 : vector<128x1xf32>
    %394 = vector.broadcast %393 : vector<128x1xf32> to vector<128x256xf32>
    %395 = arith.mulf %385, %394 : vector<128x256xf32>
    %396 = vector.broadcast %370 : vector<1x256xf32> to vector<128x256xf32>
    %397 = arith.mulf %395, %396 : vector<128x256xf32>
    %398 = vector.broadcast %371 : vector<1x256xf32> to vector<128x256xf32>
    %399 = arith.addf %397, %398 : vector<128x256xf32>
    %400 = vector.extract_strided_slice %368 {offsets = [3, 0], sizes = [1, 256], strides = [1, 1]} : vector<8x256xf32> to vector<1x256xf32>
    %401 = vector.extract_strided_slice %368 {offsets = [4, 0], sizes = [1, 256], strides = [1, 1]} : vector<8x256xf32> to vector<1x256xf32>
    %402 = vector.extract_strided_slice %368 {offsets = [5, 0], sizes = [1, 256], strides = [1, 1]} : vector<8x256xf32> to vector<1x256xf32>
    %c0_119 = arith.constant 0 : index
    %c0_120 = arith.constant 0 : index
    %403 = vector.load %arg7[%c0_119, %c0_120] : memref<256x256xbf16, #tpu.memory_space<vmem>>, vector<256x256xbf16>
    %cst_121 = arith.constant dense<0.000000e+00> : vector<128x256xf32>
    %404 = tpu.matmul %13, %403, %cst_121 {dimension_numbers = #tpu.dot_dimension_numbers<[1], [0], [0], [1], [0, 0, 1, 1], [], []>} : vector<128x256xbf16>, vector<256x256xbf16>, vector<128x256xf32> -> vector<128x256xf32>
    %405 = arith.truncf %367 : vector<128x128xf32> to vector<128x128xbf16>
    %c0_122 = arith.constant 0 : index
    %c0_123 = arith.constant 0 : index
    %406 = vector.load %arg8[%c0_122, %c0_123] : memref<128x256xbf16, #tpu.memory_space<vmem>>, vector<128x256xbf16>
    %cst_124 = arith.constant dense<0.000000e+00> : vector<128x256xf32>
    %407 = tpu.matmul %405, %406, %cst_124 {dimension_numbers = #tpu.dot_dimension_numbers<[1], [0], [0], [1], [0, 0, 1, 1], [], []>} : vector<128x128xbf16>, vector<128x256xbf16>, vector<128x256xf32> -> vector<128x256xf32>
    %408 = arith.addf %404, %407 : vector<128x256xf32>
    %409 = vector.broadcast %400 : vector<1x256xf32> to vector<128x256xf32>
    %410 = arith.addf %408, %409 : vector<128x256xf32>
    %cst_125 = arith.constant dense<0.000000e+00> : vector<128xf32>
    %411 = vector.multi_reduction <add>, %410, %cst_125 [1] : vector<128x256xf32> to vector<128xf32>
    %412 = vector.shape_cast %411 : vector<128xf32> to vector<128x1xf32>
    %cst_126 = arith.constant 2.560000e+02 : f32
    %413 = vector.broadcast %cst_126 : f32 to vector<128x1xf32>
    %414 = arith.divf %412, %413 : vector<128x1xf32>
    %415 = vector.broadcast %414 : vector<128x1xf32> to vector<128x256xf32>
    %416 = arith.subf %410, %415 : vector<128x256xf32>
    %417 = arith.mulf %416, %416 : vector<128x256xf32>
    %cst_127 = arith.constant dense<0.000000e+00> : vector<128xf32>
    %418 = vector.multi_reduction <add>, %417, %cst_127 [1] : vector<128x256xf32> to vector<128xf32>
    %419 = vector.shape_cast %418 : vector<128xf32> to vector<128x1xf32>
    %cst_128 = arith.constant 2.560000e+02 : f32
    %420 = vector.broadcast %cst_128 : f32 to vector<128x1xf32>
    %421 = arith.divf %419, %420 : vector<128x1xf32>
    %cst_129 = arith.constant 9.99999974E-6 : f32
    %422 = vector.broadcast %cst_129 : f32 to vector<128x1xf32>
    %423 = arith.addf %421, %422 : vector<128x1xf32>
    %424 = math.rsqrt %423 : vector<128x1xf32>
    %425 = vector.broadcast %424 : vector<128x1xf32> to vector<128x256xf32>
    %426 = arith.mulf %416, %425 : vector<128x256xf32>
    %427 = vector.broadcast %401 : vector<1x256xf32> to vector<128x256xf32>
    %428 = arith.mulf %426, %427 : vector<128x256xf32>
    %429 = vector.broadcast %402 : vector<1x256xf32> to vector<128x256xf32>
    %430 = arith.addf %428, %429 : vector<128x256xf32>
    %431 = arith.addf %399, %430 : vector<128x256xf32>
    %432 = tpu.transpose %431, [1, 0] : vector<128x256xf32> -> vector<256x128xf32>
    %433 = vector.extract_strided_slice %432 {offsets = [0, 0], sizes = [256, 64], strides = [1, 1]} : vector<256x128xf32> to vector<256x64xf32>
    %c0_130 = arith.constant 0 : index
    %c0_131 = arith.constant 0 : index
    %c0_132 = arith.constant 0 : index
    %434 = vector.load %arg10[%c0_130, %c0_131, %c0_132] : memref<2x256x64xf32, #tpu.memory_space<vmem>>, vector<1x256x64xf32>
    %435 = vector.shape_cast %434 : vector<1x256x64xf32> to vector<256x64xf32>
    %436 = vector.shape_cast %433 : vector<256x64xf32> to vector<1x256x64xf32>
    tpu.vector_store %arg10[%c0_130, %c0_131, %c0_132], %436 {strides = array<i32>} : memref<2x256x64xf32, #tpu.memory_space<vmem>>, vector<1x256x64xf32>,
    %437 = vector.extract_strided_slice %432 {offsets = [0, 64], sizes = [256, 64], strides = [1, 1]} : vector<256x128xf32> to vector<256x64xf32>
    %c1_133 = arith.constant 1 : index
    %c0_134 = arith.constant 0 : index
    %c0_135 = arith.constant 0 : index
    %438 = vector.load %arg10[%c1_133, %c0_134, %c0_135] : memref<2x256x64xf32, #tpu.memory_space<vmem>>, vector<1x256x64xf32>
    %439 = vector.shape_cast %438 : vector<1x256x64xf32> to vector<256x64xf32>
    %440 = vector.shape_cast %437 : vector<256x64xf32> to vector<1x256x64xf32>
    tpu.vector_store %arg10[%c1_133, %c0_134, %c0_135], %440 {strides = array<i32>} : memref<2x256x64xf32, #tpu.memory_space<vmem>>, vector<1x256x64xf32>,
    return
  }
  func.func @transform_0(%arg0: i32) -> (i32, i32, i32) {
    %c0_i32 = arith.constant 0 : i32
    %c0_i32_0 = arith.constant 0 : i32
    %c0_i32_1 = arith.constant 0 : i32
    return %arg0, %c0_i32, %c0_i32_0 : i32, i32, i32
  }
  func.func @transform_1(%arg0: i32) -> (i32, i32, i32) {
    %c0_i32 = arith.constant 0 : i32
    %c0_i32_0 = arith.constant 0 : i32
    %c0_i32_1 = arith.constant 0 : i32
    return %arg0, %c0_i32, %c0_i32_0 : i32, i32, i32
  }
  func.func @transform_2(%arg0: i32) -> (i32, i32) {
    %c0_i32 = arith.constant 0 : i32
    %c0_i32_0 = arith.constant 0 : i32
    %c0_i32_1 = arith.constant 0 : i32
    return %c0_i32, %c0_i32_0 : i32, i32
  }
  func.func @transform_3(%arg0: i32) -> (i32, i32) {
    %c0_i32 = arith.constant 0 : i32
    %c0_i32_0 = arith.constant 0 : i32
    %c0_i32_1 = arith.constant 0 : i32
    return %c0_i32, %c0_i32_0 : i32, i32
  }
  func.func @transform_4(%arg0: i32) -> (i32, i32) {
    %c0_i32 = arith.constant 0 : i32
    %c0_i32_0 = arith.constant 0 : i32
    %c0_i32_1 = arith.constant 0 : i32
    return %c0_i32, %c0_i32_0 : i32, i32
  }
  func.func @transform_5(%arg0: i32) -> (i32, i32) {
    %c0_i32 = arith.constant 0 : i32
    %c0_i32_0 = arith.constant 0 : i32
    %c0_i32_1 = arith.constant 0 : i32
    return %c0_i32, %c0_i32_0 : i32, i32
  }
  func.func @transform_6(%arg0: i32) -> (i32, i32) {
    %c0_i32 = arith.constant 0 : i32
    %c0_i32_0 = arith.constant 0 : i32
    %c0_i32_1 = arith.constant 0 : i32
    return %c0_i32, %c0_i32_0 : i32, i32
  }
  func.func @transform_7(%arg0: i32) -> (i32, i32) {
    %c0_i32 = arith.constant 0 : i32
    %c0_i32_0 = arith.constant 0 : i32
    %c0_i32_1 = arith.constant 0 : i32
    return %c0_i32, %c0_i32_0 : i32, i32
  }
  func.func @transform_8(%arg0: i32) -> (i32, i32) {
    %c0_i32 = arith.constant 0 : i32
    %c0_i32_0 = arith.constant 0 : i32
    %c0_i32_1 = arith.constant 0 : i32
    return %c0_i32, %c0_i32_0 : i32, i32
  }
  func.func @transform_9(%arg0: i32) -> (i32, i32, i32) {
    %c0_i32 = arith.constant 0 : i32
    %c0_i32_0 = arith.constant 0 : i32
    %c0_i32_1 = arith.constant 0 : i32
    return %arg0, %c0_i32, %c0_i32_0 : i32, i32, i32
  }
}

</mosaic_0001>

<llo_original>
// kernel: tpu_custom_call.1
$region0: #{tpu_custom_call.1}
  #allocation0 [shape = 'u32[]', space=smem, size = 0x4, offset = 0x4, fixed_abs, tag = 'smem constant byte address 0x4 - core index']
  #allocation1 [shape = 'u32[144,128]{1,0:T(1,128)}', space=vmem, size = 0x12000, scoped, tag = 'internal scratch']
  #allocation2 [shape = 'bf16[128,384]{1,0:T(8,128)(2,1)}', space=vmem, size = 0x18000, scoped, tag = 'scratch operand']
  #allocation3 [shape = 'bf16[128,384]{1,0:T(8,128)(2,1)}', space=vmem, size = 0x18000, scoped, tag = 'scratch operand']
  %s0 = inlined_call_operand.vmem [shape: f32[2,256,64], index: 0, kind: input, shape index: {}]
  %s1 = inlined_call_operand.vmem [shape: f32[2,256,64], index: 1, kind: input, shape index: {}]
  %s2 = inlined_call_operand.vmem [shape: bf16[256,384], index: 2, kind: input, shape index: {}]
  %s3 = inlined_call_operand.vmem [shape: bf16[256,384], index: 3, kind: input, shape index: {}]
  %s4 = inlined_call_operand.vmem [shape: bf16[256,256], index: 4, kind: input, shape index: {}]
  %s5 = inlined_call_operand.hbm [shape: bf16[128,256], index: 5, kind: input, shape index: {}]
  %s6 = inlined_call_operand.vmem [shape: bf16[256,256], index: 6, kind: input, shape index: {}]
  %s7 = inlined_call_operand.hbm [shape: bf16[128,256], index: 7, kind: input, shape index: {}]
  %s8 = inlined_call_operand.hbm [shape: f32[8,256], index: 8, kind: input, shape index: {}]
  %s9 = inlined_call_operand.vmem [shape: f32[2,256,64], index: 9, kind: output, shape index: {}]
  %s10 = sld [smem:[#allocation0]]
  $region58: #{tpu_custom_call.1} parent=0
    _
  %s12 = ssub.s32 1, %s10
  %s13 = scalar_select 0, %s12, %s10
  $region1: #{tpu_custom_call.1} parent=0
    #allocation4 [shape = 'u8[65536]{0}', space=vmem, size = 0x10000, scoped, tag = 'input window, operand 5, single buffered']
    #allocation5 [shape = 's32[1]{0}', space=sflag, size = 0x4, scoped, tag = 'scoped memory for tpu_custom_call.1']
    #allocation6 [shape = 'u8[65536]{0}', space=vmem, size = 0x10000, scoped, tag = 'input window, operand 7, single buffered']
    #allocation7 [shape = 's32[1]{0}', space=sflag, size = 0x4, scoped, tag = 'scoped memory for tpu_custom_call.1']
    #allocation8 [shape = 'u8[8192]{0}', space=vmem, size = 0x2000, scoped, tag = 'input window, operand 8, single buffered']
    %14 = vsyncpa [#allocation5], 0
    %15 = vsyncpa [#allocation7], 0
    // Predicated region
    $region2: #{tpu_custom_call.1} parent=1 // pred_check
      _
    $region3: #{tpu_custom_call.1} parent=1 // pred_check_branch
      %17 = sbr.rel (0) target = $region5
    $region4: #{tpu_custom_call.1} parent=1 // pred_region
      _
    $region5: #{tpu_custom_call.1} parent=1 // pred_fallthru
      _
    // Predicated region
    $region6: #{tpu_custom_call.1} parent=1 // pred_check
      _
    $region7: #{tpu_custom_call.1} parent=1 // pred_check_branch
      %19 = sbr.rel (0) target = $region9
    $region8: #{tpu_custom_call.1} parent=1 // pred_region
      _
    $region9: #{tpu_custom_call.1} parent=1 // pred_fallthru
      _
    // Predicated region
    $region10: #{tpu_custom_call.1} parent=1 // pred_check
      _
    $region11: #{tpu_custom_call.1} parent=1 // pred_check_branch
      %21 = sbr.rel (0) target = $region13
    $region12: #{tpu_custom_call.1} parent=1 // pred_region
      _
    $region13: #{tpu_custom_call.1} parent=1 // pred_fallthru
      _
    // Predicated region
    $region14: #{tpu_custom_call.1} parent=1 // pred_check
      _
    $region15: #{tpu_custom_call.1} parent=1 // pred_check_branch
      %23 = sbr.rel (0) target = $region17
    $region16: #{tpu_custom_call.1} parent=1 // pred_region
      _
    $region17: #{tpu_custom_call.1} parent=1 // pred_fallthru
      _
    // Predicated region
    $region18: #{tpu_custom_call.1} parent=1 // pred_check
      _
    $region19: #{tpu_custom_call.1} parent=1 // pred_check_branch
      %25 = sbr.rel (0) target = $region21
    $region20: #{tpu_custom_call.1} parent=1 // pred_region
      _
    $region21: #{tpu_custom_call.1} parent=1 // pred_fallthru
      _
    // Predicated region
    $region22: #{tpu_custom_call.1} parent=1 // pred_check
      _
    $region23: #{tpu_custom_call.1} parent=1 // pred_check_branch
      %27 = sbr.rel (0) target = $region25
    $region24: #{tpu_custom_call.1} parent=1 // pred_region
      %s29 = ssub.s32 2048, 2048
      %30 = vsyncadd [#allocation5], %s29
      %s31 = sshll.u32 [#allocation4], 4
      %s32 = int_to_ptr.vmem [resolvable:$true] %s31
      %37 = dma.hbm_to_vmem [thread:$0]  %s5, 2048, %s32, [#allocation5], 128, 128, 8
    $region25: #{tpu_custom_call.1} parent=1 // pred_fallthru
      _
    // Predicated region
    $region26: #{tpu_custom_call.1} parent=1 // pred_check
      _
    $region27: #{tpu_custom_call.1} parent=1 // pred_check_branch
      %39 = sbr.rel (0) target = $region29
    $region28: #{tpu_custom_call.1} parent=1 // pred_region
      _
    $region29: #{tpu_custom_call.1} parent=1 // pred_fallthru
      _
    // Predicated region
    $region30: #{tpu_custom_call.1} parent=1 // pred_check
      _
    $region31: #{tpu_custom_call.1} parent=1 // pred_check_branch
      %41 = sbr.rel (0) target = $region33
    $region32: #{tpu_custom_call.1} parent=1 // pred_region
      %s43 = ssub.s32 2048, 2048
      %44 = vsyncadd [#allocation7], %s43
      %s45 = sshll.u32 [#allocation6], 4
      %s46 = int_to_ptr.vmem [resolvable:$true] %s45
      %51 = dma.hbm_to_vmem [thread:$0]  %s7, 2048, %s46, [#allocation7], 128, 128, 8
    $region33: #{tpu_custom_call.1} parent=1 // pred_fallthru
      _
    // Predicated region
    $region34: #{tpu_custom_call.1} parent=1 // pred_check
      _
    $region35: #{tpu_custom_call.1} parent=1 // pred_check_branch
      %53 = sbr.rel (0) target = $region37
    $region36: #{tpu_custom_call.1} parent=1 // pred_region
      %s55 = ssub.s32 256, 256
      %56 = vsyncadd [#allocation7], %s55
      %s58 = sshll.u32 [#allocation8], 4
      %s59 = int_to_ptr.vmem [resolvable:$true] %s58
      %61 = dma.hbm_to_vmem [thread:$0]  %s8, 256, %s59, [#allocation7]
    $region37: #{tpu_custom_call.1} parent=1 // pred_fallthru
      _
    // Predicated region
    $region38: #{tpu_custom_call.1} parent=1 // pred_check
      _
    $region39: #{tpu_custom_call.1} parent=1 // pred_check_branch
      %63 = sbr.rel (0) target = $region41
    $region40: #{tpu_custom_call.1} parent=1 // pred_region
      %64 = dma.done [#allocation5], 2048
    $region41: #{tpu_custom_call.1} parent=1 // pred_fallthru
      _
    // Predicated region
    $region42: #{tpu_custom_call.1} parent=1 // pred_check
      _
    $region43: #{tpu_custom_call.1} parent=1 // pred_check_branch
      %66 = sbr.rel (0) target = $region45
    $region44: #{tpu_custom_call.1} parent=1 // pred_region
      %67 = dma.done [#allocation7], 2048
    $region45: #{tpu_custom_call.1} parent=1 // pred_fallthru
      _
    // Predicated region
    $region46: #{tpu_custom_call.1} parent=1 // pred_check
      _
    $region47: #{tpu_custom_call.1} parent=1 // pred_check_branch
      %69 = sbr.rel (0) target = $region49
    $region48: #{tpu_custom_call.1} parent=1 // pred_region
      %70 = dma.done [#allocation7], 256
    $region49: #{tpu_custom_call.1} parent=1 // pred_fallthru
      _
    %v72 = vld [vmem:[%s0] sm:$0xff]
    %v73 = vld [vmem:[%s0 + $0x8] sm:$0xff]
    %v74 = vld [vmem:[%s0 + $0x10] sm:$0xff]
    %v75 = vld [vmem:[%s0 + $0x18] sm:$0xff]
    %v76 = vld [vmem:[%s0 + $0x20] sm:$0xff]
    %v77 = vld [vmem:[%s0 + $0x28] sm:$0xff]
    %v78 = vld [vmem:[%s0 + $0x30] sm:$0xff]
    %v79 = vld [vmem:[%s0 + $0x38] sm:$0xff]
    %v80 = vld [vmem:[%s0 + $0x40] sm:$0xff]
    %v81 = vld [vmem:[%s0 + $0x48] sm:$0xff]
    %v82 = vld [vmem:[%s0 + $0x50] sm:$0xff]
    %v83 = vld [vmem:[%s0 + $0x58] sm:$0xff]
    %v84 = vld [vmem:[%s0 + $0x60] sm:$0xff]
    %v85 = vld [vmem:[%s0 + $0x68] sm:$0xff]
    %v86 = vld [vmem:[%s0 + $0x70] sm:$0xff]
    %v87 = vld [vmem:[%s0 + $0x78] sm:$0xff]
    %v88 = vld [vmem:[%s0 + $0x80] sm:$0xff]
    %v89 = vld [vmem:[%s0 + $0x88] sm:$0xff]
    %v90 = vld [vmem:[%s0 + $0x90] sm:$0xff]
    %v91 = vld [vmem:[%s0 + $0x98] sm:$0xff]
    %v92 = vld [vmem:[%s0 + $0xa0] sm:$0xff]
    %v93 = vld [vmem:[%s0 + $0xa8] sm:$0xff]
    %v94 = vld [vmem:[%s0 + $0xb0] sm:$0xff]
    %v95 = vld [vmem:[%s0 + $0xb8] sm:$0xff]
    %v96 = vld [vmem:[%s0 + $0xc0] sm:$0xff]
    %v97 = vld [vmem:[%s0 + $0xc8] sm:$0xff]
    %v98 = vld [vmem:[%s0 + $0xd0] sm:$0xff]
    %v99 = vld [vmem:[%s0 + $0xd8] sm:$0xff]
    %v100 = vld [vmem:[%s0 + $0xe0] sm:$0xff]
    %v101 = vld [vmem:[%s0 + $0xe8] sm:$0xff]
    %v102 = vld [vmem:[%s0 + $0xf0] sm:$0xff]
    %v103 = vld [vmem:[%s0 + $0xf8] sm:$0xff]
    %s104 = scalar_lea.vmem %s0, 256
    %v105 = vld [vmem:[%s104] sm:$0xff]
    %v106 = vld [vmem:[%s104 + $0x8] sm:$0xff]
    %v107 = vld [vmem:[%s104 + $0x10] sm:$0xff]
    %v108 = vld [vmem:[%s104 + $0x18] sm:$0xff]
    %v109 = vld [vmem:[%s104 + $0x20] sm:$0xff]
    %v110 = vld [vmem:[%s104 + $0x28] sm:$0xff]
    %v111 = vld [vmem:[%s104 + $0x30] sm:$0xff]
    %v112 = vld [vmem:[%s104 + $0x38] sm:$0xff]
    %v113 = vld [vmem:[%s104 + $0x40] sm:$0xff]
    %v114 = vld [vmem:[%s104 + $0x48] sm:$0xff]
    %v115 = vld [vmem:[%s104 + $0x50] sm:$0xff]
    %v116 = vld [vmem:[%s104 + $0x58] sm:$0xff]
    %v117 = vld [vmem:[%s104 + $0x60] sm:$0xff]
    %v118 = vld [vmem:[%s104 + $0x68] sm:$0xff]
    %v119 = vld [vmem:[%s104 + $0x70] sm:$0xff]
    %v120 = vld [vmem:[%s104 + $0x78] sm:$0xff]
    %v121 = vld [vmem:[%s104 + $0x80] sm:$0xff]
    %v122 = vld [vmem:[%s104 + $0x88] sm:$0xff]
    %v123 = vld [vmem:[%s104 + $0x90] sm:$0xff]
    %v124 = vld [vmem:[%s104 + $0x98] sm:$0xff]
    %v125 = vld [vmem:[%s104 + $0xa0] sm:$0xff]
    %v126 = vld [vmem:[%s104 + $0xa8] sm:$0xff]
    %v127 = vld [vmem:[%s104 + $0xb0] sm:$0xff]
    %v128 = vld [vmem:[%s104 + $0xb8] sm:$0xff]
    %v129 = vld [vmem:[%s104 + $0xc0] sm:$0xff]
    %v130 = vld [vmem:[%s104 + $0xc8] sm:$0xff]
    %v131 = vld [vmem:[%s104 + $0xd0] sm:$0xff]
    %v132 = vld [vmem:[%s104 + $0xd8] sm:$0xff]
    %v133 = vld [vmem:[%s104 + $0xe0] sm:$0xff]
    %v134 = vld [vmem:[%s104 + $0xe8] sm:$0xff]
    %v135 = vld [vmem:[%s104 + $0xf0] sm:$0xff]
    %v136 = vld [vmem:[%s104 + $0xf8] sm:$0xff]
    %169 = vrot.lane.b32.xlu0 %v105, 64
    %v170 = vpop.permute.xlu0 %169
    %171 = vrot.lane.b32.xlu0 %v106, 64
    %v172 = vpop.permute.xlu0 %171
    %173 = vrot.lane.b32.xlu0 %v107, 64
    %v174 = vpop.permute.xlu0 %173
    %175 = vrot.lane.b32.xlu0 %v108, 64
    %v176 = vpop.permute.xlu0 %175
    %177 = vrot.lane.b32.xlu0 %v109, 64
    %v178 = vpop.permute.xlu0 %177
    %179 = vrot.lane.b32.xlu0 %v110, 64
    %v180 = vpop.permute.xlu0 %179
    %181 = vrot.lane.b32.xlu0 %v111, 64
    %v182 = vpop.permute.xlu0 %181
    %183 = vrot.lane.b32.xlu0 %v112, 64
    %v184 = vpop.permute.xlu0 %183
    %185 = vrot.lane.b32.xlu0 %v113, 64
    %v186 = vpop.permute.xlu0 %185
    %187 = vrot.lane.b32.xlu0 %v114, 64
    %v188 = vpop.permute.xlu0 %187
    %189 = vrot.lane.b32.xlu0 %v115, 64
    %v190 = vpop.permute.xlu0 %189
    %191 = vrot.lane.b32.xlu0 %v116, 64
    %v192 = vpop.permute.xlu0 %191
    %193 = vrot.lane.b32.xlu0 %v117, 64
    %v194 = vpop.permute.xlu0 %193
    %195 = vrot.lane.b32.xlu0 %v118, 64
    %v196 = vpop.permute.xlu0 %195
    %197 = vrot.lane.b32.xlu0 %v119, 64
    %v198 = vpop.permute.xlu0 %197
    %199 = vrot.lane.b32.xlu0 %v120, 64
    %v200 = vpop.permute.xlu0 %199
    %201 = vrot.lane.b32.xlu0 %v121, 64
    %v202 = vpop.permute.xlu0 %201
    %203 = vrot.lane.b32.xlu0 %v122, 64
    %v204 = vpop.permute.xlu0 %203
    %205 = vrot.lane.b32.xlu0 %v123, 64
    %v206 = vpop.permute.xlu0 %205
    %207 = vrot.lane.b32.xlu0 %v124, 64
    %v208 = vpop.permute.xlu0 %207
    %209 = vrot.lane.b32.xlu0 %v125, 64
    %v210 = vpop.permute.xlu0 %209
    %211 = vrot.lane.b32.xlu0 %v126, 64
    %v212 = vpop.permute.xlu0 %211
    %213 = vrot.lane.b32.xlu0 %v127, 64
    %v214 = vpop.permute.xlu0 %213
    %215 = vrot.lane.b32.xlu0 %v128, 64
    %v216 = vpop.permute.xlu0 %215
    %217 = vrot.lane.b32.xlu0 %v129, 64
    %v218 = vpop.permute.xlu0 %217
    %219 = vrot.lane.b32.xlu0 %v130, 64
    %v220 = vpop.permute.xlu0 %219
    %221 = vrot.lane.b32.xlu0 %v131, 64
    %v222 = vpop.permute.xlu0 %221
    %223 = vrot.lane.b32.xlu0 %v132, 64
    %v224 = vpop.permute.xlu0 %223
    %225 = vrot.lane.b32.xlu0 %v133, 64
    %v226 = vpop.permute.xlu0 %225
    %227 = vrot.lane.b32.xlu0 %v134, 64
    %v228 = vpop.permute.xlu0 %227
    %229 = vrot.lane.b32.xlu0 %v135, 64
    %v230 = vpop.permute.xlu0 %229
    %231 = vrot.lane.b32.xlu0 %v136, 64
    %v232 = vpop.permute.xlu0 %231
    %vm265 = vcmask 523264
    %v266 = vsel %vm265, %v72, %v170
    %v267 = vsel %vm265, %v73, %v172
    %v268 = vsel %vm265, %v74, %v174
    %v269 = vsel %vm265, %v75, %v176
    %v270 = vsel %vm265, %v76, %v178
    %v271 = vsel %vm265, %v77, %v180
    %v272 = vsel %vm265, %v78, %v182
    %v273 = vsel %vm265, %v79, %v184
    %v274 = vsel %vm265, %v80, %v186
    %v275 = vsel %vm265, %v81, %v188
    %v276 = vsel %vm265, %v82, %v190
    %v277 = vsel %vm265, %v83, %v192
    %v278 = vsel %vm265, %v84, %v194
    %v279 = vsel %vm265, %v85, %v196
    %v280 = vsel %vm265, %v86, %v198
    %v281 = vsel %vm265, %v87, %v200
    %v282 = vsel %vm265, %v88, %v202
    %v283 = vsel %vm265, %v89, %v204
    %v284 = vsel %vm265, %v90, %v206
    %v285 = vsel %vm265, %v91, %v208
    %v286 = vsel %vm265, %v92, %v210
    %v287 = vsel %vm265, %v93, %v212
    %v288 = vsel %vm265, %v94, %v214
    %v289 = vsel %vm265, %v95, %v216
    %v290 = vsel %vm265, %v96, %v218
    %v291 = vsel %vm265, %v97, %v220
    %v292 = vsel %vm265, %v98, %v222
    %v293 = vsel %vm265, %v99, %v224
    %v294 = vsel %vm265, %v100, %v226
    %v295 = vsel %vm265, %v101, %v228
    %v296 = vsel %vm265, %v102, %v230
    %v297 = vsel %vm265, %v103, %v232
    %298 = vxpose.xlu0.b32.start [1/16] %v266, 128
    %299 = vxpose.xlu0.b32.cont [2/16] %v267, 128
    %300 = vxpose.xlu0.b32.cont [3/16] %v268, 128
    %301 = vxpose.xlu0.b32.cont [4/16] %v269, 128
    %302 = vxpose.xlu0.b32.cont [5/16] %v270, 128
    %303 = vxpose.xlu0.b32.cont [6/16] %v271, 128
    %304 = vxpose.xlu0.b32.cont [7/16] %v272, 128
    %305 = vxpose.xlu0.b32.cont [8/16] %v273, 128
    %306 = vxpose.xlu0.b32.cont [9/16] %v274, 128
    %307 = vxpose.xlu0.b32.cont [10/16] %v275, 128
    %308 = vxpose.xlu0.b32.cont [11/16] %v276, 128
    %309 = vxpose.xlu0.b32.cont [12/16] %v277, 128
    %310 = vxpose.xlu0.b32.cont [13/16] %v278, 128
    %311 = vxpose.xlu0.b32.cont [14/16] %v279, 128
    %312 = vxpose.xlu0.b32.cont [15/16] %v280, 128
    %313 = vxpose.xlu0.b32.end [16/16] %v281, 128
    %v314 = vpop.trf.xlu0
    %v315 = vpop.trf.xlu0
    %v316 = vpop.trf.xlu0
    %v317 = vpop.trf.xlu0
    %v318 = vpop.trf.xlu0
    %v319 = vpop.trf.xlu0
    %v320 = vpop.trf.xlu0
    %v321 = vpop.trf.xlu0
    %v322 = vpop.trf.xlu0
    %v323 = vpop.trf.xlu0
    %v324 = vpop.trf.xlu0
    %v325 = vpop.trf.xlu0
    %v326 = vpop.trf.xlu0
    %v327 = vpop.trf.xlu0
    %v328 = vpop.trf.xlu0
    %v329 = vpop.trf.xlu0
    %330 = vxpose.xlu0.b32.start [1/16] %v282, 128
    %331 = vxpose.xlu0.b32.cont [2/16] %v283, 128
    %332 = vxpose.xlu0.b32.cont [3/16] %v284, 128
    %333 = vxpose.xlu0.b32.cont [4/16] %v285, 128
    %334 = vxpose.xlu0.b32.cont [5/16] %v286, 128
    %335 = vxpose.xlu0.b32.cont [6/16] %v287, 128
    %336 = vxpose.xlu0.b32.cont [7/16] %v288, 128
    %337 = vxpose.xlu0.b32.cont [8/16] %v289, 128
    %338 = vxpose.xlu0.b32.cont [9/16] %v290, 128
    %339 = vxpose.xlu0.b32.cont [10/16] %v291, 128
    %340 = vxpose.xlu0.b32.cont [11/16] %v292, 128
    %341 = vxpose.xlu0.b32.cont [12/16] %v293, 128
    %342 = vxpose.xlu0.b32.cont [13/16] %v294, 128
    %343 = vxpose.xlu0.b32.cont [14/16] %v295, 128
    %344 = vxpose.xlu0.b32.cont [15/16] %v296, 128
    %345 = vxpose.xlu0.b32.end [16/16] %v297, 128
    %v346 = vpop.trf.xlu0
    %v347 = vpop.trf.xlu0
    %v348 = vpop.trf.xlu0
    %v349 = vpop.trf.xlu0
    %v350 = vpop.trf.xlu0
    %v351 = vpop.trf.xlu0
    %v352 = vpop.trf.xlu0
    %v353 = vpop.trf.xlu0
    %v354 = vpop.trf.xlu0
    %v355 = vpop.trf.xlu0
    %v356 = vpop.trf.xlu0
    %v357 = vpop.trf.xlu0
    %v358 = vpop.trf.xlu0
    %v359 = vpop.trf.xlu0
    %v360 = vpop.trf.xlu0
    %v361 = vpop.trf.xlu0
    %v362 = vpack.c.bf16 %v315, %v314
    %v363 = vpack.c.bf16 %v347, %v346
    %v364 = vpack.c.bf16 %v317, %v316
    %v365 = vpack.c.bf16 %v349, %v348
    %v366 = vpack.c.bf16 %v319, %v318
    %v367 = vpack.c.bf16 %v351, %v350
    %v368 = vpack.c.bf16 %v321, %v320
    %v369 = vpack.c.bf16 %v353, %v352
    %v370 = vpack.c.bf16 %v323, %v322
    %v371 = vpack.c.bf16 %v355, %v354
    %v372 = vpack.c.bf16 %v325, %v324
    %v373 = vpack.c.bf16 %v357, %v356
    %v374 = vpack.c.bf16 %v327, %v326
    %v375 = vpack.c.bf16 %v359, %v358
    %v376 = vpack.c.bf16 %v329, %v328
    %v377 = vpack.c.bf16 %v361, %v360
    %v378 = vld [vmem:[%s1] sm:$0xff]
    %v379 = vld [vmem:[%s1 + $0x8] sm:$0xff]
    %v380 = vld [vmem:[%s1 + $0x10] sm:$0xff]
    %v381 = vld [vmem:[%s1 + $0x18] sm:$0xff]
    %v382 = vld [vmem:[%s1 + $0x20] sm:$0xff]
    %v383 = vld [vmem:[%s1 + $0x28] sm:$0xff]
    %v384 = vld [vmem:[%s1 + $0x30] sm:$0xff]
    %v385 = vld [vmem:[%s1 + $0x38] sm:$0xff]
    %v386 = vld [vmem:[%s1 + $0x40] sm:$0xff]
    %v387 = vld [vmem:[%s1 + $0x48] sm:$0xff]
    %v388 = vld [vmem:[%s1 + $0x50] sm:$0xff]
    %v389 = vld [vmem:[%s1 + $0x58] sm:$0xff]
    %v390 = vld [vmem:[%s1 + $0x60] sm:$0xff]
    %v391 = vld [vmem:[%s1 + $0x68] sm:$0xff]
    %v392 = vld [vmem:[%s1 + $0x70] sm:$0xff]
    %v393 = vld [vmem:[%s1 + $0x78] sm:$0xff]
    %v394 = vld [vmem:[%s1 + $0x80] sm:$0xff]
    %v395 = vld [vmem:[%s1 + $0x88] sm:$0xff]
    %v396 = vld [vmem:[%s1 + $0x90] sm:$0xff]
    %v397 = vld [vmem:[%s1 + $0x98] sm:$0xff]
    %v398 = vld [vmem:[%s1 + $0xa0] sm:$0xff]
    %v399 = vld [vmem:[%s1 + $0xa8] sm:$0xff]
    %v400 = vld [vmem:[%s1 + $0xb0] sm:$0xff]
    %v401 = vld [vmem:[%s1 + $0xb8] sm:$0xff]
    %v402 = vld [vmem:[%s1 + $0xc0] sm:$0xff]
    %v403 = vld [vmem:[%s1 + $0xc8] sm:$0xff]
    %v404 = vld [vmem:[%s1 + $0xd0] sm:$0xff]
    %v405 = vld [vmem:[%s1 + $0xd8] sm:$0xff]
    %v406 = vld [vmem:[%s1 + $0xe0] sm:$0xff]
    %v407 = vld [vmem:[%s1 + $0xe8] sm:$0xff]
    %v408 = vld [vmem:[%s1 + $0xf0] sm:$0xff]
    %v409 = vld [vmem:[%s1 + $0xf8] sm:$0xff]
    %s410 = scalar_lea.vmem %s1, 256
    %v411 = vld [vmem:[%s410] sm:$0xff]
    %v412 = vld [vmem:[%s410 + $0x8] sm:$0xff]
    %v413 = vld [vmem:[%s410 + $0x10] sm:$0xff]
    %v414 = vld [vmem:[%s410 + $0x18] sm:$0xff]
    %v415 = vld [vmem:[%s410 + $0x20] sm:$0xff]
    %v416 = vld [vmem:[%s410 + $0x28] sm:$0xff]
    %v417 = vld [vmem:[%s410 + $0x30] sm:$0xff]
    %v418 = vld [vmem:[%s410 + $0x38] sm:$0xff]
    %v419 = vld [vmem:[%s410 + $0x40] sm:$0xff]
    %v420 = vld [vmem:[%s410 + $0x48] sm:$0xff]
    %v421 = vld [vmem:[%s410 + $0x50] sm:$0xff]
    %v422 = vld [vmem:[%s410 + $0x58] sm:$0xff]
    %v423 = vld [vmem:[%s410 + $0x60] sm:$0xff]
    %v424 = vld [vmem:[%s410 + $0x68] sm:$0xff]
    %v425 = vld [vmem:[%s410 + $0x70] sm:$0xff]
    %v426 = vld [vmem:[%s410 + $0x78] sm:$0xff]
    %v427 = vld [vmem:[%s410 + $0x80] sm:$0xff]
    %v428 = vld [vmem:[%s410 + $0x88] sm:$0xff]
    %v429 = vld [vmem:[%s410 + $0x90] sm:$0xff]
    %v430 = vld [vmem:[%s410 + $0x98] sm:$0xff]
    %v431 = vld [vmem:[%s410 + $0xa0] sm:$0xff]
    %v432 = vld [vmem:[%s410 + $0xa8] sm:$0xff]
    %v433 = vld [vmem:[%s410 + $0xb0] sm:$0xff]
    %v434 = vld [vmem:[%s410 + $0xb8] sm:$0xff]
    %v435 = vld [vmem:[%s410 + $0xc0] sm:$0xff]
    %v436 = vld [vmem:[%s410 + $0xc8] sm:$0xff]
    %v437 = vld [vmem:[%s410 + $0xd0] sm:$0xff]
    %v438 = vld [vmem:[%s410 + $0xd8] sm:$0xff]
    %v439 = vld [vmem:[%s410 + $0xe0] sm:$0xff]
    %v440 = vld [vmem:[%s410 + $0xe8] sm:$0xff]
    %v441 = vld [vmem:[%s410 + $0xf0] sm:$0xff]
    %v442 = vld [vmem:[%s410 + $0xf8] sm:$0xff]
    %475 = vrot.lane.b32.xlu0 %v411, 64
    %v476 = vpop.permute.xlu0 %475
    %477 = vrot.lane.b32.xlu0 %v412, 64
    %v478 = vpop.permute.xlu0 %477
    %479 = vrot.lane.b32.xlu0 %v413, 64
    %v480 = vpop.permute.xlu0 %479
    %481 = vrot.lane.b32.xlu0 %v414, 64
    %v482 = vpop.permute.xlu0 %481
    %483 = vrot.lane.b32.xlu0 %v415, 64
    %v484 = vpop.permute.xlu0 %483
    %485 = vrot.lane.b32.xlu0 %v416, 64
    %v486 = vpop.permute.xlu0 %485
    %487 = vrot.lane.b32.xlu0 %v417, 64
    %v488 = vpop.permute.xlu0 %487
    %489 = vrot.lane.b32.xlu0 %v418, 64
    %v490 = vpop.permute.xlu0 %489
    %491 = vrot.lane.b32.xlu0 %v419, 64
    %v492 = vpop.permute.xlu0 %491
    %493 = vrot.lane.b32.xlu0 %v420, 64
    %v494 = vpop.permute.xlu0 %493
    %495 = vrot.lane.b32.xlu0 %v421, 64
    %v496 = vpop.permute.xlu0 %495
    %497 = vrot.lane.b32.xlu0 %v422, 64
    %v498 = vpop.permute.xlu0 %497
    %499 = vrot.lane.b32.xlu0 %v423, 64
    %v500 = vpop.permute.xlu0 %499
    %501 = vrot.lane.b32.xlu0 %v424, 64
    %v502 = vpop.permute.xlu0 %501
    %503 = vrot.lane.b32.xlu0 %v425, 64
    %v504 = vpop.permute.xlu0 %503
    %505 = vrot.lane.b32.xlu0 %v426, 64
    %v506 = vpop.permute.xlu0 %505
    %507 = vrot.lane.b32.xlu0 %v427, 64
    %v508 = vpop.permute.xlu0 %507
    %509 = vrot.lane.b32.xlu0 %v428, 64
    %v510 = vpop.permute.xlu0 %509
    %511 = vrot.lane.b32.xlu0 %v429, 64
    %v512 = vpop.permute.xlu0 %511
    %513 = vrot.lane.b32.xlu0 %v430, 64
    %v514 = vpop.permute.xlu0 %513
    %515 = vrot.lane.b32.xlu0 %v431, 64
    %v516 = vpop.permute.xlu0 %515
    %517 = vrot.lane.b32.xlu0 %v432, 64
    %v518 = vpop.permute.xlu0 %517
    %519 = vrot.lane.b32.xlu0 %v433, 64
    %v520 = vpop.permute.xlu0 %519
    %521 = vrot.lane.b32.xlu0 %v434, 64
    %v522 = vpop.permute.xlu0 %521
    %523 = vrot.lane.b32.xlu0 %v435, 64
    %v524 = vpop.permute.xlu0 %523
    %525 = vrot.lane.b32.xlu0 %v436, 64
    %v526 = vpop.permute.xlu0 %525
    %527 = vrot.lane.b32.xlu0 %v437, 64
    %v528 = vpop.permute.xlu0 %527
    %529 = vrot.lane.b32.xlu0 %v438, 64
    %v530 = vpop.permute.xlu0 %529
    %531 = vrot.lane.b32.xlu0 %v439, 64
    %v532 = vpop.permute.xlu0 %531
    %533 = vrot.lane.b32.xlu0 %v440, 64
    %v534 = vpop.permute.xlu0 %533
    %535 = vrot.lane.b32.xlu0 %v441, 64
    %v536 = vpop.permute.xlu0 %535
    %537 = vrot.lane.b32.xlu0 %v442, 64
    %v538 = vpop.permute.xlu0 %537
    %v571 = vsel %vm265, %v378, %v476
    %v572 = vsel %vm265, %v379, %v478
    %v573 = vsel %vm265, %v380, %v480
    %v574 = vsel %vm265, %v381, %v482
    %v575 = vsel %vm265, %v382, %v484
    %v576 = vsel %vm265, %v383, %v486
    %v577 = vsel %vm265, %v384, %v488
    %v578 = vsel %vm265, %v385, %v490
    %v579 = vsel %vm265, %v386, %v492
    %v580 = vsel %vm265, %v387, %v494
    %v581 = vsel %vm265, %v388, %v496
    %v582 = vsel %vm265, %v389, %v498
    %v583 = vsel %vm265, %v390, %v500
    %v584 = vsel %vm265, %v391, %v502
    %v585 = vsel %vm265, %v392, %v504
    %v586 = vsel %vm265, %v393, %v506
    %v587 = vsel %vm265, %v394, %v508
    %v588 = vsel %vm265, %v395, %v510
    %v589 = vsel %vm265, %v396, %v512
    %v590 = vsel %vm265, %v397, %v514
    %v591 = vsel %vm265, %v398, %v516
    %v592 = vsel %vm265, %v399, %v518
    %v593 = vsel %vm265, %v400, %v520
    %v594 = vsel %vm265, %v401, %v522
    %v595 = vsel %vm265, %v402, %v524
    %v596 = vsel %vm265, %v403, %v526
    %v597 = vsel %vm265, %v404, %v528
    %v598 = vsel %vm265, %v405, %v530
    %v599 = vsel %vm265, %v406, %v532
    %v600 = vsel %vm265, %v407, %v534
    %v601 = vsel %vm265, %v408, %v536
    %v602 = vsel %vm265, %v409, %v538
    %603 = vxpose.xlu0.b32.start [1/16] %v571, 128
    %604 = vxpose.xlu0.b32.cont [2/16] %v572, 128
    %605 = vxpose.xlu0.b32.cont [3/16] %v573, 128
    %606 = vxpose.xlu0.b32.cont [4/16] %v574, 128
    %607 = vxpose.xlu0.b32.cont [5/16] %v575, 128
    %608 = vxpose.xlu0.b32.cont [6/16] %v576, 128
    %609 = vxpose.xlu0.b32.cont [7/16] %v577, 128
    %610 = vxpose.xlu0.b32.cont [8/16] %v578, 128
    %611 = vxpose.xlu0.b32.cont [9/16] %v579, 128
    %612 = vxpose.xlu0.b32.cont [10/16] %v580, 128
    %613 = vxpose.xlu0.b32.cont [11/16] %v581, 128
    %614 = vxpose.xlu0.b32.cont [12/16] %v582, 128
    %615 = vxpose.xlu0.b32.cont [13/16] %v583, 128
    %616 = vxpose.xlu0.b32.cont [14/16] %v584, 128
    %617 = vxpose.xlu0.b32.cont [15/16] %v585, 128
    %618 = vxpose.xlu0.b32.end [16/16] %v586, 128
    %v619 = vpop.trf.xlu0
    %v620 = vpop.trf.xlu0
    %v621 = vpop.trf.xlu0
    %v622 = vpop.trf.xlu0
    %v623 = vpop.trf.xlu0
    %v624 = vpop.trf.xlu0
    %v625 = vpop.trf.xlu0
    %v626 = vpop.trf.xlu0
    %v627 = vpop.trf.xlu0
    %v628 = vpop.trf.xlu0
    %v629 = vpop.trf.xlu0
    %v630 = vpop.trf.xlu0
    %v631 = vpop.trf.xlu0
    %v632 = vpop.trf.xlu0
    %v633 = vpop.trf.xlu0
    %v634 = vpop.trf.xlu0
    %635 = vxpose.xlu0.b32.start [1/16] %v587, 128
    %636 = vxpose.xlu0.b32.cont [2/16] %v588, 128
    %637 = vxpose.xlu0.b32.cont [3/16] %v589, 128
    %638 = vxpose.xlu0.b32.cont [4/16] %v590, 128
    %639 = vxpose.xlu0.b32.cont [5/16] %v591, 128
    %640 = vxpose.xlu0.b32.cont [6/16] %v592, 128
    %641 = vxpose.xlu0.b32.cont [7/16] %v593, 128
    %642 = vxpose.xlu0.b32.cont [8/16] %v594, 128
    %643 = vxpose.xlu0.b32.cont [9/16] %v595, 128
    %644 = vxpose.xlu0.b32.cont [10/16] %v596, 128
    %645 = vxpose.xlu0.b32.cont [11/16] %v597, 128
    %646 = vxpose.xlu0.b32.cont [12/16] %v598, 128
    %647 = vxpose.xlu0.b32.cont [13/16] %v599, 128
    %648 = vxpose.xlu0.b32.cont [14/16] %v600, 128
    %649 = vxpose.xlu0.b32.cont [15/16] %v601, 128
    %650 = vxpose.xlu0.b32.end [16/16] %v602, 128
    %v651 = vpop.trf.xlu0
    %v652 = vpop.trf.xlu0
    %v653 = vpop.trf.xlu0
    %v654 = vpop.trf.xlu0
    %v655 = vpop.trf.xlu0
    %v656 = vpop.trf.xlu0
    %v657 = vpop.trf.xlu0
    %v658 = vpop.trf.xlu0
    %v659 = vpop.trf.xlu0
    %v660 = vpop.trf.xlu0
    %v661 = vpop.trf.xlu0
    %v662 = vpop.trf.xlu0
    %v663 = vpop.trf.xlu0
    %v664 = vpop.trf.xlu0
    %v665 = vpop.trf.xlu0
    %v666 = vpop.trf.xlu0
    %v667 = vpack.c.bf16 %v620, %v619
    %v668 = vpack.c.bf16 %v652, %v651
    %v669 = vpack.c.bf16 %v622, %v621
    %v670 = vpack.c.bf16 %v654, %v653
    %v671 = vpack.c.bf16 %v624, %v623
    %v672 = vpack.c.bf16 %v656, %v655
    %v673 = vpack.c.bf16 %v626, %v625
    %v674 = vpack.c.bf16 %v658, %v657
    %v675 = vpack.c.bf16 %v628, %v627
    %v676 = vpack.c.bf16 %v660, %v659
    %v677 = vpack.c.bf16 %v630, %v629
    %v678 = vpack.c.bf16 %v662, %v661
    %v679 = vpack.c.bf16 %v632, %v631
    %v680 = vpack.c.bf16 %v664, %v663
    %v681 = vpack.c.bf16 %v634, %v633
    %v682 = vpack.c.bf16 %v666, %v665
    %v683 = vld [vmem:[%s2] sm:$0xff]
    %v684 = vld [vmem:[%s2 + $0x8] sm:$0xf]
    %v685 = vld [vmem:[%s2 + $0xc] sm:$0xff]
    %v686 = vld [vmem:[%s2 + $0x14] sm:$0xf]
    %v687 = vld [vmem:[%s2 + $0x18] sm:$0xff]
    %v688 = vld [vmem:[%s2 + $0x20] sm:$0xf]
    %v689 = vld [vmem:[%s2 + $0x24] sm:$0xff]
    %v690 = vld [vmem:[%s2 + $0x2c] sm:$0xf]
    %v691 = vld [vmem:[%s2 + $0x30] sm:$0xff]
    %v692 = vld [vmem:[%s2 + $0x38] sm:$0xf]
    %v693 = vld [vmem:[%s2 + $0x3c] sm:$0xff]
    %v694 = vld [vmem:[%s2 + $0x44] sm:$0xf]
    %v695 = vld [vmem:[%s2 + $0x48] sm:$0xff]
    %v696 = vld [vmem:[%s2 + $0x50] sm:$0xf]
    %v697 = vld [vmem:[%s2 + $0x54] sm:$0xff]
    %v698 = vld [vmem:[%s2 + $0x5c] sm:$0xf]
    %v699 = vld [vmem:[%s2 + $0x60] sm:$0xff]
    %v700 = vld [vmem:[%s2 + $0x68] sm:$0xf]
    %v701 = vld [vmem:[%s2 + $0x6c] sm:$0xff]
    %v702 = vld [vmem:[%s2 + $0x74] sm:$0xf]
    %v703 = vld [vmem:[%s2 + $0x78] sm:$0xff]
    %v704 = vld [vmem:[%s2 + $0x80] sm:$0xf]
    %v705 = vld [vmem:[%s2 + $0x84] sm:$0xff]
    %v706 = vld [vmem:[%s2 + $0x8c] sm:$0xf]
    %v707 = vld [vmem:[%s2 + $0x90] sm:$0xff]
    %v708 = vld [vmem:[%s2 + $0x98] sm:$0xf]
    %v709 = vld [vmem:[%s2 + $0x9c] sm:$0xff]
    %v710 = vld [vmem:[%s2 + $0xa4] sm:$0xf]
    %v711 = vld [vmem:[%s2 + $0xa8] sm:$0xff]
    %v712 = vld [vmem:[%s2 + $0xb0] sm:$0xf]
    %v713 = vld [vmem:[%s2 + $0xb4] sm:$0xff]
    %v714 = vld [vmem:[%s2 + $0xbc] sm:$0xf]
    %v715 = vld [vmem:[%s2 + $0xc0] sm:$0xff]
    %v716 = vld [vmem:[%s2 + $0xc8] sm:$0xf]
    %v717 = vld [vmem:[%s2 + $0xcc] sm:$0xff]
    %v718 = vld [vmem:[%s2 + $0xd4] sm:$0xf]
    %v719 = vld [vmem:[%s2 + $0xd8] sm:$0xff]
    %v720 = vld [vmem:[%s2 + $0xe0] sm:$0xf]
    %v721 = vld [vmem:[%s2 + $0xe4] sm:$0xff]
    %v722 = vld [vmem:[%s2 + $0xec] sm:$0xf]
    %v723 = vld [vmem:[%s2 + $0xf0] sm:$0xff]
    %v724 = vld [vmem:[%s2 + $0xf8] sm:$0xf]
    %v725 = vld [vmem:[%s2 + $0xfc] sm:$0xff]
    %v726 = vld [vmem:[%s2 + $0x104] sm:$0xf]
    %v727 = vld [vmem:[%s2 + $0x108] sm:$0xff]
    %v728 = vld [vmem:[%s2 + $0x110] sm:$0xf]
    %v729 = vld [vmem:[%s2 + $0x114] sm:$0xff]
    %v730 = vld [vmem:[%s2 + $0x11c] sm:$0xf]
    %v731 = vld [vmem:[%s2 + $0x120] sm:$0xff]
    %v732 = vld [vmem:[%s2 + $0x128] sm:$0xf]
    %v733 = vld [vmem:[%s2 + $0x12c] sm:$0xff]
    %v734 = vld [vmem:[%s2 + $0x134] sm:$0xf]
    %v735 = vld [vmem:[%s2 + $0x138] sm:$0xff]
    %v736 = vld [vmem:[%s2 + $0x140] sm:$0xf]
    %v737 = vld [vmem:[%s2 + $0x144] sm:$0xff]
    %v738 = vld [vmem:[%s2 + $0x14c] sm:$0xf]
    %v739 = vld [vmem:[%s2 + $0x150] sm:$0xff]
    %v740 = vld [vmem:[%s2 + $0x158] sm:$0xf]
    %v741 = vld [vmem:[%s2 + $0x15c] sm:$0xff]
    %v742 = vld [vmem:[%s2 + $0x164] sm:$0xf]
    %v743 = vld [vmem:[%s2 + $0x168] sm:$0xff]
    %v744 = vld [vmem:[%s2 + $0x170] sm:$0xf]
    %v745 = vld [vmem:[%s2 + $0x174] sm:$0xff]
    %v746 = vld [vmem:[%s2 + $0x17c] sm:$0xf]
    %v811 = vunpack.c.l.b16 %v683
    %v812 = vunpack.c.h.b16 %v683
    %v813 = vunpack.c.l.b16 %v684
    %v814 = vunpack.c.l.b16 %v685
    %v815 = vunpack.c.h.b16 %v685
    %v816 = vunpack.c.l.b16 %v686
    %v817 = vunpack.c.l.b16 %v687
    %v818 = vunpack.c.h.b16 %v687
    %v819 = vunpack.c.l.b16 %v688
    %v820 = vunpack.c.l.b16 %v689
    %v821 = vunpack.c.h.b16 %v689
    %v822 = vunpack.c.l.b16 %v690
    %v823 = vunpack.c.l.b16 %v691
    %v824 = vunpack.c.h.b16 %v691
    %v825 = vunpack.c.l.b16 %v692
    %v826 = vunpack.c.l.b16 %v693
    %v827 = vunpack.c.h.b16 %v693
    %v828 = vunpack.c.l.b16 %v694
    %v829 = vunpack.c.l.b16 %v695
    %v830 = vunpack.c.h.b16 %v695
    %v831 = vunpack.c.l.b16 %v696
    %v832 = vunpack.c.l.b16 %v697
    %v833 = vunpack.c.h.b16 %v697
    %v834 = vunpack.c.l.b16 %v698
    %v835 = vunpack.c.l.b16 %v699
    %v836 = vunpack.c.h.b16 %v699
    %v837 = vunpack.c.l.b16 %v700
    %v838 = vunpack.c.l.b16 %v701
    %v839 = vunpack.c.h.b16 %v701
    %v840 = vunpack.c.l.b16 %v702
    %v841 = vunpack.c.l.b16 %v703
    %v842 = vunpack.c.h.b16 %v703
    %v843 = vunpack.c.l.b16 %v704
    %v844 = vunpack.c.l.b16 %v705
    %v845 = vunpack.c.h.b16 %v705
    %v846 = vunpack.c.l.b16 %v706
    %v847 = vunpack.c.l.b16 %v707
    %v848 = vunpack.c.h.b16 %v707
    %v849 = vunpack.c.l.b16 %v708
    %v850 = vunpack.c.l.b16 %v709
    %v851 = vunpack.c.h.b16 %v709
    %v852 = vunpack.c.l.b16 %v710
    %v853 = vunpack.c.l.b16 %v711
    %v854 = vunpack.c.h.b16 %v711
    %v855 = vunpack.c.l.b16 %v712
    %v856 = vunpack.c.l.b16 %v713
    %v857 = vunpack.c.h.b16 %v713
    %v858 = vunpack.c.l.b16 %v714
    %v859 = vunpack.c.l.b16 %v715
    %v860 = vunpack.c.h.b16 %v715
    %v861 = vunpack.c.l.b16 %v716
    %v862 = vunpack.c.l.b16 %v717
    %v863 = vunpack.c.h.b16 %v717
    %v864 = vunpack.c.l.b16 %v718
    %v865 = vunpack.c.l.b16 %v719
    %v866 = vunpack.c.h.b16 %v719
    %v867 = vunpack.c.l.b16 %v720
    %v868 = vunpack.c.l.b16 %v721
    %v869 = vunpack.c.h.b16 %v721
    %v870 = vunpack.c.l.b16 %v722
    %v871 = vunpack.c.l.b16 %v723
    %v872 = vunpack.c.h.b16 %v723
    %v873 = vunpack.c.l.b16 %v724
    %v874 = vunpack.c.l.b16 %v725
    %v875 = vunpack.c.h.b16 %v725
    %v876 = vunpack.c.l.b16 %v726
    %v877 = vunpack.c.l.b16 %v727
    %v878 = vunpack.c.h.b16 %v727
    %v879 = vunpack.c.l.b16 %v728
    %v880 = vunpack.c.l.b16 %v729
    %v881 = vunpack.c.h.b16 %v729
    %v882 = vunpack.c.l.b16 %v730
    %v883 = vunpack.c.l.b16 %v731
    %v884 = vunpack.c.h.b16 %v731
    %v885 = vunpack.c.l.b16 %v732
    %v886 = vunpack.c.l.b16 %v733
    %v887 = vunpack.c.h.b16 %v733
    %v888 = vunpack.c.l.b16 %v734
    %v889 = vunpack.c.l.b16 %v735
    %v890 = vunpack.c.h.b16 %v735
    %v891 = vunpack.c.l.b16 %v736
    %v892 = vunpack.c.l.b16 %v737
    %v893 = vunpack.c.h.b16 %v737
    %v894 = vunpack.c.l.b16 %v738
    %v895 = vunpack.c.l.b16 %v739
    %v896 = vunpack.c.h.b16 %v739
    %v897 = vunpack.c.l.b16 %v740
    %v898 = vunpack.c.l.b16 %v741
    %v899 = vunpack.c.h.b16 %v741
    %v900 = vunpack.c.l.b16 %v742
    %v901 = vunpack.c.l.b16 %v743
    %v902 = vunpack.c.h.b16 %v743
    %v903 = vunpack.c.l.b16 %v744
    %v904 = vunpack.c.l.b16 %v745
    %v905 = vunpack.c.h.b16 %v745
    %v906 = vunpack.c.l.b16 %v746
    %v907 = vpack.c.b16 %v814, %v811
    %v908 = vpack.c.b16 %v815, %v812
    %v909 = vpack.c.b16 %v816, %v813
    %v910 = vpack.c.b16 %v820, %v817
    %v911 = vpack.c.b16 %v821, %v818
    %v912 = vpack.c.b16 %v822, %v819
    %v913 = vpack.c.b16 %v826, %v823
    %v914 = vpack.c.b16 %v827, %v824
    %v915 = vpack.c.b16 %v828, %v825
    %v916 = vpack.c.b16 %v832, %v829
    %v917 = vpack.c.b16 %v833, %v830
    %v918 = vpack.c.b16 %v834, %v831
    %v919 = vpack.c.b16 %v838, %v835
    %v920 = vpack.c.b16 %v839, %v836
    %v921 = vpack.c.b16 %v840, %v837
    %v922 = vpack.c.b16 %v844, %v841
    %v923 = vpack.c.b16 %v845, %v842
    %v924 = vpack.c.b16 %v846, %v843
    %v925 = vpack.c.b16 %v850, %v847
    %v926 = vpack.c.b16 %v851, %v848
    %v927 = vpack.c.b16 %v852, %v849
    %v928 = vpack.c.b16 %v856, %v853
    %v929 = vpack.c.b16 %v857, %v854
    %v930 = vpack.c.b16 %v858, %v855
    %v931 = vpack.c.b16 %v862, %v859
    %v932 = vpack.c.b16 %v863, %v860
    %v933 = vpack.c.b16 %v864, %v861
    %v934 = vpack.c.b16 %v868, %v865
    %v935 = vpack.c.b16 %v869, %v866
    %v936 = vpack.c.b16 %v870, %v867
    %v937 = vpack.c.b16 %v874, %v871
    %v938 = vpack.c.b16 %v875, %v872
    %v939 = vpack.c.b16 %v876, %v873
    %v940 = vpack.c.b16 %v880, %v877
    %v941 = vpack.c.b16 %v881, %v878
    %v942 = vpack.c.b16 %v882, %v879
    %v943 = vpack.c.b16 %v886, %v883
    %v944 = vpack.c.b16 %v887, %v884
    %v945 = vpack.c.b16 %v888, %v885
    %v946 = vpack.c.b16 %v892, %v889
    %v947 = vpack.c.b16 %v893, %v890
    %v948 = vpack.c.b16 %v894, %v891
    %v949 = vpack.c.b16 %v898, %v895
    %v950 = vpack.c.b16 %v899, %v896
    %v951 = vpack.c.b16 %v900, %v897
    %v952 = vpack.c.b16 %v904, %v901
    %v953 = vpack.c.b16 %v905, %v902
    %v954 = vpack.c.b16 %v906, %v903
    %1003 = vmatprep.subr.bf16.mxu0 %v929
    %1004 = vmatpush1.bf16.msra.mxu0 %v928
    %1005 = vmatprep.subr.bf16.mxu0 %v926
    %1006 = vmatpush1.bf16.msra.mxu0 %v925
    %1007 = vmatprep.subr.bf16.mxu0 %v923
    %1008 = vmatpush1.bf16.msra.mxu0 %v922
    %1009 = vmatprep.subr.bf16.mxu0 %v920
    %1010 = vmatpush1.bf16.msra.mxu0 %v919
    %1011 = vmatprep.subr.bf16.mxu0 %v917
    %1012 = vmatpush1.bf16.msra.mxu0 %v916
    %1013 = vmatprep.subr.bf16.mxu0 %v914
    %1014 = vmatpush1.bf16.msra.mxu0 %v913
    %1015 = vmatprep.subr.bf16.mxu0 %v911
    %1016 = vmatpush1.bf16.msra.mxu0 %v910
    %1017 = vmatprep.subr.bf16.mxu0 %v908
    %1018 = vmatpush1.bf16.msra.mxu0 %v907
    %1019 = vmatprep.subr.bf16.mxu0 %v953
    %1020 = vmatpush2.bf16.msra.mxu0 %v952
    %1021 = vmatprep.subr.bf16.mxu0 %v950
    %1022 = vmatpush2.bf16.msra.mxu0 %v949
    %1023 = vmatprep.subr.bf16.mxu0 %v947
    %1024 = vmatpush2.bf16.msra.mxu0 %v946
    %1025 = vmatprep.subr.bf16.mxu0 %v944
    %1026 = vmatpush2.bf16.msra.mxu0 %v943
    %1027 = vmatprep.subr.bf16.mxu0 %v941
    %1028 = vmatpush2.bf16.msra.mxu0 %v940
    %1029 = vmatprep.subr.bf16.mxu0 %v938
    %1030 = vmatpush2.bf16.msra.mxu0 %v937
    %1031 = vmatprep.subr.bf16.mxu0 %v935
    %1032 = vmatpush2.bf16.msra.mxu0 %v934
    %1033 = vmatprep.subr.bf16.mxu0 %v932
    %1034 = vmatpush2.bf16.msra.mxu0 %v931
    %1035 = vmatprep.mubr.bf16.mxu0 %v363
    %1036 = vmatmul.mubr.bf16.gmra.mxu0 %v362
    %v1037 = vpop.f32.mrf.mxu0
    %v1038 = vadd.f32 0.0, %v1037
    %v1039 = vpop.f32.mrf.mxu0
    %v1040 = vadd.f32 0.0, %v1039
    %v1041 = vpop.f32.mrf.mxu0
    %v1042 = vadd.f32 0.0, %v1041
    %v1043 = vpop.f32.mrf.mxu0
    %v1044 = vadd.f32 0.0, %v1043
    %1045 = vmatprep.mubr.bf16.mxu0 %v365
    %1046 = vmatmul.mubr.bf16.gmra.mxu0 %v364
    %v1047 = vpop.f32.mrf.mxu0
    %v1048 = vadd.f32 0.0, %v1047
    %v1049 = vpop.f32.mrf.mxu0
    %v1050 = vadd.f32 0.0, %v1049
    %v1051 = vpop.f32.mrf.mxu0
    %v1052 = vadd.f32 0.0, %v1051
    %v1053 = vpop.f32.mrf.mxu0
    %v1054 = vadd.f32 0.0, %v1053
    %1055 = vmatprep.mubr.bf16.mxu0 %v367
    %1056 = vmatmul.mubr.bf16.gmra.mxu0 %v366
    %v1057 = vpop.f32.mrf.mxu0
    %v1058 = vadd.f32 0.0, %v1057
    %v1059 = vpop.f32.mrf.mxu0
    %v1060 = vadd.f32 0.0, %v1059
    %v1061 = vpop.f32.mrf.mxu0
    %v1062 = vadd.f32 0.0, %v1061
    %v1063 = vpop.f32.mrf.mxu0
    %v1064 = vadd.f32 0.0, %v1063
    %1065 = vmatprep.mubr.bf16.mxu0 %v369
    %1066 = vmatmul.mubr.bf16.gmra.mxu0 %v368
    %v1067 = vpop.f32.mrf.mxu0
    %v1068 = vadd.f32 0.0, %v1067
    %v1069 = vpop.f32.mrf.mxu0
    %v1070 = vadd.f32 0.0, %v1069
    %v1071 = vpop.f32.mrf.mxu0
    %v1072 = vadd.f32 0.0, %v1071
    %v1073 = vpop.f32.mrf.mxu0
    %v1074 = vadd.f32 0.0, %v1073
    %1075 = vmatprep.mubr.bf16.mxu0 %v371
    %1076 = vmatmul.mubr.bf16.gmra.mxu0 %v370
    %v1077 = vpop.f32.mrf.mxu0
    %v1078 = vadd.f32 0.0, %v1077
    %v1079 = vpop.f32.mrf.mxu0
    %v1080 = vadd.f32 0.0, %v1079
    %v1081 = vpop.f32.mrf.mxu0
    %v1082 = vadd.f32 0.0, %v1081
    %v1083 = vpop.f32.mrf.mxu0
    %v1084 = vadd.f32 0.0, %v1083
    %1085 = vmatprep.mubr.bf16.mxu0 %v373
    %1086 = vmatmul.mubr.bf16.gmra.mxu0 %v372
    %v1087 = vpop.f32.mrf.mxu0
    %v1088 = vadd.f32 0.0, %v1087
    %v1089 = vpop.f32.mrf.mxu0
    %v1090 = vadd.f32 0.0, %v1089
    %v1091 = vpop.f32.mrf.mxu0
    %v1092 = vadd.f32 0.0, %v1091
    %v1093 = vpop.f32.mrf.mxu0
    %v1094 = vadd.f32 0.0, %v1093
    %1095 = vmatprep.mubr.bf16.mxu0 %v375
    %1096 = vmatmul.mubr.bf16.gmra.mxu0 %v374
    %v1097 = vpop.f32.mrf.mxu0
    %v1098 = vadd.f32 0.0, %v1097
    %v1099 = vpop.f32.mrf.mxu0
    %v1100 = vadd.f32 0.0, %v1099
    %v1101 = vpop.f32.mrf.mxu0
    %v1102 = vadd.f32 0.0, %v1101
    %v1103 = vpop.f32.mrf.mxu0
    %v1104 = vadd.f32 0.0, %v1103
    %1105 = vmatprep.mubr.bf16.mxu0 %v377
    %1106 = vmatmul.mubr.bf16.gmra.mxu0 %v376
    %v1107 = vpop.f32.mrf.mxu0
    %v1108 = vadd.f32 0.0, %v1107
    %v1109 = vpop.f32.mrf.mxu0
    %v1110 = vadd.f32 0.0, %v1109
    %v1111 = vpop.f32.mrf.mxu0
    %v1112 = vadd.f32 0.0, %v1111
    %v1113 = vpop.f32.mrf.mxu0
    %v1114 = vadd.f32 0.0, %v1113
    %1115 = vdwg.mxu0
    %1116 = vmatprep.subr.bf16.mxu0 0
    %1117 = vmatpush1.bf16.msra.mxu0 %v930
    %1118 = vmatprep.subr.bf16.mxu0 0
    %1119 = vmatpush1.bf16.msra.mxu0 %v927
    %1120 = vmatprep.subr.bf16.mxu0 0
    %1121 = vmatpush1.bf16.msra.mxu0 %v924
    %1122 = vmatprep.subr.bf16.mxu0 0
    %1123 = vmatpush1.bf16.msra.mxu0 %v921
    %1124 = vmatprep.subr.bf16.mxu0 0
    %1125 = vmatpush1.bf16.msra.mxu0 %v918
    %1126 = vmatprep.subr.bf16.mxu0 0
    %1127 = vmatpush1.bf16.msra.mxu0 %v915
    %1128 = vmatprep.subr.bf16.mxu0 0
    %1129 = vmatpush1.bf16.msra.mxu0 %v912
    %1130 = vmatprep.subr.bf16.mxu0 0
    %1131 = vmatpush1.bf16.msra.mxu0 %v909
    %1132 = vmatprep.subr.bf16.mxu0 0
    %1133 = vmatpush2.bf16.msra.mxu0 %v954
    %1134 = vmatprep.subr.bf16.mxu0 0
    %1135 = vmatpush2.bf16.msra.mxu0 %v951
    %1136 = vmatprep.subr.bf16.mxu0 0
    %1137 = vmatpush2.bf16.msra.mxu0 %v948
    %1138 = vmatprep.subr.bf16.mxu0 0
    %1139 = vmatpush2.bf16.msra.mxu0 %v945
    %1140 = vmatprep.subr.bf16.mxu0 0
    %1141 = vmatpush2.bf16.msra.mxu0 %v942
    %1142 = vmatprep.subr.bf16.mxu0 0
    %1143 = vmatpush2.bf16.msra.mxu0 %v939
    %1144 = vmatprep.subr.bf16.mxu0 0
    %1145 = vmatpush2.bf16.msra.mxu0 %v936
    %1146 = vmatprep.subr.bf16.mxu0 0
    %1147 = vmatpush2.bf16.msra.mxu0 %v933
    %1148 = vmatprep.mubr.bf16.mxu0 %v363
    %1149 = vmatmul.mubr.bf16.gmra.mxu0 %v362
    %v1150 = vpop.f32.mrf.mxu0
    %v1151 = vadd.f32 0.0, %v1150
    %v1152 = vpop.f32.mrf.mxu0
    %v1153 = vpop.f32.mrf.mxu0
    %v1154 = vadd.f32 0.0, %v1153
    %v1155 = vpop.f32.mrf.mxu0
    %1156 = vmatprep.mubr.bf16.mxu0 %v365
    %1157 = vmatmul.mubr.bf16.gmra.mxu0 %v364
    %v1158 = vpop.f32.mrf.mxu0
    %v1159 = vadd.f32 0.0, %v1158
    %v1160 = vpop.f32.mrf.mxu0
    %v1161 = vpop.f32.mrf.mxu0
    %v1162 = vadd.f32 0.0, %v1161
    %v1163 = vpop.f32.mrf.mxu0
    %1164 = vmatprep.mubr.bf16.mxu0 %v367
    %1165 = vmatmul.mubr.bf16.gmra.mxu0 %v366
    %v1166 = vpop.f32.mrf.mxu0
    %v1167 = vadd.f32 0.0, %v1166
    %v1168 = vpop.f32.mrf.mxu0
    %v1169 = vpop.f32.mrf.mxu0
    %v1170 = vadd.f32 0.0, %v1169
    %v1171 = vpop.f32.mrf.mxu0
    %1172 = vmatprep.mubr.bf16.mxu0 %v369
    %1173 = vmatmul.mubr.bf16.gmra.mxu0 %v368
    %v1174 = vpop.f32.mrf.mxu0
    %v1175 = vadd.f32 0.0, %v1174
    %v1176 = vpop.f32.mrf.mxu0
    %v1177 = vpop.f32.mrf.mxu0
    %v1178 = vadd.f32 0.0, %v1177
    %v1179 = vpop.f32.mrf.mxu0
    %1180 = vmatprep.mubr.bf16.mxu0 %v371
    %1181 = vmatmul.mubr.bf16.gmra.mxu0 %v370
    %v1182 = vpop.f32.mrf.mxu0
    %v1183 = vadd.f32 0.0, %v1182
    %v1184 = vpop.f32.mrf.mxu0
    %v1185 = vpop.f32.mrf.mxu0
    %v1186 = vadd.f32 0.0, %v1185
    %v1187 = vpop.f32.mrf.mxu0
    %1188 = vmatprep.mubr.bf16.mxu0 %v373
    %1189 = vmatmul.mubr.bf16.gmra.mxu0 %v372
    %v1190 = vpop.f32.mrf.mxu0
    %v1191 = vadd.f32 0.0, %v1190
    %v1192 = vpop.f32.mrf.mxu0
    %v1193 = vpop.f32.mrf.mxu0
    %v1194 = vadd.f32 0.0, %v1193
    %v1195 = vpop.f32.mrf.mxu0
    %1196 = vmatprep.mubr.bf16.mxu0 %v375
    %1197 = vmatmul.mubr.bf16.gmra.mxu0 %v374
    %v1198 = vpop.f32.mrf.mxu0
    %v1199 = vadd.f32 0.0, %v1198
    %v1200 = vpop.f32.mrf.mxu0
    %v1201 = vpop.f32.mrf.mxu0
    %v1202 = vadd.f32 0.0, %v1201
    %v1203 = vpop.f32.mrf.mxu0
    %1204 = vmatprep.mubr.bf16.mxu0 %v377
    %1205 = vmatmul.mubr.bf16.gmra.mxu0 %v376
    %v1206 = vpop.f32.mrf.mxu0
    %v1207 = vadd.f32 0.0, %v1206
    %v1208 = vpop.f32.mrf.mxu0
    %v1209 = vpop.f32.mrf.mxu0
    %v1210 = vadd.f32 0.0, %v1209
    %v1211 = vpop.f32.mrf.mxu0
    %1212 = vdwg.mxu0
    %v1213 = vpack.c.bf16 %v1042, %v1038
    %v1214 = vpack.c.bf16 %v1044, %v1040
    %v1215 = vpack.c.bf16 %v1154, %v1151
    %v1216 = vpack.c.bf16 %v1052, %v1048
    %v1217 = vpack.c.bf16 %v1054, %v1050
    %v1218 = vpack.c.bf16 %v1162, %v1159
    %v1219 = vpack.c.bf16 %v1062, %v1058
    %v1220 = vpack.c.bf16 %v1064, %v1060
    %v1221 = vpack.c.bf16 %v1170, %v1167
    %v1222 = vpack.c.bf16 %v1072, %v1068
    %v1223 = vpack.c.bf16 %v1074, %v1070
    %v1224 = vpack.c.bf16 %v1178, %v1175
    %v1225 = vpack.c.bf16 %v1082, %v1078
    %v1226 = vpack.c.bf16 %v1084, %v1080
    %v1227 = vpack.c.bf16 %v1186, %v1183
    %v1228 = vpack.c.bf16 %v1092, %v1088
    %v1229 = vpack.c.bf16 %v1094, %v1090
    %v1230 = vpack.c.bf16 %v1194, %v1191
    %v1231 = vpack.c.bf16 %v1102, %v1098
    %v1232 = vpack.c.bf16 %v1104, %v1100
    %v1233 = vpack.c.bf16 %v1202, %v1199
    %v1234 = vpack.c.bf16 %v1112, %v1108
    %v1235 = vpack.c.bf16 %v1114, %v1110
    %v1236 = vpack.c.bf16 %v1210, %v1207
    %v1261 = vunpack.c.l.b16 %v1213
    %v1262 = vunpack.c.l.b16 %v1214
    %v1263 = vunpack.c.l.b16 %v1215
    %v1264 = vunpack.c.h.b16 %v1213
    %v1265 = vunpack.c.h.b16 %v1214
    %v1266 = vunpack.c.h.b16 %v1215
    %v1267 = vunpack.c.l.b16 %v1216
    %v1268 = vunpack.c.l.b16 %v1217
    %v1269 = vunpack.c.l.b16 %v1218
    %v1270 = vunpack.c.h.b16 %v1216
    %v1271 = vunpack.c.h.b16 %v1217
    %v1272 = vunpack.c.h.b16 %v1218
    %v1273 = vunpack.c.l.b16 %v1219
    %v1274 = vunpack.c.l.b16 %v1220
    %v1275 = vunpack.c.l.b16 %v1221
    %v1276 = vunpack.c.h.b16 %v1219
    %v1277 = vunpack.c.h.b16 %v1220
    %v1278 = vunpack.c.h.b16 %v1221
    %v1279 = vunpack.c.l.b16 %v1222
    %v1280 = vunpack.c.l.b16 %v1223
    %v1281 = vunpack.c.l.b16 %v1224
    %v1282 = vunpack.c.h.b16 %v1222
    %v1283 = vunpack.c.h.b16 %v1223
    %v1284 = vunpack.c.h.b16 %v1224
    %v1285 = vunpack.c.l.b16 %v1225
    %v1286 = vunpack.c.l.b16 %v1226
    %v1287 = vunpack.c.l.b16 %v1227
    %v1288 = vunpack.c.h.b16 %v1225
    %v1289 = vunpack.c.h.b16 %v1226
    %v1290 = vunpack.c.h.b16 %v1227
    %v1291 = vunpack.c.l.b16 %v1228
    %v1292 = vunpack.c.l.b16 %v1229
    %v1293 = vunpack.c.l.b16 %v1230
    %v1294 = vunpack.c.h.b16 %v1228
    %v1295 = vunpack.c.h.b16 %v1229
    %v1296 = vunpack.c.h.b16 %v1230
    %v1297 = vunpack.c.l.b16 %v1231
    %v1298 = vunpack.c.l.b16 %v1232
    %v1299 = vunpack.c.l.b16 %v1233
    %v1300 = vunpack.c.h.b16 %v1231
    %v1301 = vunpack.c.h.b16 %v1232
    %v1302 = vunpack.c.h.b16 %v1233
    %v1303 = vunpack.c.l.b16 %v1234
    %v1304 = vunpack.c.l.b16 %v1235
    %v1305 = vunpack.c.l.b16 %v1236
    %v1306 = vunpack.c.h.b16 %v1234
    %v1307 = vunpack.c.h.b16 %v1235
    %v1308 = vunpack.c.h.b16 %v1236
    %v1309 = vpack.c.b16 %v1262, %v1261
    %v1310 = vpack.c.b16 %v1263, %v1263
    %v1311 = vpack.c.b16 %v1265, %v1264
    %v1312 = vpack.c.b16 %v1266, %v1266
    %v1313 = vpack.c.b16 %v1268, %v1267
    %v1314 = vpack.c.b16 %v1269, %v1269
    %v1315 = vpack.c.b16 %v1271, %v1270
    %v1316 = vpack.c.b16 %v1272, %v1272
    %v1317 = vpack.c.b16 %v1274, %v1273
    %v1318 = vpack.c.b16 %v1275, %v1275
    %v1319 = vpack.c.b16 %v1277, %v1276
    %v1320 = vpack.c.b16 %v1278, %v1278
    %v1321 = vpack.c.b16 %v1280, %v1279
    %v1322 = vpack.c.b16 %v1281, %v1281
    %v1323 = vpack.c.b16 %v1283, %v1282
    %v1324 = vpack.c.b16 %v1284, %v1284
    %v1325 = vpack.c.b16 %v1286, %v1285
    %v1326 = vpack.c.b16 %v1287, %v1287
    %v1327 = vpack.c.b16 %v1289, %v1288
    %v1328 = vpack.c.b16 %v1290, %v1290
    %v1329 = vpack.c.b16 %v1292, %v1291
    %v1330 = vpack.c.b16 %v1293, %v1293
    %v1331 = vpack.c.b16 %v1295, %v1294
    %v1332 = vpack.c.b16 %v1296, %v1296
    %v1333 = vpack.c.b16 %v1298, %v1297
    %v1334 = vpack.c.b16 %v1299, %v1299
    %v1335 = vpack.c.b16 %v1301, %v1300
    %v1336 = vpack.c.b16 %v1302, %v1302
    %v1337 = vpack.c.b16 %v1304, %v1303
    %v1338 = vpack.c.b16 %v1305, %v1305
    %v1339 = vpack.c.b16 %v1307, %v1306
    %v1340 = vpack.c.b16 %v1308, %v1308
    %1373 = vst [vmem:[#allocation2] sm:$0xff] %v1309
    %1374 = vst [vmem:[#allocation2 + $0x8] sm:$0xf] %v1310
    %1375 = vst [vmem:[#allocation2 + $0xc] sm:$0xff] %v1311
    %1376 = vst [vmem:[#allocation2 + $0x14] sm:$0xf] %v1312
    %1377 = vst [vmem:[#allocation2 + $0x18] sm:$0xff] %v1313
    %1378 = vst [vmem:[#allocation2 + $0x20] sm:$0xf] %v1314
    %1379 = vst [vmem:[#allocation2 + $0x24] sm:$0xff] %v1315
    %1380 = vst [vmem:[#allocation2 + $0x2c] sm:$0xf] %v1316
    %1381 = vst [vmem:[#allocation2 + $0x30] sm:$0xff] %v1317
    %1382 = vst [vmem:[#allocation2 + $0x38] sm:$0xf] %v1318
    %1383 = vst [vmem:[#allocation2 + $0x3c] sm:$0xff] %v1319
    %1384 = vst [vmem:[#allocation2 + $0x44] sm:$0xf] %v1320
    %1385 = vst [vmem:[#allocation2 + $0x48] sm:$0xff] %v1321
    %1386 = vst [vmem:[#allocation2 + $0x50] sm:$0xf] %v1322
    %1387 = vst [vmem:[#allocation2 + $0x54] sm:$0xff] %v1323
    %1388 = vst [vmem:[#allocation2 + $0x5c] sm:$0xf] %v1324
    %1389 = vst [vmem:[#allocation2 + $0x60] sm:$0xff] %v1325
    %1390 = vst [vmem:[#allocation2 + $0x68] sm:$0xf] %v1326
    %1391 = vst [vmem:[#allocation2 + $0x6c] sm:$0xff] %v1327
    %1392 = vst [vmem:[#allocation2 + $0x74] sm:$0xf] %v1328
    %1393 = vst [vmem:[#allocation2 + $0x78] sm:$0xff] %v1329
    %1394 = vst [vmem:[#allocation2 + $0x80] sm:$0xf] %v1330
    %1395 = vst [vmem:[#allocation2 + $0x84] sm:$0xff] %v1331
    %1396 = vst [vmem:[#allocation2 + $0x8c] sm:$0xf] %v1332
    %1397 = vst [vmem:[#allocation2 + $0x90] sm:$0xff] %v1333
    %1398 = vst [vmem:[#allocation2 + $0x98] sm:$0xf] %v1334
    %1399 = vst [vmem:[#allocation2 + $0x9c] sm:$0xff] %v1335
    %1400 = vst [vmem:[#allocation2 + $0xa4] sm:$0xf] %v1336
    %1401 = vst [vmem:[#allocation2 + $0xa8] sm:$0xff] %v1337
    %1402 = vst [vmem:[#allocation2 + $0xb0] sm:$0xf] %v1338
    %1403 = vst [vmem:[#allocation2 + $0xb4] sm:$0xff] %v1339
    %1404 = vst [vmem:[#allocation2 + $0xbc] sm:$0xf] %v1340
    %v1405 = vld [vmem:[%s3] sm:$0xff]
    %v1406 = vld [vmem:[%s3 + $0x8] sm:$0xf]
    %v1407 = vld [vmem:[%s3 + $0xc] sm:$0xff]
    %v1408 = vld [vmem:[%s3 + $0x14] sm:$0xf]
    %v1409 = vld [vmem:[%s3 + $0x18] sm:$0xff]
    %v1410 = vld [vmem:[%s3 + $0x20] sm:$0xf]
    %v1411 = vld [vmem:[%s3 + $0x24] sm:$0xff]
    %v1412 = vld [vmem:[%s3 + $0x2c] sm:$0xf]
    %v1413 = vld [vmem:[%s3 + $0x30] sm:$0xff]
    %v1414 = vld [vmem:[%s3 + $0x38] sm:$0xf]
    %v1415 = vld [vmem:[%s3 + $0x3c] sm:$0xff]
    %v1416 = vld [vmem:[%s3 + $0x44] sm:$0xf]
    %v1417 = vld [vmem:[%s3 + $0x48] sm:$0xff]
    %v1418 = vld [vmem:[%s3 + $0x50] sm:$0xf]
    %v1419 = vld [vmem:[%s3 + $0x54] sm:$0xff]
    %v1420 = vld [vmem:[%s3 + $0x5c] sm:$0xf]
    %v1421 = vld [vmem:[%s3 + $0x60] sm:$0xff]
    %v1422 = vld [vmem:[%s3 + $0x68] sm:$0xf]
    %v1423 = vld [vmem:[%s3 + $0x6c] sm:$0xff]
    %v1424 = vld [vmem:[%s3 + $0x74] sm:$0xf]
    %v1425 = vld [vmem:[%s3 + $0x78] sm:$0xff]
    %v1426 = vld [vmem:[%s3 + $0x80] sm:$0xf]
    %v1427 = vld [vmem:[%s3 + $0x84] sm:$0xff]
    %v1428 = vld [vmem:[%s3 + $0x8c] sm:$0xf]
    %v1429 = vld [vmem:[%s3 + $0x90] sm:$0xff]
    %v1430 = vld [vmem:[%s3 + $0x98] sm:$0xf]
    %v1431 = vld [vmem:[%s3 + $0x9c] sm:$0xff]
    %v1432 = vld [vmem:[%s3 + $0xa4] sm:$0xf]
    %v1433 = vld [vmem:[%s3 + $0xa8] sm:$0xff]
    %v1434 = vld [vmem:[%s3 + $0xb0] sm:$0xf]
    %v1435 = vld [vmem:[%s3 + $0xb4] sm:$0xff]
    %v1436 = vld [vmem:[%s3 + $0xbc] sm:$0xf]
    %v1437 = vld [vmem:[%s3 + $0xc0] sm:$0xff]
    %v1438 = vld [vmem:[%s3 + $0xc8] sm:$0xf]
    %v1439 = vld [vmem:[%s3 + $0xcc] sm:$0xff]
    %v1440 = vld [vmem:[%s3 + $0xd4] sm:$0xf]
    %v1441 = vld [vmem:[%s3 + $0xd8] sm:$0xff]
    %v1442 = vld [vmem:[%s3 + $0xe0] sm:$0xf]
    %v1443 = vld [vmem:[%s3 + $0xe4] sm:$0xff]
    %v1444 = vld [vmem:[%s3 + $0xec] sm:$0xf]
    %v1445 = vld [vmem:[%s3 + $0xf0] sm:$0xff]
    %v1446 = vld [vmem:[%s3 + $0xf8] sm:$0xf]
    %v1447 = vld [vmem:[%s3 + $0xfc] sm:$0xff]
    %v1448 = vld [vmem:[%s3 + $0x104] sm:$0xf]
    %v1449 = vld [vmem:[%s3 + $0x108] sm:$0xff]
    %v1450 = vld [vmem:[%s3 + $0x110] sm:$0xf]
    %v1451 = vld [vmem:[%s3 + $0x114] sm:$0xff]
    %v1452 = vld [vmem:[%s3 + $0x11c] sm:$0xf]
    %v1453 = vld [vmem:[%s3 + $0x120] sm:$0xff]
    %v1454 = vld [vmem:[%s3 + $0x128] sm:$0xf]
    %v1455 = vld [vmem:[%s3 + $0x12c] sm:$0xff]
    %v1456 = vld [vmem:[%s3 + $0x134] sm:$0xf]
    %v1457 = vld [vmem:[%s3 + $0x138] sm:$0xff]
    %v1458 = vld [vmem:[%s3 + $0x140] sm:$0xf]
    %v1459 = vld [vmem:[%s3 + $0x144] sm:$0xff]
    %v1460 = vld [vmem:[%s3 + $0x14c] sm:$0xf]
    %v1461 = vld [vmem:[%s3 + $0x150] sm:$0xff]
    %v1462 = vld [vmem:[%s3 + $0x158] sm:$0xf]
    %v1463 = vld [vmem:[%s3 + $0x15c] sm:$0xff]
    %v1464 = vld [vmem:[%s3 + $0x164] sm:$0xf]
    %v1465 = vld [vmem:[%s3 + $0x168] sm:$0xff]
    %v1466 = vld [vmem:[%s3 + $0x170] sm:$0xf]
    %v1467 = vld [vmem:[%s3 + $0x174] sm:$0xff]
    %v1468 = vld [vmem:[%s3 + $0x17c] sm:$0xf]
    %v1533 = vunpack.c.l.b16 %v1405
    %v1534 = vunpack.c.h.b16 %v1405
    %v1535 = vunpack.c.l.b16 %v1406
    %v1536 = vunpack.c.l.b16 %v1407
    %v1537 = vunpack.c.h.b16 %v1407
    %v1538 = vunpack.c.l.b16 %v1408
    %v1539 = vunpack.c.l.b16 %v1409
    %v1540 = vunpack.c.h.b16 %v1409
    %v1541 = vunpack.c.l.b16 %v1410
    %v1542 = vunpack.c.l.b16 %v1411
    %v1543 = vunpack.c.h.b16 %v1411
    %v1544 = vunpack.c.l.b16 %v1412
    %v1545 = vunpack.c.l.b16 %v1413
    %v1546 = vunpack.c.h.b16 %v1413
    %v1547 = vunpack.c.l.b16 %v1414
    %v1548 = vunpack.c.l.b16 %v1415
    %v1549 = vunpack.c.h.b16 %v1415
    %v1550 = vunpack.c.l.b16 %v1416
    %v1551 = vunpack.c.l.b16 %v1417
    %v1552 = vunpack.c.h.b16 %v1417
    %v1553 = vunpack.c.l.b16 %v1418
    %v1554 = vunpack.c.l.b16 %v1419
    %v1555 = vunpack.c.h.b16 %v1419
    %v1556 = vunpack.c.l.b16 %v1420
    %v1557 = vunpack.c.l.b16 %v1421
    %v1558 = vunpack.c.h.b16 %v1421
    %v1559 = vunpack.c.l.b16 %v1422
    %v1560 = vunpack.c.l.b16 %v1423
    %v1561 = vunpack.c.h.b16 %v1423
    %v1562 = vunpack.c.l.b16 %v1424
    %v1563 = vunpack.c.l.b16 %v1425
    %v1564 = vunpack.c.h.b16 %v1425
    %v1565 = vunpack.c.l.b16 %v1426
    %v1566 = vunpack.c.l.b16 %v1427
    %v1567 = vunpack.c.h.b16 %v1427
    %v1568 = vunpack.c.l.b16 %v1428
    %v1569 = vunpack.c.l.b16 %v1429
    %v1570 = vunpack.c.h.b16 %v1429
    %v1571 = vunpack.c.l.b16 %v1430
    %v1572 = vunpack.c.l.b16 %v1431
    %v1573 = vunpack.c.h.b16 %v1431
    %v1574 = vunpack.c.l.b16 %v1432
    %v1575 = vunpack.c.l.b16 %v1433
    %v1576 = vunpack.c.h.b16 %v1433
    %v1577 = vunpack.c.l.b16 %v1434
    %v1578 = vunpack.c.l.b16 %v1435
    %v1579 = vunpack.c.h.b16 %v1435
    %v1580 = vunpack.c.l.b16 %v1436
    %v1581 = vunpack.c.l.b16 %v1437
    %v1582 = vunpack.c.h.b16 %v1437
    %v1583 = vunpack.c.l.b16 %v1438
    %v1584 = vunpack.c.l.b16 %v1439
    %v1585 = vunpack.c.h.b16 %v1439
    %v1586 = vunpack.c.l.b16 %v1440
    %v1587 = vunpack.c.l.b16 %v1441
    %v1588 = vunpack.c.h.b16 %v1441
    %v1589 = vunpack.c.l.b16 %v1442
    %v1590 = vunpack.c.l.b16 %v1443
    %v1591 = vunpack.c.h.b16 %v1443
    %v1592 = vunpack.c.l.b16 %v1444
    %v1593 = vunpack.c.l.b16 %v1445
    %v1594 = vunpack.c.h.b16 %v1445
    %v1595 = vunpack.c.l.b16 %v1446
    %v1596 = vunpack.c.l.b16 %v1447
    %v1597 = vunpack.c.h.b16 %v1447
    %v1598 = vunpack.c.l.b16 %v1448
    %v1599 = vunpack.c.l.b16 %v1449
    %v1600 = vunpack.c.h.b16 %v1449
    %v1601 = vunpack.c.l.b16 %v1450
    %v1602 = vunpack.c.l.b16 %v1451
    %v1603 = vunpack.c.h.b16 %v1451
    %v1604 = vunpack.c.l.b16 %v1452
    %v1605 = vunpack.c.l.b16 %v1453
    %v1606 = vunpack.c.h.b16 %v1453
    %v1607 = vunpack.c.l.b16 %v1454
    %v1608 = vunpack.c.l.b16 %v1455
    %v1609 = vunpack.c.h.b16 %v1455
    %v1610 = vunpack.c.l.b16 %v1456
    %v1611 = vunpack.c.l.b16 %v1457
    %v1612 = vunpack.c.h.b16 %v1457
    %v1613 = vunpack.c.l.b16 %v1458
    %v1614 = vunpack.c.l.b16 %v1459
    %v1615 = vunpack.c.h.b16 %v1459
    %v1616 = vunpack.c.l.b16 %v1460
    %v1617 = vunpack.c.l.b16 %v1461
    %v1618 = vunpack.c.h.b16 %v1461
    %v1619 = vunpack.c.l.b16 %v1462
    %v1620 = vunpack.c.l.b16 %v1463
    %v1621 = vunpack.c.h.b16 %v1463
    %v1622 = vunpack.c.l.b16 %v1464
    %v1623 = vunpack.c.l.b16 %v1465
    %v1624 = vunpack.c.h.b16 %v1465
    %v1625 = vunpack.c.l.b16 %v1466
    %v1626 = vunpack.c.l.b16 %v1467
    %v1627 = vunpack.c.h.b16 %v1467
    %v1628 = vunpack.c.l.b16 %v1468
    %v1629 = vpack.c.b16 %v1536, %v1533
    %v1630 = vpack.c.b16 %v1537, %v1534
    %v1631 = vpack.c.b16 %v1538, %v1535
    %v1632 = vpack.c.b16 %v1542, %v1539
    %v1633 = vpack.c.b16 %v1543, %v1540
    %v1634 = vpack.c.b16 %v1544, %v1541
    %v1635 = vpack.c.b16 %v1548, %v1545
    %v1636 = vpack.c.b16 %v1549, %v1546
    %v1637 = vpack.c.b16 %v1550, %v1547
    %v1638 = vpack.c.b16 %v1554, %v1551
    %v1639 = vpack.c.b16 %v1555, %v1552
    %v1640 = vpack.c.b16 %v1556, %v1553
    %v1641 = vpack.c.b16 %v1560, %v1557
    %v1642 = vpack.c.b16 %v1561, %v1558
    %v1643 = vpack.c.b16 %v1562, %v1559
    %v1644 = vpack.c.b16 %v1566, %v1563
    %v1645 = vpack.c.b16 %v1567, %v1564
    %v1646 = vpack.c.b16 %v1568, %v1565
    %v1647 = vpack.c.b16 %v1572, %v1569
    %v1648 = vpack.c.b16 %v1573, %v1570
    %v1649 = vpack.c.b16 %v1574, %v1571
    %v1650 = vpack.c.b16 %v1578, %v1575
    %v1651 = vpack.c.b16 %v1579, %v1576
    %v1652 = vpack.c.b16 %v1580, %v1577
    %v1653 = vpack.c.b16 %v1584, %v1581
    %v1654 = vpack.c.b16 %v1585, %v1582
    %v1655 = vpack.c.b16 %v1586, %v1583
    %v1656 = vpack.c.b16 %v1590, %v1587
    %v1657 = vpack.c.b16 %v1591, %v1588
    %v1658 = vpack.c.b16 %v1592, %v1589
    %v1659 = vpack.c.b16 %v1596, %v1593
    %v1660 = vpack.c.b16 %v1597, %v1594
    %v1661 = vpack.c.b16 %v1598, %v1595
    %v1662 = vpack.c.b16 %v1602, %v1599
    %v1663 = vpack.c.b16 %v1603, %v1600
    %v1664 = vpack.c.b16 %v1604, %v1601
    %v1665 = vpack.c.b16 %v1608, %v1605
    %v1666 = vpack.c.b16 %v1609, %v1606
    %v1667 = vpack.c.b16 %v1610, %v1607
    %v1668 = vpack.c.b16 %v1614, %v1611
    %v1669 = vpack.c.b16 %v1615, %v1612
    %v1670 = vpack.c.b16 %v1616, %v1613
    %v1671 = vpack.c.b16 %v1620, %v1617
    %v1672 = vpack.c.b16 %v1621, %v1618
    %v1673 = vpack.c.b16 %v1622, %v1619
    %v1674 = vpack.c.b16 %v1626, %v1623
    %v1675 = vpack.c.b16 %v1627, %v1624
    %v1676 = vpack.c.b16 %v1628, %v1625
    %1725 = vmatprep.subr.bf16.mxu0 %v1651
    %1726 = vmatpush1.bf16.msra.mxu0 %v1650
    %1727 = vmatprep.subr.bf16.mxu0 %v1648
    %1728 = vmatpush1.bf16.msra.mxu0 %v1647
    %1729 = vmatprep.subr.bf16.mxu0 %v1645
    %1730 = vmatpush1.bf16.msra.mxu0 %v1644
    %1731 = vmatprep.subr.bf16.mxu0 %v1642
    %1732 = vmatpush1.bf16.msra.mxu0 %v1641
    %1733 = vmatprep.subr.bf16.mxu0 %v1639
    %1734 = vmatpush1.bf16.msra.mxu0 %v1638
    %1735 = vmatprep.subr.bf16.mxu0 %v1636
    %1736 = vmatpush1.bf16.msra.mxu0 %v1635
    %1737 = vmatprep.subr.bf16.mxu0 %v1633
    %1738 = vmatpush1.bf16.msra.mxu0 %v1632
    %1739 = vmatprep.subr.bf16.mxu0 %v1630
    %1740 = vmatpush1.bf16.msra.mxu0 %v1629
    %1741 = vmatprep.subr.bf16.mxu0 %v1675
    %1742 = vmatpush2.bf16.msra.mxu0 %v1674
    %1743 = vmatprep.subr.bf16.mxu0 %v1672
    %1744 = vmatpush2.bf16.msra.mxu0 %v1671
    %1745 = vmatprep.subr.bf16.mxu0 %v1669
    %1746 = vmatpush2.bf16.msra.mxu0 %v1668
    %1747 = vmatprep.subr.bf16.mxu0 %v1666
    %1748 = vmatpush2.bf16.msra.mxu0 %v1665
    %1749 = vmatprep.subr.bf16.mxu0 %v1663
    %1750 = vmatpush2.bf16.msra.mxu0 %v1662
    %1751 = vmatprep.subr.bf16.mxu0 %v1660
    %1752 = vmatpush2.bf16.msra.mxu0 %v1659
    %1753 = vmatprep.subr.bf16.mxu0 %v1657
    %1754 = vmatpush2.bf16.msra.mxu0 %v1656
    %1755 = vmatprep.subr.bf16.mxu0 %v1654
    %1756 = vmatpush2.bf16.msra.mxu0 %v1653
    %1757 = vmatprep.mubr.bf16.mxu0 %v668
    %1758 = vmatmul.mubr.bf16.gmra.mxu0 %v667
    %v1759 = vpop.f32.mrf.mxu0
    %v1760 = vadd.f32 0.0, %v1759
    %v1761 = vpop.f32.mrf.mxu0
    %v1762 = vadd.f32 0.0, %v1761
    %v1763 = vpop.f32.mrf.mxu0
    %v1764 = vadd.f32 0.0, %v1763
    %v1765 = vpop.f32.mrf.mxu0
    %v1766 = vadd.f32 0.0, %v1765
    %1767 = vmatprep.mubr.bf16.mxu0 %v670
    %1768 = vmatmul.mubr.bf16.gmra.mxu0 %v669
    %v1769 = vpop.f32.mrf.mxu0
    %v1770 = vadd.f32 0.0, %v1769
    %v1771 = vpop.f32.mrf.mxu0
    %v1772 = vadd.f32 0.0, %v1771
    %v1773 = vpop.f32.mrf.mxu0
    %v1774 = vadd.f32 0.0, %v1773
    %v1775 = vpop.f32.mrf.mxu0
    %v1776 = vadd.f32 0.0, %v1775
    %1777 = vmatprep.mubr.bf16.mxu0 %v672
    %1778 = vmatmul.mubr.bf16.gmra.mxu0 %v671
    %v1779 = vpop.f32.mrf.mxu0
    %v1780 = vadd.f32 0.0, %v1779
    %v1781 = vpop.f32.mrf.mxu0
    %v1782 = vadd.f32 0.0, %v1781
    %v1783 = vpop.f32.mrf.mxu0
    %v1784 = vadd.f32 0.0, %v1783
    %v1785 = vpop.f32.mrf.mxu0
    %v1786 = vadd.f32 0.0, %v1785
    %1787 = vmatprep.mubr.bf16.mxu0 %v674
    %1788 = vmatmul.mubr.bf16.gmra.mxu0 %v673
    %v1789 = vpop.f32.mrf.mxu0
    %v1790 = vadd.f32 0.0, %v1789
    %v1791 = vpop.f32.mrf.mxu0
    %v1792 = vadd.f32 0.0, %v1791
    %v1793 = vpop.f32.mrf.mxu0
    %v1794 = vadd.f32 0.0, %v1793
    %v1795 = vpop.f32.mrf.mxu0
    %v1796 = vadd.f32 0.0, %v1795
    %1797 = vmatprep.mubr.bf16.mxu0 %v676
    %1798 = vmatmul.mubr.bf16.gmra.mxu0 %v675
    %v1799 = vpop.f32.mrf.mxu0
    %v1800 = vadd.f32 0.0, %v1799
    %v1801 = vpop.f32.mrf.mxu0
    %v1802 = vadd.f32 0.0, %v1801
    %v1803 = vpop.f32.mrf.mxu0
    %v1804 = vadd.f32 0.0, %v1803
    %v1805 = vpop.f32.mrf.mxu0
    %v1806 = vadd.f32 0.0, %v1805
    %1807 = vmatprep.mubr.bf16.mxu0 %v678
    %1808 = vmatmul.mubr.bf16.gmra.mxu0 %v677
    %v1809 = vpop.f32.mrf.mxu0
    %v1810 = vadd.f32 0.0, %v1809
    %v1811 = vpop.f32.mrf.mxu0
    %v1812 = vadd.f32 0.0, %v1811
    %v1813 = vpop.f32.mrf.mxu0
    %v1814 = vadd.f32 0.0, %v1813
    %v1815 = vpop.f32.mrf.mxu0
    %v1816 = vadd.f32 0.0, %v1815
    %1817 = vmatprep.mubr.bf16.mxu0 %v680
    %1818 = vmatmul.mubr.bf16.gmra.mxu0 %v679
    %v1819 = vpop.f32.mrf.mxu0
    %v1820 = vadd.f32 0.0, %v1819
    %v1821 = vpop.f32.mrf.mxu0
    %v1822 = vadd.f32 0.0, %v1821
    %v1823 = vpop.f32.mrf.mxu0
    %v1824 = vadd.f32 0.0, %v1823
    %v1825 = vpop.f32.mrf.mxu0
    %v1826 = vadd.f32 0.0, %v1825
    %1827 = vmatprep.mubr.bf16.mxu0 %v682
    %1828 = vmatmul.mubr.bf16.gmra.mxu0 %v681
    %v1829 = vpop.f32.mrf.mxu0
    %v1830 = vadd.f32 0.0, %v1829
    %v1831 = vpop.f32.mrf.mxu0
    %v1832 = vadd.f32 0.0, %v1831
    %v1833 = vpop.f32.mrf.mxu0
    %v1834 = vadd.f32 0.0, %v1833
    %v1835 = vpop.f32.mrf.mxu0
    %v1836 = vadd.f32 0.0, %v1835
    %1837 = vdwg.mxu0
    %1838 = vmatprep.subr.bf16.mxu0 0
    %1839 = vmatpush1.bf16.msra.mxu0 %v1652
    %1840 = vmatprep.subr.bf16.mxu0 0
    %1841 = vmatpush1.bf16.msra.mxu0 %v1649
    %1842 = vmatprep.subr.bf16.mxu0 0
    %1843 = vmatpush1.bf16.msra.mxu0 %v1646
    %1844 = vmatprep.subr.bf16.mxu0 0
    %1845 = vmatpush1.bf16.msra.mxu0 %v1643
    %1846 = vmatprep.subr.bf16.mxu0 0
    %1847 = vmatpush1.bf16.msra.mxu0 %v1640
    %1848 = vmatprep.subr.bf16.mxu0 0
    %1849 = vmatpush1.bf16.msra.mxu0 %v1637
    %1850 = vmatprep.subr.bf16.mxu0 0
    %1851 = vmatpush1.bf16.msra.mxu0 %v1634
    %1852 = vmatprep.subr.bf16.mxu0 0
    %1853 = vmatpush1.bf16.msra.mxu0 %v1631
    %1854 = vmatprep.subr.bf16.mxu0 0
    %1855 = vmatpush2.bf16.msra.mxu0 %v1676
    %1856 = vmatprep.subr.bf16.mxu0 0
    %1857 = vmatpush2.bf16.msra.mxu0 %v1673
    %1858 = vmatprep.subr.bf16.mxu0 0
    %1859 = vmatpush2.bf16.msra.mxu0 %v1670
    %1860 = vmatprep.subr.bf16.mxu0 0
    %1861 = vmatpush2.bf16.msra.mxu0 %v1667
    %1862 = vmatprep.subr.bf16.mxu0 0
    %1863 = vmatpush2.bf16.msra.mxu0 %v1664
    %1864 = vmatprep.subr.bf16.mxu0 0
    %1865 = vmatpush2.bf16.msra.mxu0 %v1661
    %1866 = vmatprep.subr.bf16.mxu0 0
    %1867 = vmatpush2.bf16.msra.mxu0 %v1658
    %1868 = vmatprep.subr.bf16.mxu0 0
    %1869 = vmatpush2.bf16.msra.mxu0 %v1655
    %1870 = vmatprep.mubr.bf16.mxu0 %v668
    %1871 = vmatmul.mubr.bf16.gmra.mxu0 %v667
    %v1872 = vpop.f32.mrf.mxu0
    %v1873 = vadd.f32 0.0, %v1872
    %v1874 = vpop.f32.mrf.mxu0
    %v1875 = vpop.f32.mrf.mxu0
    %v1876 = vadd.f32 0.0, %v1875
    %v1877 = vpop.f32.mrf.mxu0
    %1878 = vmatprep.mubr.bf16.mxu0 %v670
    %1879 = vmatmul.mubr.bf16.gmra.mxu0 %v669
    %v1880 = vpop.f32.mrf.mxu0
    %v1881 = vadd.f32 0.0, %v1880
    %v1882 = vpop.f32.mrf.mxu0
    %v1883 = vpop.f32.mrf.mxu0
    %v1884 = vadd.f32 0.0, %v1883
    %v1885 = vpop.f32.mrf.mxu0
    %1886 = vmatprep.mubr.bf16.mxu0 %v672
    %1887 = vmatmul.mubr.bf16.gmra.mxu0 %v671
    %v1888 = vpop.f32.mrf.mxu0
    %v1889 = vadd.f32 0.0, %v1888
    %v1890 = vpop.f32.mrf.mxu0
    %v1891 = vpop.f32.mrf.mxu0
    %v1892 = vadd.f32 0.0, %v1891
    %v1893 = vpop.f32.mrf.mxu0
    %1894 = vmatprep.mubr.bf16.mxu0 %v674
    %1895 = vmatmul.mubr.bf16.gmra.mxu0 %v673
    %v1896 = vpop.f32.mrf.mxu0
    %v1897 = vadd.f32 0.0, %v1896
    %v1898 = vpop.f32.mrf.mxu0
    %v1899 = vpop.f32.mrf.mxu0
    %v1900 = vadd.f32 0.0, %v1899
    %v1901 = vpop.f32.mrf.mxu0
    %1902 = vmatprep.mubr.bf16.mxu0 %v676
    %1903 = vmatmul.mubr.bf16.gmra.mxu0 %v675
    %v1904 = vpop.f32.mrf.mxu0
    %v1905 = vadd.f32 0.0, %v1904
    %v1906 = vpop.f32.mrf.mxu0
    %v1907 = vpop.f32.mrf.mxu0
    %v1908 = vadd.f32 0.0, %v1907
    %v1909 = vpop.f32.mrf.mxu0
    %1910 = vmatprep.mubr.bf16.mxu0 %v678
    %1911 = vmatmul.mubr.bf16.gmra.mxu0 %v677
    %v1912 = vpop.f32.mrf.mxu0
    %v1913 = vadd.f32 0.0, %v1912
    %v1914 = vpop.f32.mrf.mxu0
    %v1915 = vpop.f32.mrf.mxu0
    %v1916 = vadd.f32 0.0, %v1915
    %v1917 = vpop.f32.mrf.mxu0
    %1918 = vmatprep.mubr.bf16.mxu0 %v680
    %1919 = vmatmul.mubr.bf16.gmra.mxu0 %v679
    %v1920 = vpop.f32.mrf.mxu0
    %v1921 = vadd.f32 0.0, %v1920
    %v1922 = vpop.f32.mrf.mxu0
    %v1923 = vpop.f32.mrf.mxu0
    %v1924 = vadd.f32 0.0, %v1923
    %v1925 = vpop.f32.mrf.mxu0
    %1926 = vmatprep.mubr.bf16.mxu0 %v682
    %1927 = vmatmul.mubr.bf16.gmra.mxu0 %v681
    %v1928 = vpop.f32.mrf.mxu0
    %v1929 = vadd.f32 0.0, %v1928
    %v1930 = vpop.f32.mrf.mxu0
    %v1931 = vpop.f32.mrf.mxu0
    %v1932 = vadd.f32 0.0, %v1931
    %v1933 = vpop.f32.mrf.mxu0
    %1934 = vdwg.mxu0
    %v1935 = vpack.c.bf16 %v1764, %v1760
    %v1936 = vpack.c.bf16 %v1766, %v1762
    %v1937 = vpack.c.bf16 %v1876, %v1873
    %v1938 = vpack.c.bf16 %v1774, %v1770
    %v1939 = vpack.c.bf16 %v1776, %v1772
    %v1940 = vpack.c.bf16 %v1884, %v1881
    %v1941 = vpack.c.bf16 %v1784, %v1780
    %v1942 = vpack.c.bf16 %v1786, %v1782
    %v1943 = vpack.c.bf16 %v1892, %v1889
    %v1944 = vpack.c.bf16 %v1794, %v1790
    %v1945 = vpack.c.bf16 %v1796, %v1792
    %v1946 = vpack.c.bf16 %v1900, %v1897
    %v1947 = vpack.c.bf16 %v1804, %v1800
    %v1948 = vpack.c.bf16 %v1806, %v1802
    %v1949 = vpack.c.bf16 %v1908, %v1905
    %v1950 = vpack.c.bf16 %v1814, %v1810
    %v1951 = vpack.c.bf16 %v1816, %v1812
    %v1952 = vpack.c.bf16 %v1916, %v1913
    %v1953 = vpack.c.bf16 %v1824, %v1820
    %v1954 = vpack.c.bf16 %v1826, %v1822
    %v1955 = vpack.c.bf16 %v1924, %v1921
    %v1956 = vpack.c.bf16 %v1834, %v1830
    %v1957 = vpack.c.bf16 %v1836, %v1832
    %v1958 = vpack.c.bf16 %v1932, %v1929
    %v1983 = vunpack.c.l.b16 %v1935
    %v1984 = vunpack.c.l.b16 %v1936
    %v1985 = vunpack.c.l.b16 %v1937
    %v1986 = vunpack.c.h.b16 %v1935
    %v1987 = vunpack.c.h.b16 %v1936
    %v1988 = vunpack.c.h.b16 %v1937
    %v1989 = vunpack.c.l.b16 %v1938
    %v1990 = vunpack.c.l.b16 %v1939
    %v1991 = vunpack.c.l.b16 %v1940
    %v1992 = vunpack.c.h.b16 %v1938
    %v1993 = vunpack.c.h.b16 %v1939
    %v1994 = vunpack.c.h.b16 %v1940
    %v1995 = vunpack.c.l.b16 %v1941
    %v1996 = vunpack.c.l.b16 %v1942
    %v1997 = vunpack.c.l.b16 %v1943
    %v1998 = vunpack.c.h.b16 %v1941
    %v1999 = vunpack.c.h.b16 %v1942
    %v2000 = vunpack.c.h.b16 %v1943
    %v2001 = vunpack.c.l.b16 %v1944
    %v2002 = vunpack.c.l.b16 %v1945
    %v2003 = vunpack.c.l.b16 %v1946
    %v2004 = vunpack.c.h.b16 %v1944
    %v2005 = vunpack.c.h.b16 %v1945
    %v2006 = vunpack.c.h.b16 %v1946
    %v2007 = vunpack.c.l.b16 %v1947
    %v2008 = vunpack.c.l.b16 %v1948
    %v2009 = vunpack.c.l.b16 %v1949
    %v2010 = vunpack.c.h.b16 %v1947
    %v2011 = vunpack.c.h.b16 %v1948
    %v2012 = vunpack.c.h.b16 %v1949
    %v2013 = vunpack.c.l.b16 %v1950
    %v2014 = vunpack.c.l.b16 %v1951
    %v2015 = vunpack.c.l.b16 %v1952
    %v2016 = vunpack.c.h.b16 %v1950
    %v2017 = vunpack.c.h.b16 %v1951
    %v2018 = vunpack.c.h.b16 %v1952
    %v2019 = vunpack.c.l.b16 %v1953
    %v2020 = vunpack.c.l.b16 %v1954
    %v2021 = vunpack.c.l.b16 %v1955
    %v2022 = vunpack.c.h.b16 %v1953
    %v2023 = vunpack.c.h.b16 %v1954
    %v2024 = vunpack.c.h.b16 %v1955
    %v2025 = vunpack.c.l.b16 %v1956
    %v2026 = vunpack.c.l.b16 %v1957
    %v2027 = vunpack.c.l.b16 %v1958
    %v2028 = vunpack.c.h.b16 %v1956
    %v2029 = vunpack.c.h.b16 %v1957
    %v2030 = vunpack.c.h.b16 %v1958
    %v2031 = vpack.c.b16 %v1984, %v1983
    %v2032 = vpack.c.b16 %v1985, %v1985
    %v2033 = vpack.c.b16 %v1987, %v1986
    %v2034 = vpack.c.b16 %v1988, %v1988
    %v2035 = vpack.c.b16 %v1990, %v1989
    %v2036 = vpack.c.b16 %v1991, %v1991
    %v2037 = vpack.c.b16 %v1993, %v1992
    %v2038 = vpack.c.b16 %v1994, %v1994
    %v2039 = vpack.c.b16 %v1996, %v1995
    %v2040 = vpack.c.b16 %v1997, %v1997
    %v2041 = vpack.c.b16 %v1999, %v1998
    %v2042 = vpack.c.b16 %v2000, %v2000
    %v2043 = vpack.c.b16 %v2002, %v2001
    %v2044 = vpack.c.b16 %v2003, %v2003
    %v2045 = vpack.c.b16 %v2005, %v2004
    %v2046 = vpack.c.b16 %v2006, %v2006
    %v2047 = vpack.c.b16 %v2008, %v2007
    %v2048 = vpack.c.b16 %v2009, %v2009
    %v2049 = vpack.c.b16 %v2011, %v2010
    %v2050 = vpack.c.b16 %v2012, %v2012
    %v2051 = vpack.c.b16 %v2014, %v2013
    %v2052 = vpack.c.b16 %v2015, %v2015
    %v2053 = vpack.c.b16 %v2017, %v2016
    %v2054 = vpack.c.b16 %v2018, %v2018
    %v2055 = vpack.c.b16 %v2020, %v2019
    %v2056 = vpack.c.b16 %v2021, %v2021
    %v2057 = vpack.c.b16 %v2023, %v2022
    %v2058 = vpack.c.b16 %v2024, %v2024
    %v2059 = vpack.c.b16 %v2026, %v2025
    %v2060 = vpack.c.b16 %v2027, %v2027
    %v2061 = vpack.c.b16 %v2029, %v2028
    %v2062 = vpack.c.b16 %v2030, %v2030
    %2095 = vst [vmem:[#allocation3] sm:$0xff] %v2031
    %2096 = vst [vmem:[#allocation3 + $0x8] sm:$0xf] %v2032
    %2097 = vst [vmem:[#allocation3 + $0xc] sm:$0xff] %v2033
    %2098 = vst [vmem:[#allocation3 + $0x14] sm:$0xf] %v2034
    %2099 = vst [vmem:[#allocation3 + $0x18] sm:$0xff] %v2035
    %2100 = vst [vmem:[#allocation3 + $0x20] sm:$0xf] %v2036
    %2101 = vst [vmem:[#allocation3 + $0x24] sm:$0xff] %v2037
    %2102 = vst [vmem:[#allocation3 + $0x2c] sm:$0xf] %v2038
    %2103 = vst [vmem:[#allocation3 + $0x30] sm:$0xff] %v2039
    %2104 = vst [vmem:[#allocation3 + $0x38] sm:$0xf] %v2040
    %2105 = vst [vmem:[#allocation3 + $0x3c] sm:$0xff] %v2041
    %2106 = vst [vmem:[#allocation3 + $0x44] sm:$0xf] %v2042
    %2107 = vst [vmem:[#allocation3 + $0x48] sm:$0xff] %v2043
    %2108 = vst [vmem:[#allocation3 + $0x50] sm:$0xf] %v2044
    %2109 = vst [vmem:[#allocation3 + $0x54] sm:$0xff] %v2045
    %2110 = vst [vmem:[#allocation3 + $0x5c] sm:$0xf] %v2046
    %2111 = vst [vmem:[#allocation3 + $0x60] sm:$0xff] %v2047
    %2112 = vst [vmem:[#allocation3 + $0x68] sm:$0xf] %v2048
    %2113 = vst [vmem:[#allocation3 + $0x6c] sm:$0xff] %v2049
    %2114 = vst [vmem:[#allocation3 + $0x74] sm:$0xf] %v2050
    %2115 = vst [vmem:[#allocation3 + $0x78] sm:$0xff] %v2051
    %2116 = vst [vmem:[#allocation3 + $0x80] sm:$0xf] %v2052
    %2117 = vst [vmem:[#allocation3 + $0x84] sm:$0xff] %v2053
    %2118 = vst [vmem:[#allocation3 + $0x8c] sm:$0xf] %v2054
    %2119 = vst [vmem:[#allocation3 + $0x90] sm:$0xff] %v2055
    %2120 = vst [vmem:[#allocation3 + $0x98] sm:$0xf] %v2056
    %2121 = vst [vmem:[#allocation3 + $0x9c] sm:$0xff] %v2057
    %2122 = vst [vmem:[#allocation3 + $0xa4] sm:$0xf] %v2058
    %2123 = vst [vmem:[#allocation3 + $0xa8] sm:$0xff] %v2059
    %2124 = vst [vmem:[#allocation3 + $0xb0] sm:$0xf] %v2060
    %2125 = vst [vmem:[#allocation3 + $0xb4] sm:$0xff] %v2061
    %2126 = vst [vmem:[#allocation3 + $0xbc] sm:$0xf] %v2062
    %v2127 = vld [vmem:[#allocation2] sm:$0xff]
    %v2128 = vld [vmem:[#allocation2 + $0x8] sm:$0xf]
    %v2129 = vld [vmem:[#allocation2 + $0xc] sm:$0xff]
    %v2130 = vld [vmem:[#allocation2 + $0x14] sm:$0xf]
    %v2131 = vld [vmem:[#allocation2 + $0x18] sm:$0xff]
    %v2132 = vld [vmem:[#allocation2 + $0x20] sm:$0xf]
    %v2133 = vld [vmem:[#allocation2 + $0x24] sm:$0xff]
    %v2134 = vld [vmem:[#allocation2 + $0x2c] sm:$0xf]
    %v2135 = vld [vmem:[#allocation2 + $0x30] sm:$0xff]
    %v2136 = vld [vmem:[#allocation2 + $0x38] sm:$0xf]
    %v2137 = vld [vmem:[#allocation2 + $0x3c] sm:$0xff]
    %v2138 = vld [vmem:[#allocation2 + $0x44] sm:$0xf]
    %v2139 = vld [vmem:[#allocation2 + $0x48] sm:$0xff]
    %v2140 = vld [vmem:[#allocation2 + $0x50] sm:$0xf]
    %v2141 = vld [vmem:[#allocation2 + $0x54] sm:$0xff]
    %v2142 = vld [vmem:[#allocation2 + $0x5c] sm:$0xf]
    %v2143 = vld [vmem:[#allocation3] sm:$0xff]
    %v2144 = vld [vmem:[#allocation3 + $0x8] sm:$0xf]
    %v2145 = vld [vmem:[#allocation3 + $0xc] sm:$0xff]
    %v2146 = vld [vmem:[#allocation3 + $0x14] sm:$0xf]
    %v2147 = vld [vmem:[#allocation3 + $0x18] sm:$0xff]
    %v2148 = vld [vmem:[#allocation3 + $0x20] sm:$0xf]
    %v2149 = vld [vmem:[#allocation3 + $0x24] sm:$0xff]
    %v2150 = vld [vmem:[#allocation3 + $0x2c] sm:$0xf]
    %v2151 = vld [vmem:[#allocation3 + $0x30] sm:$0xff]
    %v2152 = vld [vmem:[#allocation3 + $0x38] sm:$0xf]
    %v2153 = vld [vmem:[#allocation3 + $0x3c] sm:$0xff]
    %v2154 = vld [vmem:[#allocation3 + $0x44] sm:$0xf]
    %v2155 = vld [vmem:[#allocation3 + $0x48] sm:$0xff]
    %v2156 = vld [vmem:[#allocation3 + $0x50] sm:$0xf]
    %v2157 = vld [vmem:[#allocation3 + $0x54] sm:$0xff]
    %v2158 = vld [vmem:[#allocation3 + $0x5c] sm:$0xf]
    %v2167 = vunpack.c.l.b16 %v2127
    %v2168 = vunpack.c.l.b16 %v2129
    %v2169 = vunpack.c.l.b16 %v2131
    %v2170 = vunpack.c.l.b16 %v2133
    %v2171 = vunpack.c.l.b16 %v2135
    %v2172 = vunpack.c.l.b16 %v2137
    %v2173 = vunpack.c.l.b16 %v2139
    %v2174 = vunpack.c.l.b16 %v2141
    %v2175 = vpack.c.b16 %v2168, %v2167
    %v2176 = vpack.c.b16 %v2170, %v2169
    %v2177 = vpack.c.b16 %v2172, %v2171
    %v2178 = vpack.c.b16 %v2174, %v2173
    %v2187 = vunpack.c.h.b16 %v2143
    %v2188 = vunpack.c.h.b16 %v2145
    %v2189 = vunpack.c.h.b16 %v2147
    %v2190 = vunpack.c.h.b16 %v2149
    %v2191 = vunpack.c.h.b16 %v2151
    %v2192 = vunpack.c.h.b16 %v2153
    %v2193 = vunpack.c.h.b16 %v2155
    %v2194 = vunpack.c.h.b16 %v2157
    %v2195 = vpack.c.b16 %v2188, %v2187
    %v2196 = vpack.c.b16 %v2190, %v2189
    %v2197 = vpack.c.b16 %v2192, %v2191
    %v2198 = vpack.c.b16 %v2194, %v2193
    %vm2199 = vcmask 261120
    %v2201 = vsel %vm2199, %v2175, 0
    %v2204 = vsel %vm2199, %v2176, 0
    %v2207 = vsel %vm2199, %v2177, 0
    %v2210 = vsel %vm2199, %v2178, 0
    %v2213 = vsel %vm2199, %v2195, 0
    %v2216 = vsel %vm2199, %v2196, 0
    %v2219 = vsel %vm2199, %v2197, 0
    %v2222 = vsel %vm2199, %v2198, 0
    %2224 = vmatprep.subr.bf16.mxu0 0
    %2225 = vmatpush1.bf16.xpose.msra.mxu0 0
    %2226 = vmatprep.subr.bf16.mxu0 0
    %2227 = vmatpush1.bf16.xpose.msra.mxu0 0
    %2228 = vmatprep.subr.bf16.mxu0 0
    %2229 = vmatpush1.bf16.xpose.msra.mxu0 0
    %2230 = vmatprep.subr.bf16.mxu0 0
    %2231 = vmatpush1.bf16.xpose.msra.mxu0 0
    %2232 = vmatprep.subr.bf16.mxu0 0
    %2233 = vmatpush1.bf16.xpose.msra.mxu0 %v2222
    %2234 = vmatprep.subr.bf16.mxu0 0
    %2235 = vmatpush1.bf16.xpose.msra.mxu0 %v2219
    %2236 = vmatprep.subr.bf16.mxu0 0
    %2237 = vmatpush1.bf16.xpose.msra.mxu0 %v2216
    %2238 = vmatprep.subr.bf16.mxu0 0
    %2239 = vmatpush1.bf16.xpose.msra.mxu0 %v2213
    %2240 = vmatprep.subr.bf16.mxu0 0
    %2241 = vmatpush2.bf16.xpose.msra.mxu0 0
    %2242 = vmatprep.subr.bf16.mxu0 0
    %2243 = vmatpush2.bf16.xpose.msra.mxu0 0
    %2244 = vmatprep.subr.bf16.mxu0 0
    %2245 = vmatpush2.bf16.xpose.msra.mxu0 0
    %2246 = vmatprep.subr.bf16.mxu0 0
    %2247 = vmatpush2.bf16.xpose.msra.mxu0 0
    %2248 = vmatprep.subr.bf16.mxu0 0
    %2249 = vmatpush2.bf16.xpose.msra.mxu0 0
    %2250 = vmatprep.subr.bf16.mxu0 0
    %2251 = vmatpush2.bf16.xpose.msra.mxu0 0
    %2252 = vmatprep.subr.bf16.mxu0 0
    %2253 = vmatpush2.bf16.xpose.msra.mxu0 0
    %2254 = vmatprep.subr.bf16.mxu0 0
    %2255 = vmatpush2.bf16.xpose.msra.mxu0 0
    %2256 = vmatprep.mubr.bf16.mxu0 0
    %2257 = vmatmul.mubr.bf16.gmra.mxu0 %v2201
    %v2258 = vpop.f32.mrf.mxu0
    %v2259 = vadd.f32 0.0, %v2258
    %v2260 = vpop.f32.mrf.mxu0
    %v2261 = vpop.f32.mrf.mxu0
    %v2262 = vadd.f32 0.0, %v2261
    %v2263 = vpop.f32.mrf.mxu0
    %2264 = vmatprep.mubr.bf16.mxu0 0
    %2265 = vmatmul.mubr.bf16.gmra.mxu0 %v2204
    %v2266 = vpop.f32.mrf.mxu0
    %v2267 = vadd.f32 0.0, %v2266
    %v2268 = vpop.f32.mrf.mxu0
    %v2269 = vpop.f32.mrf.mxu0
    %v2270 = vadd.f32 0.0, %v2269
    %v2271 = vpop.f32.mrf.mxu0
    %2272 = vmatprep.mubr.bf16.mxu0 0
    %2273 = vmatmul.mubr.bf16.gmra.mxu0 %v2207
    %v2274 = vpop.f32.mrf.mxu0
    %v2275 = vadd.f32 0.0, %v2274
    %v2276 = vpop.f32.mrf.mxu0
    %v2277 = vpop.f32.mrf.mxu0
    %v2278 = vadd.f32 0.0, %v2277
    %v2279 = vpop.f32.mrf.mxu0
    %2280 = vmatprep.mubr.bf16.mxu0 0
    %2281 = vmatmul.mubr.bf16.gmra.mxu0 %v2210
    %v2282 = vpop.f32.mrf.mxu0
    %v2283 = vadd.f32 0.0, %v2282
    %v2284 = vpop.f32.mrf.mxu0
    %v2285 = vpop.f32.mrf.mxu0
    %v2286 = vadd.f32 0.0, %v2285
    %v2287 = vpop.f32.mrf.mxu0
    %2288 = vdwg.mxu0
    %v2289 = vmul.f32 %v2259, 0.17677669
    %v2290 = vmul.f32 %v2262, 0.17677669
    %v2291 = vmul.f32 %v2267, 0.17677669
    %v2292 = vmul.f32 %v2270, 0.17677669
    %v2293 = vmul.f32 %v2275, 0.17677669
    %v2294 = vmul.f32 %v2278, 0.17677669
    %v2295 = vmul.f32 %v2283, 0.17677669
    %v2296 = vmul.f32 %v2286, 0.17677669
    %v2297 = vunpack.c.l.b16 %v2143
    %v2298 = vunpack.c.l.b16 %v2145
    %v2299 = vunpack.c.l.b16 %v2147
    %v2300 = vunpack.c.l.b16 %v2149
    %v2301 = vunpack.c.l.b16 %v2151
    %v2302 = vunpack.c.l.b16 %v2153
    %v2303 = vunpack.c.l.b16 %v2155
    %v2304 = vunpack.c.l.b16 %v2157
    %v2305 = vpack.c.b16 %v2298, %v2297
    %v2306 = vpack.c.b16 %v2300, %v2299
    %v2307 = vpack.c.b16 %v2302, %v2301
    %v2308 = vpack.c.b16 %v2304, %v2303
    %v2309 = vunpack.c.h.b16 %v2127
    %v2310 = vunpack.c.h.b16 %v2129
    %v2311 = vunpack.c.h.b16 %v2131
    %v2312 = vunpack.c.h.b16 %v2133
    %v2313 = vunpack.c.h.b16 %v2135
    %v2314 = vunpack.c.h.b16 %v2137
    %v2315 = vunpack.c.h.b16 %v2139
    %v2316 = vunpack.c.h.b16 %v2141
    %v2317 = vpack.c.b16 %v2310, %v2309
    %v2318 = vpack.c.b16 %v2312, %v2311
    %v2319 = vpack.c.b16 %v2314, %v2313
    %v2320 = vpack.c.b16 %v2316, %v2315
    %v2322 = vsel %vm2199, %v2305, 0
    %v2325 = vsel %vm2199, %v2306, 0
    %v2328 = vsel %vm2199, %v2307, 0
    %v2331 = vsel %vm2199, %v2308, 0
    %v2334 = vsel %vm2199, %v2317, 0
    %v2337 = vsel %vm2199, %v2318, 0
    %v2340 = vsel %vm2199, %v2319, 0
    %v2343 = vsel %vm2199, %v2320, 0
    %2345 = vmatprep.subr.bf16.mxu0 0
    %2346 = vmatpush1.bf16.xpose.msra.mxu0 0
    %2347 = vmatprep.subr.bf16.mxu0 0
    %2348 = vmatpush1.bf16.xpose.msra.mxu0 0
    %2349 = vmatprep.subr.bf16.mxu0 0
    %2350 = vmatpush1.bf16.xpose.msra.mxu0 0
    %2351 = vmatprep.subr.bf16.mxu0 0
    %2352 = vmatpush1.bf16.xpose.msra.mxu0 0
    %2353 = vmatprep.subr.bf16.mxu0 0
    %2354 = vmatpush1.bf16.xpose.msra.mxu0 %v2343
    %2355 = vmatprep.subr.bf16.mxu0 0
    %2356 = vmatpush1.bf16.xpose.msra.mxu0 %v2340
    %2357 = vmatprep.subr.bf16.mxu0 0
    %2358 = vmatpush1.bf16.xpose.msra.mxu0 %v2337
    %2359 = vmatprep.subr.bf16.mxu0 0
    %2360 = vmatpush1.bf16.xpose.msra.mxu0 %v2334
    %2361 = vmatprep.subr.bf16.mxu0 0
    %2362 = vmatpush2.bf16.xpose.msra.mxu0 0
    %2363 = vmatprep.subr.bf16.mxu0 0
    %2364 = vmatpush2.bf16.xpose.msra.mxu0 0
    %2365 = vmatprep.subr.bf16.mxu0 0
    %2366 = vmatpush2.bf16.xpose.msra.mxu0 0
    %2367 = vmatprep.subr.bf16.mxu0 0
    %2368 = vmatpush2.bf16.xpose.msra.mxu0 0
    %2369 = vmatprep.subr.bf16.mxu0 0
    %2370 = vmatpush2.bf16.xpose.msra.mxu0 0
    %2371 = vmatprep.subr.bf16.mxu0 0
    %2372 = vmatpush2.bf16.xpose.msra.mxu0 0
    %2373 = vmatprep.subr.bf16.mxu0 0
    %2374 = vmatpush2.bf16.xpose.msra.mxu0 0
    %2375 = vmatprep.subr.bf16.mxu0 0
    %2376 = vmatpush2.bf16.xpose.msra.mxu0 0
    %2377 = vmatprep.mubr.bf16.mxu0 0
    %2378 = vmatmul.mubr.bf16.gmra.mxu0 %v2322
    %v2379 = vpop.f32.mrf.mxu0
    %v2380 = vadd.f32 0.0, %v2379
    %v2381 = vpop.f32.mrf.mxu0
    %v2382 = vpop.f32.mrf.mxu0
    %v2383 = vadd.f32 0.0, %v2382
    %v2384 = vpop.f32.mrf.mxu0
    %2385 = vmatprep.mubr.bf16.mxu0 0
    %2386 = vmatmul.mubr.bf16.gmra.mxu0 %v2325
    %v2387 = vpop.f32.mrf.mxu0
    %v2388 = vadd.f32 0.0, %v2387
    %v2389 = vpop.f32.mrf.mxu0
    %v2390 = vpop.f32.mrf.mxu0
    %v2391 = vadd.f32 0.0, %v2390
    %v2392 = vpop.f32.mrf.mxu0
    %2393 = vmatprep.mubr.bf16.mxu0 0
    %2394 = vmatmul.mubr.bf16.gmra.mxu0 %v2328
    %v2395 = vpop.f32.mrf.mxu0
    %v2396 = vadd.f32 0.0, %v2395
    %v2397 = vpop.f32.mrf.mxu0
    %v2398 = vpop.f32.mrf.mxu0
    %v2399 = vadd.f32 0.0, %v2398
    %v2400 = vpop.f32.mrf.mxu0
    %2401 = vmatprep.mubr.bf16.mxu0 0
    %2402 = vmatmul.mubr.bf16.gmra.mxu0 %v2331
    %v2403 = vpop.f32.mrf.mxu0
    %v2404 = vadd.f32 0.0, %v2403
    %v2405 = vpop.f32.mrf.mxu0
    %v2406 = vpop.f32.mrf.mxu0
    %v2407 = vadd.f32 0.0, %v2406
    %v2408 = vpop.f32.mrf.mxu0
    %2409 = vdwg.mxu0
    %v2410 = vmul.f32 %v2380, 0.17677669
    %v2411 = vmul.f32 %v2383, 0.17677669
    %v2412 = vmul.f32 %v2388, 0.17677669
    %v2413 = vmul.f32 %v2391, 0.17677669
    %v2414 = vmul.f32 %v2396, 0.17677669
    %v2415 = vmul.f32 %v2399, 0.17677669
    %v2416 = vmul.f32 %v2404, 0.17677669
    %v2417 = vmul.f32 %v2407, 0.17677669
    %v2418 = vsel %vm265, %v2289, -inf
    %2419 = vmax.xlane.f32.xlu0 %v2418
    %v2420 = vpop.xlane.xlu0 %2419
    %v2421 = vsel %vm265, %v2290, -inf
    %2422 = vmax.xlane.f32.xlu0 %v2421
    %v2423 = vpop.xlane.xlu0 %2422
    %v2424 = vsel %vm265, %v2291, -inf
    %2425 = vmax.xlane.f32.xlu0 %v2424
    %v2426 = vpop.xlane.xlu0 %2425
    %v2427 = vsel %vm265, %v2292, -inf
    %2428 = vmax.xlane.f32.xlu0 %v2427
    %v2429 = vpop.xlane.xlu0 %2428
    %v2430 = vsel %vm265, %v2293, -inf
    %2431 = vmax.xlane.f32.xlu0 %v2430
    %v2432 = vpop.xlane.xlu0 %2431
    %v2433 = vsel %vm265, %v2294, -inf
    %2434 = vmax.xlane.f32.xlu0 %v2433
    %v2435 = vpop.xlane.xlu0 %2434
    %v2436 = vsel %vm265, %v2295, -inf
    %2437 = vmax.xlane.f32.xlu0 %v2436
    %v2438 = vpop.xlane.xlu0 %2437
    %v2439 = vsel %vm265, %v2296, -inf
    %2440 = vmax.xlane.f32.xlu0 %v2439
    %v2441 = vpop.xlane.xlu0 %2440
    %v2442 = vsub.f32 %v2289, %v2420
    %v2443 = vsub.f32 %v2290, %v2423
    %v2444 = vsub.f32 %v2291, %v2426
    %v2445 = vsub.f32 %v2292, %v2429
    %v2446 = vsub.f32 %v2293, %v2432
    %v2447 = vsub.f32 %v2294, %v2435
    %v2448 = vsub.f32 %v2295, %v2438
    %v2449 = vsub.f32 %v2296, %v2441
    %v2450 = vpack.c.bf16 %v2443, %v2442
    %v2451 = vpack.c.bf16 %v2445, %v2444
    %v2452 = vpack.c.bf16 %v2447, %v2446
    %v2453 = vpack.c.bf16 %v2449, %v2448
    %v2455 = vmul.bf16 %v2450, 1069105081
    %v2456 = vpow.bf16.pop %v2455
    %v2458 = vmul.bf16 %v2451, 1069105081
    %v2459 = vpow.bf16.pop %v2458
    %v2461 = vmul.bf16 %v2452, 1069105081
    %v2462 = vpow.bf16.pop %v2461
    %v2464 = vmul.bf16 %v2453, 1069105081
    %v2465 = vpow.bf16.pop %v2464
    %v2466 = vunpack.c.l.bf16 %v2456
    %v2467 = vunpack.c.h.bf16 %v2456
    %v2468 = vunpack.c.l.bf16 %v2459
    %v2469 = vunpack.c.h.bf16 %v2459
    %v2470 = vunpack.c.l.bf16 %v2462
    %v2471 = vunpack.c.h.bf16 %v2462
    %v2472 = vunpack.c.l.bf16 %v2465
    %v2473 = vunpack.c.h.bf16 %v2465
    %v2474 = vsel %vm265, %v2466, 0.0
    %2475 = vadd.xlane.f32.xlu0 %v2474
    %v2476 = vpop.xlane.xlu0 %2475
    %v2477 = vsel %vm265, %v2467, 0.0
    %2478 = vadd.xlane.f32.xlu0 %v2477
    %v2479 = vpop.xlane.xlu0 %2478
    %v2480 = vsel %vm265, %v2468, 0.0
    %2481 = vadd.xlane.f32.xlu0 %v2480
    %v2482 = vpop.xlane.xlu0 %2481
    %v2483 = vsel %vm265, %v2469, 0.0
    %2484 = vadd.xlane.f32.xlu0 %v2483
    %v2485 = vpop.xlane.xlu0 %2484
    %v2486 = vsel %vm265, %v2470, 0.0
    %2487 = vadd.xlane.f32.xlu0 %v2486
    %v2488 = vpop.xlane.xlu0 %2487
    %v2489 = vsel %vm265, %v2471, 0.0
    %2490 = vadd.xlane.f32.xlu0 %v2489
    %v2491 = vpop.xlane.xlu0 %2490
    %v2492 = vsel %vm265, %v2472, 0.0
    %2493 = vadd.xlane.f32.xlu0 %v2492
    %v2494 = vpop.xlane.xlu0 %2493
    %v2495 = vsel %vm265, %v2473, 0.0
    %2496 = vadd.xlane.f32.xlu0 %v2495
    %v2497 = vpop.xlane.xlu0 %2496
    %v2498 = vrcp.pop %v2476
    %v2499 = vrcp.pop %v2479
    %v2500 = vrcp.pop %v2482
    %v2501 = vrcp.pop %v2485
    %v2502 = vrcp.pop %v2488
    %v2503 = vrcp.pop %v2491
    %v2504 = vrcp.pop %v2494
    %v2505 = vrcp.pop %v2497
    %v2506 = vmul.f32 %v2466, %v2498
    %v2507 = vmul.f32 %v2467, %v2499
    %v2508 = vmul.f32 %v2468, %v2500
    %v2509 = vmul.f32 %v2469, %v2501
    %v2510 = vmul.f32 %v2470, %v2502
    %v2511 = vmul.f32 %v2471, %v2503
    %v2512 = vmul.f32 %v2472, %v2504
    %v2513 = vmul.f32 %v2473, %v2505
    %v2514 = vpack.c.bf16 %v2507, %v2506
    %v2515 = vpack.c.bf16 %v2509, %v2508
    %v2516 = vpack.c.bf16 %v2511, %v2510
    %v2517 = vpack.c.bf16 %v2513, %v2512
    %v2518 = vsel %vm265, %v2410, -inf
    %2519 = vmax.xlane.f32.xlu0 %v2518
    %v2520 = vpop.xlane.xlu0 %2519
    %v2521 = vsel %vm265, %v2411, -inf
    %2522 = vmax.xlane.f32.xlu0 %v2521
    %v2523 = vpop.xlane.xlu0 %2522
    %v2524 = vsel %vm265, %v2412, -inf
    %2525 = vmax.xlane.f32.xlu0 %v2524
    %v2526 = vpop.xlane.xlu0 %2525
    %v2527 = vsel %vm265, %v2413, -inf
    %2528 = vmax.xlane.f32.xlu0 %v2527
    %v2529 = vpop.xlane.xlu0 %2528
    %v2530 = vsel %vm265, %v2414, -inf
    %2531 = vmax.xlane.f32.xlu0 %v2530
    %v2532 = vpop.xlane.xlu0 %2531
    %v2533 = vsel %vm265, %v2415, -inf
    %2534 = vmax.xlane.f32.xlu0 %v2533
    %v2535 = vpop.xlane.xlu0 %2534
    %v2536 = vsel %vm265, %v2416, -inf
    %2537 = vmax.xlane.f32.xlu0 %v2536
    %v2538 = vpop.xlane.xlu0 %2537
    %v2539 = vsel %vm265, %v2417, -inf
    %2540 = vmax.xlane.f32.xlu0 %v2539
    %v2541 = vpop.xlane.xlu0 %2540
    %v2542 = vsub.f32 %v2410, %v2520
    %v2543 = vsub.f32 %v2411, %v2523
    %v2544 = vsub.f32 %v2412, %v2526
    %v2545 = vsub.f32 %v2413, %v2529
    %v2546 = vsub.f32 %v2414, %v2532
    %v2547 = vsub.f32 %v2415, %v2535
    %v2548 = vsub.f32 %v2416, %v2538
    %v2549 = vsub.f32 %v2417, %v2541
    %v2550 = vpack.c.bf16 %v2543, %v2542
    %v2551 = vpack.c.bf16 %v2545, %v2544
    %v2552 = vpack.c.bf16 %v2547, %v2546
    %v2553 = vpack.c.bf16 %v2549, %v2548
    %v2555 = vmul.bf16 %v2550, 1069105081
    %v2556 = vpow.bf16.pop %v2555
    %v2558 = vmul.bf16 %v2551, 1069105081
    %v2559 = vpow.bf16.pop %v2558
    %v2561 = vmul.bf16 %v2552, 1069105081
    %v2562 = vpow.bf16.pop %v2561
    %v2564 = vmul.bf16 %v2553, 1069105081
    %v2565 = vpow.bf16.pop %v2564
    %v2566 = vunpack.c.l.bf16 %v2556
    %v2567 = vunpack.c.h.bf16 %v2556
    %v2568 = vunpack.c.l.bf16 %v2559
    %v2569 = vunpack.c.h.bf16 %v2559
    %v2570 = vunpack.c.l.bf16 %v2562
    %v2571 = vunpack.c.h.bf16 %v2562
    %v2572 = vunpack.c.l.bf16 %v2565
    %v2573 = vunpack.c.h.bf16 %v2565
    %v2574 = vsel %vm265, %v2566, 0.0
    %2575 = vadd.xlane.f32.xlu0 %v2574
    %v2576 = vpop.xlane.xlu0 %2575
    %v2577 = vsel %vm265, %v2567, 0.0
    %2578 = vadd.xlane.f32.xlu0 %v2577
    %v2579 = vpop.xlane.xlu0 %2578
    %v2580 = vsel %vm265, %v2568, 0.0
    %2581 = vadd.xlane.f32.xlu0 %v2580
    %v2582 = vpop.xlane.xlu0 %2581
    %v2583 = vsel %vm265, %v2569, 0.0
    %2584 = vadd.xlane.f32.xlu0 %v2583
    %v2585 = vpop.xlane.xlu0 %2584
    %v2586 = vsel %vm265, %v2570, 0.0
    %2587 = vadd.xlane.f32.xlu0 %v2586
    %v2588 = vpop.xlane.xlu0 %2587
    %v2589 = vsel %vm265, %v2571, 0.0
    %2590 = vadd.xlane.f32.xlu0 %v2589
    %v2591 = vpop.xlane.xlu0 %2590
    %v2592 = vsel %vm265, %v2572, 0.0
    %2593 = vadd.xlane.f32.xlu0 %v2592
    %v2594 = vpop.xlane.xlu0 %2593
    %v2595 = vsel %vm265, %v2573, 0.0
    %2596 = vadd.xlane.f32.xlu0 %v2595
    %v2597 = vpop.xlane.xlu0 %2596
    %v2598 = vrcp.pop %v2576
    %v2599 = vrcp.pop %v2579
    %v2600 = vrcp.pop %v2582
    %v2601 = vrcp.pop %v2585
    %v2602 = vrcp.pop %v2588
    %v2603 = vrcp.pop %v2591
    %v2604 = vrcp.pop %v2594
    %v2605 = vrcp.pop %v2597
    %v2606 = vmul.f32 %v2566, %v2598
    %v2607 = vmul.f32 %v2567, %v2599
    %v2608 = vmul.f32 %v2568, %v2600
    %v2609 = vmul.f32 %v2569, %v2601
    %v2610 = vmul.f32 %v2570, %v2602
    %v2611 = vmul.f32 %v2571, %v2603
    %v2612 = vmul.f32 %v2572, %v2604
    %v2613 = vmul.f32 %v2573, %v2605
    %v2614 = vpack.c.bf16 %v2607, %v2606
    %v2615 = vpack.c.bf16 %v2609, %v2608
    %v2616 = vpack.c.bf16 %v2611, %v2610
    %v2617 = vpack.c.bf16 %v2613, %v2612
    %v2626 = vunpack.c.l.b16 %v2144
    %v2627 = vunpack.c.l.b16 %v2146
    %v2628 = vunpack.c.l.b16 %v2148
    %v2629 = vunpack.c.l.b16 %v2150
    %v2630 = vunpack.c.l.b16 %v2152
    %v2631 = vunpack.c.l.b16 %v2154
    %v2632 = vunpack.c.l.b16 %v2156
    %v2633 = vunpack.c.l.b16 %v2158
    %v2634 = vpack.c.b16 %v2627, %v2626
    %v2635 = vpack.c.b16 %v2629, %v2628
    %v2636 = vpack.c.b16 %v2631, %v2630
    %v2637 = vpack.c.b16 %v2633, %v2632
    %v2643 = vsel %vm265, %v2514, 0
    %v2646 = vsel %vm265, %v2515, 0
    %v2649 = vsel %vm265, %v2516, 0
    %v2652 = vsel %vm265, %v2517, 0
    %2654 = vmatprep.subr.bf16.mxu0 0
    %2655 = vmatpush1.bf16.msra.mxu0 0
    %2656 = vmatprep.subr.bf16.mxu0 0
    %2657 = vmatpush1.bf16.msra.mxu0 0
    %2658 = vmatprep.subr.bf16.mxu0 0
    %2659 = vmatpush1.bf16.msra.mxu0 0
    %2660 = vmatprep.subr.bf16.mxu0 0
    %2661 = vmatpush1.bf16.msra.mxu0 0
    %2662 = vmatprep.subr.bf16.mxu0 0
    %2663 = vmatpush1.bf16.msra.mxu0 %v2637
    %2664 = vmatprep.subr.bf16.mxu0 0
    %2665 = vmatpush1.bf16.msra.mxu0 %v2636
    %2666 = vmatprep.subr.bf16.mxu0 0
    %2667 = vmatpush1.bf16.msra.mxu0 %v2635
    %2668 = vmatprep.subr.bf16.mxu0 0
    %2669 = vmatpush1.bf16.msra.mxu0 %v2634
    %2670 = vmatprep.subr.bf16.mxu0 0
    %2671 = vmatpush2.bf16.msra.mxu0 0
    %2672 = vmatprep.subr.bf16.mxu0 0
    %2673 = vmatpush2.bf16.msra.mxu0 0
    %2674 = vmatprep.subr.bf16.mxu0 0
    %2675 = vmatpush2.bf16.msra.mxu0 0
    %2676 = vmatprep.subr.bf16.mxu0 0
    %2677 = vmatpush2.bf16.msra.mxu0 0
    %2678 = vmatprep.subr.bf16.mxu0 0
    %2679 = vmatpush2.bf16.msra.mxu0 0
    %2680 = vmatprep.subr.bf16.mxu0 0
    %2681 = vmatpush2.bf16.msra.mxu0 0
    %2682 = vmatprep.subr.bf16.mxu0 0
    %2683 = vmatpush2.bf16.msra.mxu0 0
    %2684 = vmatprep.subr.bf16.mxu0 0
    %2685 = vmatpush2.bf16.msra.mxu0 0
    %2686 = vmatprep.mubr.bf16.mxu0 0
    %2687 = vmatmul.mubr.bf16.gmra.mxu0 %v2643
    %v2688 = vpop.f32.mrf.mxu0
    %v2689 = vadd.f32 0.0, %v2688
    %v2690 = vpop.f32.mrf.mxu0
    %v2691 = vpop.f32.mrf.mxu0
    %v2692 = vadd.f32 0.0, %v2691
    %v2693 = vpop.f32.mrf.mxu0
    %2694 = vmatprep.mubr.bf16.mxu0 0
    %2695 = vmatmul.mubr.bf16.gmra.mxu0 %v2646
    %v2696 = vpop.f32.mrf.mxu0
    %v2697 = vadd.f32 0.0, %v2696
    %v2698 = vpop.f32.mrf.mxu0
    %v2699 = vpop.f32.mrf.mxu0
    %v2700 = vadd.f32 0.0, %v2699
    %v2701 = vpop.f32.mrf.mxu0
    %2702 = vmatprep.mubr.bf16.mxu0 0
    %2703 = vmatmul.mubr.bf16.gmra.mxu0 %v2649
    %v2704 = vpop.f32.mrf.mxu0
    %v2705 = vadd.f32 0.0, %v2704
    %v2706 = vpop.f32.mrf.mxu0
    %v2707 = vpop.f32.mrf.mxu0
    %v2708 = vadd.f32 0.0, %v2707
    %v2709 = vpop.f32.mrf.mxu0
    %2710 = vmatprep.mubr.bf16.mxu0 0
    %2711 = vmatmul.mubr.bf16.gmra.mxu0 %v2652
    %v2712 = vpop.f32.mrf.mxu0
    %v2713 = vadd.f32 0.0, %v2712
    %v2714 = vpop.f32.mrf.mxu0
    %v2715 = vpop.f32.mrf.mxu0
    %v2716 = vadd.f32 0.0, %v2715
    %v2717 = vpop.f32.mrf.mxu0
    %2718 = vdwg.mxu0
    %v2727 = vunpack.c.l.b16 %v2128
    %v2728 = vunpack.c.l.b16 %v2130
    %v2729 = vunpack.c.l.b16 %v2132
    %v2730 = vunpack.c.l.b16 %v2134
    %v2731 = vunpack.c.l.b16 %v2136
    %v2732 = vunpack.c.l.b16 %v2138
    %v2733 = vunpack.c.l.b16 %v2140
    %v2734 = vunpack.c.l.b16 %v2142
    %v2735 = vpack.c.b16 %v2728, %v2727
    %v2736 = vpack.c.b16 %v2730, %v2729
    %v2737 = vpack.c.b16 %v2732, %v2731
    %v2738 = vpack.c.b16 %v2734, %v2733
    %v2744 = vsel %vm265, %v2614, 0
    %v2747 = vsel %vm265, %v2615, 0
    %v2750 = vsel %vm265, %v2616, 0
    %v2753 = vsel %vm265, %v2617, 0
    %2755 = vmatprep.subr.bf16.mxu0 0
    %2756 = vmatpush1.bf16.msra.mxu0 0
    %2757 = vmatprep.subr.bf16.mxu0 0
    %2758 = vmatpush1.bf16.msra.mxu0 0
    %2759 = vmatprep.subr.bf16.mxu0 0
    %2760 = vmatpush1.bf16.msra.mxu0 0
    %2761 = vmatprep.subr.bf16.mxu0 0
    %2762 = vmatpush1.bf16.msra.mxu0 0
    %2763 = vmatprep.subr.bf16.mxu0 0
    %2764 = vmatpush1.bf16.msra.mxu0 %v2738
    %2765 = vmatprep.subr.bf16.mxu0 0
    %2766 = vmatpush1.bf16.msra.mxu0 %v2737
    %2767 = vmatprep.subr.bf16.mxu0 0
    %2768 = vmatpush1.bf16.msra.mxu0 %v2736
    %2769 = vmatprep.subr.bf16.mxu0 0
    %2770 = vmatpush1.bf16.msra.mxu0 %v2735
    %2771 = vmatprep.subr.bf16.mxu0 0
    %2772 = vmatpush2.bf16.msra.mxu0 0
    %2773 = vmatprep.subr.bf16.mxu0 0
    %2774 = vmatpush2.bf16.msra.mxu0 0
    %2775 = vmatprep.subr.bf16.mxu0 0
    %2776 = vmatpush2.bf16.msra.mxu0 0
    %2777 = vmatprep.subr.bf16.mxu0 0
    %2778 = vmatpush2.bf16.msra.mxu0 0
    %2779 = vmatprep.subr.bf16.mxu0 0
    %2780 = vmatpush2.bf16.msra.mxu0 0
    %2781 = vmatprep.subr.bf16.mxu0 0
    %2782 = vmatpush2.bf16.msra.mxu0 0
    %2783 = vmatprep.subr.bf16.mxu0 0
    %2784 = vmatpush2.bf16.msra.mxu0 0
    %2785 = vmatprep.subr.bf16.mxu0 0
    %2786 = vmatpush2.bf16.msra.mxu0 0
    %2787 = vmatprep.mubr.bf16.mxu0 0
    %2788 = vmatmul.mubr.bf16.gmra.mxu0 %v2744
    %v2789 = vpop.f32.mrf.mxu0
    %v2790 = vadd.f32 0.0, %v2789
    %v2791 = vpop.f32.mrf.mxu0
    %v2792 = vpop.f32.mrf.mxu0
    %v2793 = vadd.f32 0.0, %v2792
    %v2794 = vpop.f32.mrf.mxu0
    %2795 = vmatprep.mubr.bf16.mxu0 0
    %2796 = vmatmul.mubr.bf16.gmra.mxu0 %v2747
    %v2797 = vpop.f32.mrf.mxu0
    %v2798 = vadd.f32 0.0, %v2797
    %v2799 = vpop.f32.mrf.mxu0
    %v2800 = vpop.f32.mrf.mxu0
    %v2801 = vadd.f32 0.0, %v2800
    %v2802 = vpop.f32.mrf.mxu0
    %2803 = vmatprep.mubr.bf16.mxu0 0
    %2804 = vmatmul.mubr.bf16.gmra.mxu0 %v2750
    %v2805 = vpop.f32.mrf.mxu0
    %v2806 = vadd.f32 0.0, %v2805
    %v2807 = vpop.f32.mrf.mxu0
    %v2808 = vpop.f32.mrf.mxu0
    %v2809 = vadd.f32 0.0, %v2808
    %v2810 = vpop.f32.mrf.mxu0
    %2811 = vmatprep.mubr.bf16.mxu0 0
    %2812 = vmatmul.mubr.bf16.gmra.mxu0 %v2753
    %v2813 = vpop.f32.mrf.mxu0
    %v2814 = vadd.f32 0.0, %v2813
    %v2815 = vpop.f32.mrf.mxu0
    %v2816 = vpop.f32.mrf.mxu0
    %v2817 = vadd.f32 0.0, %v2816
    %v2818 = vpop.f32.mrf.mxu0
    %2819 = vdwg.mxu0
    %2820 = vrot.lane.b32.xlu0 %v2175, 96
    %v2821 = vpop.permute.xlu0 %2820
    %2822 = vrot.lane.b32.xlu0 %v2176, 96
    %v2823 = vpop.permute.xlu0 %2822
    %2824 = vrot.lane.b32.xlu0 %v2177, 96
    %v2825 = vpop.permute.xlu0 %2824
    %2826 = vrot.lane.b32.xlu0 %v2178, 96
    %v2827 = vpop.permute.xlu0 %2826
    %2828 = vrot.lane.b32.xlu0 %v2195, 96
    %v2829 = vpop.permute.xlu0 %2828
    %2830 = vrot.lane.b32.xlu0 %v2196, 96
    %v2831 = vpop.permute.xlu0 %2830
    %2832 = vrot.lane.b32.xlu0 %v2197, 96
    %v2833 = vpop.permute.xlu0 %2832
    %2834 = vrot.lane.b32.xlu0 %v2198, 96
    %v2835 = vpop.permute.xlu0 %2834
    %v2837 = vsel %vm2199, %v2821, 0
    %v2840 = vsel %vm2199, %v2823, 0
    %v2843 = vsel %vm2199, %v2825, 0
    %v2846 = vsel %vm2199, %v2827, 0
    %v2849 = vsel %vm2199, %v2829, 0
    %v2852 = vsel %vm2199, %v2831, 0
    %v2855 = vsel %vm2199, %v2833, 0
    %v2858 = vsel %vm2199, %v2835, 0
    %2860 = vmatprep.subr.bf16.mxu0 0
    %2861 = vmatpush1.bf16.xpose.msra.mxu0 0
    %2862 = vmatprep.subr.bf16.mxu0 0
    %2863 = vmatpush1.bf16.xpose.msra.mxu0 0
    %2864 = vmatprep.subr.bf16.mxu0 0
    %2865 = vmatpush1.bf16.xpose.msra.mxu0 0
    %2866 = vmatprep.subr.bf16.mxu0 0
    %2867 = vmatpush1.bf16.xpose.msra.mxu0 0
    %2868 = vmatprep.subr.bf16.mxu0 0
    %2869 = vmatpush1.bf16.xpose.msra.mxu0 %v2858
    %2870 = vmatprep.subr.bf16.mxu0 0
    %2871 = vmatpush1.bf16.xpose.msra.mxu0 %v2855
    %2872 = vmatprep.subr.bf16.mxu0 0
    %2873 = vmatpush1.bf16.xpose.msra.mxu0 %v2852
    %2874 = vmatprep.subr.bf16.mxu0 0
    %2875 = vmatpush1.bf16.xpose.msra.mxu0 %v2849
    %2876 = vmatprep.subr.bf16.mxu0 0
    %2877 = vmatpush2.bf16.xpose.msra.mxu0 0
    %2878 = vmatprep.subr.bf16.mxu0 0
    %2879 = vmatpush2.bf16.xpose.msra.mxu0 0
    %2880 = vmatprep.subr.bf16.mxu0 0
    %2881 = vmatpush2.bf16.xpose.msra.mxu0 0
    %2882 = vmatprep.subr.bf16.mxu0 0
    %2883 = vmatpush2.bf16.xpose.msra.mxu0 0
    %2884 = vmatprep.subr.bf16.mxu0 0
    %2885 = vmatpush2.bf16.xpose.msra.mxu0 0
    %2886 = vmatprep.subr.bf16.mxu0 0
    %2887 = vmatpush2.bf16.xpose.msra.mxu0 0
    %2888 = vmatprep.subr.bf16.mxu0 0
    %2889 = vmatpush2.bf16.xpose.msra.mxu0 0
    %2890 = vmatprep.subr.bf16.mxu0 0
    %2891 = vmatpush2.bf16.xpose.msra.mxu0 0
    %2892 = vmatprep.mubr.bf16.mxu0 0
    %2893 = vmatmul.mubr.bf16.gmra.mxu0 %v2837
    %v2894 = vpop.f32.mrf.mxu0
    %v2895 = vadd.f32 0.0, %v2894
    %v2896 = vpop.f32.mrf.mxu0
    %v2897 = vpop.f32.mrf.mxu0
    %v2898 = vadd.f32 0.0, %v2897
    %v2899 = vpop.f32.mrf.mxu0
    %2900 = vmatprep.mubr.bf16.mxu0 0
    %2901 = vmatmul.mubr.bf16.gmra.mxu0 %v2840
    %v2902 = vpop.f32.mrf.mxu0
    %v2903 = vadd.f32 0.0, %v2902
    %v2904 = vpop.f32.mrf.mxu0
    %v2905 = vpop.f32.mrf.mxu0
    %v2906 = vadd.f32 0.0, %v2905
    %v2907 = vpop.f32.mrf.mxu0
    %2908 = vmatprep.mubr.bf16.mxu0 0
    %2909 = vmatmul.mubr.bf16.gmra.mxu0 %v2843
    %v2910 = vpop.f32.mrf.mxu0
    %v2911 = vadd.f32 0.0, %v2910
    %v2912 = vpop.f32.mrf.mxu0
    %v2913 = vpop.f32.mrf.mxu0
    %v2914 = vadd.f32 0.0, %v2913
    %v2915 = vpop.f32.mrf.mxu0
    %2916 = vmatprep.mubr.bf16.mxu0 0
    %2917 = vmatmul.mubr.bf16.gmra.mxu0 %v2846
    %v2918 = vpop.f32.mrf.mxu0
    %v2919 = vadd.f32 0.0, %v2918
    %v2920 = vpop.f32.mrf.mxu0
    %v2921 = vpop.f32.mrf.mxu0
    %v2922 = vadd.f32 0.0, %v2921
    %v2923 = vpop.f32.mrf.mxu0
    %2924 = vdwg.mxu0
    %v2925 = vmul.f32 %v2895, 0.17677669
    %v2926 = vmul.f32 %v2898, 0.17677669
    %v2927 = vmul.f32 %v2903, 0.17677669
    %v2928 = vmul.f32 %v2906, 0.17677669
    %v2929 = vmul.f32 %v2911, 0.17677669
    %v2930 = vmul.f32 %v2914, 0.17677669
    %v2931 = vmul.f32 %v2919, 0.17677669
    %v2932 = vmul.f32 %v2922, 0.17677669
    %2933 = vrot.lane.b32.xlu0 %v2305, 96
    %v2934 = vpop.permute.xlu0 %2933
    %2935 = vrot.lane.b32.xlu0 %v2306, 96
    %v2936 = vpop.permute.xlu0 %2935
    %2937 = vrot.lane.b32.xlu0 %v2307, 96
    %v2938 = vpop.permute.xlu0 %2937
    %2939 = vrot.lane.b32.xlu0 %v2308, 96
    %v2940 = vpop.permute.xlu0 %2939
    %2941 = vrot.lane.b32.xlu0 %v2317, 96
    %v2942 = vpop.permute.xlu0 %2941
    %2943 = vrot.lane.b32.xlu0 %v2318, 96
    %v2944 = vpop.permute.xlu0 %2943
    %2945 = vrot.lane.b32.xlu0 %v2319, 96
    %v2946 = vpop.permute.xlu0 %2945
    %2947 = vrot.lane.b32.xlu0 %v2320, 96
    %v2948 = vpop.permute.xlu0 %2947
    %v2950 = vsel %vm2199, %v2934, 0
    %v2953 = vsel %vm2199, %v2936, 0
    %v2956 = vsel %vm2199, %v2938, 0
    %v2959 = vsel %vm2199, %v2940, 0
    %v2962 = vsel %vm2199, %v2942, 0
    %v2965 = vsel %vm2199, %v2944, 0
    %v2968 = vsel %vm2199, %v2946, 0
    %v2971 = vsel %vm2199, %v2948, 0
    %2973 = vmatprep.subr.bf16.mxu0 0
    %2974 = vmatpush1.bf16.xpose.msra.mxu0 0
    %2975 = vmatprep.subr.bf16.mxu0 0
    %2976 = vmatpush1.bf16.xpose.msra.mxu0 0
    %2977 = vmatprep.subr.bf16.mxu0 0
    %2978 = vmatpush1.bf16.xpose.msra.mxu0 0
    %2979 = vmatprep.subr.bf16.mxu0 0
    %2980 = vmatpush1.bf16.xpose.msra.mxu0 0
    %2981 = vmatprep.subr.bf16.mxu0 0
    %2982 = vmatpush1.bf16.xpose.msra.mxu0 %v2971
    %2983 = vmatprep.subr.bf16.mxu0 0
    %2984 = vmatpush1.bf16.xpose.msra.mxu0 %v2968
    %2985 = vmatprep.subr.bf16.mxu0 0
    %2986 = vmatpush1.bf16.xpose.msra.mxu0 %v2965
    %2987 = vmatprep.subr.bf16.mxu0 0
    %2988 = vmatpush1.bf16.xpose.msra.mxu0 %v2962
    %2989 = vmatprep.subr.bf16.mxu0 0
    %2990 = vmatpush2.bf16.xpose.msra.mxu0 0
    %2991 = vmatprep.subr.bf16.mxu0 0
    %2992 = vmatpush2.bf16.xpose.msra.mxu0 0
    %2993 = vmatprep.subr.bf16.mxu0 0
    %2994 = vmatpush2.bf16.xpose.msra.mxu0 0
    %2995 = vmatprep.subr.bf16.mxu0 0
    %2996 = vmatpush2.bf16.xpose.msra.mxu0 0
    %2997 = vmatprep.subr.bf16.mxu0 0
    %2998 = vmatpush2.bf16.xpose.msra.mxu0 0
    %2999 = vmatprep.subr.bf16.mxu0 0
    %3000 = vmatpush2.bf16.xpose.msra.mxu0 0
    %3001 = vmatprep.subr.bf16.mxu0 0
    %3002 = vmatpush2.bf16.xpose.msra.mxu0 0
    %3003 = vmatprep.subr.bf16.mxu0 0
    %3004 = vmatpush2.bf16.xpose.msra.mxu0 0
    %3005 = vmatprep.mubr.bf16.mxu0 0
    %3006 = vmatmul.mubr.bf16.gmra.mxu0 %v2950
    %v3007 = vpop.f32.mrf.mxu0
    %v3008 = vadd.f32 0.0, %v3007
    %v3009 = vpop.f32.mrf.mxu0
    %v3010 = vpop.f32.mrf.mxu0
    %v3011 = vadd.f32 0.0, %v3010
    %v3012 = vpop.f32.mrf.mxu0
    %3013 = vmatprep.mubr.bf16.mxu0 0
    %3014 = vmatmul.mubr.bf16.gmra.mxu0 %v2953
    %v3015 = vpop.f32.mrf.mxu0
    %v3016 = vadd.f32 0.0, %v3015
    %v3017 = vpop.f32.mrf.mxu0
    %v3018 = vpop.f32.mrf.mxu0
    %v3019 = vadd.f32 0.0, %v3018
    %v3020 = vpop.f32.mrf.mxu0
    %3021 = vmatprep.mubr.bf16.mxu0 0
    %3022 = vmatmul.mubr.bf16.gmra.mxu0 %v2956
    %v3023 = vpop.f32.mrf.mxu0
    %v3024 = vadd.f32 0.0, %v3023
    %v3025 = vpop.f32.mrf.mxu0
    %v3026 = vpop.f32.mrf.mxu0
    %v3027 = vadd.f32 0.0, %v3026
    %v3028 = vpop.f32.mrf.mxu0
    %3029 = vmatprep.mubr.bf16.mxu0 0
    %3030 = vmatmul.mubr.bf16.gmra.mxu0 %v2959
    %v3031 = vpop.f32.mrf.mxu0
    %v3032 = vadd.f32 0.0, %v3031
    %v3033 = vpop.f32.mrf.mxu0
    %v3034 = vpop.f32.mrf.mxu0
    %v3035 = vadd.f32 0.0, %v3034
    %v3036 = vpop.f32.mrf.mxu0
    %3037 = vdwg.mxu0
    %v3038 = vmul.f32 %v3008, 0.17677669
    %v3039 = vmul.f32 %v3011, 0.17677669
    %v3040 = vmul.f32 %v3016, 0.17677669
    %v3041 = vmul.f32 %v3019, 0.17677669
    %v3042 = vmul.f32 %v3024, 0.17677669
    %v3043 = vmul.f32 %v3027, 0.17677669
    %v3044 = vmul.f32 %v3032, 0.17677669
    %v3045 = vmul.f32 %v3035, 0.17677669
    %v3046 = vsel %vm265, %v2925, -inf
    %3047 = vmax.xlane.f32.xlu0 %v3046
    %v3048 = vpop.xlane.xlu0 %3047
    %v3049 = vsel %vm265, %v2926, -inf
    %3050 = vmax.xlane.f32.xlu0 %v3049
    %v3051 = vpop.xlane.xlu0 %3050
    %v3052 = vsel %vm265, %v2927, -inf
    %3053 = vmax.xlane.f32.xlu0 %v3052
    %v3054 = vpop.xlane.xlu0 %3053
    %v3055 = vsel %vm265, %v2928, -inf
    %3056 = vmax.xlane.f32.xlu0 %v3055
    %v3057 = vpop.xlane.xlu0 %3056
    %v3058 = vsel %vm265, %v2929, -inf
    %3059 = vmax.xlane.f32.xlu0 %v3058
    %v3060 = vpop.xlane.xlu0 %3059
    %v3061 = vsel %vm265, %v2930, -inf
    %3062 = vmax.xlane.f32.xlu0 %v3061
    %v3063 = vpop.xlane.xlu0 %3062
    %v3064 = vsel %vm265, %v2931, -inf
    %3065 = vmax.xlane.f32.xlu0 %v3064
    %v3066 = vpop.xlane.xlu0 %3065
    %v3067 = vsel %vm265, %v2932, -inf
    %3068 = vmax.xlane.f32.xlu0 %v3067
    %v3069 = vpop.xlane.xlu0 %3068
    %v3070 = vsub.f32 %v2925, %v3048
    %v3071 = vsub.f32 %v2926, %v3051
    %v3072 = vsub.f32 %v2927, %v3054
    %v3073 = vsub.f32 %v2928, %v3057
    %v3074 = vsub.f32 %v2929, %v3060
    %v3075 = vsub.f32 %v2930, %v3063
    %v3076 = vsub.f32 %v2931, %v3066
    %v3077 = vsub.f32 %v2932, %v3069
    %v3078 = vpack.c.bf16 %v3071, %v3070
    %v3079 = vpack.c.bf16 %v3073, %v3072
    %v3080 = vpack.c.bf16 %v3075, %v3074
    %v3081 = vpack.c.bf16 %v3077, %v3076
    %v3083 = vmul.bf16 %v3078, 1069105081
    %v3084 = vpow.bf16.pop %v3083
    %v3086 = vmul.bf16 %v3079, 1069105081
    %v3087 = vpow.bf16.pop %v3086
    %v3089 = vmul.bf16 %v3080, 1069105081
    %v3090 = vpow.bf16.pop %v3089
    %v3092 = vmul.bf16 %v3081, 1069105081
    %v3093 = vpow.bf16.pop %v3092
    %v3094 = vunpack.c.l.bf16 %v3084
    %v3095 = vunpack.c.h.bf16 %v3084
    %v3096 = vunpack.c.l.bf16 %v3087
    %v3097 = vunpack.c.h.bf16 %v3087
    %v3098 = vunpack.c.l.bf16 %v3090
    %v3099 = vunpack.c.h.bf16 %v3090
    %v3100 = vunpack.c.l.bf16 %v3093
    %v3101 = vunpack.c.h.bf16 %v3093
    %v3102 = vsel %vm265, %v3094, 0.0
    %3103 = vadd.xlane.f32.xlu0 %v3102
    %v3104 = vpop.xlane.xlu0 %3103
    %v3105 = vsel %vm265, %v3095, 0.0
    %3106 = vadd.xlane.f32.xlu0 %v3105
    %v3107 = vpop.xlane.xlu0 %3106
    %v3108 = vsel %vm265, %v3096, 0.0
    %3109 = vadd.xlane.f32.xlu0 %v3108
    %v3110 = vpop.xlane.xlu0 %3109
    %v3111 = vsel %vm265, %v3097, 0.0
    %3112 = vadd.xlane.f32.xlu0 %v3111
    %v3113 = vpop.xlane.xlu0 %3112
    %v3114 = vsel %vm265, %v3098, 0.0
    %3115 = vadd.xlane.f32.xlu0 %v3114
    %v3116 = vpop.xlane.xlu0 %3115
    %v3117 = vsel %vm265, %v3099, 0.0
    %3118 = vadd.xlane.f32.xlu0 %v3117
    %v3119 = vpop.xlane.xlu0 %3118
    %v3120 = vsel %vm265, %v3100, 0.0
    %3121 = vadd.xlane.f32.xlu0 %v3120
    %v3122 = vpop.xlane.xlu0 %3121
    %v3123 = vsel %vm265, %v3101, 0.0
    %3124 = vadd.xlane.f32.xlu0 %v3123
    %v3125 = vpop.xlane.xlu0 %3124
    %v3126 = vrcp.pop %v3104
    %v3127 = vrcp.pop %v3107
    %v3128 = vrcp.pop %v3110
    %v3129 = vrcp.pop %v3113
    %v3130 = vrcp.pop %v3116
    %v3131 = vrcp.pop %v3119
    %v3132 = vrcp.pop %v3122
    %v3133 = vrcp.pop %v3125
    %v3134 = vmul.f32 %v3094, %v3126
    %v3135 = vmul.f32 %v3095, %v3127
    %v3136 = vmul.f32 %v3096, %v3128
    %v3137 = vmul.f32 %v3097, %v3129
    %v3138 = vmul.f32 %v3098, %v3130
    %v3139 = vmul.f32 %v3099, %v3131
    %v3140 = vmul.f32 %v3100, %v3132
    %v3141 = vmul.f32 %v3101, %v3133
    %v3142 = vpack.c.bf16 %v3135, %v3134
    %v3143 = vpack.c.bf16 %v3137, %v3136
    %v3144 = vpack.c.bf16 %v3139, %v3138
    %v3145 = vpack.c.bf16 %v3141, %v3140
    %v3146 = vsel %vm265, %v3038, -inf
    %3147 = vmax.xlane.f32.xlu0 %v3146
    %v3148 = vpop.xlane.xlu0 %3147
    %v3149 = vsel %vm265, %v3039, -inf
    %3150 = vmax.xlane.f32.xlu0 %v3149
    %v3151 = vpop.xlane.xlu0 %3150
    %v3152 = vsel %vm265, %v3040, -inf
    %3153 = vmax.xlane.f32.xlu0 %v3152
    %v3154 = vpop.xlane.xlu0 %3153
    %v3155 = vsel %vm265, %v3041, -inf
    %3156 = vmax.xlane.f32.xlu0 %v3155
    %v3157 = vpop.xlane.xlu0 %3156
    %v3158 = vsel %vm265, %v3042, -inf
    %3159 = vmax.xlane.f32.xlu0 %v3158
    %v3160 = vpop.xlane.xlu0 %3159
    %v3161 = vsel %vm265, %v3043, -inf
    %3162 = vmax.xlane.f32.xlu0 %v3161
    %v3163 = vpop.xlane.xlu0 %3162
    %v3164 = vsel %vm265, %v3044, -inf
    %3165 = vmax.xlane.f32.xlu0 %v3164
    %v3166 = vpop.xlane.xlu0 %3165
    %v3167 = vsel %vm265, %v3045, -inf
    %3168 = vmax.xlane.f32.xlu0 %v3167
    %v3169 = vpop.xlane.xlu0 %3168
    %v3170 = vsub.f32 %v3038, %v3148
    %v3171 = vsub.f32 %v3039, %v3151
    %v3172 = vsub.f32 %v3040, %v3154
    %v3173 = vsub.f32 %v3041, %v3157
    %v3174 = vsub.f32 %v3042, %v3160
    %v3175 = vsub.f32 %v3043, %v3163
    %v3176 = vsub.f32 %v3044, %v3166
    %v3177 = vsub.f32 %v3045, %v3169
    %v3178 = vpack.c.bf16 %v3171, %v3170
    %v3179 = vpack.c.bf16 %v3173, %v3172
    %v3180 = vpack.c.bf16 %v3175, %v3174
    %v3181 = vpack.c.bf16 %v3177, %v3176
    %v3183 = vmul.bf16 %v3178, 1069105081
    %v3184 = vpow.bf16.pop %v3183
    %v3186 = vmul.bf16 %v3179, 1069105081
    %v3187 = vpow.bf16.pop %v3186
    %v3189 = vmul.bf16 %v3180, 1069105081
    %v3190 = vpow.bf16.pop %v3189
    %v3192 = vmul.bf16 %v3181, 1069105081
    %v3193 = vpow.bf16.pop %v3192
    %v3194 = vunpack.c.l.bf16 %v3184
    %v3195 = vunpack.c.h.bf16 %v3184
    %v3196 = vunpack.c.l.bf16 %v3187
    %v3197 = vunpack.c.h.bf16 %v3187
    %v3198 = vunpack.c.l.bf16 %v3190
    %v3199 = vunpack.c.h.bf16 %v3190
    %v3200 = vunpack.c.l.bf16 %v3193
    %v3201 = vunpack.c.h.bf16 %v3193
    %v3202 = vsel %vm265, %v3194, 0.0
    %3203 = vadd.xlane.f32.xlu0 %v3202
    %v3204 = vpop.xlane.xlu0 %3203
    %v3205 = vsel %vm265, %v3195, 0.0
    %3206 = vadd.xlane.f32.xlu0 %v3205
    %v3207 = vpop.xlane.xlu0 %3206
    %v3208 = vsel %vm265, %v3196, 0.0
    %3209 = vadd.xlane.f32.xlu0 %v3208
    %v3210 = vpop.xlane.xlu0 %3209
    %v3211 = vsel %vm265, %v3197, 0.0
    %3212 = vadd.xlane.f32.xlu0 %v3211
    %v3213 = vpop.xlane.xlu0 %3212
    %v3214 = vsel %vm265, %v3198, 0.0
    %3215 = vadd.xlane.f32.xlu0 %v3214
    %v3216 = vpop.xlane.xlu0 %3215
    %v3217 = vsel %vm265, %v3199, 0.0
    %3218 = vadd.xlane.f32.xlu0 %v3217
    %v3219 = vpop.xlane.xlu0 %3218
    %v3220 = vsel %vm265, %v3200, 0.0
    %3221 = vadd.xlane.f32.xlu0 %v3220
    %v3222 = vpop.xlane.xlu0 %3221
    %v3223 = vsel %vm265, %v3201, 0.0
    %3224 = vadd.xlane.f32.xlu0 %v3223
    %v3225 = vpop.xlane.xlu0 %3224
    %v3226 = vrcp.pop %v3204
    %v3227 = vrcp.pop %v3207
    %v3228 = vrcp.pop %v3210
    %v3229 = vrcp.pop %v3213
    %v3230 = vrcp.pop %v3216
    %v3231 = vrcp.pop %v3219
    %v3232 = vrcp.pop %v3222
    %v3233 = vrcp.pop %v3225
    %v3234 = vmul.f32 %v3194, %v3226
    %v3235 = vmul.f32 %v3195, %v3227
    %v3236 = vmul.f32 %v3196, %v3228
    %v3237 = vmul.f32 %v3197, %v3229
    %v3238 = vmul.f32 %v3198, %v3230
    %v3239 = vmul.f32 %v3199, %v3231
    %v3240 = vmul.f32 %v3200, %v3232
    %v3241 = vmul.f32 %v3201, %v3233
    %v3242 = vpack.c.bf16 %v3235, %v3234
    %v3243 = vpack.c.bf16 %v3237, %v3236
    %v3244 = vpack.c.bf16 %v3239, %v3238
    %v3245 = vpack.c.bf16 %v3241, %v3240
    %3246 = vrot.lane.b32.xlu0 %v2634, 96
    %v3247 = vpop.permute.xlu0 %3246
    %3248 = vrot.lane.b32.xlu0 %v2635, 96
    %v3249 = vpop.permute.xlu0 %3248
    %3250 = vrot.lane.b32.xlu0 %v2636, 96
    %v3251 = vpop.permute.xlu0 %3250
    %3252 = vrot.lane.b32.xlu0 %v2637, 96
    %v3253 = vpop.permute.xlu0 %3252
    %v3259 = vsel %vm265, %v3142, 0
    %v3262 = vsel %vm265, %v3143, 0
    %v3265 = vsel %vm265, %v3144, 0
    %v3268 = vsel %vm265, %v3145, 0
    %3270 = vmatprep.subr.bf16.mxu0 0
    %3271 = vmatpush1.bf16.msra.mxu0 0
    %3272 = vmatprep.subr.bf16.mxu0 0
    %3273 = vmatpush1.bf16.msra.mxu0 0
    %3274 = vmatprep.subr.bf16.mxu0 0
    %3275 = vmatpush1.bf16.msra.mxu0 0
    %3276 = vmatprep.subr.bf16.mxu0 0
    %3277 = vmatpush1.bf16.msra.mxu0 0
    %3278 = vmatprep.subr.bf16.mxu0 0
    %3279 = vmatpush1.bf16.msra.mxu0 %v3253
    %3280 = vmatprep.subr.bf16.mxu0 0
    %3281 = vmatpush1.bf16.msra.mxu0 %v3251
    %3282 = vmatprep.subr.bf16.mxu0 0
    %3283 = vmatpush1.bf16.msra.mxu0 %v3249
    %3284 = vmatprep.subr.bf16.mxu0 0
    %3285 = vmatpush1.bf16.msra.mxu0 %v3247
    %3286 = vmatprep.subr.bf16.mxu0 0
    %3287 = vmatpush2.bf16.msra.mxu0 0
    %3288 = vmatprep.subr.bf16.mxu0 0
    %3289 = vmatpush2.bf16.msra.mxu0 0
    %3290 = vmatprep.subr.bf16.mxu0 0
    %3291 = vmatpush2.bf16.msra.mxu0 0
    %3292 = vmatprep.subr.bf16.mxu0 0
    %3293 = vmatpush2.bf16.msra.mxu0 0
    %3294 = vmatprep.subr.bf16.mxu0 0
    %3295 = vmatpush2.bf16.msra.mxu0 0
    %3296 = vmatprep.subr.bf16.mxu0 0
    %3297 = vmatpush2.bf16.msra.mxu0 0
    %3298 = vmatprep.subr.bf16.mxu0 0
    %3299 = vmatpush2.bf16.msra.mxu0 0
    %3300 = vmatprep.subr.bf16.mxu0 0
    %3301 = vmatpush2.bf16.msra.mxu0 0
    %3302 = vmatprep.mubr.bf16.mxu0 0
    %3303 = vmatmul.mubr.bf16.gmra.mxu0 %v3259
    %v3304 = vpop.f32.mrf.mxu0
    %v3305 = vadd.f32 0.0, %v3304
    %v3306 = vpop.f32.mrf.mxu0
    %v3307 = vpop.f32.mrf.mxu0
    %v3308 = vadd.f32 0.0, %v3307
    %v3309 = vpop.f32.mrf.mxu0
    %3310 = vmatprep.mubr.bf16.mxu0 0
    %3311 = vmatmul.mubr.bf16.gmra.mxu0 %v3262
    %v3312 = vpop.f32.mrf.mxu0
    %v3313 = vadd.f32 0.0, %v3312
    %v3314 = vpop.f32.mrf.mxu0
    %v3315 = vpop.f32.mrf.mxu0
    %v3316 = vadd.f32 0.0, %v3315
    %v3317 = vpop.f32.mrf.mxu0
    %3318 = vmatprep.mubr.bf16.mxu0 0
    %3319 = vmatmul.mubr.bf16.gmra.mxu0 %v3265
    %v3320 = vpop.f32.mrf.mxu0
    %v3321 = vadd.f32 0.0, %v3320
    %v3322 = vpop.f32.mrf.mxu0
    %v3323 = vpop.f32.mrf.mxu0
    %v3324 = vadd.f32 0.0, %v3323
    %v3325 = vpop.f32.mrf.mxu0
    %3326 = vmatprep.mubr.bf16.mxu0 0
    %3327 = vmatmul.mubr.bf16.gmra.mxu0 %v3268
    %v3328 = vpop.f32.mrf.mxu0
    %v3329 = vadd.f32 0.0, %v3328
    %v3330 = vpop.f32.mrf.mxu0
    %v3331 = vpop.f32.mrf.mxu0
    %v3332 = vadd.f32 0.0, %v3331
    %v3333 = vpop.f32.mrf.mxu0
    %3334 = vdwg.mxu0
    %3335 = vrot.lane.b32.xlu0 %v2735, 96
    %v3336 = vpop.permute.xlu0 %3335
    %3337 = vrot.lane.b32.xlu0 %v2736, 96
    %v3338 = vpop.permute.xlu0 %3337
    %3339 = vrot.lane.b32.xlu0 %v2737, 96
    %v3340 = vpop.permute.xlu0 %3339
    %3341 = vrot.lane.b32.xlu0 %v2738, 96
    %v3342 = vpop.permute.xlu0 %3341
    %v3348 = vsel %vm265, %v3242, 0
    %v3351 = vsel %vm265, %v3243, 0
    %v3354 = vsel %vm265, %v3244, 0
    %v3357 = vsel %vm265, %v3245, 0
    %3359 = vmatprep.subr.bf16.mxu0 0
    %3360 = vmatpush1.bf16.msra.mxu0 0
    %3361 = vmatprep.subr.bf16.mxu0 0
    %3362 = vmatpush1.bf16.msra.mxu0 0
    %3363 = vmatprep.subr.bf16.mxu0 0
    %3364 = vmatpush1.bf16.msra.mxu0 0
    %3365 = vmatprep.subr.bf16.mxu0 0
    %3366 = vmatpush1.bf16.msra.mxu0 0
    %3367 = vmatprep.subr.bf16.mxu0 0
    %3368 = vmatpush1.bf16.msra.mxu0 %v3342
    %3369 = vmatprep.subr.bf16.mxu0 0
    %3370 = vmatpush1.bf16.msra.mxu0 %v3340
    %3371 = vmatprep.subr.bf16.mxu0 0
    %3372 = vmatpush1.bf16.msra.mxu0 %v3338
    %3373 = vmatprep.subr.bf16.mxu0 0
    %3374 = vmatpush1.bf16.msra.mxu0 %v3336
    %3375 = vmatprep.subr.bf16.mxu0 0
    %3376 = vmatpush2.bf16.msra.mxu0 0
    %3377 = vmatprep.subr.bf16.mxu0 0
    %3378 = vmatpush2.bf16.msra.mxu0 0
    %3379 = vmatprep.subr.bf16.mxu0 0
    %3380 = vmatpush2.bf16.msra.mxu0 0
    %3381 = vmatprep.subr.bf16.mxu0 0
    %3382 = vmatpush2.bf16.msra.mxu0 0
    %3383 = vmatprep.subr.bf16.mxu0 0
    %3384 = vmatpush2.bf16.msra.mxu0 0
    %3385 = vmatprep.subr.bf16.mxu0 0
    %3386 = vmatpush2.bf16.msra.mxu0 0
    %3387 = vmatprep.subr.bf16.mxu0 0
    %3388 = vmatpush2.bf16.msra.mxu0 0
    %3389 = vmatprep.subr.bf16.mxu0 0
    %3390 = vmatpush2.bf16.msra.mxu0 0
    %3391 = vmatprep.mubr.bf16.mxu0 0
    %3392 = vmatmul.mubr.bf16.gmra.mxu0 %v3348
    %v3393 = vpop.f32.mrf.mxu0
    %v3394 = vadd.f32 0.0, %v3393
    %v3395 = vpop.f32.mrf.mxu0
    %v3396 = vpop.f32.mrf.mxu0
    %v3397 = vadd.f32 0.0, %v3396
    %v3398 = vpop.f32.mrf.mxu0
    %3399 = vmatprep.mubr.bf16.mxu0 0
    %3400 = vmatmul.mubr.bf16.gmra.mxu0 %v3351
    %v3401 = vpop.f32.mrf.mxu0
    %v3402 = vadd.f32 0.0, %v3401
    %v3403 = vpop.f32.mrf.mxu0
    %v3404 = vpop.f32.mrf.mxu0
    %v3405 = vadd.f32 0.0, %v3404
    %v3406 = vpop.f32.mrf.mxu0
    %3407 = vmatprep.mubr.bf16.mxu0 0
    %3408 = vmatmul.mubr.bf16.gmra.mxu0 %v3354
    %v3409 = vpop.f32.mrf.mxu0
    %v3410 = vadd.f32 0.0, %v3409
    %v3411 = vpop.f32.mrf.mxu0
    %v3412 = vpop.f32.mrf.mxu0
    %v3413 = vadd.f32 0.0, %v3412
    %v3414 = vpop.f32.mrf.mxu0
    %3415 = vmatprep.mubr.bf16.mxu0 0
    %3416 = vmatmul.mubr.bf16.gmra.mxu0 %v3357
    %v3417 = vpop.f32.mrf.mxu0
    %v3418 = vadd.f32 0.0, %v3417
    %v3419 = vpop.f32.mrf.mxu0
    %v3420 = vpop.f32.mrf.mxu0
    %v3421 = vadd.f32 0.0, %v3420
    %v3422 = vpop.f32.mrf.mxu0
    %3423 = vdwg.mxu0
    %3424 = vrot.lane.b32.xlu0 %v2175, 64
    %v3425 = vpop.permute.xlu0 %3424
    %3426 = vrot.lane.b32.xlu0 %v2176, 64
    %v3427 = vpop.permute.xlu0 %3426
    %3428 = vrot.lane.b32.xlu0 %v2177, 64
    %v3429 = vpop.permute.xlu0 %3428
    %3430 = vrot.lane.b32.xlu0 %v2178, 64
    %v3431 = vpop.permute.xlu0 %3430
    %3432 = vrot.lane.b32.xlu0 %v2195, 64
    %v3433 = vpop.permute.xlu0 %3432
    %3434 = vrot.lane.b32.xlu0 %v2196, 64
    %v3435 = vpop.permute.xlu0 %3434
    %3436 = vrot.lane.b32.xlu0 %v2197, 64
    %v3437 = vpop.permute.xlu0 %3436
    %3438 = vrot.lane.b32.xlu0 %v2198, 64
    %v3439 = vpop.permute.xlu0 %3438
    %v3441 = vsel %vm2199, %v3425, 0
    %v3444 = vsel %vm2199, %v3427, 0
    %v3447 = vsel %vm2199, %v3429, 0
    %v3450 = vsel %vm2199, %v3431, 0
    %v3453 = vsel %vm2199, %v3433, 0
    %v3456 = vsel %vm2199, %v3435, 0
    %v3459 = vsel %vm2199, %v3437, 0
    %v3462 = vsel %vm2199, %v3439, 0
    %3464 = vmatprep.subr.bf16.mxu0 0
    %3465 = vmatpush1.bf16.xpose.msra.mxu0 0
    %3466 = vmatprep.subr.bf16.mxu0 0
    %3467 = vmatpush1.bf16.xpose.msra.mxu0 0
    %3468 = vmatprep.subr.bf16.mxu0 0
    %3469 = vmatpush1.bf16.xpose.msra.mxu0 0
    %3470 = vmatprep.subr.bf16.mxu0 0
    %3471 = vmatpush1.bf16.xpose.msra.mxu0 0
    %3472 = vmatprep.subr.bf16.mxu0 0
    %3473 = vmatpush1.bf16.xpose.msra.mxu0 %v3462
    %3474 = vmatprep.subr.bf16.mxu0 0
    %3475 = vmatpush1.bf16.xpose.msra.mxu0 %v3459
    %3476 = vmatprep.subr.bf16.mxu0 0
    %3477 = vmatpush1.bf16.xpose.msra.mxu0 %v3456
    %3478 = vmatprep.subr.bf16.mxu0 0
    %3479 = vmatpush1.bf16.xpose.msra.mxu0 %v3453
    %3480 = vmatprep.subr.bf16.mxu0 0
    %3481 = vmatpush2.bf16.xpose.msra.mxu0 0
    %3482 = vmatprep.subr.bf16.mxu0 0
    %3483 = vmatpush2.bf16.xpose.msra.mxu0 0
    %3484 = vmatprep.subr.bf16.mxu0 0
    %3485 = vmatpush2.bf16.xpose.msra.mxu0 0
    %3486 = vmatprep.subr.bf16.mxu0 0
    %3487 = vmatpush2.bf16.xpose.msra.mxu0 0
    %3488 = vmatprep.subr.bf16.mxu0 0
    %3489 = vmatpush2.bf16.xpose.msra.mxu0 0
    %3490 = vmatprep.subr.bf16.mxu0 0
    %3491 = vmatpush2.bf16.xpose.msra.mxu0 0
    %3492 = vmatprep.subr.bf16.mxu0 0
    %3493 = vmatpush2.bf16.xpose.msra.mxu0 0
    %3494 = vmatprep.subr.bf16.mxu0 0
    %3495 = vmatpush2.bf16.xpose.msra.mxu0 0
    %3496 = vmatprep.mubr.bf16.mxu0 0
    %3497 = vmatmul.mubr.bf16.gmra.mxu0 %v3441
    %v3498 = vpop.f32.mrf.mxu0
    %v3499 = vadd.f32 0.0, %v3498
    %v3500 = vpop.f32.mrf.mxu0
    %v3501 = vpop.f32.mrf.mxu0
    %v3502 = vadd.f32 0.0, %v3501
    %v3503 = vpop.f32.mrf.mxu0
    %3504 = vmatprep.mubr.bf16.mxu0 0
    %3505 = vmatmul.mubr.bf16.gmra.mxu0 %v3444
    %v3506 = vpop.f32.mrf.mxu0
    %v3507 = vadd.f32 0.0, %v3506
    %v3508 = vpop.f32.mrf.mxu0
    %v3509 = vpop.f32.mrf.mxu0
    %v3510 = vadd.f32 0.0, %v3509
    %v3511 = vpop.f32.mrf.mxu0
    %3512 = vmatprep.mubr.bf16.mxu0 0
    %3513 = vmatmul.mubr.bf16.gmra.mxu0 %v3447
    %v3514 = vpop.f32.mrf.mxu0
    %v3515 = vadd.f32 0.0, %v3514
    %v3516 = vpop.f32.mrf.mxu0
    %v3517 = vpop.f32.mrf.mxu0
    %v3518 = vadd.f32 0.0, %v3517
    %v3519 = vpop.f32.mrf.mxu0
    %3520 = vmatprep.mubr.bf16.mxu0 0
    %3521 = vmatmul.mubr.bf16.gmra.mxu0 %v3450
    %v3522 = vpop.f32.mrf.mxu0
    %v3523 = vadd.f32 0.0, %v3522
    %v3524 = vpop.f32.mrf.mxu0
    %v3525 = vpop.f32.mrf.mxu0
    %v3526 = vadd.f32 0.0, %v3525
    %v3527 = vpop.f32.mrf.mxu0
    %3528 = vdwg.mxu0
    %v3529 = vmul.f32 %v3499, 0.17677669
    %v3530 = vmul.f32 %v3502, 0.17677669
    %v3531 = vmul.f32 %v3507, 0.17677669
    %v3532 = vmul.f32 %v3510, 0.17677669
    %v3533 = vmul.f32 %v3515, 0.17677669
    %v3534 = vmul.f32 %v3518, 0.17677669
    %v3535 = vmul.f32 %v3523, 0.17677669
    %v3536 = vmul.f32 %v3526, 0.17677669
    %3537 = vrot.lane.b32.xlu0 %v2305, 64
    %v3538 = vpop.permute.xlu0 %3537
    %3539 = vrot.lane.b32.xlu0 %v2306, 64
    %v3540 = vpop.permute.xlu0 %3539
    %3541 = vrot.lane.b32.xlu0 %v2307, 64
    %v3542 = vpop.permute.xlu0 %3541
    %3543 = vrot.lane.b32.xlu0 %v2308, 64
    %v3544 = vpop.permute.xlu0 %3543
    %3545 = vrot.lane.b32.xlu0 %v2317, 64
    %v3546 = vpop.permute.xlu0 %3545
    %3547 = vrot.lane.b32.xlu0 %v2318, 64
    %v3548 = vpop.permute.xlu0 %3547
    %3549 = vrot.lane.b32.xlu0 %v2319, 64
    %v3550 = vpop.permute.xlu0 %3549
    %3551 = vrot.lane.b32.xlu0 %v2320, 64
    %v3552 = vpop.permute.xlu0 %3551
    %v3554 = vsel %vm2199, %v3538, 0
    %v3557 = vsel %vm2199, %v3540, 0
    %v3560 = vsel %vm2199, %v3542, 0
    %v3563 = vsel %vm2199, %v3544, 0
    %v3566 = vsel %vm2199, %v3546, 0
    %v3569 = vsel %vm2199, %v3548, 0
    %v3572 = vsel %vm2199, %v3550, 0
    %v3575 = vsel %vm2199, %v3552, 0
    %3577 = vmatprep.subr.bf16.mxu0 0
    %3578 = vmatpush1.bf16.xpose.msra.mxu0 0
    %3579 = vmatprep.subr.bf16.mxu0 0
    %3580 = vmatpush1.bf16.xpose.msra.mxu0 0
    %3581 = vmatprep.subr.bf16.mxu0 0
    %3582 = vmatpush1.bf16.xpose.msra.mxu0 0
    %3583 = vmatprep.subr.bf16.mxu0 0
    %3584 = vmatpush1.bf16.xpose.msra.mxu0 0
    %3585 = vmatprep.subr.bf16.mxu0 0
    %3586 = vmatpush1.bf16.xpose.msra.mxu0 %v3575
    %3587 = vmatprep.subr.bf16.mxu0 0
    %3588 = vmatpush1.bf16.xpose.msra.mxu0 %v3572
    %3589 = vmatprep.subr.bf16.mxu0 0
    %3590 = vmatpush1.bf16.xpose.msra.mxu0 %v3569
    %3591 = vmatprep.subr.bf16.mxu0 0
    %3592 = vmatpush1.bf16.xpose.msra.mxu0 %v3566
    %3593 = vmatprep.subr.bf16.mxu0 0
    %3594 = vmatpush2.bf16.xpose.msra.mxu0 0
    %3595 = vmatprep.subr.bf16.mxu0 0
    %3596 = vmatpush2.bf16.xpose.msra.mxu0 0
    %3597 = vmatprep.subr.bf16.mxu0 0
    %3598 = vmatpush2.bf16.xpose.msra.mxu0 0
    %3599 = vmatprep.subr.bf16.mxu0 0
    %3600 = vmatpush2.bf16.xpose.msra.mxu0 0
    %3601 = vmatprep.subr.bf16.mxu0 0
    %3602 = vmatpush2.bf16.xpose.msra.mxu0 0
    %3603 = vmatprep.subr.bf16.mxu0 0
    %3604 = vmatpush2.bf16.xpose.msra.mxu0 0
    %3605 = vmatprep.subr.bf16.mxu0 0
    %3606 = vmatpush2.bf16.xpose.msra.mxu0 0
    %3607 = vmatprep.subr.bf16.mxu0 0
    %3608 = vmatpush2.bf16.xpose.msra.mxu0 0
    %3609 = vmatprep.mubr.bf16.mxu0 0
    %3610 = vmatmul.mubr.bf16.gmra.mxu0 %v3554
    %v3611 = vpop.f32.mrf.mxu0
    %v3612 = vadd.f32 0.0, %v3611
    %v3613 = vpop.f32.mrf.mxu0
    %v3614 = vpop.f32.mrf.mxu0
    %v3615 = vadd.f32 0.0, %v3614
    %v3616 = vpop.f32.mrf.mxu0
    %3617 = vmatprep.mubr.bf16.mxu0 0
    %3618 = vmatmul.mubr.bf16.gmra.mxu0 %v3557
    %v3619 = vpop.f32.mrf.mxu0
    %v3620 = vadd.f32 0.0, %v3619
    %v3621 = vpop.f32.mrf.mxu0
    %v3622 = vpop.f32.mrf.mxu0
    %v3623 = vadd.f32 0.0, %v3622
    %v3624 = vpop.f32.mrf.mxu0
    %3625 = vmatprep.mubr.bf16.mxu0 0
    %3626 = vmatmul.mubr.bf16.gmra.mxu0 %v3560
    %v3627 = vpop.f32.mrf.mxu0
    %v3628 = vadd.f32 0.0, %v3627
    %v3629 = vpop.f32.mrf.mxu0
    %v3630 = vpop.f32.mrf.mxu0
    %v3631 = vadd.f32 0.0, %v3630
    %v3632 = vpop.f32.mrf.mxu0
    %3633 = vmatprep.mubr.bf16.mxu0 0
    %3634 = vmatmul.mubr.bf16.gmra.mxu0 %v3563
    %v3635 = vpop.f32.mrf.mxu0
    %v3636 = vadd.f32 0.0, %v3635
    %v3637 = vpop.f32.mrf.mxu0
    %v3638 = vpop.f32.mrf.mxu0
    %v3639 = vadd.f32 0.0, %v3638
    %v3640 = vpop.f32.mrf.mxu0
    %3641 = vdwg.mxu0
    %v3642 = vmul.f32 %v3612, 0.17677669
    %v3643 = vmul.f32 %v3615, 0.17677669
    %v3644 = vmul.f32 %v3620, 0.17677669
    %v3645 = vmul.f32 %v3623, 0.17677669
    %v3646 = vmul.f32 %v3628, 0.17677669
    %v3647 = vmul.f32 %v3631, 0.17677669
    %v3648 = vmul.f32 %v3636, 0.17677669
    %v3649 = vmul.f32 %v3639, 0.17677669
    %v3650 = vsel %vm265, %v3529, -inf
    %3651 = vmax.xlane.f32.xlu0 %v3650
    %v3652 = vpop.xlane.xlu0 %3651
    %v3653 = vsel %vm265, %v3530, -inf
    %3654 = vmax.xlane.f32.xlu0 %v3653
    %v3655 = vpop.xlane.xlu0 %3654
    %v3656 = vsel %vm265, %v3531, -inf
    %3657 = vmax.xlane.f32.xlu0 %v3656
    %v3658 = vpop.xlane.xlu0 %3657
    %v3659 = vsel %vm265, %v3532, -inf
    %3660 = vmax.xlane.f32.xlu0 %v3659
    %v3661 = vpop.xlane.xlu0 %3660
    %v3662 = vsel %vm265, %v3533, -inf
    %3663 = vmax.xlane.f32.xlu0 %v3662
    %v3664 = vpop.xlane.xlu0 %3663
    %v3665 = vsel %vm265, %v3534, -inf
    %3666 = vmax.xlane.f32.xlu0 %v3665
    %v3667 = vpop.xlane.xlu0 %3666
    %v3668 = vsel %vm265, %v3535, -inf
    %3669 = vmax.xlane.f32.xlu0 %v3668
    %v3670 = vpop.xlane.xlu0 %3669
    %v3671 = vsel %vm265, %v3536, -inf
    %3672 = vmax.xlane.f32.xlu0 %v3671
    %v3673 = vpop.xlane.xlu0 %3672
    %v3674 = vsub.f32 %v3529, %v3652
    %v3675 = vsub.f32 %v3530, %v3655
    %v3676 = vsub.f32 %v3531, %v3658
    %v3677 = vsub.f32 %v3532, %v3661
    %v3678 = vsub.f32 %v3533, %v3664
    %v3679 = vsub.f32 %v3534, %v3667
    %v3680 = vsub.f32 %v3535, %v3670
    %v3681 = vsub.f32 %v3536, %v3673
    %v3682 = vpack.c.bf16 %v3675, %v3674
    %v3683 = vpack.c.bf16 %v3677, %v3676
    %v3684 = vpack.c.bf16 %v3679, %v3678
    %v3685 = vpack.c.bf16 %v3681, %v3680
    %v3687 = vmul.bf16 %v3682, 1069105081
    %v3688 = vpow.bf16.pop %v3687
    %v3690 = vmul.bf16 %v3683, 1069105081
    %v3691 = vpow.bf16.pop %v3690
    %v3693 = vmul.bf16 %v3684, 1069105081
    %v3694 = vpow.bf16.pop %v3693
    %v3696 = vmul.bf16 %v3685, 1069105081
    %v3697 = vpow.bf16.pop %v3696
    %v3698 = vunpack.c.l.bf16 %v3688
    %v3699 = vunpack.c.h.bf16 %v3688
    %v3700 = vunpack.c.l.bf16 %v3691
    %v3701 = vunpack.c.h.bf16 %v3691
    %v3702 = vunpack.c.l.bf16 %v3694
    %v3703 = vunpack.c.h.bf16 %v3694
    %v3704 = vunpack.c.l.bf16 %v3697
    %v3705 = vunpack.c.h.bf16 %v3697
    %v3706 = vsel %vm265, %v3698, 0.0
    %3707 = vadd.xlane.f32.xlu0 %v3706
    %v3708 = vpop.xlane.xlu0 %3707
    %v3709 = vsel %vm265, %v3699, 0.0
    %3710 = vadd.xlane.f32.xlu0 %v3709
    %v3711 = vpop.xlane.xlu0 %3710
    %v3712 = vsel %vm265, %v3700, 0.0
    %3713 = vadd.xlane.f32.xlu0 %v3712
    %v3714 = vpop.xlane.xlu0 %3713
    %v3715 = vsel %vm265, %v3701, 0.0
    %3716 = vadd.xlane.f32.xlu0 %v3715
    %v3717 = vpop.xlane.xlu0 %3716
    %v3718 = vsel %vm265, %v3702, 0.0
    %3719 = vadd.xlane.f32.xlu0 %v3718
    %v3720 = vpop.xlane.xlu0 %3719
    %v3721 = vsel %vm265, %v3703, 0.0
    %3722 = vadd.xlane.f32.xlu0 %v3721
    %v3723 = vpop.xlane.xlu0 %3722
    %v3724 = vsel %vm265, %v3704, 0.0
    %3725 = vadd.xlane.f32.xlu0 %v3724
    %v3726 = vpop.xlane.xlu0 %3725
    %v3727 = vsel %vm265, %v3705, 0.0
    %3728 = vadd.xlane.f32.xlu0 %v3727
    %v3729 = vpop.xlane.xlu0 %3728
    %v3730 = vrcp.pop %v3708
    %v3731 = vrcp.pop %v3711
    %v3732 = vrcp.pop %v3714
    %v3733 = vrcp.pop %v3717
    %v3734 = vrcp.pop %v3720
    %v3735 = vrcp.pop %v3723
    %v3736 = vrcp.pop %v3726
    %v3737 = vrcp.pop %v3729
    %v3738 = vmul.f32 %v3698, %v3730
    %v3739 = vmul.f32 %v3699, %v3731
    %v3740 = vmul.f32 %v3700, %v3732
    %v3741 = vmul.f32 %v3701, %v3733
    %v3742 = vmul.f32 %v3702, %v3734
    %v3743 = vmul.f32 %v3703, %v3735
    %v3744 = vmul.f32 %v3704, %v3736
    %v3745 = vmul.f32 %v3705, %v3737
    %v3746 = vpack.c.bf16 %v3739, %v3738
    %v3747 = vpack.c.bf16 %v3741, %v3740
    %v3748 = vpack.c.bf16 %v3743, %v3742
    %v3749 = vpack.c.bf16 %v3745, %v3744
    %v3750 = vsel %vm265, %v3642, -inf
    %3751 = vmax.xlane.f32.xlu0 %v3750
    %v3752 = vpop.xlane.xlu0 %3751
    %v3753 = vsel %vm265, %v3643, -inf
    %3754 = vmax.xlane.f32.xlu0 %v3753
    %v3755 = vpop.xlane.xlu0 %3754
    %v3756 = vsel %vm265, %v3644, -inf
    %3757 = vmax.xlane.f32.xlu0 %v3756
    %v3758 = vpop.xlane.xlu0 %3757
    %v3759 = vsel %vm265, %v3645, -inf
    %3760 = vmax.xlane.f32.xlu0 %v3759
    %v3761 = vpop.xlane.xlu0 %3760
    %v3762 = vsel %vm265, %v3646, -inf
    %3763 = vmax.xlane.f32.xlu0 %v3762
    %v3764 = vpop.xlane.xlu0 %3763
    %v3765 = vsel %vm265, %v3647, -inf
    %3766 = vmax.xlane.f32.xlu0 %v3765
    %v3767 = vpop.xlane.xlu0 %3766
    %v3768 = vsel %vm265, %v3648, -inf
    %3769 = vmax.xlane.f32.xlu0 %v3768
    %v3770 = vpop.xlane.xlu0 %3769
    %v3771 = vsel %vm265, %v3649, -inf
    %3772 = vmax.xlane.f32.xlu0 %v3771
    %v3773 = vpop.xlane.xlu0 %3772
    %v3774 = vsub.f32 %v3642, %v3752
    %v3775 = vsub.f32 %v3643, %v3755
    %v3776 = vsub.f32 %v3644, %v3758
    %v3777 = vsub.f32 %v3645, %v3761
    %v3778 = vsub.f32 %v3646, %v3764
    %v3779 = vsub.f32 %v3647, %v3767
    %v3780 = vsub.f32 %v3648, %v3770
    %v3781 = vsub.f32 %v3649, %v3773
    %v3782 = vpack.c.bf16 %v3775, %v3774
    %v3783 = vpack.c.bf16 %v3777, %v3776
    %v3784 = vpack.c.bf16 %v3779, %v3778
    %v3785 = vpack.c.bf16 %v3781, %v3780
    %v3787 = vmul.bf16 %v3782, 1069105081
    %v3788 = vpow.bf16.pop %v3787
    %v3790 = vmul.bf16 %v3783, 1069105081
    %v3791 = vpow.bf16.pop %v3790
    %v3793 = vmul.bf16 %v3784, 1069105081
    %v3794 = vpow.bf16.pop %v3793
    %v3796 = vmul.bf16 %v3785, 1069105081
    %v3797 = vpow.bf16.pop %v3796
    %v3798 = vunpack.c.l.bf16 %v3788
    %v3799 = vunpack.c.h.bf16 %v3788
    %v3800 = vunpack.c.l.bf16 %v3791
    %v3801 = vunpack.c.h.bf16 %v3791
    %v3802 = vunpack.c.l.bf16 %v3794
    %v3803 = vunpack.c.h.bf16 %v3794
    %v3804 = vunpack.c.l.bf16 %v3797
    %v3805 = vunpack.c.h.bf16 %v3797
    %v3806 = vsel %vm265, %v3798, 0.0
    %3807 = vadd.xlane.f32.xlu0 %v3806
    %v3808 = vpop.xlane.xlu0 %3807
    %v3809 = vsel %vm265, %v3799, 0.0
    %3810 = vadd.xlane.f32.xlu0 %v3809
    %v3811 = vpop.xlane.xlu0 %3810
    %v3812 = vsel %vm265, %v3800, 0.0
    %3813 = vadd.xlane.f32.xlu0 %v3812
    %v3814 = vpop.xlane.xlu0 %3813
    %v3815 = vsel %vm265, %v3801, 0.0
    %3816 = vadd.xlane.f32.xlu0 %v3815
    %v3817 = vpop.xlane.xlu0 %3816
    %v3818 = vsel %vm265, %v3802, 0.0
    %3819 = vadd.xlane.f32.xlu0 %v3818
    %v3820 = vpop.xlane.xlu0 %3819
    %v3821 = vsel %vm265, %v3803, 0.0
    %3822 = vadd.xlane.f32.xlu0 %v3821
    %v3823 = vpop.xlane.xlu0 %3822
    %v3824 = vsel %vm265, %v3804, 0.0
    %3825 = vadd.xlane.f32.xlu0 %v3824
    %v3826 = vpop.xlane.xlu0 %3825
    %v3827 = vsel %vm265, %v3805, 0.0
    %3828 = vadd.xlane.f32.xlu0 %v3827
    %v3829 = vpop.xlane.xlu0 %3828
    %v3830 = vrcp.pop %v3808
    %v3831 = vrcp.pop %v3811
    %v3832 = vrcp.pop %v3814
    %v3833 = vrcp.pop %v3817
    %v3834 = vrcp.pop %v3820
    %v3835 = vrcp.pop %v3823
    %v3836 = vrcp.pop %v3826
    %v3837 = vrcp.pop %v3829
    %v3838 = vmul.f32 %v3798, %v3830
    %v3839 = vmul.f32 %v3799, %v3831
    %v3840 = vmul.f32 %v3800, %v3832
    %v3841 = vmul.f32 %v3801, %v3833
    %v3842 = vmul.f32 %v3802, %v3834
    %v3843 = vmul.f32 %v3803, %v3835
    %v3844 = vmul.f32 %v3804, %v3836
    %v3845 = vmul.f32 %v3805, %v3837
    %v3846 = vpack.c.bf16 %v3839, %v3838
    %v3847 = vpack.c.bf16 %v3841, %v3840
    %v3848 = vpack.c.bf16 %v3843, %v3842
    %v3849 = vpack.c.bf16 %v3845, %v3844
    %3850 = vrot.lane.b32.xlu0 %v2634, 64
    %v3851 = vpop.permute.xlu0 %3850
    %3852 = vrot.lane.b32.xlu0 %v2635, 64
    %v3853 = vpop.permute.xlu0 %3852
    %3854 = vrot.lane.b32.xlu0 %v2636, 64
    %v3855 = vpop.permute.xlu0 %3854
    %3856 = vrot.lane.b32.xlu0 %v2637, 64
    %v3857 = vpop.permute.xlu0 %3856
    %v3863 = vsel %vm265, %v3746, 0
    %v3866 = vsel %vm265, %v3747, 0
    %v3869 = vsel %vm265, %v3748, 0
    %v3872 = vsel %vm265, %v3749, 0
    %3874 = vmatprep.subr.bf16.mxu0 0
    %3875 = vmatpush1.bf16.msra.mxu0 0
    %3876 = vmatprep.subr.bf16.mxu0 0
    %3877 = vmatpush1.bf16.msra.mxu0 0
    %3878 = vmatprep.subr.bf16.mxu0 0
    %3879 = vmatpush1.bf16.msra.mxu0 0
    %3880 = vmatprep.subr.bf16.mxu0 0
    %3881 = vmatpush1.bf16.msra.mxu0 0
    %3882 = vmatprep.subr.bf16.mxu0 0
    %3883 = vmatpush1.bf16.msra.mxu0 %v3857
    %3884 = vmatprep.subr.bf16.mxu0 0
    %3885 = vmatpush1.bf16.msra.mxu0 %v3855
    %3886 = vmatprep.subr.bf16.mxu0 0
    %3887 = vmatpush1.bf16.msra.mxu0 %v3853
    %3888 = vmatprep.subr.bf16.mxu0 0
    %3889 = vmatpush1.bf16.msra.mxu0 %v3851
    %3890 = vmatprep.subr.bf16.mxu0 0
    %3891 = vmatpush2.bf16.msra.mxu0 0
    %3892 = vmatprep.subr.bf16.mxu0 0
    %3893 = vmatpush2.bf16.msra.mxu0 0
    %3894 = vmatprep.subr.bf16.mxu0 0
    %3895 = vmatpush2.bf16.msra.mxu0 0
    %3896 = vmatprep.subr.bf16.mxu0 0
    %3897 = vmatpush2.bf16.msra.mxu0 0
    %3898 = vmatprep.subr.bf16.mxu0 0
    %3899 = vmatpush2.bf16.msra.mxu0 0
    %3900 = vmatprep.subr.bf16.mxu0 0
    %3901 = vmatpush2.bf16.msra.mxu0 0
    %3902 = vmatprep.subr.bf16.mxu0 0
    %3903 = vmatpush2.bf16.msra.mxu0 0
    %3904 = vmatprep.subr.bf16.mxu0 0
    %3905 = vmatpush2.bf16.msra.mxu0 0
    %3906 = vmatprep.mubr.bf16.mxu0 0
    %3907 = vmatmul.mubr.bf16.gmra.mxu0 %v3863
    %v3908 = vpop.f32.mrf.mxu0
    %v3909 = vadd.f32 0.0, %v3908
    %v3910 = vpop.f32.mrf.mxu0
    %v3911 = vpop.f32.mrf.mxu0
    %v3912 = vadd.f32 0.0, %v3911
    %v3913 = vpop.f32.mrf.mxu0
    %3914 = vmatprep.mubr.bf16.mxu0 0
    %3915 = vmatmul.mubr.bf16.gmra.mxu0 %v3866
    %v3916 = vpop.f32.mrf.mxu0
    %v3917 = vadd.f32 0.0, %v3916
    %v3918 = vpop.f32.mrf.mxu0
    %v3919 = vpop.f32.mrf.mxu0
    %v3920 = vadd.f32 0.0, %v3919
    %v3921 = vpop.f32.mrf.mxu0
    %3922 = vmatprep.mubr.bf16.mxu0 0
    %3923 = vmatmul.mubr.bf16.gmra.mxu0 %v3869
    %v3924 = vpop.f32.mrf.mxu0
    %v3925 = vadd.f32 0.0, %v3924
    %v3926 = vpop.f32.mrf.mxu0
    %v3927 = vpop.f32.mrf.mxu0
    %v3928 = vadd.f32 0.0, %v3927
    %v3929 = vpop.f32.mrf.mxu0
    %3930 = vmatprep.mubr.bf16.mxu0 0
    %3931 = vmatmul.mubr.bf16.gmra.mxu0 %v3872
    %v3932 = vpop.f32.mrf.mxu0
    %v3933 = vadd.f32 0.0, %v3932
    %v3934 = vpop.f32.mrf.mxu0
    %v3935 = vpop.f32.mrf.mxu0
    %v3936 = vadd.f32 0.0, %v3935
    %v3937 = vpop.f32.mrf.mxu0
    %3938 = vdwg.mxu0
    %3939 = vrot.lane.b32.xlu0 %v2735, 64
    %v3940 = vpop.permute.xlu0 %3939
    %3941 = vrot.lane.b32.xlu0 %v2736, 64
    %v3942 = vpop.permute.xlu0 %3941
    %3943 = vrot.lane.b32.xlu0 %v2737, 64
    %v3944 = vpop.permute.xlu0 %3943
    %3945 = vrot.lane.b32.xlu0 %v2738, 64
    %v3946 = vpop.permute.xlu0 %3945
    %v3952 = vsel %vm265, %v3846, 0
    %v3955 = vsel %vm265, %v3847, 0
    %v3958 = vsel %vm265, %v3848, 0
    %v3961 = vsel %vm265, %v3849, 0
    %3963 = vmatprep.subr.bf16.mxu0 0
    %3964 = vmatpush1.bf16.msra.mxu0 0
    %3965 = vmatprep.subr.bf16.mxu0 0
    %3966 = vmatpush1.bf16.msra.mxu0 0
    %3967 = vmatprep.subr.bf16.mxu0 0
    %3968 = vmatpush1.bf16.msra.mxu0 0
    %3969 = vmatprep.subr.bf16.mxu0 0
    %3970 = vmatpush1.bf16.msra.mxu0 0
    %3971 = vmatprep.subr.bf16.mxu0 0
    %3972 = vmatpush1.bf16.msra.mxu0 %v3946
    %3973 = vmatprep.subr.bf16.mxu0 0
    %3974 = vmatpush1.bf16.msra.mxu0 %v3944
    %3975 = vmatprep.subr.bf16.mxu0 0
    %3976 = vmatpush1.bf16.msra.mxu0 %v3942
    %3977 = vmatprep.subr.bf16.mxu0 0
    %3978 = vmatpush1.bf16.msra.mxu0 %v3940
    %3979 = vmatprep.subr.bf16.mxu0 0
    %3980 = vmatpush2.bf16.msra.mxu0 0
    %3981 = vmatprep.subr.bf16.mxu0 0
    %3982 = vmatpush2.bf16.msra.mxu0 0
    %3983 = vmatprep.subr.bf16.mxu0 0
    %3984 = vmatpush2.bf16.msra.mxu0 0
    %3985 = vmatprep.subr.bf16.mxu0 0
    %3986 = vmatpush2.bf16.msra.mxu0 0
    %3987 = vmatprep.subr.bf16.mxu0 0
    %3988 = vmatpush2.bf16.msra.mxu0 0
    %3989 = vmatprep.subr.bf16.mxu0 0
    %3990 = vmatpush2.bf16.msra.mxu0 0
    %3991 = vmatprep.subr.bf16.mxu0 0
    %3992 = vmatpush2.bf16.msra.mxu0 0
    %3993 = vmatprep.subr.bf16.mxu0 0
    %3994 = vmatpush2.bf16.msra.mxu0 0
    %3995 = vmatprep.mubr.bf16.mxu0 0
    %3996 = vmatmul.mubr.bf16.gmra.mxu0 %v3952
    %v3997 = vpop.f32.mrf.mxu0
    %v3998 = vadd.f32 0.0, %v3997
    %v3999 = vpop.f32.mrf.mxu0
    %v4000 = vpop.f32.mrf.mxu0
    %v4001 = vadd.f32 0.0, %v4000
    %v4002 = vpop.f32.mrf.mxu0
    %4003 = vmatprep.mubr.bf16.mxu0 0
    %4004 = vmatmul.mubr.bf16.gmra.mxu0 %v3955
    %v4005 = vpop.f32.mrf.mxu0
    %v4006 = vadd.f32 0.0, %v4005
    %v4007 = vpop.f32.mrf.mxu0
    %v4008 = vpop.f32.mrf.mxu0
    %v4009 = vadd.f32 0.0, %v4008
    %v4010 = vpop.f32.mrf.mxu0
    %4011 = vmatprep.mubr.bf16.mxu0 0
    %4012 = vmatmul.mubr.bf16.gmra.mxu0 %v3958
    %v4013 = vpop.f32.mrf.mxu0
    %v4014 = vadd.f32 0.0, %v4013
    %v4015 = vpop.f32.mrf.mxu0
    %v4016 = vpop.f32.mrf.mxu0
    %v4017 = vadd.f32 0.0, %v4016
    %v4018 = vpop.f32.mrf.mxu0
    %4019 = vmatprep.mubr.bf16.mxu0 0
    %4020 = vmatmul.mubr.bf16.gmra.mxu0 %v3961
    %v4021 = vpop.f32.mrf.mxu0
    %v4022 = vadd.f32 0.0, %v4021
    %v4023 = vpop.f32.mrf.mxu0
    %v4024 = vpop.f32.mrf.mxu0
    %v4025 = vadd.f32 0.0, %v4024
    %v4026 = vpop.f32.mrf.mxu0
    %4027 = vdwg.mxu0
    %4028 = vrot.lane.b32.xlu0 %v2175, 32
    %v4029 = vpop.permute.xlu0 %4028
    %4030 = vrot.lane.b32.xlu0 %v2176, 32
    %v4031 = vpop.permute.xlu0 %4030
    %4032 = vrot.lane.b32.xlu0 %v2177, 32
    %v4033 = vpop.permute.xlu0 %4032
    %4034 = vrot.lane.b32.xlu0 %v2178, 32
    %v4035 = vpop.permute.xlu0 %4034
    %4036 = vrot.lane.b32.xlu0 %v2195, 32
    %v4037 = vpop.permute.xlu0 %4036
    %4038 = vrot.lane.b32.xlu0 %v2196, 32
    %v4039 = vpop.permute.xlu0 %4038
    %4040 = vrot.lane.b32.xlu0 %v2197, 32
    %v4041 = vpop.permute.xlu0 %4040
    %4042 = vrot.lane.b32.xlu0 %v2198, 32
    %v4043 = vpop.permute.xlu0 %4042
    %v4045 = vsel %vm2199, %v4029, 0
    %v4048 = vsel %vm2199, %v4031, 0
    %v4051 = vsel %vm2199, %v4033, 0
    %v4054 = vsel %vm2199, %v4035, 0
    %v4057 = vsel %vm2199, %v4037, 0
    %v4060 = vsel %vm2199, %v4039, 0
    %v4063 = vsel %vm2199, %v4041, 0
    %v4066 = vsel %vm2199, %v4043, 0
    %4068 = vmatprep.subr.bf16.mxu0 0
    %4069 = vmatpush1.bf16.xpose.msra.mxu0 0
    %4070 = vmatprep.subr.bf16.mxu0 0
    %4071 = vmatpush1.bf16.xpose.msra.mxu0 0
    %4072 = vmatprep.subr.bf16.mxu0 0
    %4073 = vmatpush1.bf16.xpose.msra.mxu0 0
    %4074 = vmatprep.subr.bf16.mxu0 0
    %4075 = vmatpush1.bf16.xpose.msra.mxu0 0
    %4076 = vmatprep.subr.bf16.mxu0 0
    %4077 = vmatpush1.bf16.xpose.msra.mxu0 %v4066
    %4078 = vmatprep.subr.bf16.mxu0 0
    %4079 = vmatpush1.bf16.xpose.msra.mxu0 %v4063
    %4080 = vmatprep.subr.bf16.mxu0 0
    %4081 = vmatpush1.bf16.xpose.msra.mxu0 %v4060
    %4082 = vmatprep.subr.bf16.mxu0 0
    %4083 = vmatpush1.bf16.xpose.msra.mxu0 %v4057
    %4084 = vmatprep.subr.bf16.mxu0 0
    %4085 = vmatpush2.bf16.xpose.msra.mxu0 0
    %4086 = vmatprep.subr.bf16.mxu0 0
    %4087 = vmatpush2.bf16.xpose.msra.mxu0 0
    %4088 = vmatprep.subr.bf16.mxu0 0
    %4089 = vmatpush2.bf16.xpose.msra.mxu0 0
    %4090 = vmatprep.subr.bf16.mxu0 0
    %4091 = vmatpush2.bf16.xpose.msra.mxu0 0
    %4092 = vmatprep.subr.bf16.mxu0 0
    %4093 = vmatpush2.bf16.xpose.msra.mxu0 0
    %4094 = vmatprep.subr.bf16.mxu0 0
    %4095 = vmatpush2.bf16.xpose.msra.mxu0 0
    %4096 = vmatprep.subr.bf16.mxu0 0
    %4097 = vmatpush2.bf16.xpose.msra.mxu0 0
    %4098 = vmatprep.subr.bf16.mxu0 0
    %4099 = vmatpush2.bf16.xpose.msra.mxu0 0
    %4100 = vmatprep.mubr.bf16.mxu0 0
    %4101 = vmatmul.mubr.bf16.gmra.mxu0 %v4045
    %v4102 = vpop.f32.mrf.mxu0
    %v4103 = vadd.f32 0.0, %v4102
    %v4104 = vpop.f32.mrf.mxu0
    %v4105 = vpop.f32.mrf.mxu0
    %v4106 = vadd.f32 0.0, %v4105
    %v4107 = vpop.f32.mrf.mxu0
    %4108 = vmatprep.mubr.bf16.mxu0 0
    %4109 = vmatmul.mubr.bf16.gmra.mxu0 %v4048
    %v4110 = vpop.f32.mrf.mxu0
    %v4111 = vadd.f32 0.0, %v4110
    %v4112 = vpop.f32.mrf.mxu0
    %v4113 = vpop.f32.mrf.mxu0
    %v4114 = vadd.f32 0.0, %v4113
    %v4115 = vpop.f32.mrf.mxu0
    %4116 = vmatprep.mubr.bf16.mxu0 0
    %4117 = vmatmul.mubr.bf16.gmra.mxu0 %v4051
    %v4118 = vpop.f32.mrf.mxu0
    %v4119 = vadd.f32 0.0, %v4118
    %v4120 = vpop.f32.mrf.mxu0
    %v4121 = vpop.f32.mrf.mxu0
    %v4122 = vadd.f32 0.0, %v4121
    %v4123 = vpop.f32.mrf.mxu0
    %4124 = vmatprep.mubr.bf16.mxu0 0
    %4125 = vmatmul.mubr.bf16.gmra.mxu0 %v4054
    %v4126 = vpop.f32.mrf.mxu0
    %v4127 = vadd.f32 0.0, %v4126
    %v4128 = vpop.f32.mrf.mxu0
    %v4129 = vpop.f32.mrf.mxu0
    %v4130 = vadd.f32 0.0, %v4129
    %v4131 = vpop.f32.mrf.mxu0
    %4132 = vdwg.mxu0
    %v4133 = vmul.f32 %v4103, 0.17677669
    %v4134 = vmul.f32 %v4106, 0.17677669
    %v4135 = vmul.f32 %v4111, 0.17677669
    %v4136 = vmul.f32 %v4114, 0.17677669
    %v4137 = vmul.f32 %v4119, 0.17677669
    %v4138 = vmul.f32 %v4122, 0.17677669
    %v4139 = vmul.f32 %v4127, 0.17677669
    %v4140 = vmul.f32 %v4130, 0.17677669
    %4141 = vrot.lane.b32.xlu0 %v2305, 32
    %v4142 = vpop.permute.xlu0 %4141
    %4143 = vrot.lane.b32.xlu0 %v2306, 32
    %v4144 = vpop.permute.xlu0 %4143
    %4145 = vrot.lane.b32.xlu0 %v2307, 32
    %v4146 = vpop.permute.xlu0 %4145
    %4147 = vrot.lane.b32.xlu0 %v2308, 32
    %v4148 = vpop.permute.xlu0 %4147
    %4149 = vrot.lane.b32.xlu0 %v2317, 32
    %v4150 = vpop.permute.xlu0 %4149
    %4151 = vrot.lane.b32.xlu0 %v2318, 32
    %v4152 = vpop.permute.xlu0 %4151
    %4153 = vrot.lane.b32.xlu0 %v2319, 32
    %v4154 = vpop.permute.xlu0 %4153
    %4155 = vrot.lane.b32.xlu0 %v2320, 32
    %v4156 = vpop.permute.xlu0 %4155
    %v4158 = vsel %vm2199, %v4142, 0
    %v4161 = vsel %vm2199, %v4144, 0
    %v4164 = vsel %vm2199, %v4146, 0
    %v4167 = vsel %vm2199, %v4148, 0
    %v4170 = vsel %vm2199, %v4150, 0
    %v4173 = vsel %vm2199, %v4152, 0
    %v4176 = vsel %vm2199, %v4154, 0
    %v4179 = vsel %vm2199, %v4156, 0
    %4181 = vmatprep.subr.bf16.mxu0 0
    %4182 = vmatpush1.bf16.xpose.msra.mxu0 0
    %4183 = vmatprep.subr.bf16.mxu0 0
    %4184 = vmatpush1.bf16.xpose.msra.mxu0 0
    %4185 = vmatprep.subr.bf16.mxu0 0
    %4186 = vmatpush1.bf16.xpose.msra.mxu0 0
    %4187 = vmatprep.subr.bf16.mxu0 0
    %4188 = vmatpush1.bf16.xpose.msra.mxu0 0
    %4189 = vmatprep.subr.bf16.mxu0 0
    %4190 = vmatpush1.bf16.xpose.msra.mxu0 %v4179
    %4191 = vmatprep.subr.bf16.mxu0 0
    %4192 = vmatpush1.bf16.xpose.msra.mxu0 %v4176
    %4193 = vmatprep.subr.bf16.mxu0 0
    %4194 = vmatpush1.bf16.xpose.msra.mxu0 %v4173
    %4195 = vmatprep.subr.bf16.mxu0 0
    %4196 = vmatpush1.bf16.xpose.msra.mxu0 %v4170
    %4197 = vmatprep.subr.bf16.mxu0 0
    %4198 = vmatpush2.bf16.xpose.msra.mxu0 0
    %4199 = vmatprep.subr.bf16.mxu0 0
    %4200 = vmatpush2.bf16.xpose.msra.mxu0 0
    %4201 = vmatprep.subr.bf16.mxu0 0
    %4202 = vmatpush2.bf16.xpose.msra.mxu0 0
    %4203 = vmatprep.subr.bf16.mxu0 0
    %4204 = vmatpush2.bf16.xpose.msra.mxu0 0
    %4205 = vmatprep.subr.bf16.mxu0 0
    %4206 = vmatpush2.bf16.xpose.msra.mxu0 0
    %4207 = vmatprep.subr.bf16.mxu0 0
    %4208 = vmatpush2.bf16.xpose.msra.mxu0 0
    %4209 = vmatprep.subr.bf16.mxu0 0
    %4210 = vmatpush2.bf16.xpose.msra.mxu0 0
    %4211 = vmatprep.subr.bf16.mxu0 0
    %4212 = vmatpush2.bf16.xpose.msra.mxu0 0
    %4213 = vmatprep.mubr.bf16.mxu0 0
    %4214 = vmatmul.mubr.bf16.gmra.mxu0 %v4158
    %v4215 = vpop.f32.mrf.mxu0
    %v4216 = vadd.f32 0.0, %v4215
    %v4217 = vpop.f32.mrf.mxu0
    %v4218 = vpop.f32.mrf.mxu0
    %v4219 = vadd.f32 0.0, %v4218
    %v4220 = vpop.f32.mrf.mxu0
    %4221 = vmatprep.mubr.bf16.mxu0 0
    %4222 = vmatmul.mubr.bf16.gmra.mxu0 %v4161
    %v4223 = vpop.f32.mrf.mxu0
    %v4224 = vadd.f32 0.0, %v4223
    %v4225 = vpop.f32.mrf.mxu0
    %v4226 = vpop.f32.mrf.mxu0
    %v4227 = vadd.f32 0.0, %v4226
    %v4228 = vpop.f32.mrf.mxu0
    %4229 = vmatprep.mubr.bf16.mxu0 0
    %4230 = vmatmul.mubr.bf16.gmra.mxu0 %v4164
    %v4231 = vpop.f32.mrf.mxu0
    %v4232 = vadd.f32 0.0, %v4231
    %v4233 = vpop.f32.mrf.mxu0
    %v4234 = vpop.f32.mrf.mxu0
    %v4235 = vadd.f32 0.0, %v4234
    %v4236 = vpop.f32.mrf.mxu0
    %4237 = vmatprep.mubr.bf16.mxu0 0
    %4238 = vmatmul.mubr.bf16.gmra.mxu0 %v4167
    %v4239 = vpop.f32.mrf.mxu0
    %v4240 = vadd.f32 0.0, %v4239
    %v4241 = vpop.f32.mrf.mxu0
    %v4242 = vpop.f32.mrf.mxu0
    %v4243 = vadd.f32 0.0, %v4242
    %v4244 = vpop.f32.mrf.mxu0
    %4245 = vdwg.mxu0
    %v4246 = vmul.f32 %v4216, 0.17677669
    %v4247 = vmul.f32 %v4219, 0.17677669
    %v4248 = vmul.f32 %v4224, 0.17677669
    %v4249 = vmul.f32 %v4227, 0.17677669
    %v4250 = vmul.f32 %v4232, 0.17677669
    %v4251 = vmul.f32 %v4235, 0.17677669
    %v4252 = vmul.f32 %v4240, 0.17677669
    %v4253 = vmul.f32 %v4243, 0.17677669
    %v4254 = vsel %vm265, %v4133, -inf
    %4255 = vmax.xlane.f32.xlu0 %v4254
    %v4256 = vpop.xlane.xlu0 %4255
    %v4257 = vsel %vm265, %v4134, -inf
    %4258 = vmax.xlane.f32.xlu0 %v4257
    %v4259 = vpop.xlane.xlu0 %4258
    %v4260 = vsel %vm265, %v4135, -inf
    %4261 = vmax.xlane.f32.xlu0 %v4260
    %v4262 = vpop.xlane.xlu0 %4261
    %v4263 = vsel %vm265, %v4136, -inf
    %4264 = vmax.xlane.f32.xlu0 %v4263
    %v4265 = vpop.xlane.xlu0 %4264
    %v4266 = vsel %vm265, %v4137, -inf
    %4267 = vmax.xlane.f32.xlu0 %v4266
    %v4268 = vpop.xlane.xlu0 %4267
    %v4269 = vsel %vm265, %v4138, -inf
    %4270 = vmax.xlane.f32.xlu0 %v4269
    %v4271 = vpop.xlane.xlu0 %4270
    %v4272 = vsel %vm265, %v4139, -inf
    %4273 = vmax.xlane.f32.xlu0 %v4272
    %v4274 = vpop.xlane.xlu0 %4273
    %v4275 = vsel %vm265, %v4140, -inf
    %4276 = vmax.xlane.f32.xlu0 %v4275
    %v4277 = vpop.xlane.xlu0 %4276
    %v4278 = vsub.f32 %v4133, %v4256
    %v4279 = vsub.f32 %v4134, %v4259
    %v4280 = vsub.f32 %v4135, %v4262
    %v4281 = vsub.f32 %v4136, %v4265
    %v4282 = vsub.f32 %v4137, %v4268
    %v4283 = vsub.f32 %v4138, %v4271
    %v4284 = vsub.f32 %v4139, %v4274
    %v4285 = vsub.f32 %v4140, %v4277
    %v4286 = vpack.c.bf16 %v4279, %v4278
    %v4287 = vpack.c.bf16 %v4281, %v4280
    %v4288 = vpack.c.bf16 %v4283, %v4282
    %v4289 = vpack.c.bf16 %v4285, %v4284
    %v4291 = vmul.bf16 %v4286, 1069105081
    %v4292 = vpow.bf16.pop %v4291
    %v4294 = vmul.bf16 %v4287, 1069105081
    %v4295 = vpow.bf16.pop %v4294
    %v4297 = vmul.bf16 %v4288, 1069105081
    %v4298 = vpow.bf16.pop %v4297
    %v4300 = vmul.bf16 %v4289, 1069105081
    %v4301 = vpow.bf16.pop %v4300
    %v4302 = vunpack.c.l.bf16 %v4292
    %v4303 = vunpack.c.h.bf16 %v4292
    %v4304 = vunpack.c.l.bf16 %v4295
    %v4305 = vunpack.c.h.bf16 %v4295
    %v4306 = vunpack.c.l.bf16 %v4298
    %v4307 = vunpack.c.h.bf16 %v4298
    %v4308 = vunpack.c.l.bf16 %v4301
    %v4309 = vunpack.c.h.bf16 %v4301
    %v4310 = vsel %vm265, %v4302, 0.0
    %4311 = vadd.xlane.f32.xlu0 %v4310
    %v4312 = vpop.xlane.xlu0 %4311
    %v4313 = vsel %vm265, %v4303, 0.0
    %4314 = vadd.xlane.f32.xlu0 %v4313
    %v4315 = vpop.xlane.xlu0 %4314
    %v4316 = vsel %vm265, %v4304, 0.0
    %4317 = vadd.xlane.f32.xlu0 %v4316
    %v4318 = vpop.xlane.xlu0 %4317
    %v4319 = vsel %vm265, %v4305, 0.0
    %4320 = vadd.xlane.f32.xlu0 %v4319
    %v4321 = vpop.xlane.xlu0 %4320
    %v4322 = vsel %vm265, %v4306, 0.0
    %4323 = vadd.xlane.f32.xlu0 %v4322
    %v4324 = vpop.xlane.xlu0 %4323
    %v4325 = vsel %vm265, %v4307, 0.0
    %4326 = vadd.xlane.f32.xlu0 %v4325
    %v4327 = vpop.xlane.xlu0 %4326
    %v4328 = vsel %vm265, %v4308, 0.0
    %4329 = vadd.xlane.f32.xlu0 %v4328
    %v4330 = vpop.xlane.xlu0 %4329
    %v4331 = vsel %vm265, %v4309, 0.0
    %4332 = vadd.xlane.f32.xlu0 %v4331
    %v4333 = vpop.xlane.xlu0 %4332
    %v4334 = vrcp.pop %v4312
    %v4335 = vrcp.pop %v4315
    %v4336 = vrcp.pop %v4318
    %v4337 = vrcp.pop %v4321
    %v4338 = vrcp.pop %v4324
    %v4339 = vrcp.pop %v4327
    %v4340 = vrcp.pop %v4330
    %v4341 = vrcp.pop %v4333
    %v4342 = vmul.f32 %v4302, %v4334
    %v4343 = vmul.f32 %v4303, %v4335
    %v4344 = vmul.f32 %v4304, %v4336
    %v4345 = vmul.f32 %v4305, %v4337
    %v4346 = vmul.f32 %v4306, %v4338
    %v4347 = vmul.f32 %v4307, %v4339
    %v4348 = vmul.f32 %v4308, %v4340
    %v4349 = vmul.f32 %v4309, %v4341
    %v4350 = vpack.c.bf16 %v4343, %v4342
    %v4351 = vpack.c.bf16 %v4345, %v4344
    %v4352 = vpack.c.bf16 %v4347, %v4346
    %v4353 = vpack.c.bf16 %v4349, %v4348
    %v4354 = vsel %vm265, %v4246, -inf
    %4355 = vmax.xlane.f32.xlu0 %v4354
    %v4356 = vpop.xlane.xlu0 %4355
    %v4357 = vsel %vm265, %v4247, -inf
    %4358 = vmax.xlane.f32.xlu0 %v4357
    %v4359 = vpop.xlane.xlu0 %4358
    %v4360 = vsel %vm265, %v4248, -inf
    %4361 = vmax.xlane.f32.xlu0 %v4360
    %v4362 = vpop.xlane.xlu0 %4361
    %v4363 = vsel %vm265, %v4249, -inf
    %4364 = vmax.xlane.f32.xlu0 %v4363
    %v4365 = vpop.xlane.xlu0 %4364
    %v4366 = vsel %vm265, %v4250, -inf
    %4367 = vmax.xlane.f32.xlu0 %v4366
    %v4368 = vpop.xlane.xlu0 %4367
    %v4369 = vsel %vm265, %v4251, -inf
    %4370 = vmax.xlane.f32.xlu0 %v4369
    %v4371 = vpop.xlane.xlu0 %4370
    %v4372 = vsel %vm265, %v4252, -inf
    %4373 = vmax.xlane.f32.xlu0 %v4372
    %v4374 = vpop.xlane.xlu0 %4373
    %v4375 = vsel %vm265, %v4253, -inf
    %4376 = vmax.xlane.f32.xlu0 %v4375
    %v4377 = vpop.xlane.xlu0 %4376
    %v4378 = vsub.f32 %v4246, %v4356
    %v4379 = vsub.f32 %v4247, %v4359
    %v4380 = vsub.f32 %v4248, %v4362
    %v4381 = vsub.f32 %v4249, %v4365
    %v4382 = vsub.f32 %v4250, %v4368
    %v4383 = vsub.f32 %v4251, %v4371
    %v4384 = vsub.f32 %v4252, %v4374
    %v4385 = vsub.f32 %v4253, %v4377
    %v4386 = vpack.c.bf16 %v4379, %v4378
    %v4387 = vpack.c.bf16 %v4381, %v4380
    %v4388 = vpack.c.bf16 %v4383, %v4382
    %v4389 = vpack.c.bf16 %v4385, %v4384
    %v4391 = vmul.bf16 %v4386, 1069105081
    %v4392 = vpow.bf16.pop %v4391
    %v4394 = vmul.bf16 %v4387, 1069105081
    %v4395 = vpow.bf16.pop %v4394
    %v4397 = vmul.bf16 %v4388, 1069105081
    %v4398 = vpow.bf16.pop %v4397
    %v4400 = vmul.bf16 %v4389, 1069105081
    %v4401 = vpow.bf16.pop %v4400
    %v4402 = vunpack.c.l.bf16 %v4392
    %v4403 = vunpack.c.h.bf16 %v4392
    %v4404 = vunpack.c.l.bf16 %v4395
    %v4405 = vunpack.c.h.bf16 %v4395
    %v4406 = vunpack.c.l.bf16 %v4398
    %v4407 = vunpack.c.h.bf16 %v4398
    %v4408 = vunpack.c.l.bf16 %v4401
    %v4409 = vunpack.c.h.bf16 %v4401
    %v4410 = vsel %vm265, %v4402, 0.0
    %4411 = vadd.xlane.f32.xlu0 %v4410
    %v4412 = vpop.xlane.xlu0 %4411
    %v4413 = vsel %vm265, %v4403, 0.0
    %4414 = vadd.xlane.f32.xlu0 %v4413
    %v4415 = vpop.xlane.xlu0 %4414
    %v4416 = vsel %vm265, %v4404, 0.0
    %4417 = vadd.xlane.f32.xlu0 %v4416
    %v4418 = vpop.xlane.xlu0 %4417
    %v4419 = vsel %vm265, %v4405, 0.0
    %4420 = vadd.xlane.f32.xlu0 %v4419
    %v4421 = vpop.xlane.xlu0 %4420
    %v4422 = vsel %vm265, %v4406, 0.0
    %4423 = vadd.xlane.f32.xlu0 %v4422
    %v4424 = vpop.xlane.xlu0 %4423
    %v4425 = vsel %vm265, %v4407, 0.0
    %4426 = vadd.xlane.f32.xlu0 %v4425
    %v4427 = vpop.xlane.xlu0 %4426
    %v4428 = vsel %vm265, %v4408, 0.0
    %4429 = vadd.xlane.f32.xlu0 %v4428
    %v4430 = vpop.xlane.xlu0 %4429
    %v4431 = vsel %vm265, %v4409, 0.0
    %4432 = vadd.xlane.f32.xlu0 %v4431
    %v4433 = vpop.xlane.xlu0 %4432
    %v4434 = vrcp.pop %v4412
    %v4435 = vrcp.pop %v4415
    %v4436 = vrcp.pop %v4418
    %v4437 = vrcp.pop %v4421
    %v4438 = vrcp.pop %v4424
    %v4439 = vrcp.pop %v4427
    %v4440 = vrcp.pop %v4430
    %v4441 = vrcp.pop %v4433
    %v4442 = vmul.f32 %v4402, %v4434
    %v4443 = vmul.f32 %v4403, %v4435
    %v4444 = vmul.f32 %v4404, %v4436
    %v4445 = vmul.f32 %v4405, %v4437
    %v4446 = vmul.f32 %v4406, %v4438
    %v4447 = vmul.f32 %v4407, %v4439
    %v4448 = vmul.f32 %v4408, %v4440
    %v4449 = vmul.f32 %v4409, %v4441
    %v4450 = vpack.c.bf16 %v4443, %v4442
    %v4451 = vpack.c.bf16 %v4445, %v4444
    %v4452 = vpack.c.bf16 %v4447, %v4446
    %v4453 = vpack.c.bf16 %v4449, %v4448
    %4454 = vrot.lane.b32.xlu0 %v2634, 32
    %v4455 = vpop.permute.xlu0 %4454
    %4456 = vrot.lane.b32.xlu0 %v2635, 32
    %v4457 = vpop.permute.xlu0 %4456
    %4458 = vrot.lane.b32.xlu0 %v2636, 32
    %v4459 = vpop.permute.xlu0 %4458
    %4460 = vrot.lane.b32.xlu0 %v2637, 32
    %v4461 = vpop.permute.xlu0 %4460
    %v4467 = vsel %vm265, %v4350, 0
    %v4470 = vsel %vm265, %v4351, 0
    %v4473 = vsel %vm265, %v4352, 0
    %v4476 = vsel %vm265, %v4353, 0
    %4478 = vmatprep.subr.bf16.mxu0 0
    %4479 = vmatpush1.bf16.msra.mxu0 0
    %4480 = vmatprep.subr.bf16.mxu0 0
    %4481 = vmatpush1.bf16.msra.mxu0 0
    %4482 = vmatprep.subr.bf16.mxu0 0
    %4483 = vmatpush1.bf16.msra.mxu0 0
    %4484 = vmatprep.subr.bf16.mxu0 0
    %4485 = vmatpush1.bf16.msra.mxu0 0
    %4486 = vmatprep.subr.bf16.mxu0 0
    %4487 = vmatpush1.bf16.msra.mxu0 %v4461
    %4488 = vmatprep.subr.bf16.mxu0 0
    %4489 = vmatpush1.bf16.msra.mxu0 %v4459
    %4490 = vmatprep.subr.bf16.mxu0 0
    %4491 = vmatpush1.bf16.msra.mxu0 %v4457
    %4492 = vmatprep.subr.bf16.mxu0 0
    %4493 = vmatpush1.bf16.msra.mxu0 %v4455
    %4494 = vmatprep.subr.bf16.mxu0 0
    %4495 = vmatpush2.bf16.msra.mxu0 0
    %4496 = vmatprep.subr.bf16.mxu0 0
    %4497 = vmatpush2.bf16.msra.mxu0 0
    %4498 = vmatprep.subr.bf16.mxu0 0
    %4499 = vmatpush2.bf16.msra.mxu0 0
    %4500 = vmatprep.subr.bf16.mxu0 0
    %4501 = vmatpush2.bf16.msra.mxu0 0
    %4502 = vmatprep.subr.bf16.mxu0 0
    %4503 = vmatpush2.bf16.msra.mxu0 0
    %4504 = vmatprep.subr.bf16.mxu0 0
    %4505 = vmatpush2.bf16.msra.mxu0 0
    %4506 = vmatprep.subr.bf16.mxu0 0
    %4507 = vmatpush2.bf16.msra.mxu0 0
    %4508 = vmatprep.subr.bf16.mxu0 0
    %4509 = vmatpush2.bf16.msra.mxu0 0
    %4510 = vmatprep.mubr.bf16.mxu0 0
    %4511 = vmatmul.mubr.bf16.gmra.mxu0 %v4467
    %v4512 = vpop.f32.mrf.mxu0
    %v4513 = vadd.f32 0.0, %v4512
    %v4514 = vpop.f32.mrf.mxu0
    %v4515 = vpop.f32.mrf.mxu0
    %v4516 = vadd.f32 0.0, %v4515
    %v4517 = vpop.f32.mrf.mxu0
    %4518 = vmatprep.mubr.bf16.mxu0 0
    %4519 = vmatmul.mubr.bf16.gmra.mxu0 %v4470
    %v4520 = vpop.f32.mrf.mxu0
    %v4521 = vadd.f32 0.0, %v4520
    %v4522 = vpop.f32.mrf.mxu0
    %v4523 = vpop.f32.mrf.mxu0
    %v4524 = vadd.f32 0.0, %v4523
    %v4525 = vpop.f32.mrf.mxu0
    %4526 = vmatprep.mubr.bf16.mxu0 0
    %4527 = vmatmul.mubr.bf16.gmra.mxu0 %v4473
    %v4528 = vpop.f32.mrf.mxu0
    %v4529 = vadd.f32 0.0, %v4528
    %v4530 = vpop.f32.mrf.mxu0
    %v4531 = vpop.f32.mrf.mxu0
    %v4532 = vadd.f32 0.0, %v4531
    %v4533 = vpop.f32.mrf.mxu0
    %4534 = vmatprep.mubr.bf16.mxu0 0
    %4535 = vmatmul.mubr.bf16.gmra.mxu0 %v4476
    %v4536 = vpop.f32.mrf.mxu0
    %v4537 = vadd.f32 0.0, %v4536
    %v4538 = vpop.f32.mrf.mxu0
    %v4539 = vpop.f32.mrf.mxu0
    %v4540 = vadd.f32 0.0, %v4539
    %v4541 = vpop.f32.mrf.mxu0
    %4542 = vdwg.mxu0
    %4543 = vrot.lane.b32.xlu0 %v2735, 32
    %v4544 = vpop.permute.xlu0 %4543
    %4545 = vrot.lane.b32.xlu0 %v2736, 32
    %v4546 = vpop.permute.xlu0 %4545
    %4547 = vrot.lane.b32.xlu0 %v2737, 32
    %v4548 = vpop.permute.xlu0 %4547
    %4549 = vrot.lane.b32.xlu0 %v2738, 32
    %v4550 = vpop.permute.xlu0 %4549
    %v4556 = vsel %vm265, %v4450, 0
    %v4559 = vsel %vm265, %v4451, 0
    %v4562 = vsel %vm265, %v4452, 0
    %v4565 = vsel %vm265, %v4453, 0
    %4567 = vmatprep.subr.bf16.mxu0 0
    %4568 = vmatpush1.bf16.msra.mxu0 0
    %4569 = vmatprep.subr.bf16.mxu0 0
    %4570 = vmatpush1.bf16.msra.mxu0 0
    %4571 = vmatprep.subr.bf16.mxu0 0
    %4572 = vmatpush1.bf16.msra.mxu0 0
    %4573 = vmatprep.subr.bf16.mxu0 0
    %4574 = vmatpush1.bf16.msra.mxu0 0
    %4575 = vmatprep.subr.bf16.mxu0 0
    %4576 = vmatpush1.bf16.msra.mxu0 %v4550
    %4577 = vmatprep.subr.bf16.mxu0 0
    %4578 = vmatpush1.bf16.msra.mxu0 %v4548
    %4579 = vmatprep.subr.bf16.mxu0 0
    %4580 = vmatpush1.bf16.msra.mxu0 %v4546
    %4581 = vmatprep.subr.bf16.mxu0 0
    %4582 = vmatpush1.bf16.msra.mxu0 %v4544
    %4583 = vmatprep.subr.bf16.mxu0 0
    %4584 = vmatpush2.bf16.msra.mxu0 0
    %4585 = vmatprep.subr.bf16.mxu0 0
    %4586 = vmatpush2.bf16.msra.mxu0 0
    %4587 = vmatprep.subr.bf16.mxu0 0
    %4588 = vmatpush2.bf16.msra.mxu0 0
    %4589 = vmatprep.subr.bf16.mxu0 0
    %4590 = vmatpush2.bf16.msra.mxu0 0
    %4591 = vmatprep.subr.bf16.mxu0 0
    %4592 = vmatpush2.bf16.msra.mxu0 0
    %4593 = vmatprep.subr.bf16.mxu0 0
    %4594 = vmatpush2.bf16.msra.mxu0 0
    %4595 = vmatprep.subr.bf16.mxu0 0
    %4596 = vmatpush2.bf16.msra.mxu0 0
    %4597 = vmatprep.subr.bf16.mxu0 0
    %4598 = vmatpush2.bf16.msra.mxu0 0
    %4599 = vmatprep.mubr.bf16.mxu0 0
    %4600 = vmatmul.mubr.bf16.gmra.mxu0 %v4556
    %v4601 = vpop.f32.mrf.mxu0
    %v4602 = vadd.f32 0.0, %v4601
    %v4603 = vpop.f32.mrf.mxu0
    %v4604 = vpop.f32.mrf.mxu0
    %v4605 = vadd.f32 0.0, %v4604
    %v4606 = vpop.f32.mrf.mxu0
    %4607 = vmatprep.mubr.bf16.mxu0 0
    %4608 = vmatmul.mubr.bf16.gmra.mxu0 %v4559
    %v4609 = vpop.f32.mrf.mxu0
    %v4610 = vadd.f32 0.0, %v4609
    %v4611 = vpop.f32.mrf.mxu0
    %v4612 = vpop.f32.mrf.mxu0
    %v4613 = vadd.f32 0.0, %v4612
    %v4614 = vpop.f32.mrf.mxu0
    %4615 = vmatprep.mubr.bf16.mxu0 0
    %4616 = vmatmul.mubr.bf16.gmra.mxu0 %v4562
    %v4617 = vpop.f32.mrf.mxu0
    %v4618 = vadd.f32 0.0, %v4617
    %v4619 = vpop.f32.mrf.mxu0
    %v4620 = vpop.f32.mrf.mxu0
    %v4621 = vadd.f32 0.0, %v4620
    %v4622 = vpop.f32.mrf.mxu0
    %4623 = vmatprep.mubr.bf16.mxu0 0
    %4624 = vmatmul.mubr.bf16.gmra.mxu0 %v4565
    %v4625 = vpop.f32.mrf.mxu0
    %v4626 = vadd.f32 0.0, %v4625
    %v4627 = vpop.f32.mrf.mxu0
    %v4628 = vpop.f32.mrf.mxu0
    %v4629 = vadd.f32 0.0, %v4628
    %v4630 = vpop.f32.mrf.mxu0
    %4631 = vdwg.mxu0
    %4640 = vrot.lane.b32.xlu0 %v3305, 32
    %v4641 = vpop.permute.xlu0 %4640
    %4642 = vrot.lane.b32.xlu0 %v3308, 32
    %v4643 = vpop.permute.xlu0 %4642
    %4644 = vrot.lane.b32.xlu0 %v3313, 32
    %v4645 = vpop.permute.xlu0 %4644
    %4646 = vrot.lane.b32.xlu0 %v3316, 32
    %v4647 = vpop.permute.xlu0 %4646
    %4648 = vrot.lane.b32.xlu0 %v3321, 32
    %v4649 = vpop.permute.xlu0 %4648
    %4650 = vrot.lane.b32.xlu0 %v3324, 32
    %v4651 = vpop.permute.xlu0 %4650
    %4652 = vrot.lane.b32.xlu0 %v3329, 32
    %v4653 = vpop.permute.xlu0 %4652
    %4654 = vrot.lane.b32.xlu0 %v3332, 32
    %v4655 = vpop.permute.xlu0 %4654
    %4672 = vrot.lane.b32.xlu0 %v3909, 64
    %v4673 = vpop.permute.xlu0 %4672
    %4674 = vrot.lane.b32.xlu0 %v3912, 64
    %v4675 = vpop.permute.xlu0 %4674
    %4676 = vrot.lane.b32.xlu0 %v3917, 64
    %v4677 = vpop.permute.xlu0 %4676
    %4678 = vrot.lane.b32.xlu0 %v3920, 64
    %v4679 = vpop.permute.xlu0 %4678
    %4680 = vrot.lane.b32.xlu0 %v3925, 64
    %v4681 = vpop.permute.xlu0 %4680
    %4682 = vrot.lane.b32.xlu0 %v3928, 64
    %v4683 = vpop.permute.xlu0 %4682
    %4684 = vrot.lane.b32.xlu0 %v3933, 64
    %v4685 = vpop.permute.xlu0 %4684
    %4686 = vrot.lane.b32.xlu0 %v3936, 64
    %v4687 = vpop.permute.xlu0 %4686
    %4704 = vrot.lane.b32.xlu0 %v4513, 96
    %v4705 = vpop.permute.xlu0 %4704
    %4706 = vrot.lane.b32.xlu0 %v4516, 96
    %v4707 = vpop.permute.xlu0 %4706
    %4708 = vrot.lane.b32.xlu0 %v4521, 96
    %v4709 = vpop.permute.xlu0 %4708
    %4710 = vrot.lane.b32.xlu0 %v4524, 96
    %v4711 = vpop.permute.xlu0 %4710
    %4712 = vrot.lane.b32.xlu0 %v4529, 96
    %v4713 = vpop.permute.xlu0 %4712
    %4714 = vrot.lane.b32.xlu0 %v4532, 96
    %v4715 = vpop.permute.xlu0 %4714
    %4716 = vrot.lane.b32.xlu0 %v4537, 96
    %v4717 = vpop.permute.xlu0 %4716
    %4718 = vrot.lane.b32.xlu0 %v4540, 96
    %v4719 = vpop.permute.xlu0 %4718
    %v4728 = vsel %vm2199, %v2689, %v4641
    %v4729 = vsel %vm2199, %v2692, %v4643
    %v4730 = vsel %vm2199, %v2697, %v4645
    %v4731 = vsel %vm2199, %v2700, %v4647
    %v4732 = vsel %vm2199, %v2705, %v4649
    %v4733 = vsel %vm2199, %v2708, %v4651
    %v4734 = vsel %vm2199, %v2713, %v4653
    %v4735 = vsel %vm2199, %v2716, %v4655
    %v4736 = vsel %vm265, %v4728, %v4673
    %v4737 = vsel %vm265, %v4729, %v4675
    %v4738 = vsel %vm265, %v4730, %v4677
    %v4739 = vsel %vm265, %v4731, %v4679
    %v4740 = vsel %vm265, %v4732, %v4681
    %v4741 = vsel %vm265, %v4733, %v4683
    %v4742 = vsel %vm265, %v4734, %v4685
    %v4743 = vsel %vm265, %v4735, %v4687
    %vm4744 = vcmask 785408
    %v4745 = vsel %vm4744, %v4736, %v4705
    %v4746 = vsel %vm4744, %v4737, %v4707
    %v4747 = vsel %vm4744, %v4738, %v4709
    %v4748 = vsel %vm4744, %v4739, %v4711
    %v4749 = vsel %vm4744, %v4740, %v4713
    %v4750 = vsel %vm4744, %v4741, %v4715
    %v4751 = vsel %vm4744, %v4742, %v4717
    %v4752 = vsel %vm4744, %v4743, %v4719
    %4761 = vrot.lane.b32.xlu0 %v3394, 32
    %v4762 = vpop.permute.xlu0 %4761
    %4763 = vrot.lane.b32.xlu0 %v3397, 32
    %v4764 = vpop.permute.xlu0 %4763
    %4765 = vrot.lane.b32.xlu0 %v3402, 32
    %v4766 = vpop.permute.xlu0 %4765
    %4767 = vrot.lane.b32.xlu0 %v3405, 32
    %v4768 = vpop.permute.xlu0 %4767
    %4769 = vrot.lane.b32.xlu0 %v3410, 32
    %v4770 = vpop.permute.xlu0 %4769
    %4771 = vrot.lane.b32.xlu0 %v3413, 32
    %v4772 = vpop.permute.xlu0 %4771
    %4773 = vrot.lane.b32.xlu0 %v3418, 32
    %v4774 = vpop.permute.xlu0 %4773
    %4775 = vrot.lane.b32.xlu0 %v3421, 32
    %v4776 = vpop.permute.xlu0 %4775
    %4793 = vrot.lane.b32.xlu0 %v3998, 64
    %v4794 = vpop.permute.xlu0 %4793
    %4795 = vrot.lane.b32.xlu0 %v4001, 64
    %v4796 = vpop.permute.xlu0 %4795
    %4797 = vrot.lane.b32.xlu0 %v4006, 64
    %v4798 = vpop.permute.xlu0 %4797
    %4799 = vrot.lane.b32.xlu0 %v4009, 64
    %v4800 = vpop.permute.xlu0 %4799
    %4801 = vrot.lane.b32.xlu0 %v4014, 64
    %v4802 = vpop.permute.xlu0 %4801
    %4803 = vrot.lane.b32.xlu0 %v4017, 64
    %v4804 = vpop.permute.xlu0 %4803
    %4805 = vrot.lane.b32.xlu0 %v4022, 64
    %v4806 = vpop.permute.xlu0 %4805
    %4807 = vrot.lane.b32.xlu0 %v4025, 64
    %v4808 = vpop.permute.xlu0 %4807
    %4825 = vrot.lane.b32.xlu0 %v4602, 96
    %v4826 = vpop.permute.xlu0 %4825
    %4827 = vrot.lane.b32.xlu0 %v4605, 96
    %v4828 = vpop.permute.xlu0 %4827
    %4829 = vrot.lane.b32.xlu0 %v4610, 96
    %v4830 = vpop.permute.xlu0 %4829
    %4831 = vrot.lane.b32.xlu0 %v4613, 96
    %v4832 = vpop.permute.xlu0 %4831
    %4833 = vrot.lane.b32.xlu0 %v4618, 96
    %v4834 = vpop.permute.xlu0 %4833
    %4835 = vrot.lane.b32.xlu0 %v4621, 96
    %v4836 = vpop.permute.xlu0 %4835
    %4837 = vrot.lane.b32.xlu0 %v4626, 96
    %v4838 = vpop.permute.xlu0 %4837
    %4839 = vrot.lane.b32.xlu0 %v4629, 96
    %v4840 = vpop.permute.xlu0 %4839
    %v4849 = vsel %vm2199, %v2790, %v4762
    %v4850 = vsel %vm2199, %v2793, %v4764
    %v4851 = vsel %vm2199, %v2798, %v4766
    %v4852 = vsel %vm2199, %v2801, %v4768
    %v4853 = vsel %vm2199, %v2806, %v4770
    %v4854 = vsel %vm2199, %v2809, %v4772
    %v4855 = vsel %vm2199, %v2814, %v4774
    %v4856 = vsel %vm2199, %v2817, %v4776
    %v4857 = vsel %vm265, %v4849, %v4794
    %v4858 = vsel %vm265, %v4850, %v4796
    %v4859 = vsel %vm265, %v4851, %v4798
    %v4860 = vsel %vm265, %v4852, %v4800
    %v4861 = vsel %vm265, %v4853, %v4802
    %v4862 = vsel %vm265, %v4854, %v4804
    %v4863 = vsel %vm265, %v4855, %v4806
    %v4864 = vsel %vm265, %v4856, %v4808
    %v4865 = vsel %vm4744, %v4857, %v4826
    %v4866 = vsel %vm4744, %v4858, %v4828
    %v4867 = vsel %vm4744, %v4859, %v4830
    %v4868 = vsel %vm4744, %v4860, %v4832
    %v4869 = vsel %vm4744, %v4861, %v4834
    %v4870 = vsel %vm4744, %v4862, %v4836
    %v4871 = vsel %vm4744, %v4863, %v4838
    %v4872 = vsel %vm4744, %v4864, %v4840
    %v4873 = vld [vmem:[#allocation2 + $0x60] sm:$0xff]
    %v4874 = vld [vmem:[#allocation2 + $0x68] sm:$0xf]
    %v4875 = vld [vmem:[#allocation2 + $0x6c] sm:$0xff]
    %v4876 = vld [vmem:[#allocation2 + $0x74] sm:$0xf]
    %v4877 = vld [vmem:[#allocation2 + $0x78] sm:$0xff]
    %v4878 = vld [vmem:[#allocation2 + $0x80] sm:$0xf]
    %v4879 = vld [vmem:[#allocation2 + $0x84] sm:$0xff]
    %v4880 = vld [vmem:[#allocation2 + $0x8c] sm:$0xf]
    %v4881 = vld [vmem:[#allocation2 + $0x90] sm:$0xff]
    %v4882 = vld [vmem:[#allocation2 + $0x98] sm:$0xf]
    %v4883 = vld [vmem:[#allocation2 + $0x9c] sm:$0xff]
    %v4884 = vld [vmem:[#allocation2 + $0xa4] sm:$0xf]
    %v4885 = vld [vmem:[#allocation2 + $0xa8] sm:$0xff]
    %v4886 = vld [vmem:[#allocation2 + $0xb0] sm:$0xf]
    %v4887 = vld [vmem:[#allocation2 + $0xb4] sm:$0xff]
    %v4888 = vld [vmem:[#allocation2 + $0xbc] sm:$0xf]
    %v4889 = vld [vmem:[#allocation3 + $0x60] sm:$0xff]
    %v4890 = vld [vmem:[#allocation3 + $0x68] sm:$0xf]
    %v4891 = vld [vmem:[#allocation3 + $0x6c] sm:$0xff]
    %v4892 = vld [vmem:[#allocation3 + $0x74] sm:$0xf]
    %v4893 = vld [vmem:[#allocation3 + $0x78] sm:$0xff]
    %v4894 = vld [vmem:[#allocation3 + $0x80] sm:$0xf]
    %v4895 = vld [vmem:[#allocation3 + $0x84] sm:$0xff]
    %v4896 = vld [vmem:[#allocation3 + $0x8c] sm:$0xf]
    %v4897 = vld [vmem:[#allocation3 + $0x90] sm:$0xff]
    %v4898 = vld [vmem:[#allocation3 + $0x98] sm:$0xf]
    %v4899 = vld [vmem:[#allocation3 + $0x9c] sm:$0xff]
    %v4900 = vld [vmem:[#allocation3 + $0xa4] sm:$0xf]
    %v4901 = vld [vmem:[#allocation3 + $0xa8] sm:$0xff]
    %v4902 = vld [vmem:[#allocation3 + $0xb0] sm:$0xf]
    %v4903 = vld [vmem:[#allocation3 + $0xb4] sm:$0xff]
    %v4904 = vld [vmem:[#allocation3 + $0xbc] sm:$0xf]
    %v4913 = vunpack.c.l.b16 %v4873
    %v4914 = vunpack.c.l.b16 %v4875
    %v4915 = vunpack.c.l.b16 %v4877
    %v4916 = vunpack.c.l.b16 %v4879
    %v4917 = vunpack.c.l.b16 %v4881
    %v4918 = vunpack.c.l.b16 %v4883
    %v4919 = vunpack.c.l.b16 %v4885
    %v4920 = vunpack.c.l.b16 %v4887
    %v4921 = vpack.c.b16 %v4914, %v4913
    %v4922 = vpack.c.b16 %v4916, %v4915
    %v4923 = vpack.c.b16 %v4918, %v4917
    %v4924 = vpack.c.b16 %v4920, %v4919
    %v4933 = vunpack.c.h.b16 %v4889
    %v4934 = vunpack.c.h.b16 %v4891
    %v4935 = vunpack.c.h.b16 %v4893
    %v4936 = vunpack.c.h.b16 %v4895
    %v4937 = vunpack.c.h.b16 %v4897
    %v4938 = vunpack.c.h.b16 %v4899
    %v4939 = vunpack.c.h.b16 %v4901
    %v4940 = vunpack.c.h.b16 %v4903
    %v4941 = vpack.c.b16 %v4934, %v4933
    %v4942 = vpack.c.b16 %v4936, %v4935
    %v4943 = vpack.c.b16 %v4938, %v4937
    %v4944 = vpack.c.b16 %v4940, %v4939
    %v4946 = vsel %vm2199, %v4921, 0
    %v4949 = vsel %vm2199, %v4922, 0
    %v4952 = vsel %vm2199, %v4923, 0
    %v4955 = vsel %vm2199, %v4924, 0
    %v4958 = vsel %vm2199, %v4941, 0
    %v4961 = vsel %vm2199, %v4942, 0
    %v4964 = vsel %vm2199, %v4943, 0
    %v4967 = vsel %vm2199, %v4944, 0
    %4969 = vmatprep.subr.bf16.mxu0 0
    %4970 = vmatpush1.bf16.xpose.msra.mxu0 0
    %4971 = vmatprep.subr.bf16.mxu0 0
    %4972 = vmatpush1.bf16.xpose.msra.mxu0 0
    %4973 = vmatprep.subr.bf16.mxu0 0
    %4974 = vmatpush1.bf16.xpose.msra.mxu0 0
    %4975 = vmatprep.subr.bf16.mxu0 0
    %4976 = vmatpush1.bf16.xpose.msra.mxu0 0
    %4977 = vmatprep.subr.bf16.mxu0 0
    %4978 = vmatpush1.bf16.xpose.msra.mxu0 %v4967
    %4979 = vmatprep.subr.bf16.mxu0 0
    %4980 = vmatpush1.bf16.xpose.msra.mxu0 %v4964
    %4981 = vmatprep.subr.bf16.mxu0 0
    %4982 = vmatpush1.bf16.xpose.msra.mxu0 %v4961
    %4983 = vmatprep.subr.bf16.mxu0 0
    %4984 = vmatpush1.bf16.xpose.msra.mxu0 %v4958
    %4985 = vmatprep.subr.bf16.mxu0 0
    %4986 = vmatpush2.bf16.xpose.msra.mxu0 0
    %4987 = vmatprep.subr.bf16.mxu0 0
    %4988 = vmatpush2.bf16.xpose.msra.mxu0 0
    %4989 = vmatprep.subr.bf16.mxu0 0
    %4990 = vmatpush2.bf16.xpose.msra.mxu0 0
    %4991 = vmatprep.subr.bf16.mxu0 0
    %4992 = vmatpush2.bf16.xpose.msra.mxu0 0
    %4993 = vmatprep.subr.bf16.mxu0 0
    %4994 = vmatpush2.bf16.xpose.msra.mxu0 0
    %4995 = vmatprep.subr.bf16.mxu0 0
    %4996 = vmatpush2.bf16.xpose.msra.mxu0 0
    %4997 = vmatprep.subr.bf16.mxu0 0
    %4998 = vmatpush2.bf16.xpose.msra.mxu0 0
    %4999 = vmatprep.subr.bf16.mxu0 0
    %5000 = vmatpush2.bf16.xpose.msra.mxu0 0
    %5001 = vmatprep.mubr.bf16.mxu0 0
    %5002 = vmatmul.mubr.bf16.gmra.mxu0 %v4946
    %v5003 = vpop.f32.mrf.mxu0
    %v5004 = vadd.f32 0.0, %v5003
    %v5005 = vpop.f32.mrf.mxu0
    %v5006 = vpop.f32.mrf.mxu0
    %v5007 = vadd.f32 0.0, %v5006
    %v5008 = vpop.f32.mrf.mxu0
    %5009 = vmatprep.mubr.bf16.mxu0 0
    %5010 = vmatmul.mubr.bf16.gmra.mxu0 %v4949
    %v5011 = vpop.f32.mrf.mxu0
    %v5012 = vadd.f32 0.0, %v5011
    %v5013 = vpop.f32.mrf.mxu0
    %v5014 = vpop.f32.mrf.mxu0
    %v5015 = vadd.f32 0.0, %v5014
    %v5016 = vpop.f32.mrf.mxu0
    %5017 = vmatprep.mubr.bf16.mxu0 0
    %5018 = vmatmul.mubr.bf16.gmra.mxu0 %v4952
    %v5019 = vpop.f32.mrf.mxu0
    %v5020 = vadd.f32 0.0, %v5019
    %v5021 = vpop.f32.mrf.mxu0
    %v5022 = vpop.f32.mrf.mxu0
    %v5023 = vadd.f32 0.0, %v5022
    %v5024 = vpop.f32.mrf.mxu0
    %5025 = vmatprep.mubr.bf16.mxu0 0
    %5026 = vmatmul.mubr.bf16.gmra.mxu0 %v4955
    %v5027 = vpop.f32.mrf.mxu0
    %v5028 = vadd.f32 0.0, %v5027
    %v5029 = vpop.f32.mrf.mxu0
    %v5030 = vpop.f32.mrf.mxu0
    %v5031 = vadd.f32 0.0, %v5030
    %v5032 = vpop.f32.mrf.mxu0
    %5033 = vdwg.mxu0
    %v5034 = vmul.f32 %v5004, 0.17677669
    %v5035 = vmul.f32 %v5007, 0.17677669
    %v5036 = vmul.f32 %v5012, 0.17677669
    %v5037 = vmul.f32 %v5015, 0.17677669
    %v5038 = vmul.f32 %v5020, 0.17677669
    %v5039 = vmul.f32 %v5023, 0.17677669
    %v5040 = vmul.f32 %v5028, 0.17677669
    %v5041 = vmul.f32 %v5031, 0.17677669
    %v5042 = vunpack.c.l.b16 %v4889
    %v5043 = vunpack.c.l.b16 %v4891
    %v5044 = vunpack.c.l.b16 %v4893
    %v5045 = vunpack.c.l.b16 %v4895
    %v5046 = vunpack.c.l.b16 %v4897
    %v5047 = vunpack.c.l.b16 %v4899
    %v5048 = vunpack.c.l.b16 %v4901
    %v5049 = vunpack.c.l.b16 %v4903
    %v5050 = vpack.c.b16 %v5043, %v5042
    %v5051 = vpack.c.b16 %v5045, %v5044
    %v5052 = vpack.c.b16 %v5047, %v5046
    %v5053 = vpack.c.b16 %v5049, %v5048
    %v5054 = vunpack.c.h.b16 %v4873
    %v5055 = vunpack.c.h.b16 %v4875
    %v5056 = vunpack.c.h.b16 %v4877
    %v5057 = vunpack.c.h.b16 %v4879
    %v5058 = vunpack.c.h.b16 %v4881
    %v5059 = vunpack.c.h.b16 %v4883
    %v5060 = vunpack.c.h.b16 %v4885
    %v5061 = vunpack.c.h.b16 %v4887
    %v5062 = vpack.c.b16 %v5055, %v5054
    %v5063 = vpack.c.b16 %v5057, %v5056
    %v5064 = vpack.c.b16 %v5059, %v5058
    %v5065 = vpack.c.b16 %v5061, %v5060
    %v5067 = vsel %vm2199, %v5050, 0
    %v5070 = vsel %vm2199, %v5051, 0
    %v5073 = vsel %vm2199, %v5052, 0
    %v5076 = vsel %vm2199, %v5053, 0
    %v5079 = vsel %vm2199, %v5062, 0
    %v5082 = vsel %vm2199, %v5063, 0
    %v5085 = vsel %vm2199, %v5064, 0
    %v5088 = vsel %vm2199, %v5065, 0
    %5090 = vmatprep.subr.bf16.mxu0 0
    %5091 = vmatpush1.bf16.xpose.msra.mxu0 0
    %5092 = vmatprep.subr.bf16.mxu0 0
    %5093 = vmatpush1.bf16.xpose.msra.mxu0 0
    %5094 = vmatprep.subr.bf16.mxu0 0
    %5095 = vmatpush1.bf16.xpose.msra.mxu0 0
    %5096 = vmatprep.subr.bf16.mxu0 0
    %5097 = vmatpush1.bf16.xpose.msra.mxu0 0
    %5098 = vmatprep.subr.bf16.mxu0 0
    %5099 = vmatpush1.bf16.xpose.msra.mxu0 %v5088
    %5100 = vmatprep.subr.bf16.mxu0 0
    %5101 = vmatpush1.bf16.xpose.msra.mxu0 %v5085
    %5102 = vmatprep.subr.bf16.mxu0 0
    %5103 = vmatpush1.bf16.xpose.msra.mxu0 %v5082
    %5104 = vmatprep.subr.bf16.mxu0 0
    %5105 = vmatpush1.bf16.xpose.msra.mxu0 %v5079
    %5106 = vmatprep.subr.bf16.mxu0 0
    %5107 = vmatpush2.bf16.xpose.msra.mxu0 0
    %5108 = vmatprep.subr.bf16.mxu0 0
    %5109 = vmatpush2.bf16.xpose.msra.mxu0 0
    %5110 = vmatprep.subr.bf16.mxu0 0
    %5111 = vmatpush2.bf16.xpose.msra.mxu0 0
    %5112 = vmatprep.subr.bf16.mxu0 0
    %5113 = vmatpush2.bf16.xpose.msra.mxu0 0
    %5114 = vmatprep.subr.bf16.mxu0 0
    %5115 = vmatpush2.bf16.xpose.msra.mxu0 0
    %5116 = vmatprep.subr.bf16.mxu0 0
    %5117 = vmatpush2.bf16.xpose.msra.mxu0 0
    %5118 = vmatprep.subr.bf16.mxu0 0
    %5119 = vmatpush2.bf16.xpose.msra.mxu0 0
    %5120 = vmatprep.subr.bf16.mxu0 0
    %5121 = vmatpush2.bf16.xpose.msra.mxu0 0
    %5122 = vmatprep.mubr.bf16.mxu0 0
    %5123 = vmatmul.mubr.bf16.gmra.mxu0 %v5067
    %v5124 = vpop.f32.mrf.mxu0
    %v5125 = vadd.f32 0.0, %v5124
    %v5126 = vpop.f32.mrf.mxu0
    %v5127 = vpop.f32.mrf.mxu0
    %v5128 = vadd.f32 0.0, %v5127
    %v5129 = vpop.f32.mrf.mxu0
    %5130 = vmatprep.mubr.bf16.mxu0 0
    %5131 = vmatmul.mubr.bf16.gmra.mxu0 %v5070
    %v5132 = vpop.f32.mrf.mxu0
    %v5133 = vadd.f32 0.0, %v5132
    %v5134 = vpop.f32.mrf.mxu0
    %v5135 = vpop.f32.mrf.mxu0
    %v5136 = vadd.f32 0.0, %v5135
    %v5137 = vpop.f32.mrf.mxu0
    %5138 = vmatprep.mubr.bf16.mxu0 0
    %5139 = vmatmul.mubr.bf16.gmra.mxu0 %v5073
    %v5140 = vpop.f32.mrf.mxu0
    %v5141 = vadd.f32 0.0, %v5140
    %v5142 = vpop.f32.mrf.mxu0
    %v5143 = vpop.f32.mrf.mxu0
    %v5144 = vadd.f32 0.0, %v5143
    %v5145 = vpop.f32.mrf.mxu0
    %5146 = vmatprep.mubr.bf16.mxu0 0
    %5147 = vmatmul.mubr.bf16.gmra.mxu0 %v5076
    %v5148 = vpop.f32.mrf.mxu0
    %v5149 = vadd.f32 0.0, %v5148
    %v5150 = vpop.f32.mrf.mxu0
    %v5151 = vpop.f32.mrf.mxu0
    %v5152 = vadd.f32 0.0, %v5151
    %v5153 = vpop.f32.mrf.mxu0
    %5154 = vdwg.mxu0
    %v5155 = vmul.f32 %v5125, 0.17677669
    %v5156 = vmul.f32 %v5128, 0.17677669
    %v5157 = vmul.f32 %v5133, 0.17677669
    %v5158 = vmul.f32 %v5136, 0.17677669
    %v5159 = vmul.f32 %v5141, 0.17677669
    %v5160 = vmul.f32 %v5144, 0.17677669
    %v5161 = vmul.f32 %v5149, 0.17677669
    %v5162 = vmul.f32 %v5152, 0.17677669
    %v5163 = vsel %vm265, %v5034, -inf
    %5164 = vmax.xlane.f32.xlu0 %v5163
    %v5165 = vpop.xlane.xlu0 %5164
    %v5166 = vsel %vm265, %v5035, -inf
    %5167 = vmax.xlane.f32.xlu0 %v5166
    %v5168 = vpop.xlane.xlu0 %5167
    %v5169 = vsel %vm265, %v5036, -inf
    %5170 = vmax.xlane.f32.xlu0 %v5169
    %v5171 = vpop.xlane.xlu0 %5170
    %v5172 = vsel %vm265, %v5037, -inf
    %5173 = vmax.xlane.f32.xlu0 %v5172
    %v5174 = vpop.xlane.xlu0 %5173
    %v5175 = vsel %vm265, %v5038, -inf
    %5176 = vmax.xlane.f32.xlu0 %v5175
    %v5177 = vpop.xlane.xlu0 %5176
    %v5178 = vsel %vm265, %v5039, -inf
    %5179 = vmax.xlane.f32.xlu0 %v5178
    %v5180 = vpop.xlane.xlu0 %5179
    %v5181 = vsel %vm265, %v5040, -inf
    %5182 = vmax.xlane.f32.xlu0 %v5181
    %v5183 = vpop.xlane.xlu0 %5182
    %v5184 = vsel %vm265, %v5041, -inf
    %5185 = vmax.xlane.f32.xlu0 %v5184
    %v5186 = vpop.xlane.xlu0 %5185
    %v5187 = vsub.f32 %v5034, %v5165
    %v5188 = vsub.f32 %v5035, %v5168
    %v5189 = vsub.f32 %v5036, %v5171
    %v5190 = vsub.f32 %v5037, %v5174
    %v5191 = vsub.f32 %v5038, %v5177
    %v5192 = vsub.f32 %v5039, %v5180
    %v5193 = vsub.f32 %v5040, %v5183
    %v5194 = vsub.f32 %v5041, %v5186
    %v5195 = vpack.c.bf16 %v5188, %v5187
    %v5196 = vpack.c.bf16 %v5190, %v5189
    %v5197 = vpack.c.bf16 %v5192, %v5191
    %v5198 = vpack.c.bf16 %v5194, %v5193
    %v5200 = vmul.bf16 %v5195, 1069105081
    %v5201 = vpow.bf16.pop %v5200
    %v5203 = vmul.bf16 %v5196, 1069105081
    %v5204 = vpow.bf16.pop %v5203
    %v5206 = vmul.bf16 %v5197, 1069105081
    %v5207 = vpow.bf16.pop %v5206
    %v5209 = vmul.bf16 %v5198, 1069105081
    %v5210 = vpow.bf16.pop %v5209
    %v5211 = vunpack.c.l.bf16 %v5201
    %v5212 = vunpack.c.h.bf16 %v5201
    %v5213 = vunpack.c.l.bf16 %v5204
    %v5214 = vunpack.c.h.bf16 %v5204
    %v5215 = vunpack.c.l.bf16 %v5207
    %v5216 = vunpack.c.h.bf16 %v5207
    %v5217 = vunpack.c.l.bf16 %v5210
    %v5218 = vunpack.c.h.bf16 %v5210
    %v5219 = vsel %vm265, %v5211, 0.0
    %5220 = vadd.xlane.f32.xlu0 %v5219
    %v5221 = vpop.xlane.xlu0 %5220
    %v5222 = vsel %vm265, %v5212, 0.0
    %5223 = vadd.xlane.f32.xlu0 %v5222
    %v5224 = vpop.xlane.xlu0 %5223
    %v5225 = vsel %vm265, %v5213, 0.0
    %5226 = vadd.xlane.f32.xlu0 %v5225
    %v5227 = vpop.xlane.xlu0 %5226
    %v5228 = vsel %vm265, %v5214, 0.0
    %5229 = vadd.xlane.f32.xlu0 %v5228
    %v5230 = vpop.xlane.xlu0 %5229
    %v5231 = vsel %vm265, %v5215, 0.0
    %5232 = vadd.xlane.f32.xlu0 %v5231
    %v5233 = vpop.xlane.xlu0 %5232
    %v5234 = vsel %vm265, %v5216, 0.0
    %5235 = vadd.xlane.f32.xlu0 %v5234
    %v5236 = vpop.xlane.xlu0 %5235
    %v5237 = vsel %vm265, %v5217, 0.0
    %5238 = vadd.xlane.f32.xlu0 %v5237
    %v5239 = vpop.xlane.xlu0 %5238
    %v5240 = vsel %vm265, %v5218, 0.0
    %5241 = vadd.xlane.f32.xlu0 %v5240
    %v5242 = vpop.xlane.xlu0 %5241
    %v5243 = vrcp.pop %v5221
    %v5244 = vrcp.pop %v5224
    %v5245 = vrcp.pop %v5227
    %v5246 = vrcp.pop %v5230
    %v5247 = vrcp.pop %v5233
    %v5248 = vrcp.pop %v5236
    %v5249 = vrcp.pop %v5239
    %v5250 = vrcp.pop %v5242
    %v5251 = vmul.f32 %v5211, %v5243
    %v5252 = vmul.f32 %v5212, %v5244
    %v5253 = vmul.f32 %v5213, %v5245
    %v5254 = vmul.f32 %v5214, %v5246
    %v5255 = vmul.f32 %v5215, %v5247
    %v5256 = vmul.f32 %v5216, %v5248
    %v5257 = vmul.f32 %v5217, %v5249
    %v5258 = vmul.f32 %v5218, %v5250
    %v5259 = vpack.c.bf16 %v5252, %v5251
    %v5260 = vpack.c.bf16 %v5254, %v5253
    %v5261 = vpack.c.bf16 %v5256, %v5255
    %v5262 = vpack.c.bf16 %v5258, %v5257
    %v5263 = vsel %vm265, %v5155, -inf
    %5264 = vmax.xlane.f32.xlu0 %v5263
    %v5265 = vpop.xlane.xlu0 %5264
    %v5266 = vsel %vm265, %v5156, -inf
    %5267 = vmax.xlane.f32.xlu0 %v5266
    %v5268 = vpop.xlane.xlu0 %5267
    %v5269 = vsel %vm265, %v5157, -inf
    %5270 = vmax.xlane.f32.xlu0 %v5269
    %v5271 = vpop.xlane.xlu0 %5270
    %v5272 = vsel %vm265, %v5158, -inf
    %5273 = vmax.xlane.f32.xlu0 %v5272
    %v5274 = vpop.xlane.xlu0 %5273
    %v5275 = vsel %vm265, %v5159, -inf
    %5276 = vmax.xlane.f32.xlu0 %v5275
    %v5277 = vpop.xlane.xlu0 %5276
    %v5278 = vsel %vm265, %v5160, -inf
    %5279 = vmax.xlane.f32.xlu0 %v5278
    %v5280 = vpop.xlane.xlu0 %5279
    %v5281 = vsel %vm265, %v5161, -inf
    %5282 = vmax.xlane.f32.xlu0 %v5281
    %v5283 = vpop.xlane.xlu0 %5282
    %v5284 = vsel %vm265, %v5162, -inf
    %5285 = vmax.xlane.f32.xlu0 %v5284
    %v5286 = vpop.xlane.xlu0 %5285
    %v5287 = vsub.f32 %v5155, %v5265
    %v5288 = vsub.f32 %v5156, %v5268
    %v5289 = vsub.f32 %v5157, %v5271
    %v5290 = vsub.f32 %v5158, %v5274
    %v5291 = vsub.f32 %v5159, %v5277
    %v5292 = vsub.f32 %v5160, %v5280
    %v5293 = vsub.f32 %v5161, %v5283
    %v5294 = vsub.f32 %v5162, %v5286
    %v5295 = vpack.c.bf16 %v5288, %v5287
    %v5296 = vpack.c.bf16 %v5290, %v5289
    %v5297 = vpack.c.bf16 %v5292, %v5291
    %v5298 = vpack.c.bf16 %v5294, %v5293
    %v5300 = vmul.bf16 %v5295, 1069105081
    %v5301 = vpow.bf16.pop %v5300
    %v5303 = vmul.bf16 %v5296, 1069105081
    %v5304 = vpow.bf16.pop %v5303
    %v5306 = vmul.bf16 %v5297, 1069105081
    %v5307 = vpow.bf16.pop %v5306
    %v5309 = vmul.bf16 %v5298, 1069105081
    %v5310 = vpow.bf16.pop %v5309
    %v5311 = vunpack.c.l.bf16 %v5301
    %v5312 = vunpack.c.h.bf16 %v5301
    %v5313 = vunpack.c.l.bf16 %v5304
    %v5314 = vunpack.c.h.bf16 %v5304
    %v5315 = vunpack.c.l.bf16 %v5307
    %v5316 = vunpack.c.h.bf16 %v5307
    %v5317 = vunpack.c.l.bf16 %v5310
    %v5318 = vunpack.c.h.bf16 %v5310
    %v5319 = vsel %vm265, %v5311, 0.0
    %5320 = vadd.xlane.f32.xlu0 %v5319
    %v5321 = vpop.xlane.xlu0 %5320
    %v5322 = vsel %vm265, %v5312, 0.0
    %5323 = vadd.xlane.f32.xlu0 %v5322
    %v5324 = vpop.xlane.xlu0 %5323
    %v5325 = vsel %vm265, %v5313, 0.0
    %5326 = vadd.xlane.f32.xlu0 %v5325
    %v5327 = vpop.xlane.xlu0 %5326
    %v5328 = vsel %vm265, %v5314, 0.0
    %5329 = vadd.xlane.f32.xlu0 %v5328
    %v5330 = vpop.xlane.xlu0 %5329
    %v5331 = vsel %vm265, %v5315, 0.0
    %5332 = vadd.xlane.f32.xlu0 %v5331
    %v5333 = vpop.xlane.xlu0 %5332
    %v5334 = vsel %vm265, %v5316, 0.0
    %5335 = vadd.xlane.f32.xlu0 %v5334
    %v5336 = vpop.xlane.xlu0 %5335
    %v5337 = vsel %vm265, %v5317, 0.0
    %5338 = vadd.xlane.f32.xlu0 %v5337
    %v5339 = vpop.xlane.xlu0 %5338
    %v5340 = vsel %vm265, %v5318, 0.0
    %5341 = vadd.xlane.f32.xlu0 %v5340
    %v5342 = vpop.xlane.xlu0 %5341
    %v5343 = vrcp.pop %v5321
    %v5344 = vrcp.pop %v5324
    %v5345 = vrcp.pop %v5327
    %v5346 = vrcp.pop %v5330
    %v5347 = vrcp.pop %v5333
    %v5348 = vrcp.pop %v5336
    %v5349 = vrcp.pop %v5339
    %v5350 = vrcp.pop %v5342
    %v5351 = vmul.f32 %v5311, %v5343
    %v5352 = vmul.f32 %v5312, %v5344
    %v5353 = vmul.f32 %v5313, %v5345
    %v5354 = vmul.f32 %v5314, %v5346
    %v5355 = vmul.f32 %v5315, %v5347
    %v5356 = vmul.f32 %v5316, %v5348
    %v5357 = vmul.f32 %v5317, %v5349
    %v5358 = vmul.f32 %v5318, %v5350
    %v5359 = vpack.c.bf16 %v5352, %v5351
    %v5360 = vpack.c.bf16 %v5354, %v5353
    %v5361 = vpack.c.bf16 %v5356, %v5355
    %v5362 = vpack.c.bf16 %v5358, %v5357
    %v5371 = vunpack.c.l.b16 %v4890
    %v5372 = vunpack.c.l.b16 %v4892
    %v5373 = vunpack.c.l.b16 %v4894
    %v5374 = vunpack.c.l.b16 %v4896
    %v5375 = vunpack.c.l.b16 %v4898
    %v5376 = vunpack.c.l.b16 %v4900
    %v5377 = vunpack.c.l.b16 %v4902
    %v5378 = vunpack.c.l.b16 %v4904
    %v5379 = vpack.c.b16 %v5372, %v5371
    %v5380 = vpack.c.b16 %v5374, %v5373
    %v5381 = vpack.c.b16 %v5376, %v5375
    %v5382 = vpack.c.b16 %v5378, %v5377
    %v5388 = vsel %vm265, %v5259, 0
    %v5391 = vsel %vm265, %v5260, 0
    %v5394 = vsel %vm265, %v5261, 0
    %v5397 = vsel %vm265, %v5262, 0
    %5399 = vmatprep.subr.bf16.mxu0 0
    %5400 = vmatpush1.bf16.msra.mxu0 0
    %5401 = vmatprep.subr.bf16.mxu0 0
    %5402 = vmatpush1.bf16.msra.mxu0 0
    %5403 = vmatprep.subr.bf16.mxu0 0
    %5404 = vmatpush1.bf16.msra.mxu0 0
    %5405 = vmatprep.subr.bf16.mxu0 0
    %5406 = vmatpush1.bf16.msra.mxu0 0
    %5407 = vmatprep.subr.bf16.mxu0 0
    %5408 = vmatpush1.bf16.msra.mxu0 %v5382
    %5409 = vmatprep.subr.bf16.mxu0 0
    %5410 = vmatpush1.bf16.msra.mxu0 %v5381
    %5411 = vmatprep.subr.bf16.mxu0 0
    %5412 = vmatpush1.bf16.msra.mxu0 %v5380
    %5413 = vmatprep.subr.bf16.mxu0 0
    %5414 = vmatpush1.bf16.msra.mxu0 %v5379
    %5415 = vmatprep.subr.bf16.mxu0 0
    %5416 = vmatpush2.bf16.msra.mxu0 0
    %5417 = vmatprep.subr.bf16.mxu0 0
    %5418 = vmatpush2.bf16.msra.mxu0 0
    %5419 = vmatprep.subr.bf16.mxu0 0
    %5420 = vmatpush2.bf16.msra.mxu0 0
    %5421 = vmatprep.subr.bf16.mxu0 0
    %5422 = vmatpush2.bf16.msra.mxu0 0
    %5423 = vmatprep.subr.bf16.mxu0 0
    %5424 = vmatpush2.bf16.msra.mxu0 0
    %5425 = vmatprep.subr.bf16.mxu0 0
    %5426 = vmatpush2.bf16.msra.mxu0 0
    %5427 = vmatprep.subr.bf16.mxu0 0
    %5428 = vmatpush2.bf16.msra.mxu0 0
    %5429 = vmatprep.subr.bf16.mxu0 0
    %5430 = vmatpush2.bf16.msra.mxu0 0
    %5431 = vmatprep.mubr.bf16.mxu0 0
    %5432 = vmatmul.mubr.bf16.gmra.mxu0 %v5388
    %v5433 = vpop.f32.mrf.mxu0
    %v5434 = vadd.f32 0.0, %v5433
    %v5435 = vpop.f32.mrf.mxu0
    %v5436 = vpop.f32.mrf.mxu0
    %v5437 = vadd.f32 0.0, %v5436
    %v5438 = vpop.f32.mrf.mxu0
    %5439 = vmatprep.mubr.bf16.mxu0 0
    %5440 = vmatmul.mubr.bf16.gmra.mxu0 %v5391
    %v5441 = vpop.f32.mrf.mxu0
    %v5442 = vadd.f32 0.0, %v5441
    %v5443 = vpop.f32.mrf.mxu0
    %v5444 = vpop.f32.mrf.mxu0
    %v5445 = vadd.f32 0.0, %v5444
    %v5446 = vpop.f32.mrf.mxu0
    %5447 = vmatprep.mubr.bf16.mxu0 0
    %5448 = vmatmul.mubr.bf16.gmra.mxu0 %v5394
    %v5449 = vpop.f32.mrf.mxu0
    %v5450 = vadd.f32 0.0, %v5449
    %v5451 = vpop.f32.mrf.mxu0
    %v5452 = vpop.f32.mrf.mxu0
    %v5453 = vadd.f32 0.0, %v5452
    %v5454 = vpop.f32.mrf.mxu0
    %5455 = vmatprep.mubr.bf16.mxu0 0
    %5456 = vmatmul.mubr.bf16.gmra.mxu0 %v5397
    %v5457 = vpop.f32.mrf.mxu0
    %v5458 = vadd.f32 0.0, %v5457
    %v5459 = vpop.f32.mrf.mxu0
    %v5460 = vpop.f32.mrf.mxu0
    %v5461 = vadd.f32 0.0, %v5460
    %v5462 = vpop.f32.mrf.mxu0
    %5463 = vdwg.mxu0
    %v5472 = vunpack.c.l.b16 %v4874
    %v5473 = vunpack.c.l.b16 %v4876
    %v5474 = vunpack.c.l.b16 %v4878
    %v5475 = vunpack.c.l.b16 %v4880
    %v5476 = vunpack.c.l.b16 %v4882
    %v5477 = vunpack.c.l.b16 %v4884
    %v5478 = vunpack.c.l.b16 %v4886
    %v5479 = vunpack.c.l.b16 %v4888
    %v5480 = vpack.c.b16 %v5473, %v5472
    %v5481 = vpack.c.b16 %v5475, %v5474
    %v5482 = vpack.c.b16 %v5477, %v5476
    %v5483 = vpack.c.b16 %v5479, %v5478
    %v5489 = vsel %vm265, %v5359, 0
    %v5492 = vsel %vm265, %v5360, 0
    %v5495 = vsel %vm265, %v5361, 0
    %v5498 = vsel %vm265, %v5362, 0
    %5500 = vmatprep.subr.bf16.mxu0 0
    %5501 = vmatpush1.bf16.msra.mxu0 0
    %5502 = vmatprep.subr.bf16.mxu0 0
    %5503 = vmatpush1.bf16.msra.mxu0 0
    %5504 = vmatprep.subr.bf16.mxu0 0
    %5505 = vmatpush1.bf16.msra.mxu0 0
    %5506 = vmatprep.subr.bf16.mxu0 0
    %5507 = vmatpush1.bf16.msra.mxu0 0
    %5508 = vmatprep.subr.bf16.mxu0 0
    %5509 = vmatpush1.bf16.msra.mxu0 %v5483
    %5510 = vmatprep.subr.bf16.mxu0 0
    %5511 = vmatpush1.bf16.msra.mxu0 %v5482
    %5512 = vmatprep.subr.bf16.mxu0 0
    %5513 = vmatpush1.bf16.msra.mxu0 %v5481
    %5514 = vmatprep.subr.bf16.mxu0 0
    %5515 = vmatpush1.bf16.msra.mxu0 %v5480
    %5516 = vmatprep.subr.bf16.mxu0 0
    %5517 = vmatpush2.bf16.msra.mxu0 0
    %5518 = vmatprep.subr.bf16.mxu0 0
    %5519 = vmatpush2.bf16.msra.mxu0 0
    %5520 = vmatprep.subr.bf16.mxu0 0
    %5521 = vmatpush2.bf16.msra.mxu0 0
    %5522 = vmatprep.subr.bf16.mxu0 0
    %5523 = vmatpush2.bf16.msra.mxu0 0
    %5524 = vmatprep.subr.bf16.mxu0 0
    %5525 = vmatpush2.bf16.msra.mxu0 0
    %5526 = vmatprep.subr.bf16.mxu0 0
    %5527 = vmatpush2.bf16.msra.mxu0 0
    %5528 = vmatprep.subr.bf16.mxu0 0
    %5529 = vmatpush2.bf16.msra.mxu0 0
    %5530 = vmatprep.subr.bf16.mxu0 0
    %5531 = vmatpush2.bf16.msra.mxu0 0
    %5532 = vmatprep.mubr.bf16.mxu0 0
    %5533 = vmatmul.mubr.bf16.gmra.mxu0 %v5489
    %v5534 = vpop.f32.mrf.mxu0
    %v5535 = vadd.f32 0.0, %v5534
    %v5536 = vpop.f32.mrf.mxu0
    %v5537 = vpop.f32.mrf.mxu0
    %v5538 = vadd.f32 0.0, %v5537
    %v5539 = vpop.f32.mrf.mxu0
    %5540 = vmatprep.mubr.bf16.mxu0 0
    %5541 = vmatmul.mubr.bf16.gmra.mxu0 %v5492
    %v5542 = vpop.f32.mrf.mxu0
    %v5543 = vadd.f32 0.0, %v5542
    %v5544 = vpop.f32.mrf.mxu0
    %v5545 = vpop.f32.mrf.mxu0
    %v5546 = vadd.f32 0.0, %v5545
    %v5547 = vpop.f32.mrf.mxu0
    %5548 = vmatprep.mubr.bf16.mxu0 0
    %5549 = vmatmul.mubr.bf16.gmra.mxu0 %v5495
    %v5550 = vpop.f32.mrf.mxu0
    %v5551 = vadd.f32 0.0, %v5550
    %v5552 = vpop.f32.mrf.mxu0
    %v5553 = vpop.f32.mrf.mxu0
    %v5554 = vadd.f32 0.0, %v5553
    %v5555 = vpop.f32.mrf.mxu0
    %5556 = vmatprep.mubr.bf16.mxu0 0
    %5557 = vmatmul.mubr.bf16.gmra.mxu0 %v5498
    %v5558 = vpop.f32.mrf.mxu0
    %v5559 = vadd.f32 0.0, %v5558
    %v5560 = vpop.f32.mrf.mxu0
    %v5561 = vpop.f32.mrf.mxu0
    %v5562 = vadd.f32 0.0, %v5561
    %v5563 = vpop.f32.mrf.mxu0
    %5564 = vdwg.mxu0
    %5565 = vrot.lane.b32.xlu0 %v4921, 96
    %v5566 = vpop.permute.xlu0 %5565
    %5567 = vrot.lane.b32.xlu0 %v4922, 96
    %v5568 = vpop.permute.xlu0 %5567
    %5569 = vrot.lane.b32.xlu0 %v4923, 96
    %v5570 = vpop.permute.xlu0 %5569
    %5571 = vrot.lane.b32.xlu0 %v4924, 96
    %v5572 = vpop.permute.xlu0 %5571
    %5573 = vrot.lane.b32.xlu0 %v4941, 96
    %v5574 = vpop.permute.xlu0 %5573
    %5575 = vrot.lane.b32.xlu0 %v4942, 96
    %v5576 = vpop.permute.xlu0 %5575
    %5577 = vrot.lane.b32.xlu0 %v4943, 96
    %v5578 = vpop.permute.xlu0 %5577
    %5579 = vrot.lane.b32.xlu0 %v4944, 96
    %v5580 = vpop.permute.xlu0 %5579
    %v5582 = vsel %vm2199, %v5566, 0
    %v5585 = vsel %vm2199, %v5568, 0
    %v5588 = vsel %vm2199, %v5570, 0
    %v5591 = vsel %vm2199, %v5572, 0
    %v5594 = vsel %vm2199, %v5574, 0
    %v5597 = vsel %vm2199, %v5576, 0
    %v5600 = vsel %vm2199, %v5578, 0
    %v5603 = vsel %vm2199, %v5580, 0
    %5605 = vmatprep.subr.bf16.mxu0 0
    %5606 = vmatpush1.bf16.xpose.msra.mxu0 0
    %5607 = vmatprep.subr.bf16.mxu0 0
    %5608 = vmatpush1.bf16.xpose.msra.mxu0 0
    %5609 = vmatprep.subr.bf16.mxu0 0
    %5610 = vmatpush1.bf16.xpose.msra.mxu0 0
    %5611 = vmatprep.subr.bf16.mxu0 0
    %5612 = vmatpush1.bf16.xpose.msra.mxu0 0
    %5613 = vmatprep.subr.bf16.mxu0 0
    %5614 = vmatpush1.bf16.xpose.msra.mxu0 %v5603
    %5615 = vmatprep.subr.bf16.mxu0 0
    %5616 = vmatpush1.bf16.xpose.msra.mxu0 %v5600
    %5617 = vmatprep.subr.bf16.mxu0 0
    %5618 = vmatpush1.bf16.xpose.msra.mxu0 %v5597
    %5619 = vmatprep.subr.bf16.mxu0 0
    %5620 = vmatpush1.bf16.xpose.msra.mxu0 %v5594
    %5621 = vmatprep.subr.bf16.mxu0 0
    %5622 = vmatpush2.bf16.xpose.msra.mxu0 0
    %5623 = vmatprep.subr.bf16.mxu0 0
    %5624 = vmatpush2.bf16.xpose.msra.mxu0 0
    %5625 = vmatprep.subr.bf16.mxu0 0
    %5626 = vmatpush2.bf16.xpose.msra.mxu0 0
    %5627 = vmatprep.subr.bf16.mxu0 0
    %5628 = vmatpush2.bf16.xpose.msra.mxu0 0
    %5629 = vmatprep.subr.bf16.mxu0 0
    %5630 = vmatpush2.bf16.xpose.msra.mxu0 0
    %5631 = vmatprep.subr.bf16.mxu0 0
    %5632 = vmatpush2.bf16.xpose.msra.mxu0 0
    %5633 = vmatprep.subr.bf16.mxu0 0
    %5634 = vmatpush2.bf16.xpose.msra.mxu0 0
    %5635 = vmatprep.subr.bf16.mxu0 0
    %5636 = vmatpush2.bf16.xpose.msra.mxu0 0
    %5637 = vmatprep.mubr.bf16.mxu0 0
    %5638 = vmatmul.mubr.bf16.gmra.mxu0 %v5582
    %v5639 = vpop.f32.mrf.mxu0
    %v5640 = vadd.f32 0.0, %v5639
    %v5641 = vpop.f32.mrf.mxu0
    %v5642 = vpop.f32.mrf.mxu0
    %v5643 = vadd.f32 0.0, %v5642
    %v5644 = vpop.f32.mrf.mxu0
    %5645 = vmatprep.mubr.bf16.mxu0 0
    %5646 = vmatmul.mubr.bf16.gmra.mxu0 %v5585
    %v5647 = vpop.f32.mrf.mxu0
    %v5648 = vadd.f32 0.0, %v5647
    %v5649 = vpop.f32.mrf.mxu0
    %v5650 = vpop.f32.mrf.mxu0
    %v5651 = vadd.f32 0.0, %v5650
    %v5652 = vpop.f32.mrf.mxu0
    %5653 = vmatprep.mubr.bf16.mxu0 0
    %5654 = vmatmul.mubr.bf16.gmra.mxu0 %v5588
    %v5655 = vpop.f32.mrf.mxu0
    %v5656 = vadd.f32 0.0, %v5655
    %v5657 = vpop.f32.mrf.mxu0
    %v5658 = vpop.f32.mrf.mxu0
    %v5659 = vadd.f32 0.0, %v5658
    %v5660 = vpop.f32.mrf.mxu0
    %5661 = vmatprep.mubr.bf16.mxu0 0
    %5662 = vmatmul.mubr.bf16.gmra.mxu0 %v5591
    %v5663 = vpop.f32.mrf.mxu0
    %v5664 = vadd.f32 0.0, %v5663
    %v5665 = vpop.f32.mrf.mxu0
    %v5666 = vpop.f32.mrf.mxu0
    %v5667 = vadd.f32 0.0, %v5666
    %v5668 = vpop.f32.mrf.mxu0
    %5669 = vdwg.mxu0
    %v5670 = vmul.f32 %v5640, 0.17677669
    %v5671 = vmul.f32 %v5643, 0.17677669
    %v5672 = vmul.f32 %v5648, 0.17677669
    %v5673 = vmul.f32 %v5651, 0.17677669
    %v5674 = vmul.f32 %v5656, 0.17677669
    %v5675 = vmul.f32 %v5659, 0.17677669
    %v5676 = vmul.f32 %v5664, 0.17677669
    %v5677 = vmul.f32 %v5667, 0.17677669
    %5678 = vrot.lane.b32.xlu0 %v5050, 96
    %v5679 = vpop.permute.xlu0 %5678
    %5680 = vrot.lane.b32.xlu0 %v5051, 96
    %v5681 = vpop.permute.xlu0 %5680
    %5682 = vrot.lane.b32.xlu0 %v5052, 96
    %v5683 = vpop.permute.xlu0 %5682
    %5684 = vrot.lane.b32.xlu0 %v5053, 96
    %v5685 = vpop.permute.xlu0 %5684
    %5686 = vrot.lane.b32.xlu0 %v5062, 96
    %v5687 = vpop.permute.xlu0 %5686
    %5688 = vrot.lane.b32.xlu0 %v5063, 96
    %v5689 = vpop.permute.xlu0 %5688
    %5690 = vrot.lane.b32.xlu0 %v5064, 96
    %v5691 = vpop.permute.xlu0 %5690
    %5692 = vrot.lane.b32.xlu0 %v5065, 96
    %v5693 = vpop.permute.xlu0 %5692
    %v5695 = vsel %vm2199, %v5679, 0
    %v5698 = vsel %vm2199, %v5681, 0
    %v5701 = vsel %vm2199, %v5683, 0
    %v5704 = vsel %vm2199, %v5685, 0
    %v5707 = vsel %vm2199, %v5687, 0
    %v5710 = vsel %vm2199, %v5689, 0
    %v5713 = vsel %vm2199, %v5691, 0
    %v5716 = vsel %vm2199, %v5693, 0
    %5718 = vmatprep.subr.bf16.mxu0 0
    %5719 = vmatpush1.bf16.xpose.msra.mxu0 0
    %5720 = vmatprep.subr.bf16.mxu0 0
    %5721 = vmatpush1.bf16.xpose.msra.mxu0 0
    %5722 = vmatprep.subr.bf16.mxu0 0
    %5723 = vmatpush1.bf16.xpose.msra.mxu0 0
    %5724 = vmatprep.subr.bf16.mxu0 0
    %5725 = vmatpush1.bf16.xpose.msra.mxu0 0
    %5726 = vmatprep.subr.bf16.mxu0 0
    %5727 = vmatpush1.bf16.xpose.msra.mxu0 %v5716
    %5728 = vmatprep.subr.bf16.mxu0 0
    %5729 = vmatpush1.bf16.xpose.msra.mxu0 %v5713
    %5730 = vmatprep.subr.bf16.mxu0 0
    %5731 = vmatpush1.bf16.xpose.msra.mxu0 %v5710
    %5732 = vmatprep.subr.bf16.mxu0 0
    %5733 = vmatpush1.bf16.xpose.msra.mxu0 %v5707
    %5734 = vmatprep.subr.bf16.mxu0 0
    %5735 = vmatpush2.bf16.xpose.msra.mxu0 0
    %5736 = vmatprep.subr.bf16.mxu0 0
    %5737 = vmatpush2.bf16.xpose.msra.mxu0 0
    %5738 = vmatprep.subr.bf16.mxu0 0
    %5739 = vmatpush2.bf16.xpose.msra.mxu0 0
    %5740 = vmatprep.subr.bf16.mxu0 0
    %5741 = vmatpush2.bf16.xpose.msra.mxu0 0
    %5742 = vmatprep.subr.bf16.mxu0 0
    %5743 = vmatpush2.bf16.xpose.msra.mxu0 0
    %5744 = vmatprep.subr.bf16.mxu0 0
    %5745 = vmatpush2.bf16.xpose.msra.mxu0 0
    %5746 = vmatprep.subr.bf16.mxu0 0
    %5747 = vmatpush2.bf16.xpose.msra.mxu0 0
    %5748 = vmatprep.subr.bf16.mxu0 0
    %5749 = vmatpush2.bf16.xpose.msra.mxu0 0
    %5750 = vmatprep.mubr.bf16.mxu0 0
    %5751 = vmatmul.mubr.bf16.gmra.mxu0 %v5695
    %v5752 = vpop.f32.mrf.mxu0
    %v5753 = vadd.f32 0.0, %v5752
    %v5754 = vpop.f32.mrf.mxu0
    %v5755 = vpop.f32.mrf.mxu0
    %v5756 = vadd.f32 0.0, %v5755
    %v5757 = vpop.f32.mrf.mxu0
    %5758 = vmatprep.mubr.bf16.mxu0 0
    %5759 = vmatmul.mubr.bf16.gmra.mxu0 %v5698
    %v5760 = vpop.f32.mrf.mxu0
    %v5761 = vadd.f32 0.0, %v5760
    %v5762 = vpop.f32.mrf.mxu0
    %v5763 = vpop.f32.mrf.mxu0
    %v5764 = vadd.f32 0.0, %v5763
    %v5765 = vpop.f32.mrf.mxu0
    %5766 = vmatprep.mubr.bf16.mxu0 0
    %5767 = vmatmul.mubr.bf16.gmra.mxu0 %v5701
    %v5768 = vpop.f32.mrf.mxu0
    %v5769 = vadd.f32 0.0, %v5768
    %v5770 = vpop.f32.mrf.mxu0
    %v5771 = vpop.f32.mrf.mxu0
    %v5772 = vadd.f32 0.0, %v5771
    %v5773 = vpop.f32.mrf.mxu0
    %5774 = vmatprep.mubr.bf16.mxu0 0
    %5775 = vmatmul.mubr.bf16.gmra.mxu0 %v5704
    %v5776 = vpop.f32.mrf.mxu0
    %v5777 = vadd.f32 0.0, %v5776
    %v5778 = vpop.f32.mrf.mxu0
    %v5779 = vpop.f32.mrf.mxu0
    %v5780 = vadd.f32 0.0, %v5779
    %v5781 = vpop.f32.mrf.mxu0
    %5782 = vdwg.mxu0
    %v5783 = vmul.f32 %v5753, 0.17677669
    %v5784 = vmul.f32 %v5756, 0.17677669
    %v5785 = vmul.f32 %v5761, 0.17677669
    %v5786 = vmul.f32 %v5764, 0.17677669
    %v5787 = vmul.f32 %v5769, 0.17677669
    %v5788 = vmul.f32 %v5772, 0.17677669
    %v5789 = vmul.f32 %v5777, 0.17677669
    %v5790 = vmul.f32 %v5780, 0.17677669
    %v5791 = vsel %vm265, %v5670, -inf
    %5792 = vmax.xlane.f32.xlu0 %v5791
    %v5793 = vpop.xlane.xlu0 %5792
    %v5794 = vsel %vm265, %v5671, -inf
    %5795 = vmax.xlane.f32.xlu0 %v5794
    %v5796 = vpop.xlane.xlu0 %5795
    %v5797 = vsel %vm265, %v5672, -inf
    %5798 = vmax.xlane.f32.xlu0 %v5797
    %v5799 = vpop.xlane.xlu0 %5798
    %v5800 = vsel %vm265, %v5673, -inf
    %5801 = vmax.xlane.f32.xlu0 %v5800
    %v5802 = vpop.xlane.xlu0 %5801
    %v5803 = vsel %vm265, %v5674, -inf
    %5804 = vmax.xlane.f32.xlu0 %v5803
    %v5805 = vpop.xlane.xlu0 %5804
    %v5806 = vsel %vm265, %v5675, -inf
    %5807 = vmax.xlane.f32.xlu0 %v5806
    %v5808 = vpop.xlane.xlu0 %5807
    %v5809 = vsel %vm265, %v5676, -inf
    %5810 = vmax.xlane.f32.xlu0 %v5809
    %v5811 = vpop.xlane.xlu0 %5810
    %v5812 = vsel %vm265, %v5677, -inf
    %5813 = vmax.xlane.f32.xlu0 %v5812
    %v5814 = vpop.xlane.xlu0 %5813
    %v5815 = vsub.f32 %v5670, %v5793
    %v5816 = vsub.f32 %v5671, %v5796
    %v5817 = vsub.f32 %v5672, %v5799
    %v5818 = vsub.f32 %v5673, %v5802
    %v5819 = vsub.f32 %v5674, %v5805
    %v5820 = vsub.f32 %v5675, %v5808
    %v5821 = vsub.f32 %v5676, %v5811
    %v5822 = vsub.f32 %v5677, %v5814
    %v5823 = vpack.c.bf16 %v5816, %v5815
    %v5824 = vpack.c.bf16 %v5818, %v5817
    %v5825 = vpack.c.bf16 %v5820, %v5819
    %v5826 = vpack.c.bf16 %v5822, %v5821
    %v5828 = vmul.bf16 %v5823, 1069105081
    %v5829 = vpow.bf16.pop %v5828
    %v5831 = vmul.bf16 %v5824, 1069105081
    %v5832 = vpow.bf16.pop %v5831
    %v5834 = vmul.bf16 %v5825, 1069105081
    %v5835 = vpow.bf16.pop %v5834
    %v5837 = vmul.bf16 %v5826, 1069105081
    %v5838 = vpow.bf16.pop %v5837
    %v5839 = vunpack.c.l.bf16 %v5829
    %v5840 = vunpack.c.h.bf16 %v5829
    %v5841 = vunpack.c.l.bf16 %v5832
    %v5842 = vunpack.c.h.bf16 %v5832
    %v5843 = vunpack.c.l.bf16 %v5835
    %v5844 = vunpack.c.h.bf16 %v5835
    %v5845 = vunpack.c.l.bf16 %v5838
    %v5846 = vunpack.c.h.bf16 %v5838
    %v5847 = vsel %vm265, %v5839, 0.0
    %5848 = vadd.xlane.f32.xlu0 %v5847
    %v5849 = vpop.xlane.xlu0 %5848
    %v5850 = vsel %vm265, %v5840, 0.0
    %5851 = vadd.xlane.f32.xlu0 %v5850
    %v5852 = vpop.xlane.xlu0 %5851
    %v5853 = vsel %vm265, %v5841, 0.0
    %5854 = vadd.xlane.f32.xlu0 %v5853
    %v5855 = vpop.xlane.xlu0 %5854
    %v5856 = vsel %vm265, %v5842, 0.0
    %5857 = vadd.xlane.f32.xlu0 %v5856
    %v5858 = vpop.xlane.xlu0 %5857
    %v5859 = vsel %vm265, %v5843, 0.0
    %5860 = vadd.xlane.f32.xlu0 %v5859
    %v5861 = vpop.xlane.xlu0 %5860
    %v5862 = vsel %vm265, %v5844, 0.0
    %5863 = vadd.xlane.f32.xlu0 %v5862
    %v5864 = vpop.xlane.xlu0 %5863
    %v5865 = vsel %vm265, %v5845, 0.0
    %5866 = vadd.xlane.f32.xlu0 %v5865
    %v5867 = vpop.xlane.xlu0 %5866
    %v5868 = vsel %vm265, %v5846, 0.0
    %5869 = vadd.xlane.f32.xlu0 %v5868
    %v5870 = vpop.xlane.xlu0 %5869
    %v5871 = vrcp.pop %v5849
    %v5872 = vrcp.pop %v5852
    %v5873 = vrcp.pop %v5855
    %v5874 = vrcp.pop %v5858
    %v5875 = vrcp.pop %v5861
    %v5876 = vrcp.pop %v5864
    %v5877 = vrcp.pop %v5867
    %v5878 = vrcp.pop %v5870
    %v5879 = vmul.f32 %v5839, %v5871
    %v5880 = vmul.f32 %v5840, %v5872
    %v5881 = vmul.f32 %v5841, %v5873
    %v5882 = vmul.f32 %v5842, %v5874
    %v5883 = vmul.f32 %v5843, %v5875
    %v5884 = vmul.f32 %v5844, %v5876
    %v5885 = vmul.f32 %v5845, %v5877
    %v5886 = vmul.f32 %v5846, %v5878
    %v5887 = vpack.c.bf16 %v5880, %v5879
    %v5888 = vpack.c.bf16 %v5882, %v5881
    %v5889 = vpack.c.bf16 %v5884, %v5883
    %v5890 = vpack.c.bf16 %v5886, %v5885
    %v5891 = vsel %vm265, %v5783, -inf
    %5892 = vmax.xlane.f32.xlu0 %v5891
    %v5893 = vpop.xlane.xlu0 %5892
    %v5894 = vsel %vm265, %v5784, -inf
    %5895 = vmax.xlane.f32.xlu0 %v5894
    %v5896 = vpop.xlane.xlu0 %5895
    %v5897 = vsel %vm265, %v5785, -inf
    %5898 = vmax.xlane.f32.xlu0 %v5897
    %v5899 = vpop.xlane.xlu0 %5898
    %v5900 = vsel %vm265, %v5786, -inf
    %5901 = vmax.xlane.f32.xlu0 %v5900
    %v5902 = vpop.xlane.xlu0 %5901
    %v5903 = vsel %vm265, %v5787, -inf
    %5904 = vmax.xlane.f32.xlu0 %v5903
    %v5905 = vpop.xlane.xlu0 %5904
    %v5906 = vsel %vm265, %v5788, -inf
    %5907 = vmax.xlane.f32.xlu0 %v5906
    %v5908 = vpop.xlane.xlu0 %5907
    %v5909 = vsel %vm265, %v5789, -inf
    %5910 = vmax.xlane.f32.xlu0 %v5909
    %v5911 = vpop.xlane.xlu0 %5910
    %v5912 = vsel %vm265, %v5790, -inf
    %5913 = vmax.xlane.f32.xlu0 %v5912
    %v5914 = vpop.xlane.xlu0 %5913
    %v5915 = vsub.f32 %v5783, %v5893
    %v5916 = vsub.f32 %v5784, %v5896
    %v5917 = vsub.f32 %v5785, %v5899
    %v5918 = vsub.f32 %v5786, %v5902
    %v5919 = vsub.f32 %v5787, %v5905
    %v5920 = vsub.f32 %v5788, %v5908
    %v5921 = vsub.f32 %v5789, %v5911
    %v5922 = vsub.f32 %v5790, %v5914
    %v5923 = vpack.c.bf16 %v5916, %v5915
    %v5924 = vpack.c.bf16 %v5918, %v5917
    %v5925 = vpack.c.bf16 %v5920, %v5919
    %v5926 = vpack.c.bf16 %v5922, %v5921
    %v5928 = vmul.bf16 %v5923, 1069105081
    %v5929 = vpow.bf16.pop %v5928
    %v5931 = vmul.bf16 %v5924, 1069105081
    %v5932 = vpow.bf16.pop %v5931
    %v5934 = vmul.bf16 %v5925, 1069105081
    %v5935 = vpow.bf16.pop %v5934
    %v5937 = vmul.bf16 %v5926, 1069105081
    %v5938 = vpow.bf16.pop %v5937
    %v5939 = vunpack.c.l.bf16 %v5929
    %v5940 = vunpack.c.h.bf16 %v5929
    %v5941 = vunpack.c.l.bf16 %v5932
    %v5942 = vunpack.c.h.bf16 %v5932
    %v5943 = vunpack.c.l.bf16 %v5935
    %v5944 = vunpack.c.h.bf16 %v5935
    %v5945 = vunpack.c.l.bf16 %v5938
    %v5946 = vunpack.c.h.bf16 %v5938
    %v5947 = vsel %vm265, %v5939, 0.0
    %5948 = vadd.xlane.f32.xlu0 %v5947
    %v5949 = vpop.xlane.xlu0 %5948
    %v5950 = vsel %vm265, %v5940, 0.0
    %5951 = vadd.xlane.f32.xlu0 %v5950
    %v5952 = vpop.xlane.xlu0 %5951
    %v5953 = vsel %vm265, %v5941, 0.0
    %5954 = vadd.xlane.f32.xlu0 %v5953
    %v5955 = vpop.xlane.xlu0 %5954
    %v5956 = vsel %vm265, %v5942, 0.0
    %5957 = vadd.xlane.f32.xlu0 %v5956
    %v5958 = vpop.xlane.xlu0 %5957
    %v5959 = vsel %vm265, %v5943, 0.0
    %5960 = vadd.xlane.f32.xlu0 %v5959
    %v5961 = vpop.xlane.xlu0 %5960
    %v5962 = vsel %vm265, %v5944, 0.0
    %5963 = vadd.xlane.f32.xlu0 %v5962
    %v5964 = vpop.xlane.xlu0 %5963
    %v5965 = vsel %vm265, %v5945, 0.0
    %5966 = vadd.xlane.f32.xlu0 %v5965
    %v5967 = vpop.xlane.xlu0 %5966
    %v5968 = vsel %vm265, %v5946, 0.0
    %5969 = vadd.xlane.f32.xlu0 %v5968
    %v5970 = vpop.xlane.xlu0 %5969
    %v5971 = vrcp.pop %v5949
    %v5972 = vrcp.pop %v5952
    %v5973 = vrcp.pop %v5955
    %v5974 = vrcp.pop %v5958
    %v5975 = vrcp.pop %v5961
    %v5976 = vrcp.pop %v5964
    %v5977 = vrcp.pop %v5967
    %v5978 = vrcp.pop %v5970
    %v5979 = vmul.f32 %v5939, %v5971
    %v5980 = vmul.f32 %v5940, %v5972
    %v5981 = vmul.f32 %v5941, %v5973
    %v5982 = vmul.f32 %v5942, %v5974
    %v5983 = vmul.f32 %v5943, %v5975
    %v5984 = vmul.f32 %v5944, %v5976
    %v5985 = vmul.f32 %v5945, %v5977
    %v5986 = vmul.f32 %v5946, %v5978
    %v5987 = vpack.c.bf16 %v5980, %v5979
    %v5988 = vpack.c.bf16 %v5982, %v5981
    %v5989 = vpack.c.bf16 %v5984, %v5983
    %v5990 = vpack.c.bf16 %v5986, %v5985
    %5991 = vrot.lane.b32.xlu0 %v5379, 96
    %v5992 = vpop.permute.xlu0 %5991
    %5993 = vrot.lane.b32.xlu0 %v5380, 96
    %v5994 = vpop.permute.xlu0 %5993
    %5995 = vrot.lane.b32.xlu0 %v5381, 96
    %v5996 = vpop.permute.xlu0 %5995
    %5997 = vrot.lane.b32.xlu0 %v5382, 96
    %v5998 = vpop.permute.xlu0 %5997
    %v6004 = vsel %vm265, %v5887, 0
    %v6007 = vsel %vm265, %v5888, 0
    %v6010 = vsel %vm265, %v5889, 0
    %v6013 = vsel %vm265, %v5890, 0
    %6015 = vmatprep.subr.bf16.mxu0 0
    %6016 = vmatpush1.bf16.msra.mxu0 0
    %6017 = vmatprep.subr.bf16.mxu0 0
    %6018 = vmatpush1.bf16.msra.mxu0 0
    %6019 = vmatprep.subr.bf16.mxu0 0
    %6020 = vmatpush1.bf16.msra.mxu0 0
    %6021 = vmatprep.subr.bf16.mxu0 0
    %6022 = vmatpush1.bf16.msra.mxu0 0
    %6023 = vmatprep.subr.bf16.mxu0 0
    %6024 = vmatpush1.bf16.msra.mxu0 %v5998
    %6025 = vmatprep.subr.bf16.mxu0 0
    %6026 = vmatpush1.bf16.msra.mxu0 %v5996
    %6027 = vmatprep.subr.bf16.mxu0 0
    %6028 = vmatpush1.bf16.msra.mxu0 %v5994
    %6029 = vmatprep.subr.bf16.mxu0 0
    %6030 = vmatpush1.bf16.msra.mxu0 %v5992
    %6031 = vmatprep.subr.bf16.mxu0 0
    %6032 = vmatpush2.bf16.msra.mxu0 0
    %6033 = vmatprep.subr.bf16.mxu0 0
    %6034 = vmatpush2.bf16.msra.mxu0 0
    %6035 = vmatprep.subr.bf16.mxu0 0
    %6036 = vmatpush2.bf16.msra.mxu0 0
    %6037 = vmatprep.subr.bf16.mxu0 0
    %6038 = vmatpush2.bf16.msra.mxu0 0
    %6039 = vmatprep.subr.bf16.mxu0 0
    %6040 = vmatpush2.bf16.msra.mxu0 0
    %6041 = vmatprep.subr.bf16.mxu0 0
    %6042 = vmatpush2.bf16.msra.mxu0 0
    %6043 = vmatprep.subr.bf16.mxu0 0
    %6044 = vmatpush2.bf16.msra.mxu0 0
    %6045 = vmatprep.subr.bf16.mxu0 0
    %6046 = vmatpush2.bf16.msra.mxu0 0
    %6047 = vmatprep.mubr.bf16.mxu0 0
    %6048 = vmatmul.mubr.bf16.gmra.mxu0 %v6004
    %v6049 = vpop.f32.mrf.mxu0
    %v6050 = vadd.f32 0.0, %v6049
    %v6051 = vpop.f32.mrf.mxu0
    %v6052 = vpop.f32.mrf.mxu0
    %v6053 = vadd.f32 0.0, %v6052
    %v6054 = vpop.f32.mrf.mxu0
    %6055 = vmatprep.mubr.bf16.mxu0 0
    %6056 = vmatmul.mubr.bf16.gmra.mxu0 %v6007
    %v6057 = vpop.f32.mrf.mxu0
    %v6058 = vadd.f32 0.0, %v6057
    %v6059 = vpop.f32.mrf.mxu0
    %v6060 = vpop.f32.mrf.mxu0
    %v6061 = vadd.f32 0.0, %v6060
    %v6062 = vpop.f32.mrf.mxu0
    %6063 = vmatprep.mubr.bf16.mxu0 0
    %6064 = vmatmul.mubr.bf16.gmra.mxu0 %v6010
    %v6065 = vpop.f32.mrf.mxu0
    %v6066 = vadd.f32 0.0, %v6065
    %v6067 = vpop.f32.mrf.mxu0
    %v6068 = vpop.f32.mrf.mxu0
    %v6069 = vadd.f32 0.0, %v6068
    %v6070 = vpop.f32.mrf.mxu0
    %6071 = vmatprep.mubr.bf16.mxu0 0
    %6072 = vmatmul.mubr.bf16.gmra.mxu0 %v6013
    %v6073 = vpop.f32.mrf.mxu0
    %v6074 = vadd.f32 0.0, %v6073
    %v6075 = vpop.f32.mrf.mxu0
    %v6076 = vpop.f32.mrf.mxu0
    %v6077 = vadd.f32 0.0, %v6076
    %v6078 = vpop.f32.mrf.mxu0
    %6079 = vdwg.mxu0
    %6080 = vrot.lane.b32.xlu0 %v5480, 96
    %v6081 = vpop.permute.xlu0 %6080
    %6082 = vrot.lane.b32.xlu0 %v5481, 96
    %v6083 = vpop.permute.xlu0 %6082
    %6084 = vrot.lane.b32.xlu0 %v5482, 96
    %v6085 = vpop.permute.xlu0 %6084
    %6086 = vrot.lane.b32.xlu0 %v5483, 96
    %v6087 = vpop.permute.xlu0 %6086
    %v6093 = vsel %vm265, %v5987, 0
    %v6096 = vsel %vm265, %v5988, 0
    %v6099 = vsel %vm265, %v5989, 0
    %v6102 = vsel %vm265, %v5990, 0
    %6104 = vmatprep.subr.bf16.mxu0 0
    %6105 = vmatpush1.bf16.msra.mxu0 0
    %6106 = vmatprep.subr.bf16.mxu0 0
    %6107 = vmatpush1.bf16.msra.mxu0 0
    %6108 = vmatprep.subr.bf16.mxu0 0
    %6109 = vmatpush1.bf16.msra.mxu0 0
    %6110 = vmatprep.subr.bf16.mxu0 0
    %6111 = vmatpush1.bf16.msra.mxu0 0
    %6112 = vmatprep.subr.bf16.mxu0 0
    %6113 = vmatpush1.bf16.msra.mxu0 %v6087
    %6114 = vmatprep.subr.bf16.mxu0 0
    %6115 = vmatpush1.bf16.msra.mxu0 %v6085
    %6116 = vmatprep.subr.bf16.mxu0 0
    %6117 = vmatpush1.bf16.msra.mxu0 %v6083
    %6118 = vmatprep.subr.bf16.mxu0 0
    %6119 = vmatpush1.bf16.msra.mxu0 %v6081
    %6120 = vmatprep.subr.bf16.mxu0 0
    %6121 = vmatpush2.bf16.msra.mxu0 0
    %6122 = vmatprep.subr.bf16.mxu0 0
    %6123 = vmatpush2.bf16.msra.mxu0 0
    %6124 = vmatprep.subr.bf16.mxu0 0
    %6125 = vmatpush2.bf16.msra.mxu0 0
    %6126 = vmatprep.subr.bf16.mxu0 0
    %6127 = vmatpush2.bf16.msra.mxu0 0
    %6128 = vmatprep.subr.bf16.mxu0 0
    %6129 = vmatpush2.bf16.msra.mxu0 0
    %6130 = vmatprep.subr.bf16.mxu0 0
    %6131 = vmatpush2.bf16.msra.mxu0 0
    %6132 = vmatprep.subr.bf16.mxu0 0
    %6133 = vmatpush2.bf16.msra.mxu0 0
    %6134 = vmatprep.subr.bf16.mxu0 0
    %6135 = vmatpush2.bf16.msra.mxu0 0
    %6136 = vmatprep.mubr.bf16.mxu0 0
    %6137 = vmatmul.mubr.bf16.gmra.mxu0 %v6093
    %v6138 = vpop.f32.mrf.mxu0
    %v6139 = vadd.f32 0.0, %v6138
    %v6140 = vpop.f32.mrf.mxu0
    %v6141 = vpop.f32.mrf.mxu0
    %v6142 = vadd.f32 0.0, %v6141
    %v6143 = vpop.f32.mrf.mxu0
    %6144 = vmatprep.mubr.bf16.mxu0 0
    %6145 = vmatmul.mubr.bf16.gmra.mxu0 %v6096
    %v6146 = vpop.f32.mrf.mxu0
    %v6147 = vadd.f32 0.0, %v6146
    %v6148 = vpop.f32.mrf.mxu0
    %v6149 = vpop.f32.mrf.mxu0
    %v6150 = vadd.f32 0.0, %v6149
    %v6151 = vpop.f32.mrf.mxu0
    %6152 = vmatprep.mubr.bf16.mxu0 0
    %6153 = vmatmul.mubr.bf16.gmra.mxu0 %v6099
    %v6154 = vpop.f32.mrf.mxu0
    %v6155 = vadd.f32 0.0, %v6154
    %v6156 = vpop.f32.mrf.mxu0
    %v6157 = vpop.f32.mrf.mxu0
    %v6158 = vadd.f32 0.0, %v6157
    %v6159 = vpop.f32.mrf.mxu0
    %6160 = vmatprep.mubr.bf16.mxu0 0
    %6161 = vmatmul.mubr.bf16.gmra.mxu0 %v6102
    %v6162 = vpop.f32.mrf.mxu0
    %v6163 = vadd.f32 0.0, %v6162
    %v6164 = vpop.f32.mrf.mxu0
    %v6165 = vpop.f32.mrf.mxu0
    %v6166 = vadd.f32 0.0, %v6165
    %v6167 = vpop.f32.mrf.mxu0
    %6168 = vdwg.mxu0
    %6169 = vrot.lane.b32.xlu0 %v4921, 64
    %v6170 = vpop.permute.xlu0 %6169
    %6171 = vrot.lane.b32.xlu0 %v4922, 64
    %v6172 = vpop.permute.xlu0 %6171
    %6173 = vrot.lane.b32.xlu0 %v4923, 64
    %v6174 = vpop.permute.xlu0 %6173
    %6175 = vrot.lane.b32.xlu0 %v4924, 64
    %v6176 = vpop.permute.xlu0 %6175
    %6177 = vrot.lane.b32.xlu0 %v4941, 64
    %v6178 = vpop.permute.xlu0 %6177
    %6179 = vrot.lane.b32.xlu0 %v4942, 64
    %v6180 = vpop.permute.xlu0 %6179
    %6181 = vrot.lane.b32.xlu0 %v4943, 64
    %v6182 = vpop.permute.xlu0 %6181
    %6183 = vrot.lane.b32.xlu0 %v4944, 64
    %v6184 = vpop.permute.xlu0 %6183
    %v6186 = vsel %vm2199, %v6170, 0
    %v6189 = vsel %vm2199, %v6172, 0
    %v6192 = vsel %vm2199, %v6174, 0
    %v6195 = vsel %vm2199, %v6176, 0
    %v6198 = vsel %vm2199, %v6178, 0
    %v6201 = vsel %vm2199, %v6180, 0
    %v6204 = vsel %vm2199, %v6182, 0
    %v6207 = vsel %vm2199, %v6184, 0
    %6209 = vmatprep.subr.bf16.mxu0 0
    %6210 = vmatpush1.bf16.xpose.msra.mxu0 0
    %6211 = vmatprep.subr.bf16.mxu0 0
    %6212 = vmatpush1.bf16.xpose.msra.mxu0 0
    %6213 = vmatprep.subr.bf16.mxu0 0
    %6214 = vmatpush1.bf16.xpose.msra.mxu0 0
    %6215 = vmatprep.subr.bf16.mxu0 0
    %6216 = vmatpush1.bf16.xpose.msra.mxu0 0
    %6217 = vmatprep.subr.bf16.mxu0 0
    %6218 = vmatpush1.bf16.xpose.msra.mxu0 %v6207
    %6219 = vmatprep.subr.bf16.mxu0 0
    %6220 = vmatpush1.bf16.xpose.msra.mxu0 %v6204
    %6221 = vmatprep.subr.bf16.mxu0 0
    %6222 = vmatpush1.bf16.xpose.msra.mxu0 %v6201
    %6223 = vmatprep.subr.bf16.mxu0 0
    %6224 = vmatpush1.bf16.xpose.msra.mxu0 %v6198
    %6225 = vmatprep.subr.bf16.mxu0 0
    %6226 = vmatpush2.bf16.xpose.msra.mxu0 0
    %6227 = vmatprep.subr.bf16.mxu0 0
    %6228 = vmatpush2.bf16.xpose.msra.mxu0 0
    %6229 = vmatprep.subr.bf16.mxu0 0
    %6230 = vmatpush2.bf16.xpose.msra.mxu0 0
    %6231 = vmatprep.subr.bf16.mxu0 0
    %6232 = vmatpush2.bf16.xpose.msra.mxu0 0
    %6233 = vmatprep.subr.bf16.mxu0 0
    %6234 = vmatpush2.bf16.xpose.msra.mxu0 0
    %6235 = vmatprep.subr.bf16.mxu0 0
    %6236 = vmatpush2.bf16.xpose.msra.mxu0 0
    %6237 = vmatprep.subr.bf16.mxu0 0
    %6238 = vmatpush2.bf16.xpose.msra.mxu0 0
    %6239 = vmatprep.subr.bf16.mxu0 0
    %6240 = vmatpush2.bf16.xpose.msra.mxu0 0
    %6241 = vmatprep.mubr.bf16.mxu0 0
    %6242 = vmatmul.mubr.bf16.gmra.mxu0 %v6186
    %v6243 = vpop.f32.mrf.mxu0
    %v6244 = vadd.f32 0.0, %v6243
    %v6245 = vpop.f32.mrf.mxu0
    %v6246 = vpop.f32.mrf.mxu0
    %v6247 = vadd.f32 0.0, %v6246
    %v6248 = vpop.f32.mrf.mxu0
    %6249 = vmatprep.mubr.bf16.mxu0 0
    %6250 = vmatmul.mubr.bf16.gmra.mxu0 %v6189
    %v6251 = vpop.f32.mrf.mxu0
    %v6252 = vadd.f32 0.0, %v6251
    %v6253 = vpop.f32.mrf.mxu0
    %v6254 = vpop.f32.mrf.mxu0
    %v6255 = vadd.f32 0.0, %v6254
    %v6256 = vpop.f32.mrf.mxu0
    %6257 = vmatprep.mubr.bf16.mxu0 0
    %6258 = vmatmul.mubr.bf16.gmra.mxu0 %v6192
    %v6259 = vpop.f32.mrf.mxu0
    %v6260 = vadd.f32 0.0, %v6259
    %v6261 = vpop.f32.mrf.mxu0
    %v6262 = vpop.f32.mrf.mxu0
    %v6263 = vadd.f32 0.0, %v6262
    %v6264 = vpop.f32.mrf.mxu0
    %6265 = vmatprep.mubr.bf16.mxu0 0
    %6266 = vmatmul.mubr.bf16.gmra.mxu0 %v6195
    %v6267 = vpop.f32.mrf.mxu0
    %v6268 = vadd.f32 0.0, %v6267
    %v6269 = vpop.f32.mrf.mxu0
    %v6270 = vpop.f32.mrf.mxu0
    %v6271 = vadd.f32 0.0, %v6270
    %v6272 = vpop.f32.mrf.mxu0
    %6273 = vdwg.mxu0
    %v6274 = vmul.f32 %v6244, 0.17677669
    %v6275 = vmul.f32 %v6247, 0.17677669
    %v6276 = vmul.f32 %v6252, 0.17677669
    %v6277 = vmul.f32 %v6255, 0.17677669
    %v6278 = vmul.f32 %v6260, 0.17677669
    %v6279 = vmul.f32 %v6263, 0.17677669
    %v6280 = vmul.f32 %v6268, 0.17677669
    %v6281 = vmul.f32 %v6271, 0.17677669
    %6282 = vrot.lane.b32.xlu0 %v5050, 64
    %v6283 = vpop.permute.xlu0 %6282
    %6284 = vrot.lane.b32.xlu0 %v5051, 64
    %v6285 = vpop.permute.xlu0 %6284
    %6286 = vrot.lane.b32.xlu0 %v5052, 64
    %v6287 = vpop.permute.xlu0 %6286
    %6288 = vrot.lane.b32.xlu0 %v5053, 64
    %v6289 = vpop.permute.xlu0 %6288
    %6290 = vrot.lane.b32.xlu0 %v5062, 64
    %v6291 = vpop.permute.xlu0 %6290
    %6292 = vrot.lane.b32.xlu0 %v5063, 64
    %v6293 = vpop.permute.xlu0 %6292
    %6294 = vrot.lane.b32.xlu0 %v5064, 64
    %v6295 = vpop.permute.xlu0 %6294
    %6296 = vrot.lane.b32.xlu0 %v5065, 64
    %v6297 = vpop.permute.xlu0 %6296
    %v6299 = vsel %vm2199, %v6283, 0
    %v6302 = vsel %vm2199, %v6285, 0
    %v6305 = vsel %vm2199, %v6287, 0
    %v6308 = vsel %vm2199, %v6289, 0
    %v6311 = vsel %vm2199, %v6291, 0
    %v6314 = vsel %vm2199, %v6293, 0
    %v6317 = vsel %vm2199, %v6295, 0
    %v6320 = vsel %vm2199, %v6297, 0
    %6322 = vmatprep.subr.bf16.mxu0 0
    %6323 = vmatpush1.bf16.xpose.msra.mxu0 0
    %6324 = vmatprep.subr.bf16.mxu0 0
    %6325 = vmatpush1.bf16.xpose.msra.mxu0 0
    %6326 = vmatprep.subr.bf16.mxu0 0
    %6327 = vmatpush1.bf16.xpose.msra.mxu0 0
    %6328 = vmatprep.subr.bf16.mxu0 0
    %6329 = vmatpush1.bf16.xpose.msra.mxu0 0
    %6330 = vmatprep.subr.bf16.mxu0 0
    %6331 = vmatpush1.bf16.xpose.msra.mxu0 %v6320
    %6332 = vmatprep.subr.bf16.mxu0 0
    %6333 = vmatpush1.bf16.xpose.msra.mxu0 %v6317
    %6334 = vmatprep.subr.bf16.mxu0 0
    %6335 = vmatpush1.bf16.xpose.msra.mxu0 %v6314
    %6336 = vmatprep.subr.bf16.mxu0 0
    %6337 = vmatpush1.bf16.xpose.msra.mxu0 %v6311
    %6338 = vmatprep.subr.bf16.mxu0 0
    %6339 = vmatpush2.bf16.xpose.msra.mxu0 0
    %6340 = vmatprep.subr.bf16.mxu0 0
    %6341 = vmatpush2.bf16.xpose.msra.mxu0 0
    %6342 = vmatprep.subr.bf16.mxu0 0
    %6343 = vmatpush2.bf16.xpose.msra.mxu0 0
    %6344 = vmatprep.subr.bf16.mxu0 0
    %6345 = vmatpush2.bf16.xpose.msra.mxu0 0
    %6346 = vmatprep.subr.bf16.mxu0 0
    %6347 = vmatpush2.bf16.xpose.msra.mxu0 0
    %6348 = vmatprep.subr.bf16.mxu0 0
    %6349 = vmatpush2.bf16.xpose.msra.mxu0 0
    %6350 = vmatprep.subr.bf16.mxu0 0
    %6351 = vmatpush2.bf16.xpose.msra.mxu0 0
    %6352 = vmatprep.subr.bf16.mxu0 0
    %6353 = vmatpush2.bf16.xpose.msra.mxu0 0
    %6354 = vmatprep.mubr.bf16.mxu0 0
    %6355 = vmatmul.mubr.bf16.gmra.mxu0 %v6299
    %v6356 = vpop.f32.mrf.mxu0
    %v6357 = vadd.f32 0.0, %v6356
    %v6358 = vpop.f32.mrf.mxu0
    %v6359 = vpop.f32.mrf.mxu0
    %v6360 = vadd.f32 0.0, %v6359
    %v6361 = vpop.f32.mrf.mxu0
    %6362 = vmatprep.mubr.bf16.mxu0 0
    %6363 = vmatmul.mubr.bf16.gmra.mxu0 %v6302
    %v6364 = vpop.f32.mrf.mxu0
    %v6365 = vadd.f32 0.0, %v6364
    %v6366 = vpop.f32.mrf.mxu0
    %v6367 = vpop.f32.mrf.mxu0
    %v6368 = vadd.f32 0.0, %v6367
    %v6369 = vpop.f32.mrf.mxu0
    %6370 = vmatprep.mubr.bf16.mxu0 0
    %6371 = vmatmul.mubr.bf16.gmra.mxu0 %v6305
    %v6372 = vpop.f32.mrf.mxu0
    %v6373 = vadd.f32 0.0, %v6372
    %v6374 = vpop.f32.mrf.mxu0
    %v6375 = vpop.f32.mrf.mxu0
    %v6376 = vadd.f32 0.0, %v6375
    %v6377 = vpop.f32.mrf.mxu0
    %6378 = vmatprep.mubr.bf16.mxu0 0
    %6379 = vmatmul.mubr.bf16.gmra.mxu0 %v6308
    %v6380 = vpop.f32.mrf.mxu0
    %v6381 = vadd.f32 0.0, %v6380
    %v6382 = vpop.f32.mrf.mxu0
    %v6383 = vpop.f32.mrf.mxu0
    %v6384 = vadd.f32 0.0, %v6383
    %v6385 = vpop.f32.mrf.mxu0
    %6386 = vdwg.mxu0
    %v6387 = vmul.f32 %v6357, 0.17677669
    %v6388 = vmul.f32 %v6360, 0.17677669
    %v6389 = vmul.f32 %v6365, 0.17677669
    %v6390 = vmul.f32 %v6368, 0.17677669
    %v6391 = vmul.f32 %v6373, 0.17677669
    %v6392 = vmul.f32 %v6376, 0.17677669
    %v6393 = vmul.f32 %v6381, 0.17677669
    %v6394 = vmul.f32 %v6384, 0.17677669
    %v6395 = vsel %vm265, %v6274, -inf
    %6396 = vmax.xlane.f32.xlu0 %v6395
    %v6397 = vpop.xlane.xlu0 %6396
    %v6398 = vsel %vm265, %v6275, -inf
    %6399 = vmax.xlane.f32.xlu0 %v6398
    %v6400 = vpop.xlane.xlu0 %6399
    %v6401 = vsel %vm265, %v6276, -inf
    %6402 = vmax.xlane.f32.xlu0 %v6401
    %v6403 = vpop.xlane.xlu0 %6402
    %v6404 = vsel %vm265, %v6277, -inf
    %6405 = vmax.xlane.f32.xlu0 %v6404
    %v6406 = vpop.xlane.xlu0 %6405
    %v6407 = vsel %vm265, %v6278, -inf
    %6408 = vmax.xlane.f32.xlu0 %v6407
    %v6409 = vpop.xlane.xlu0 %6408
    %v6410 = vsel %vm265, %v6279, -inf
    %6411 = vmax.xlane.f32.xlu0 %v6410
    %v6412 = vpop.xlane.xlu0 %6411
    %v6413 = vsel %vm265, %v6280, -inf
    %6414 = vmax.xlane.f32.xlu0 %v6413
    %v6415 = vpop.xlane.xlu0 %6414
    %v6416 = vsel %vm265, %v6281, -inf
    %6417 = vmax.xlane.f32.xlu0 %v6416
    %v6418 = vpop.xlane.xlu0 %6417
    %v6419 = vsub.f32 %v6274, %v6397
    %v6420 = vsub.f32 %v6275, %v6400
    %v6421 = vsub.f32 %v6276, %v6403
    %v6422 = vsub.f32 %v6277, %v6406
    %v6423 = vsub.f32 %v6278, %v6409
    %v6424 = vsub.f32 %v6279, %v6412
    %v6425 = vsub.f32 %v6280, %v6415
    %v6426 = vsub.f32 %v6281, %v6418
    %v6427 = vpack.c.bf16 %v6420, %v6419
    %v6428 = vpack.c.bf16 %v6422, %v6421
    %v6429 = vpack.c.bf16 %v6424, %v6423
    %v6430 = vpack.c.bf16 %v6426, %v6425
    %v6432 = vmul.bf16 %v6427, 1069105081
    %v6433 = vpow.bf16.pop %v6432
    %v6435 = vmul.bf16 %v6428, 1069105081
    %v6436 = vpow.bf16.pop %v6435
    %v6438 = vmul.bf16 %v6429, 1069105081
    %v6439 = vpow.bf16.pop %v6438
    %v6441 = vmul.bf16 %v6430, 1069105081
    %v6442 = vpow.bf16.pop %v6441
    %v6443 = vunpack.c.l.bf16 %v6433
    %v6444 = vunpack.c.h.bf16 %v6433
    %v6445 = vunpack.c.l.bf16 %v6436
    %v6446 = vunpack.c.h.bf16 %v6436
    %v6447 = vunpack.c.l.bf16 %v6439
    %v6448 = vunpack.c.h.bf16 %v6439
    %v6449 = vunpack.c.l.bf16 %v6442
    %v6450 = vunpack.c.h.bf16 %v6442
    %v6451 = vsel %vm265, %v6443, 0.0
    %6452 = vadd.xlane.f32.xlu0 %v6451
    %v6453 = vpop.xlane.xlu0 %6452
    %v6454 = vsel %vm265, %v6444, 0.0
    %6455 = vadd.xlane.f32.xlu0 %v6454
    %v6456 = vpop.xlane.xlu0 %6455
    %v6457 = vsel %vm265, %v6445, 0.0
    %6458 = vadd.xlane.f32.xlu0 %v6457
    %v6459 = vpop.xlane.xlu0 %6458
    %v6460 = vsel %vm265, %v6446, 0.0
    %6461 = vadd.xlane.f32.xlu0 %v6460
    %v6462 = vpop.xlane.xlu0 %6461
    %v6463 = vsel %vm265, %v6447, 0.0
    %6464 = vadd.xlane.f32.xlu0 %v6463
    %v6465 = vpop.xlane.xlu0 %6464
    %v6466 = vsel %vm265, %v6448, 0.0
    %6467 = vadd.xlane.f32.xlu0 %v6466
    %v6468 = vpop.xlane.xlu0 %6467
    %v6469 = vsel %vm265, %v6449, 0.0
    %6470 = vadd.xlane.f32.xlu0 %v6469
    %v6471 = vpop.xlane.xlu0 %6470
    %v6472 = vsel %vm265, %v6450, 0.0
    %6473 = vadd.xlane.f32.xlu0 %v6472
    %v6474 = vpop.xlane.xlu0 %6473
    %v6475 = vrcp.pop %v6453
    %v6476 = vrcp.pop %v6456
    %v6477 = vrcp.pop %v6459
    %v6478 = vrcp.pop %v6462
    %v6479 = vrcp.pop %v6465
    %v6480 = vrcp.pop %v6468
    %v6481 = vrcp.pop %v6471
    %v6482 = vrcp.pop %v6474
    %v6483 = vmul.f32 %v6443, %v6475
    %v6484 = vmul.f32 %v6444, %v6476
    %v6485 = vmul.f32 %v6445, %v6477
    %v6486 = vmul.f32 %v6446, %v6478
    %v6487 = vmul.f32 %v6447, %v6479
    %v6488 = vmul.f32 %v6448, %v6480
    %v6489 = vmul.f32 %v6449, %v6481
    %v6490 = vmul.f32 %v6450, %v6482
    %v6491 = vpack.c.bf16 %v6484, %v6483
    %v6492 = vpack.c.bf16 %v6486, %v6485
    %v6493 = vpack.c.bf16 %v6488, %v6487
    %v6494 = vpack.c.bf16 %v6490, %v6489
    %v6495 = vsel %vm265, %v6387, -inf
    %6496 = vmax.xlane.f32.xlu0 %v6495
    %v6497 = vpop.xlane.xlu0 %6496
    %v6498 = vsel %vm265, %v6388, -inf
    %6499 = vmax.xlane.f32.xlu0 %v6498
    %v6500 = vpop.xlane.xlu0 %6499
    %v6501 = vsel %vm265, %v6389, -inf
    %6502 = vmax.xlane.f32.xlu0 %v6501
    %v6503 = vpop.xlane.xlu0 %6502
    %v6504 = vsel %vm265, %v6390, -inf
    %6505 = vmax.xlane.f32.xlu0 %v6504
    %v6506 = vpop.xlane.xlu0 %6505
    %v6507 = vsel %vm265, %v6391, -inf
    %6508 = vmax.xlane.f32.xlu0 %v6507
    %v6509 = vpop.xlane.xlu0 %6508
    %v6510 = vsel %vm265, %v6392, -inf
    %6511 = vmax.xlane.f32.xlu0 %v6510
    %v6512 = vpop.xlane.xlu0 %6511
    %v6513 = vsel %vm265, %v6393, -inf
    %6514 = vmax.xlane.f32.xlu0 %v6513
    %v6515 = vpop.xlane.xlu0 %6514
    %v6516 = vsel %vm265, %v6394, -inf
    %6517 = vmax.xlane.f32.xlu0 %v6516
    %v6518 = vpop.xlane.xlu0 %6517
    %v6519 = vsub.f32 %v6387, %v6497
    %v6520 = vsub.f32 %v6388, %v6500
    %v6521 = vsub.f32 %v6389, %v6503
    %v6522 = vsub.f32 %v6390, %v6506
    %v6523 = vsub.f32 %v6391, %v6509
    %v6524 = vsub.f32 %v6392, %v6512
    %v6525 = vsub.f32 %v6393, %v6515
    %v6526 = vsub.f32 %v6394, %v6518
    %v6527 = vpack.c.bf16 %v6520, %v6519
    %v6528 = vpack.c.bf16 %v6522, %v6521
    %v6529 = vpack.c.bf16 %v6524, %v6523
    %v6530 = vpack.c.bf16 %v6526, %v6525
    %v6532 = vmul.bf16 %v6527, 1069105081
    %v6533 = vpow.bf16.pop %v6532
    %v6535 = vmul.bf16 %v6528, 1069105081
    %v6536 = vpow.bf16.pop %v6535
    %v6538 = vmul.bf16 %v6529, 1069105081
    %v6539 = vpow.bf16.pop %v6538
    %v6541 = vmul.bf16 %v6530, 1069105081
    %v6542 = vpow.bf16.pop %v6541
    %v6543 = vunpack.c.l.bf16 %v6533
    %v6544 = vunpack.c.h.bf16 %v6533
    %v6545 = vunpack.c.l.bf16 %v6536
    %v6546 = vunpack.c.h.bf16 %v6536
    %v6547 = vunpack.c.l.bf16 %v6539
    %v6548 = vunpack.c.h.bf16 %v6539
    %v6549 = vunpack.c.l.bf16 %v6542
    %v6550 = vunpack.c.h.bf16 %v6542
    %v6551 = vsel %vm265, %v6543, 0.0
    %6552 = vadd.xlane.f32.xlu0 %v6551
    %v6553 = vpop.xlane.xlu0 %6552
    %v6554 = vsel %vm265, %v6544, 0.0
    %6555 = vadd.xlane.f32.xlu0 %v6554
    %v6556 = vpop.xlane.xlu0 %6555
    %v6557 = vsel %vm265, %v6545, 0.0
    %6558 = vadd.xlane.f32.xlu0 %v6557
    %v6559 = vpop.xlane.xlu0 %6558
    %v6560 = vsel %vm265, %v6546, 0.0
    %6561 = vadd.xlane.f32.xlu0 %v6560
    %v6562 = vpop.xlane.xlu0 %6561
    %v6563 = vsel %vm265, %v6547, 0.0
    %6564 = vadd.xlane.f32.xlu0 %v6563
    %v6565 = vpop.xlane.xlu0 %6564
    %v6566 = vsel %vm265, %v6548, 0.0
    %6567 = vadd.xlane.f32.xlu0 %v6566
    %v6568 = vpop.xlane.xlu0 %6567
    %v6569 = vsel %vm265, %v6549, 0.0
    %6570 = vadd.xlane.f32.xlu0 %v6569
    %v6571 = vpop.xlane.xlu0 %6570
    %v6572 = vsel %vm265, %v6550, 0.0
    %6573 = vadd.xlane.f32.xlu0 %v6572
    %v6574 = vpop.xlane.xlu0 %6573
    %v6575 = vrcp.pop %v6553
    %v6576 = vrcp.pop %v6556
    %v6577 = vrcp.pop %v6559
    %v6578 = vrcp.pop %v6562
    %v6579 = vrcp.pop %v6565
    %v6580 = vrcp.pop %v6568
    %v6581 = vrcp.pop %v6571
    %v6582 = vrcp.pop %v6574
    %v6583 = vmul.f32 %v6543, %v6575
    %v6584 = vmul.f32 %v6544, %v6576
    %v6585 = vmul.f32 %v6545, %v6577
    %v6586 = vmul.f32 %v6546, %v6578
    %v6587 = vmul.f32 %v6547, %v6579
    %v6588 = vmul.f32 %v6548, %v6580
    %v6589 = vmul.f32 %v6549, %v6581
    %v6590 = vmul.f32 %v6550, %v6582
    %v6591 = vpack.c.bf16 %v6584, %v6583
    %v6592 = vpack.c.bf16 %v6586, %v6585
    %v6593 = vpack.c.bf16 %v6588, %v6587
    %v6594 = vpack.c.bf16 %v6590, %v6589
    %6595 = vrot.lane.b32.xlu0 %v5379, 64
    %v6596 = vpop.permute.xlu0 %6595
    %6597 = vrot.lane.b32.xlu0 %v5380, 64
    %v6598 = vpop.permute.xlu0 %6597
    %6599 = vrot.lane.b32.xlu0 %v5381, 64
    %v6600 = vpop.permute.xlu0 %6599
    %6601 = vrot.lane.b32.xlu0 %v5382, 64
    %v6602 = vpop.permute.xlu0 %6601
    %v6608 = vsel %vm265, %v6491, 0
    %v6611 = vsel %vm265, %v6492, 0
    %v6614 = vsel %vm265, %v6493, 0
    %v6617 = vsel %vm265, %v6494, 0
    %6619 = vmatprep.subr.bf16.mxu0 0
    %6620 = vmatpush1.bf16.msra.mxu0 0
    %6621 = vmatprep.subr.bf16.mxu0 0
    %6622 = vmatpush1.bf16.msra.mxu0 0
    %6623 = vmatprep.subr.bf16.mxu0 0
    %6624 = vmatpush1.bf16.msra.mxu0 0
    %6625 = vmatprep.subr.bf16.mxu0 0
    %6626 = vmatpush1.bf16.msra.mxu0 0
    %6627 = vmatprep.subr.bf16.mxu0 0
    %6628 = vmatpush1.bf16.msra.mxu0 %v6602
    %6629 = vmatprep.subr.bf16.mxu0 0
    %6630 = vmatpush1.bf16.msra.mxu0 %v6600
    %6631 = vmatprep.subr.bf16.mxu0 0
    %6632 = vmatpush1.bf16.msra.mxu0 %v6598
    %6633 = vmatprep.subr.bf16.mxu0 0
    %6634 = vmatpush1.bf16.msra.mxu0 %v6596
    %6635 = vmatprep.subr.bf16.mxu0 0
    %6636 = vmatpush2.bf16.msra.mxu0 0
    %6637 = vmatprep.subr.bf16.mxu0 0
    %6638 = vmatpush2.bf16.msra.mxu0 0
    %6639 = vmatprep.subr.bf16.mxu0 0
    %6640 = vmatpush2.bf16.msra.mxu0 0
    %6641 = vmatprep.subr.bf16.mxu0 0
    %6642 = vmatpush2.bf16.msra.mxu0 0
    %6643 = vmatprep.subr.bf16.mxu0 0
    %6644 = vmatpush2.bf16.msra.mxu0 0
    %6645 = vmatprep.subr.bf16.mxu0 0
    %6646 = vmatpush2.bf16.msra.mxu0 0
    %6647 = vmatprep.subr.bf16.mxu0 0
    %6648 = vmatpush2.bf16.msra.mxu0 0
    %6649 = vmatprep.subr.bf16.mxu0 0
    %6650 = vmatpush2.bf16.msra.mxu0 0
    %6651 = vmatprep.mubr.bf16.mxu0 0
    %6652 = vmatmul.mubr.bf16.gmra.mxu0 %v6608
    %v6653 = vpop.f32.mrf.mxu0
    %v6654 = vadd.f32 0.0, %v6653
    %v6655 = vpop.f32.mrf.mxu0
    %v6656 = vpop.f32.mrf.mxu0
    %v6657 = vadd.f32 0.0, %v6656
    %v6658 = vpop.f32.mrf.mxu0
    %6659 = vmatprep.mubr.bf16.mxu0 0
    %6660 = vmatmul.mubr.bf16.gmra.mxu0 %v6611
    %v6661 = vpop.f32.mrf.mxu0
    %v6662 = vadd.f32 0.0, %v6661
    %v6663 = vpop.f32.mrf.mxu0
    %v6664 = vpop.f32.mrf.mxu0
    %v6665 = vadd.f32 0.0, %v6664
    %v6666 = vpop.f32.mrf.mxu0
    %6667 = vmatprep.mubr.bf16.mxu0 0
    %6668 = vmatmul.mubr.bf16.gmra.mxu0 %v6614
    %v6669 = vpop.f32.mrf.mxu0
    %v6670 = vadd.f32 0.0, %v6669
    %v6671 = vpop.f32.mrf.mxu0
    %v6672 = vpop.f32.mrf.mxu0
    %v6673 = vadd.f32 0.0, %v6672
    %v6674 = vpop.f32.mrf.mxu0
    %6675 = vmatprep.mubr.bf16.mxu0 0
    %6676 = vmatmul.mubr.bf16.gmra.mxu0 %v6617
    %v6677 = vpop.f32.mrf.mxu0
    %v6678 = vadd.f32 0.0, %v6677
    %v6679 = vpop.f32.mrf.mxu0
    %v6680 = vpop.f32.mrf.mxu0
    %v6681 = vadd.f32 0.0, %v6680
    %v6682 = vpop.f32.mrf.mxu0
    %6683 = vdwg.mxu0
    %6684 = vrot.lane.b32.xlu0 %v5480, 64
    %v6685 = vpop.permute.xlu0 %6684
    %6686 = vrot.lane.b32.xlu0 %v5481, 64
    %v6687 = vpop.permute.xlu0 %6686
    %6688 = vrot.lane.b32.xlu0 %v5482, 64
    %v6689 = vpop.permute.xlu0 %6688
    %6690 = vrot.lane.b32.xlu0 %v5483, 64
    %v6691 = vpop.permute.xlu0 %6690
    %v6697 = vsel %vm265, %v6591, 0
    %v6700 = vsel %vm265, %v6592, 0
    %v6703 = vsel %vm265, %v6593, 0
    %v6706 = vsel %vm265, %v6594, 0
    %6708 = vmatprep.subr.bf16.mxu0 0
    %6709 = vmatpush1.bf16.msra.mxu0 0
    %6710 = vmatprep.subr.bf16.mxu0 0
    %6711 = vmatpush1.bf16.msra.mxu0 0
    %6712 = vmatprep.subr.bf16.mxu0 0
    %6713 = vmatpush1.bf16.msra.mxu0 0
    %6714 = vmatprep.subr.bf16.mxu0 0
    %6715 = vmatpush1.bf16.msra.mxu0 0
    %6716 = vmatprep.subr.bf16.mxu0 0
    %6717 = vmatpush1.bf16.msra.mxu0 %v6691
    %6718 = vmatprep.subr.bf16.mxu0 0
    %6719 = vmatpush1.bf16.msra.mxu0 %v6689
    %6720 = vmatprep.subr.bf16.mxu0 0
    %6721 = vmatpush1.bf16.msra.mxu0 %v6687
    %6722 = vmatprep.subr.bf16.mxu0 0
    %6723 = vmatpush1.bf16.msra.mxu0 %v6685
    %6724 = vmatprep.subr.bf16.mxu0 0
    %6725 = vmatpush2.bf16.msra.mxu0 0
    %6726 = vmatprep.subr.bf16.mxu0 0
    %6727 = vmatpush2.bf16.msra.mxu0 0
    %6728 = vmatprep.subr.bf16.mxu0 0
    %6729 = vmatpush2.bf16.msra.mxu0 0
    %6730 = vmatprep.subr.bf16.mxu0 0
    %6731 = vmatpush2.bf16.msra.mxu0 0
    %6732 = vmatprep.subr.bf16.mxu0 0
    %6733 = vmatpush2.bf16.msra.mxu0 0
    %6734 = vmatprep.subr.bf16.mxu0 0
    %6735 = vmatpush2.bf16.msra.mxu0 0
    %6736 = vmatprep.subr.bf16.mxu0 0
    %6737 = vmatpush2.bf16.msra.mxu0 0
    %6738 = vmatprep.subr.bf16.mxu0 0
    %6739 = vmatpush2.bf16.msra.mxu0 0
    %6740 = vmatprep.mubr.bf16.mxu0 0
    %6741 = vmatmul.mubr.bf16.gmra.mxu0 %v6697
    %v6742 = vpop.f32.mrf.mxu0
    %v6743 = vadd.f32 0.0, %v6742
    %v6744 = vpop.f32.mrf.mxu0
    %v6745 = vpop.f32.mrf.mxu0
    %v6746 = vadd.f32 0.0, %v6745
    %v6747 = vpop.f32.mrf.mxu0
    %6748 = vmatprep.mubr.bf16.mxu0 0
    %6749 = vmatmul.mubr.bf16.gmra.mxu0 %v6700
    %v6750 = vpop.f32.mrf.mxu0
    %v6751 = vadd.f32 0.0, %v6750
    %v6752 = vpop.f32.mrf.mxu0
    %v6753 = vpop.f32.mrf.mxu0
    %v6754 = vadd.f32 0.0, %v6753
    %v6755 = vpop.f32.mrf.mxu0
    %6756 = vmatprep.mubr.bf16.mxu0 0
    %6757 = vmatmul.mubr.bf16.gmra.mxu0 %v6703
    %v6758 = vpop.f32.mrf.mxu0
    %v6759 = vadd.f32 0.0, %v6758
    %v6760 = vpop.f32.mrf.mxu0
    %v6761 = vpop.f32.mrf.mxu0
    %v6762 = vadd.f32 0.0, %v6761
    %v6763 = vpop.f32.mrf.mxu0
    %6764 = vmatprep.mubr.bf16.mxu0 0
    %6765 = vmatmul.mubr.bf16.gmra.mxu0 %v6706
    %v6766 = vpop.f32.mrf.mxu0
    %v6767 = vadd.f32 0.0, %v6766
    %v6768 = vpop.f32.mrf.mxu0
    %v6769 = vpop.f32.mrf.mxu0
    %v6770 = vadd.f32 0.0, %v6769
    %v6771 = vpop.f32.mrf.mxu0
    %6772 = vdwg.mxu0
    %6773 = vrot.lane.b32.xlu0 %v4921, 32
    %v6774 = vpop.permute.xlu0 %6773
    %6775 = vrot.lane.b32.xlu0 %v4922, 32
    %v6776 = vpop.permute.xlu0 %6775
    %6777 = vrot.lane.b32.xlu0 %v4923, 32
    %v6778 = vpop.permute.xlu0 %6777
    %6779 = vrot.lane.b32.xlu0 %v4924, 32
    %v6780 = vpop.permute.xlu0 %6779
    %6781 = vrot.lane.b32.xlu0 %v4941, 32
    %v6782 = vpop.permute.xlu0 %6781
    %6783 = vrot.lane.b32.xlu0 %v4942, 32
    %v6784 = vpop.permute.xlu0 %6783
    %6785 = vrot.lane.b32.xlu0 %v4943, 32
    %v6786 = vpop.permute.xlu0 %6785
    %6787 = vrot.lane.b32.xlu0 %v4944, 32
    %v6788 = vpop.permute.xlu0 %6787
    %v6790 = vsel %vm2199, %v6774, 0
    %v6793 = vsel %vm2199, %v6776, 0
    %v6796 = vsel %vm2199, %v6778, 0
    %v6799 = vsel %vm2199, %v6780, 0
    %v6802 = vsel %vm2199, %v6782, 0
    %v6805 = vsel %vm2199, %v6784, 0
    %v6808 = vsel %vm2199, %v6786, 0
    %v6811 = vsel %vm2199, %v6788, 0
    %6813 = vmatprep.subr.bf16.mxu0 0
    %6814 = vmatpush1.bf16.xpose.msra.mxu0 0
    %6815 = vmatprep.subr.bf16.mxu0 0
    %6816 = vmatpush1.bf16.xpose.msra.mxu0 0
    %6817 = vmatprep.subr.bf16.mxu0 0
    %6818 = vmatpush1.bf16.xpose.msra.mxu0 0
    %6819 = vmatprep.subr.bf16.mxu0 0
    %6820 = vmatpush1.bf16.xpose.msra.mxu0 0
    %6821 = vmatprep.subr.bf16.mxu0 0
    %6822 = vmatpush1.bf16.xpose.msra.mxu0 %v6811
    %6823 = vmatprep.subr.bf16.mxu0 0
    %6824 = vmatpush1.bf16.xpose.msra.mxu0 %v6808
    %6825 = vmatprep.subr.bf16.mxu0 0
    %6826 = vmatpush1.bf16.xpose.msra.mxu0 %v6805
    %6827 = vmatprep.subr.bf16.mxu0 0
    %6828 = vmatpush1.bf16.xpose.msra.mxu0 %v6802
    %6829 = vmatprep.subr.bf16.mxu0 0
    %6830 = vmatpush2.bf16.xpose.msra.mxu0 0
    %6831 = vmatprep.subr.bf16.mxu0 0
    %6832 = vmatpush2.bf16.xpose.msra.mxu0 0
    %6833 = vmatprep.subr.bf16.mxu0 0
    %6834 = vmatpush2.bf16.xpose.msra.mxu0 0
    %6835 = vmatprep.subr.bf16.mxu0 0
    %6836 = vmatpush2.bf16.xpose.msra.mxu0 0
    %6837 = vmatprep.subr.bf16.mxu0 0
    %6838 = vmatpush2.bf16.xpose.msra.mxu0 0
    %6839 = vmatprep.subr.bf16.mxu0 0
    %6840 = vmatpush2.bf16.xpose.msra.mxu0 0
    %6841 = vmatprep.subr.bf16.mxu0 0
    %6842 = vmatpush2.bf16.xpose.msra.mxu0 0
    %6843 = vmatprep.subr.bf16.mxu0 0
    %6844 = vmatpush2.bf16.xpose.msra.mxu0 0
    %6845 = vmatprep.mubr.bf16.mxu0 0
    %6846 = vmatmul.mubr.bf16.gmra.mxu0 %v6790
    %v6847 = vpop.f32.mrf.mxu0
    %v6848 = vadd.f32 0.0, %v6847
    %v6849 = vpop.f32.mrf.mxu0
    %v6850 = vpop.f32.mrf.mxu0
    %v6851 = vadd.f32 0.0, %v6850
    %v6852 = vpop.f32.mrf.mxu0
    %6853 = vmatprep.mubr.bf16.mxu0 0
    %6854 = vmatmul.mubr.bf16.gmra.mxu0 %v6793
    %v6855 = vpop.f32.mrf.mxu0
    %v6856 = vadd.f32 0.0, %v6855
    %v6857 = vpop.f32.mrf.mxu0
    %v6858 = vpop.f32.mrf.mxu0
    %v6859 = vadd.f32 0.0, %v6858
    %v6860 = vpop.f32.mrf.mxu0
    %6861 = vmatprep.mubr.bf16.mxu0 0
    %6862 = vmatmul.mubr.bf16.gmra.mxu0 %v6796
    %v6863 = vpop.f32.mrf.mxu0
    %v6864 = vadd.f32 0.0, %v6863
    %v6865 = vpop.f32.mrf.mxu0
    %v6866 = vpop.f32.mrf.mxu0
    %v6867 = vadd.f32 0.0, %v6866
    %v6868 = vpop.f32.mrf.mxu0
    %6869 = vmatprep.mubr.bf16.mxu0 0
    %6870 = vmatmul.mubr.bf16.gmra.mxu0 %v6799
    %v6871 = vpop.f32.mrf.mxu0
    %v6872 = vadd.f32 0.0, %v6871
    %v6873 = vpop.f32.mrf.mxu0
    %v6874 = vpop.f32.mrf.mxu0
    %v6875 = vadd.f32 0.0, %v6874
    %v6876 = vpop.f32.mrf.mxu0
    %6877 = vdwg.mxu0
    %v6878 = vmul.f32 %v6848, 0.17677669
    %v6879 = vmul.f32 %v6851, 0.17677669
    %v6880 = vmul.f32 %v6856, 0.17677669
    %v6881 = vmul.f32 %v6859, 0.17677669
    %v6882 = vmul.f32 %v6864, 0.17677669
    %v6883 = vmul.f32 %v6867, 0.17677669
    %v6884 = vmul.f32 %v6872, 0.17677669
    %v6885 = vmul.f32 %v6875, 0.17677669
    %6886 = vrot.lane.b32.xlu0 %v5050, 32
    %v6887 = vpop.permute.xlu0 %6886
    %6888 = vrot.lane.b32.xlu0 %v5051, 32
    %v6889 = vpop.permute.xlu0 %6888
    %6890 = vrot.lane.b32.xlu0 %v5052, 32
    %v6891 = vpop.permute.xlu0 %6890
    %6892 = vrot.lane.b32.xlu0 %v5053, 32
    %v6893 = vpop.permute.xlu0 %6892
    %6894 = vrot.lane.b32.xlu0 %v5062, 32
    %v6895 = vpop.permute.xlu0 %6894
    %6896 = vrot.lane.b32.xlu0 %v5063, 32
    %v6897 = vpop.permute.xlu0 %6896
    %6898 = vrot.lane.b32.xlu0 %v5064, 32
    %v6899 = vpop.permute.xlu0 %6898
    %6900 = vrot.lane.b32.xlu0 %v5065, 32
    %v6901 = vpop.permute.xlu0 %6900
    %v6903 = vsel %vm2199, %v6887, 0
    %v6906 = vsel %vm2199, %v6889, 0
    %v6909 = vsel %vm2199, %v6891, 0
    %v6912 = vsel %vm2199, %v6893, 0
    %v6915 = vsel %vm2199, %v6895, 0
    %v6918 = vsel %vm2199, %v6897, 0
    %v6921 = vsel %vm2199, %v6899, 0
    %v6924 = vsel %vm2199, %v6901, 0
    %6926 = vmatprep.subr.bf16.mxu0 0
    %6927 = vmatpush1.bf16.xpose.msra.mxu0 0
    %6928 = vmatprep.subr.bf16.mxu0 0
    %6929 = vmatpush1.bf16.xpose.msra.mxu0 0
    %6930 = vmatprep.subr.bf16.mxu0 0
    %6931 = vmatpush1.bf16.xpose.msra.mxu0 0
    %6932 = vmatprep.subr.bf16.mxu0 0
    %6933 = vmatpush1.bf16.xpose.msra.mxu0 0
    %6934 = vmatprep.subr.bf16.mxu0 0
    %6935 = vmatpush1.bf16.xpose.msra.mxu0 %v6924
    %6936 = vmatprep.subr.bf16.mxu0 0
    %6937 = vmatpush1.bf16.xpose.msra.mxu0 %v6921
    %6938 = vmatprep.subr.bf16.mxu0 0
    %6939 = vmatpush1.bf16.xpose.msra.mxu0 %v6918
    %6940 = vmatprep.subr.bf16.mxu0 0
    %6941 = vmatpush1.bf16.xpose.msra.mxu0 %v6915
    %6942 = vmatprep.subr.bf16.mxu0 0
    %6943 = vmatpush2.bf16.xpose.msra.mxu0 0
    %6944 = vmatprep.subr.bf16.mxu0 0
    %6945 = vmatpush2.bf16.xpose.msra.mxu0 0
    %6946 = vmatprep.subr.bf16.mxu0 0
    %6947 = vmatpush2.bf16.xpose.msra.mxu0 0
    %6948 = vmatprep.subr.bf16.mxu0 0
    %6949 = vmatpush2.bf16.xpose.msra.mxu0 0
    %6950 = vmatprep.subr.bf16.mxu0 0
    %6951 = vmatpush2.bf16.xpose.msra.mxu0 0
    %6952 = vmatprep.subr.bf16.mxu0 0
    %6953 = vmatpush2.bf16.xpose.msra.mxu0 0
    %6954 = vmatprep.subr.bf16.mxu0 0
    %6955 = vmatpush2.bf16.xpose.msra.mxu0 0
    %6956 = vmatprep.subr.bf16.mxu0 0
    %6957 = vmatpush2.bf16.xpose.msra.mxu0 0
    %6958 = vmatprep.mubr.bf16.mxu0 0
    %6959 = vmatmul.mubr.bf16.gmra.mxu0 %v6903
    %v6960 = vpop.f32.mrf.mxu0
    %v6961 = vadd.f32 0.0, %v6960
    %v6962 = vpop.f32.mrf.mxu0
    %v6963 = vpop.f32.mrf.mxu0
    %v6964 = vadd.f32 0.0, %v6963
    %v6965 = vpop.f32.mrf.mxu0
    %6966 = vmatprep.mubr.bf16.mxu0 0
    %6967 = vmatmul.mubr.bf16.gmra.mxu0 %v6906
    %v6968 = vpop.f32.mrf.mxu0
    %v6969 = vadd.f32 0.0, %v6968
    %v6970 = vpop.f32.mrf.mxu0
    %v6971 = vpop.f32.mrf.mxu0
    %v6972 = vadd.f32 0.0, %v6971
    %v6973 = vpop.f32.mrf.mxu0
    %6974 = vmatprep.mubr.bf16.mxu0 0
    %6975 = vmatmul.mubr.bf16.gmra.mxu0 %v6909
    %v6976 = vpop.f32.mrf.mxu0
    %v6977 = vadd.f32 0.0, %v6976
    %v6978 = vpop.f32.mrf.mxu0
    %v6979 = vpop.f32.mrf.mxu0
    %v6980 = vadd.f32 0.0, %v6979
    %v6981 = vpop.f32.mrf.mxu0
    %6982 = vmatprep.mubr.bf16.mxu0 0
    %6983 = vmatmul.mubr.bf16.gmra.mxu0 %v6912
    %v6984 = vpop.f32.mrf.mxu0
    %v6985 = vadd.f32 0.0, %v6984
    %v6986 = vpop.f32.mrf.mxu0
    %v6987 = vpop.f32.mrf.mxu0
    %v6988 = vadd.f32 0.0, %v6987
    %v6989 = vpop.f32.mrf.mxu0
    %6990 = vdwg.mxu0
    %v6991 = vmul.f32 %v6961, 0.17677669
    %v6992 = vmul.f32 %v6964, 0.17677669
    %v6993 = vmul.f32 %v6969, 0.17677669
    %v6994 = vmul.f32 %v6972, 0.17677669
    %v6995 = vmul.f32 %v6977, 0.17677669
    %v6996 = vmul.f32 %v6980, 0.17677669
    %v6997 = vmul.f32 %v6985, 0.17677669
    %v6998 = vmul.f32 %v6988, 0.17677669
    %v6999 = vsel %vm265, %v6878, -inf
    %7000 = vmax.xlane.f32.xlu0 %v6999
    %v7001 = vpop.xlane.xlu0 %7000
    %v7002 = vsel %vm265, %v6879, -inf
    %7003 = vmax.xlane.f32.xlu0 %v7002
    %v7004 = vpop.xlane.xlu0 %7003
    %v7005 = vsel %vm265, %v6880, -inf
    %7006 = vmax.xlane.f32.xlu0 %v7005
    %v7007 = vpop.xlane.xlu0 %7006
    %v7008 = vsel %vm265, %v6881, -inf
    %7009 = vmax.xlane.f32.xlu0 %v7008
    %v7010 = vpop.xlane.xlu0 %7009
    %v7011 = vsel %vm265, %v6882, -inf
    %7012 = vmax.xlane.f32.xlu0 %v7011
    %v7013 = vpop.xlane.xlu0 %7012
    %v7014 = vsel %vm265, %v6883, -inf
    %7015 = vmax.xlane.f32.xlu0 %v7014
    %v7016 = vpop.xlane.xlu0 %7015
    %v7017 = vsel %vm265, %v6884, -inf
    %7018 = vmax.xlane.f32.xlu0 %v7017
    %v7019 = vpop.xlane.xlu0 %7018
    %v7020 = vsel %vm265, %v6885, -inf
    %7021 = vmax.xlane.f32.xlu0 %v7020
    %v7022 = vpop.xlane.xlu0 %7021
    %v7023 = vsub.f32 %v6878, %v7001
    %v7024 = vsub.f32 %v6879, %v7004
    %v7025 = vsub.f32 %v6880, %v7007
    %v7026 = vsub.f32 %v6881, %v7010
    %v7027 = vsub.f32 %v6882, %v7013
    %v7028 = vsub.f32 %v6883, %v7016
    %v7029 = vsub.f32 %v6884, %v7019
    %v7030 = vsub.f32 %v6885, %v7022
    %v7031 = vpack.c.bf16 %v7024, %v7023
    %v7032 = vpack.c.bf16 %v7026, %v7025
    %v7033 = vpack.c.bf16 %v7028, %v7027
    %v7034 = vpack.c.bf16 %v7030, %v7029
    %v7036 = vmul.bf16 %v7031, 1069105081
    %v7037 = vpow.bf16.pop %v7036
    %v7039 = vmul.bf16 %v7032, 1069105081
    %v7040 = vpow.bf16.pop %v7039
    %v7042 = vmul.bf16 %v7033, 1069105081
    %v7043 = vpow.bf16.pop %v7042
    %v7045 = vmul.bf16 %v7034, 1069105081
    %v7046 = vpow.bf16.pop %v7045
    %v7047 = vunpack.c.l.bf16 %v7037
    %v7048 = vunpack.c.h.bf16 %v7037
    %v7049 = vunpack.c.l.bf16 %v7040
    %v7050 = vunpack.c.h.bf16 %v7040
    %v7051 = vunpack.c.l.bf16 %v7043
    %v7052 = vunpack.c.h.bf16 %v7043
    %v7053 = vunpack.c.l.bf16 %v7046
    %v7054 = vunpack.c.h.bf16 %v7046
    %v7055 = vsel %vm265, %v7047, 0.0
    %7056 = vadd.xlane.f32.xlu0 %v7055
    %v7057 = vpop.xlane.xlu0 %7056
    %v7058 = vsel %vm265, %v7048, 0.0
    %7059 = vadd.xlane.f32.xlu0 %v7058
    %v7060 = vpop.xlane.xlu0 %7059
    %v7061 = vsel %vm265, %v7049, 0.0
    %7062 = vadd.xlane.f32.xlu0 %v7061
    %v7063 = vpop.xlane.xlu0 %7062
    %v7064 = vsel %vm265, %v7050, 0.0
    %7065 = vadd.xlane.f32.xlu0 %v7064
    %v7066 = vpop.xlane.xlu0 %7065
    %v7067 = vsel %vm265, %v7051, 0.0
    %7068 = vadd.xlane.f32.xlu0 %v7067
    %v7069 = vpop.xlane.xlu0 %7068
    %v7070 = vsel %vm265, %v7052, 0.0
    %7071 = vadd.xlane.f32.xlu0 %v7070
    %v7072 = vpop.xlane.xlu0 %7071
    %v7073 = vsel %vm265, %v7053, 0.0
    %7074 = vadd.xlane.f32.xlu0 %v7073
    %v7075 = vpop.xlane.xlu0 %7074
    %v7076 = vsel %vm265, %v7054, 0.0
    %7077 = vadd.xlane.f32.xlu0 %v7076
    %v7078 = vpop.xlane.xlu0 %7077
    %v7079 = vrcp.pop %v7057
    %v7080 = vrcp.pop %v7060
    %v7081 = vrcp.pop %v7063
    %v7082 = vrcp.pop %v7066
    %v7083 = vrcp.pop %v7069
    %v7084 = vrcp.pop %v7072
    %v7085 = vrcp.pop %v7075
    %v7086 = vrcp.pop %v7078
    %v7087 = vmul.f32 %v7047, %v7079
    %v7088 = vmul.f32 %v7048, %v7080
    %v7089 = vmul.f32 %v7049, %v7081
    %v7090 = vmul.f32 %v7050, %v7082
    %v7091 = vmul.f32 %v7051, %v7083
    %v7092 = vmul.f32 %v7052, %v7084
    %v7093 = vmul.f32 %v7053, %v7085
    %v7094 = vmul.f32 %v7054, %v7086
    %v7095 = vpack.c.bf16 %v7088, %v7087
    %v7096 = vpack.c.bf16 %v7090, %v7089
    %v7097 = vpack.c.bf16 %v7092, %v7091
    %v7098 = vpack.c.bf16 %v7094, %v7093
    %v7099 = vsel %vm265, %v6991, -inf
    %7100 = vmax.xlane.f32.xlu0 %v7099
    %v7101 = vpop.xlane.xlu0 %7100
    %v7102 = vsel %vm265, %v6992, -inf
    %7103 = vmax.xlane.f32.xlu0 %v7102
    %v7104 = vpop.xlane.xlu0 %7103
    %v7105 = vsel %vm265, %v6993, -inf
    %7106 = vmax.xlane.f32.xlu0 %v7105
    %v7107 = vpop.xlane.xlu0 %7106
    %v7108 = vsel %vm265, %v6994, -inf
    %7109 = vmax.xlane.f32.xlu0 %v7108
    %v7110 = vpop.xlane.xlu0 %7109
    %v7111 = vsel %vm265, %v6995, -inf
    %7112 = vmax.xlane.f32.xlu0 %v7111
    %v7113 = vpop.xlane.xlu0 %7112
    %v7114 = vsel %vm265, %v6996, -inf
    %7115 = vmax.xlane.f32.xlu0 %v7114
    %v7116 = vpop.xlane.xlu0 %7115
    %v7117 = vsel %vm265, %v6997, -inf
    %7118 = vmax.xlane.f32.xlu0 %v7117
    %v7119 = vpop.xlane.xlu0 %7118
    %v7120 = vsel %vm265, %v6998, -inf
    %7121 = vmax.xlane.f32.xlu0 %v7120
    %v7122 = vpop.xlane.xlu0 %7121
    %v7123 = vsub.f32 %v6991, %v7101
    %v7124 = vsub.f32 %v6992, %v7104
    %v7125 = vsub.f32 %v6993, %v7107
    %v7126 = vsub.f32 %v6994, %v7110
    %v7127 = vsub.f32 %v6995, %v7113
    %v7128 = vsub.f32 %v6996, %v7116
    %v7129 = vsub.f32 %v6997, %v7119
    %v7130 = vsub.f32 %v6998, %v7122
    %v7131 = vpack.c.bf16 %v7124, %v7123
    %v7132 = vpack.c.bf16 %v7126, %v7125
    %v7133 = vpack.c.bf16 %v7128, %v7127
    %v7134 = vpack.c.bf16 %v7130, %v7129
    %v7136 = vmul.bf16 %v7131, 1069105081
    %v7137 = vpow.bf16.pop %v7136
    %v7139 = vmul.bf16 %v7132, 1069105081
    %v7140 = vpow.bf16.pop %v7139
    %v7142 = vmul.bf16 %v7133, 1069105081
    %v7143 = vpow.bf16.pop %v7142
    %v7145 = vmul.bf16 %v7134, 1069105081
    %v7146 = vpow.bf16.pop %v7145
    %v7147 = vunpack.c.l.bf16 %v7137
    %v7148 = vunpack.c.h.bf16 %v7137
    %v7149 = vunpack.c.l.bf16 %v7140
    %v7150 = vunpack.c.h.bf16 %v7140
    %v7151 = vunpack.c.l.bf16 %v7143
    %v7152 = vunpack.c.h.bf16 %v7143
    %v7153 = vunpack.c.l.bf16 %v7146
    %v7154 = vunpack.c.h.bf16 %v7146
    %v7155 = vsel %vm265, %v7147, 0.0
    %7156 = vadd.xlane.f32.xlu0 %v7155
    %v7157 = vpop.xlane.xlu0 %7156
    %v7158 = vsel %vm265, %v7148, 0.0
    %7159 = vadd.xlane.f32.xlu0 %v7158
    %v7160 = vpop.xlane.xlu0 %7159
    %v7161 = vsel %vm265, %v7149, 0.0
    %7162 = vadd.xlane.f32.xlu0 %v7161
    %v7163 = vpop.xlane.xlu0 %7162
    %v7164 = vsel %vm265, %v7150, 0.0
    %7165 = vadd.xlane.f32.xlu0 %v7164
    %v7166 = vpop.xlane.xlu0 %7165
    %v7167 = vsel %vm265, %v7151, 0.0
    %7168 = vadd.xlane.f32.xlu0 %v7167
    %v7169 = vpop.xlane.xlu0 %7168
    %v7170 = vsel %vm265, %v7152, 0.0
    %7171 = vadd.xlane.f32.xlu0 %v7170
    %v7172 = vpop.xlane.xlu0 %7171
    %v7173 = vsel %vm265, %v7153, 0.0
    %7174 = vadd.xlane.f32.xlu0 %v7173
    %v7175 = vpop.xlane.xlu0 %7174
    %v7176 = vsel %vm265, %v7154, 0.0
    %7177 = vadd.xlane.f32.xlu0 %v7176
    %v7178 = vpop.xlane.xlu0 %7177
    %v7179 = vrcp.pop %v7157
    %v7180 = vrcp.pop %v7160
    %v7181 = vrcp.pop %v7163
    %v7182 = vrcp.pop %v7166
    %v7183 = vrcp.pop %v7169
    %v7184 = vrcp.pop %v7172
    %v7185 = vrcp.pop %v7175
    %v7186 = vrcp.pop %v7178
    %v7187 = vmul.f32 %v7147, %v7179
    %v7188 = vmul.f32 %v7148, %v7180
    %v7189 = vmul.f32 %v7149, %v7181
    %v7190 = vmul.f32 %v7150, %v7182
    %v7191 = vmul.f32 %v7151, %v7183
    %v7192 = vmul.f32 %v7152, %v7184
    %v7193 = vmul.f32 %v7153, %v7185
    %v7194 = vmul.f32 %v7154, %v7186
    %v7195 = vpack.c.bf16 %v7188, %v7187
    %v7196 = vpack.c.bf16 %v7190, %v7189
    %v7197 = vpack.c.bf16 %v7192, %v7191
    %v7198 = vpack.c.bf16 %v7194, %v7193
    %7199 = vrot.lane.b32.xlu0 %v5379, 32
    %v7200 = vpop.permute.xlu0 %7199
    %7201 = vrot.lane.b32.xlu0 %v5380, 32
    %v7202 = vpop.permute.xlu0 %7201
    %7203 = vrot.lane.b32.xlu0 %v5381, 32
    %v7204 = vpop.permute.xlu0 %7203
    %7205 = vrot.lane.b32.xlu0 %v5382, 32
    %v7206 = vpop.permute.xlu0 %7205
    %v7212 = vsel %vm265, %v7095, 0
    %v7215 = vsel %vm265, %v7096, 0
    %v7218 = vsel %vm265, %v7097, 0
    %v7221 = vsel %vm265, %v7098, 0
    %7223 = vmatprep.subr.bf16.mxu0 0
    %7224 = vmatpush1.bf16.msra.mxu0 0
    %7225 = vmatprep.subr.bf16.mxu0 0
    %7226 = vmatpush1.bf16.msra.mxu0 0
    %7227 = vmatprep.subr.bf16.mxu0 0
    %7228 = vmatpush1.bf16.msra.mxu0 0
    %7229 = vmatprep.subr.bf16.mxu0 0
    %7230 = vmatpush1.bf16.msra.mxu0 0
    %7231 = vmatprep.subr.bf16.mxu0 0
    %7232 = vmatpush1.bf16.msra.mxu0 %v7206
    %7233 = vmatprep.subr.bf16.mxu0 0
    %7234 = vmatpush1.bf16.msra.mxu0 %v7204
    %7235 = vmatprep.subr.bf16.mxu0 0
    %7236 = vmatpush1.bf16.msra.mxu0 %v7202
    %7237 = vmatprep.subr.bf16.mxu0 0
    %7238 = vmatpush1.bf16.msra.mxu0 %v7200
    %7239 = vmatprep.subr.bf16.mxu0 0
    %7240 = vmatpush2.bf16.msra.mxu0 0
    %7241 = vmatprep.subr.bf16.mxu0 0
    %7242 = vmatpush2.bf16.msra.mxu0 0
    %7243 = vmatprep.subr.bf16.mxu0 0
    %7244 = vmatpush2.bf16.msra.mxu0 0
    %7245 = vmatprep.subr.bf16.mxu0 0
    %7246 = vmatpush2.bf16.msra.mxu0 0
    %7247 = vmatprep.subr.bf16.mxu0 0
    %7248 = vmatpush2.bf16.msra.mxu0 0
    %7249 = vmatprep.subr.bf16.mxu0 0
    %7250 = vmatpush2.bf16.msra.mxu0 0
    %7251 = vmatprep.subr.bf16.mxu0 0
    %7252 = vmatpush2.bf16.msra.mxu0 0
    %7253 = vmatprep.subr.bf16.mxu0 0
    %7254 = vmatpush2.bf16.msra.mxu0 0
    %7255 = vmatprep.mubr.bf16.mxu0 0
    %7256 = vmatmul.mubr.bf16.gmra.mxu0 %v7212
    %v7257 = vpop.f32.mrf.mxu0
    %v7258 = vadd.f32 0.0, %v7257
    %v7259 = vpop.f32.mrf.mxu0
    %v7260 = vpop.f32.mrf.mxu0
    %v7261 = vadd.f32 0.0, %v7260
    %v7262 = vpop.f32.mrf.mxu0
    %7263 = vmatprep.mubr.bf16.mxu0 0
    %7264 = vmatmul.mubr.bf16.gmra.mxu0 %v7215
    %v7265 = vpop.f32.mrf.mxu0
    %v7266 = vadd.f32 0.0, %v7265
    %v7267 = vpop.f32.mrf.mxu0
    %v7268 = vpop.f32.mrf.mxu0
    %v7269 = vadd.f32 0.0, %v7268
    %v7270 = vpop.f32.mrf.mxu0
    %7271 = vmatprep.mubr.bf16.mxu0 0
    %7272 = vmatmul.mubr.bf16.gmra.mxu0 %v7218
    %v7273 = vpop.f32.mrf.mxu0
    %v7274 = vadd.f32 0.0, %v7273
    %v7275 = vpop.f32.mrf.mxu0
    %v7276 = vpop.f32.mrf.mxu0
    %v7277 = vadd.f32 0.0, %v7276
    %v7278 = vpop.f32.mrf.mxu0
    %7279 = vmatprep.mubr.bf16.mxu0 0
    %7280 = vmatmul.mubr.bf16.gmra.mxu0 %v7221
    %v7281 = vpop.f32.mrf.mxu0
    %v7282 = vadd.f32 0.0, %v7281
    %v7283 = vpop.f32.mrf.mxu0
    %v7284 = vpop.f32.mrf.mxu0
    %v7285 = vadd.f32 0.0, %v7284
    %v7286 = vpop.f32.mrf.mxu0
    %7287 = vdwg.mxu0
    %7288 = vrot.lane.b32.xlu0 %v5480, 32
    %v7289 = vpop.permute.xlu0 %7288
    %7290 = vrot.lane.b32.xlu0 %v5481, 32
    %v7291 = vpop.permute.xlu0 %7290
    %7292 = vrot.lane.b32.xlu0 %v5482, 32
    %v7293 = vpop.permute.xlu0 %7292
    %7294 = vrot.lane.b32.xlu0 %v5483, 32
    %v7295 = vpop.permute.xlu0 %7294
    %v7301 = vsel %vm265, %v7195, 0
    %v7304 = vsel %vm265, %v7196, 0
    %v7307 = vsel %vm265, %v7197, 0
    %v7310 = vsel %vm265, %v7198, 0
    %7312 = vmatprep.subr.bf16.mxu0 0
    %7313 = vmatpush1.bf16.msra.mxu0 0
    %7314 = vmatprep.subr.bf16.mxu0 0
    %7315 = vmatpush1.bf16.msra.mxu0 0
    %7316 = vmatprep.subr.bf16.mxu0 0
    %7317 = vmatpush1.bf16.msra.mxu0 0
    %7318 = vmatprep.subr.bf16.mxu0 0
    %7319 = vmatpush1.bf16.msra.mxu0 0
    %7320 = vmatprep.subr.bf16.mxu0 0
    %7321 = vmatpush1.bf16.msra.mxu0 %v7295
    %7322 = vmatprep.subr.bf16.mxu0 0
    %7323 = vmatpush1.bf16.msra.mxu0 %v7293
    %7324 = vmatprep.subr.bf16.mxu0 0
    %7325 = vmatpush1.bf16.msra.mxu0 %v7291
    %7326 = vmatprep.subr.bf16.mxu0 0
    %7327 = vmatpush1.bf16.msra.mxu0 %v7289
    %7328 = vmatprep.subr.bf16.mxu0 0
    %7329 = vmatpush2.bf16.msra.mxu0 0
    %7330 = vmatprep.subr.bf16.mxu0 0
    %7331 = vmatpush2.bf16.msra.mxu0 0
    %7332 = vmatprep.subr.bf16.mxu0 0
    %7333 = vmatpush2.bf16.msra.mxu0 0
    %7334 = vmatprep.subr.bf16.mxu0 0
    %7335 = vmatpush2.bf16.msra.mxu0 0
    %7336 = vmatprep.subr.bf16.mxu0 0
    %7337 = vmatpush2.bf16.msra.mxu0 0
    %7338 = vmatprep.subr.bf16.mxu0 0
    %7339 = vmatpush2.bf16.msra.mxu0 0
    %7340 = vmatprep.subr.bf16.mxu0 0
    %7341 = vmatpush2.bf16.msra.mxu0 0
    %7342 = vmatprep.subr.bf16.mxu0 0
    %7343 = vmatpush2.bf16.msra.mxu0 0
    %7344 = vmatprep.mubr.bf16.mxu0 0
    %7345 = vmatmul.mubr.bf16.gmra.mxu0 %v7301
    %v7346 = vpop.f32.mrf.mxu0
    %v7347 = vadd.f32 0.0, %v7346
    %v7348 = vpop.f32.mrf.mxu0
    %v7349 = vpop.f32.mrf.mxu0
    %v7350 = vadd.f32 0.0, %v7349
    %v7351 = vpop.f32.mrf.mxu0
    %7352 = vmatprep.mubr.bf16.mxu0 0
    %7353 = vmatmul.mubr.bf16.gmra.mxu0 %v7304
    %v7354 = vpop.f32.mrf.mxu0
    %v7355 = vadd.f32 0.0, %v7354
    %v7356 = vpop.f32.mrf.mxu0
    %v7357 = vpop.f32.mrf.mxu0
    %v7358 = vadd.f32 0.0, %v7357
    %v7359 = vpop.f32.mrf.mxu0
    %7360 = vmatprep.mubr.bf16.mxu0 0
    %7361 = vmatmul.mubr.bf16.gmra.mxu0 %v7307
    %v7362 = vpop.f32.mrf.mxu0
    %v7363 = vadd.f32 0.0, %v7362
    %v7364 = vpop.f32.mrf.mxu0
    %v7365 = vpop.f32.mrf.mxu0
    %v7366 = vadd.f32 0.0, %v7365
    %v7367 = vpop.f32.mrf.mxu0
    %7368 = vmatprep.mubr.bf16.mxu0 0
    %7369 = vmatmul.mubr.bf16.gmra.mxu0 %v7310
    %v7370 = vpop.f32.mrf.mxu0
    %v7371 = vadd.f32 0.0, %v7370
    %v7372 = vpop.f32.mrf.mxu0
    %v7373 = vpop.f32.mrf.mxu0
    %v7374 = vadd.f32 0.0, %v7373
    %v7375 = vpop.f32.mrf.mxu0
    %7376 = vdwg.mxu0
    %7385 = vrot.lane.b32.xlu0 %v6050, 32
    %v7386 = vpop.permute.xlu0 %7385
    %7387 = vrot.lane.b32.xlu0 %v6053, 32
    %v7388 = vpop.permute.xlu0 %7387
    %7389 = vrot.lane.b32.xlu0 %v6058, 32
    %v7390 = vpop.permute.xlu0 %7389
    %7391 = vrot.lane.b32.xlu0 %v6061, 32
    %v7392 = vpop.permute.xlu0 %7391
    %7393 = vrot.lane.b32.xlu0 %v6066, 32
    %v7394 = vpop.permute.xlu0 %7393
    %7395 = vrot.lane.b32.xlu0 %v6069, 32
    %v7396 = vpop.permute.xlu0 %7395
    %7397 = vrot.lane.b32.xlu0 %v6074, 32
    %v7398 = vpop.permute.xlu0 %7397
    %7399 = vrot.lane.b32.xlu0 %v6077, 32
    %v7400 = vpop.permute.xlu0 %7399
    %7417 = vrot.lane.b32.xlu0 %v6654, 64
    %v7418 = vpop.permute.xlu0 %7417
    %7419 = vrot.lane.b32.xlu0 %v6657, 64
    %v7420 = vpop.permute.xlu0 %7419
    %7421 = vrot.lane.b32.xlu0 %v6662, 64
    %v7422 = vpop.permute.xlu0 %7421
    %7423 = vrot.lane.b32.xlu0 %v6665, 64
    %v7424 = vpop.permute.xlu0 %7423
    %7425 = vrot.lane.b32.xlu0 %v6670, 64
    %v7426 = vpop.permute.xlu0 %7425
    %7427 = vrot.lane.b32.xlu0 %v6673, 64
    %v7428 = vpop.permute.xlu0 %7427
    %7429 = vrot.lane.b32.xlu0 %v6678, 64
    %v7430 = vpop.permute.xlu0 %7429
    %7431 = vrot.lane.b32.xlu0 %v6681, 64
    %v7432 = vpop.permute.xlu0 %7431
    %7449 = vrot.lane.b32.xlu0 %v7258, 96
    %v7450 = vpop.permute.xlu0 %7449
    %7451 = vrot.lane.b32.xlu0 %v7261, 96
    %v7452 = vpop.permute.xlu0 %7451
    %7453 = vrot.lane.b32.xlu0 %v7266, 96
    %v7454 = vpop.permute.xlu0 %7453
    %7455 = vrot.lane.b32.xlu0 %v7269, 96
    %v7456 = vpop.permute.xlu0 %7455
    %7457 = vrot.lane.b32.xlu0 %v7274, 96
    %v7458 = vpop.permute.xlu0 %7457
    %7459 = vrot.lane.b32.xlu0 %v7277, 96
    %v7460 = vpop.permute.xlu0 %7459
    %7461 = vrot.lane.b32.xlu0 %v7282, 96
    %v7462 = vpop.permute.xlu0 %7461
    %7463 = vrot.lane.b32.xlu0 %v7285, 96
    %v7464 = vpop.permute.xlu0 %7463
    %v7473 = vsel %vm2199, %v5434, %v7386
    %v7474 = vsel %vm2199, %v5437, %v7388
    %v7475 = vsel %vm2199, %v5442, %v7390
    %v7476 = vsel %vm2199, %v5445, %v7392
    %v7477 = vsel %vm2199, %v5450, %v7394
    %v7478 = vsel %vm2199, %v5453, %v7396
    %v7479 = vsel %vm2199, %v5458, %v7398
    %v7480 = vsel %vm2199, %v5461, %v7400
    %v7481 = vsel %vm265, %v7473, %v7418
    %v7482 = vsel %vm265, %v7474, %v7420
    %v7483 = vsel %vm265, %v7475, %v7422
    %v7484 = vsel %vm265, %v7476, %v7424
    %v7485 = vsel %vm265, %v7477, %v7426
    %v7486 = vsel %vm265, %v7478, %v7428
    %v7487 = vsel %vm265, %v7479, %v7430
    %v7488 = vsel %vm265, %v7480, %v7432
    %v7489 = vsel %vm4744, %v7481, %v7450
    %v7490 = vsel %vm4744, %v7482, %v7452
    %v7491 = vsel %vm4744, %v7483, %v7454
    %v7492 = vsel %vm4744, %v7484, %v7456
    %v7493 = vsel %vm4744, %v7485, %v7458
    %v7494 = vsel %vm4744, %v7486, %v7460
    %v7495 = vsel %vm4744, %v7487, %v7462
    %v7496 = vsel %vm4744, %v7488, %v7464
    %7505 = vrot.lane.b32.xlu0 %v6139, 32
    %v7506 = vpop.permute.xlu0 %7505
    %7507 = vrot.lane.b32.xlu0 %v6142, 32
    %v7508 = vpop.permute.xlu0 %7507
    %7509 = vrot.lane.b32.xlu0 %v6147, 32
    %v7510 = vpop.permute.xlu0 %7509
    %7511 = vrot.lane.b32.xlu0 %v6150, 32
    %v7512 = vpop.permute.xlu0 %7511
    %7513 = vrot.lane.b32.xlu0 %v6155, 32
    %v7514 = vpop.permute.xlu0 %7513
    %7515 = vrot.lane.b32.xlu0 %v6158, 32
    %v7516 = vpop.permute.xlu0 %7515
    %7517 = vrot.lane.b32.xlu0 %v6163, 32
    %v7518 = vpop.permute.xlu0 %7517
    %7519 = vrot.lane.b32.xlu0 %v6166, 32
    %v7520 = vpop.permute.xlu0 %7519
    %7537 = vrot.lane.b32.xlu0 %v6743, 64
    %v7538 = vpop.permute.xlu0 %7537
    %7539 = vrot.lane.b32.xlu0 %v6746, 64
    %v7540 = vpop.permute.xlu0 %7539
    %7541 = vrot.lane.b32.xlu0 %v6751, 64
    %v7542 = vpop.permute.xlu0 %7541
    %7543 = vrot.lane.b32.xlu0 %v6754, 64
    %v7544 = vpop.permute.xlu0 %7543
    %7545 = vrot.lane.b32.xlu0 %v6759, 64
    %v7546 = vpop.permute.xlu0 %7545
    %7547 = vrot.lane.b32.xlu0 %v6762, 64
    %v7548 = vpop.permute.xlu0 %7547
    %7549 = vrot.lane.b32.xlu0 %v6767, 64
    %v7550 = vpop.permute.xlu0 %7549
    %7551 = vrot.lane.b32.xlu0 %v6770, 64
    %v7552 = vpop.permute.xlu0 %7551
    %7569 = vrot.lane.b32.xlu0 %v7347, 96
    %v7570 = vpop.permute.xlu0 %7569
    %7571 = vrot.lane.b32.xlu0 %v7350, 96
    %v7572 = vpop.permute.xlu0 %7571
    %7573 = vrot.lane.b32.xlu0 %v7355, 96
    %v7574 = vpop.permute.xlu0 %7573
    %7575 = vrot.lane.b32.xlu0 %v7358, 96
    %v7576 = vpop.permute.xlu0 %7575
    %7577 = vrot.lane.b32.xlu0 %v7363, 96
    %v7578 = vpop.permute.xlu0 %7577
    %7579 = vrot.lane.b32.xlu0 %v7366, 96
    %v7580 = vpop.permute.xlu0 %7579
    %7581 = vrot.lane.b32.xlu0 %v7371, 96
    %v7582 = vpop.permute.xlu0 %7581
    %7583 = vrot.lane.b32.xlu0 %v7374, 96
    %v7584 = vpop.permute.xlu0 %7583
    %v7593 = vsel %vm2199, %v5535, %v7506
    %v7594 = vsel %vm2199, %v5538, %v7508
    %v7595 = vsel %vm2199, %v5543, %v7510
    %v7596 = vsel %vm2199, %v5546, %v7512
    %v7597 = vsel %vm2199, %v5551, %v7514
    %v7598 = vsel %vm2199, %v5554, %v7516
    %v7599 = vsel %vm2199, %v5559, %v7518
    %v7600 = vsel %vm2199, %v5562, %v7520
    %v7601 = vsel %vm265, %v7593, %v7538
    %v7602 = vsel %vm265, %v7594, %v7540
    %v7603 = vsel %vm265, %v7595, %v7542
    %v7604 = vsel %vm265, %v7596, %v7544
    %v7605 = vsel %vm265, %v7597, %v7546
    %v7606 = vsel %vm265, %v7598, %v7548
    %v7607 = vsel %vm265, %v7599, %v7550
    %v7608 = vsel %vm265, %v7600, %v7552
    %v7609 = vsel %vm4744, %v7601, %v7570
    %v7610 = vsel %vm4744, %v7602, %v7572
    %v7611 = vsel %vm4744, %v7603, %v7574
    %v7612 = vsel %vm4744, %v7604, %v7576
    %v7613 = vsel %vm4744, %v7605, %v7578
    %v7614 = vsel %vm4744, %v7606, %v7580
    %v7615 = vsel %vm4744, %v7607, %v7582
    %v7616 = vsel %vm4744, %v7608, %v7584
    %v7617 = vld [vmem:[#allocation8] sm:$0xff]
    %v7618 = vld [vmem:[#allocation8 + $0x8] sm:$0xff]
    %v7619 = vld [vmem:[%s4] sm:$0xff]
    %v7620 = vld [vmem:[%s4 + $0x8] sm:$0xff]
    %v7621 = vld [vmem:[%s4 + $0x10] sm:$0xff]
    %v7622 = vld [vmem:[%s4 + $0x18] sm:$0xff]
    %v7623 = vld [vmem:[%s4 + $0x20] sm:$0xff]
    %v7624 = vld [vmem:[%s4 + $0x28] sm:$0xff]
    %v7625 = vld [vmem:[%s4 + $0x30] sm:$0xff]
    %v7626 = vld [vmem:[%s4 + $0x38] sm:$0xff]
    %v7627 = vld [vmem:[%s4 + $0x40] sm:$0xff]
    %v7628 = vld [vmem:[%s4 + $0x48] sm:$0xff]
    %v7629 = vld [vmem:[%s4 + $0x50] sm:$0xff]
    %v7630 = vld [vmem:[%s4 + $0x58] sm:$0xff]
    %v7631 = vld [vmem:[%s4 + $0x60] sm:$0xff]
    %v7632 = vld [vmem:[%s4 + $0x68] sm:$0xff]
    %v7633 = vld [vmem:[%s4 + $0x70] sm:$0xff]
    %v7634 = vld [vmem:[%s4 + $0x78] sm:$0xff]
    %v7635 = vld [vmem:[%s4 + $0x80] sm:$0xff]
    %v7636 = vld [vmem:[%s4 + $0x88] sm:$0xff]
    %v7637 = vld [vmem:[%s4 + $0x90] sm:$0xff]
    %v7638 = vld [vmem:[%s4 + $0x98] sm:$0xff]
    %v7639 = vld [vmem:[%s4 + $0xa0] sm:$0xff]
    %v7640 = vld [vmem:[%s4 + $0xa8] sm:$0xff]
    %v7641 = vld [vmem:[%s4 + $0xb0] sm:$0xff]
    %v7642 = vld [vmem:[%s4 + $0xb8] sm:$0xff]
    %v7643 = vld [vmem:[%s4 + $0xc0] sm:$0xff]
    %v7644 = vld [vmem:[%s4 + $0xc8] sm:$0xff]
    %v7645 = vld [vmem:[%s4 + $0xd0] sm:$0xff]
    %v7646 = vld [vmem:[%s4 + $0xd8] sm:$0xff]
    %v7647 = vld [vmem:[%s4 + $0xe0] sm:$0xff]
    %v7648 = vld [vmem:[%s4 + $0xe8] sm:$0xff]
    %v7649 = vld [vmem:[%s4 + $0xf0] sm:$0xff]
    %v7650 = vld [vmem:[%s4 + $0xf8] sm:$0xff]
    %v7651 = vpack.c.bf16 %v4746, %v4745
    %v7652 = vpack.c.bf16 %v4748, %v4747
    %v7653 = vpack.c.bf16 %v4750, %v4749
    %v7654 = vpack.c.bf16 %v4752, %v4751
    %v7655 = vpack.c.bf16 %v7490, %v7489
    %v7656 = vpack.c.bf16 %v7492, %v7491
    %v7657 = vpack.c.bf16 %v7494, %v7493
    %v7658 = vpack.c.bf16 %v7496, %v7495
    %v7659 = vld [vmem:[#allocation4] sm:$0xff]
    %v7660 = vld [vmem:[#allocation4 + $0x8] sm:$0xff]
    %v7661 = vld [vmem:[#allocation4 + $0x10] sm:$0xff]
    %v7662 = vld [vmem:[#allocation4 + $0x18] sm:$0xff]
    %v7663 = vld [vmem:[#allocation4 + $0x20] sm:$0xff]
    %v7664 = vld [vmem:[#allocation4 + $0x28] sm:$0xff]
    %v7665 = vld [vmem:[#allocation4 + $0x30] sm:$0xff]
    %v7666 = vld [vmem:[#allocation4 + $0x38] sm:$0xff]
    %v7667 = vld [vmem:[#allocation4 + $0x40] sm:$0xff]
    %v7668 = vld [vmem:[#allocation4 + $0x48] sm:$0xff]
    %v7669 = vld [vmem:[#allocation4 + $0x50] sm:$0xff]
    %v7670 = vld [vmem:[#allocation4 + $0x58] sm:$0xff]
    %v7671 = vld [vmem:[#allocation4 + $0x60] sm:$0xff]
    %v7672 = vld [vmem:[#allocation4 + $0x68] sm:$0xff]
    %v7673 = vld [vmem:[#allocation4 + $0x70] sm:$0xff]
    %v7674 = vld [vmem:[#allocation4 + $0x78] sm:$0xff]
    %v7691 = vunpack.c.l.b16 %v7659
    %v7692 = vunpack.c.h.b16 %v7659
    %v7693 = vunpack.c.l.b16 %v7660
    %v7694 = vunpack.c.h.b16 %v7660
    %v7695 = vunpack.c.l.b16 %v7661
    %v7696 = vunpack.c.h.b16 %v7661
    %v7697 = vunpack.c.l.b16 %v7662
    %v7698 = vunpack.c.h.b16 %v7662
    %v7699 = vunpack.c.l.b16 %v7663
    %v7700 = vunpack.c.h.b16 %v7663
    %v7701 = vunpack.c.l.b16 %v7664
    %v7702 = vunpack.c.h.b16 %v7664
    %v7703 = vunpack.c.l.b16 %v7665
    %v7704 = vunpack.c.h.b16 %v7665
    %v7705 = vunpack.c.l.b16 %v7666
    %v7706 = vunpack.c.h.b16 %v7666
    %v7707 = vunpack.c.l.b16 %v7667
    %v7708 = vunpack.c.h.b16 %v7667
    %v7709 = vunpack.c.l.b16 %v7668
    %v7710 = vunpack.c.h.b16 %v7668
    %v7711 = vunpack.c.l.b16 %v7669
    %v7712 = vunpack.c.h.b16 %v7669
    %v7713 = vunpack.c.l.b16 %v7670
    %v7714 = vunpack.c.h.b16 %v7670
    %v7715 = vunpack.c.l.b16 %v7671
    %v7716 = vunpack.c.h.b16 %v7671
    %v7717 = vunpack.c.l.b16 %v7672
    %v7718 = vunpack.c.h.b16 %v7672
    %v7719 = vunpack.c.l.b16 %v7673
    %v7720 = vunpack.c.h.b16 %v7673
    %v7721 = vunpack.c.l.b16 %v7674
    %v7722 = vunpack.c.h.b16 %v7674
    %v7723 = vpack.c.b16 %v7693, %v7691
    %v7724 = vpack.c.b16 %v7694, %v7692
    %v7725 = vpack.c.b16 %v7697, %v7695
    %v7726 = vpack.c.b16 %v7698, %v7696
    %v7727 = vpack.c.b16 %v7701, %v7699
    %v7728 = vpack.c.b16 %v7702, %v7700
    %v7729 = vpack.c.b16 %v7705, %v7703
    %v7730 = vpack.c.b16 %v7706, %v7704
    %v7731 = vpack.c.b16 %v7709, %v7707
    %v7732 = vpack.c.b16 %v7710, %v7708
    %v7733 = vpack.c.b16 %v7713, %v7711
    %v7734 = vpack.c.b16 %v7714, %v7712
    %v7735 = vpack.c.b16 %v7717, %v7715
    %v7736 = vpack.c.b16 %v7718, %v7716
    %v7737 = vpack.c.b16 %v7721, %v7719
    %v7738 = vpack.c.b16 %v7722, %v7720
    %7755 = vmatprep.subr.bf16.mxu0 %v7738
    %7756 = vmatpush1.bf16.msra.mxu0 %v7737
    %7757 = vmatprep.subr.bf16.mxu0 %v7736
    %7758 = vmatpush1.bf16.msra.mxu0 %v7735
    %7759 = vmatprep.subr.bf16.mxu0 %v7734
    %7760 = vmatpush1.bf16.msra.mxu0 %v7733
    %7761 = vmatprep.subr.bf16.mxu0 %v7732
    %7762 = vmatpush1.bf16.msra.mxu0 %v7731
    %7763 = vmatprep.subr.bf16.mxu0 %v7730
    %7764 = vmatpush1.bf16.msra.mxu0 %v7729
    %7765 = vmatprep.subr.bf16.mxu0 %v7728
    %7766 = vmatpush1.bf16.msra.mxu0 %v7727
    %7767 = vmatprep.subr.bf16.mxu0 %v7726
    %7768 = vmatpush1.bf16.msra.mxu0 %v7725
    %7769 = vmatprep.subr.bf16.mxu0 %v7724
    %7770 = vmatpush1.bf16.msra.mxu0 %v7723
    %7771 = vmatprep.subr.bf16.mxu0 0
    %7772 = vmatpush2.bf16.msra.mxu0 0
    %7773 = vmatprep.subr.bf16.mxu0 0
    %7774 = vmatpush2.bf16.msra.mxu0 0
    %7775 = vmatprep.subr.bf16.mxu0 0
    %7776 = vmatpush2.bf16.msra.mxu0 0
    %7777 = vmatprep.subr.bf16.mxu0 0
    %7778 = vmatpush2.bf16.msra.mxu0 0
    %7779 = vmatprep.subr.bf16.mxu0 0
    %7780 = vmatpush2.bf16.msra.mxu0 0
    %7781 = vmatprep.subr.bf16.mxu0 0
    %7782 = vmatpush2.bf16.msra.mxu0 0
    %7783 = vmatprep.subr.bf16.mxu0 0
    %7784 = vmatpush2.bf16.msra.mxu0 0
    %7785 = vmatprep.subr.bf16.mxu0 0
    %7786 = vmatpush2.bf16.msra.mxu0 0
    %7787 = vmatprep.mubr.bf16.mxu0 0
    %7788 = vmatmul.mubr.bf16.gmra.mxu0 %v7651
    %v7789 = vpop.f32.mrf.mxu0
    %v7790 = vadd.f32 0.0, %v7789
    %v7791 = vpop.f32.mrf.mxu0
    %v7792 = vadd.f32 0.0, %v7791
    %v7793 = vpop.f32.mrf.mxu0
    %v7794 = vadd.f32 0.0, %v7793
    %v7795 = vpop.f32.mrf.mxu0
    %v7796 = vadd.f32 0.0, %v7795
    %7797 = vmatprep.mubr.bf16.mxu0 0
    %7798 = vmatmul.mubr.bf16.gmra.mxu0 %v7652
    %v7799 = vpop.f32.mrf.mxu0
    %v7800 = vadd.f32 0.0, %v7799
    %v7801 = vpop.f32.mrf.mxu0
    %v7802 = vadd.f32 0.0, %v7801
    %v7803 = vpop.f32.mrf.mxu0
    %v7804 = vadd.f32 0.0, %v7803
    %v7805 = vpop.f32.mrf.mxu0
    %v7806 = vadd.f32 0.0, %v7805
    %7807 = vmatprep.mubr.bf16.mxu0 0
    %7808 = vmatmul.mubr.bf16.gmra.mxu0 %v7653
    %v7809 = vpop.f32.mrf.mxu0
    %v7810 = vadd.f32 0.0, %v7809
    %v7811 = vpop.f32.mrf.mxu0
    %v7812 = vadd.f32 0.0, %v7811
    %v7813 = vpop.f32.mrf.mxu0
    %v7814 = vadd.f32 0.0, %v7813
    %v7815 = vpop.f32.mrf.mxu0
    %v7816 = vadd.f32 0.0, %v7815
    %7817 = vmatprep.mubr.bf16.mxu0 0
    %7818 = vmatmul.mubr.bf16.gmra.mxu0 %v7654
    %v7819 = vpop.f32.mrf.mxu0
    %v7820 = vadd.f32 0.0, %v7819
    %v7821 = vpop.f32.mrf.mxu0
    %v7822 = vadd.f32 0.0, %v7821
    %v7823 = vpop.f32.mrf.mxu0
    %v7824 = vadd.f32 0.0, %v7823
    %v7825 = vpop.f32.mrf.mxu0
    %v7826 = vadd.f32 0.0, %v7825
    %7827 = vmatprep.mubr.bf16.mxu0 0
    %7828 = vmatmul.mubr.bf16.gmra.mxu0 %v7655
    %v7829 = vpop.f32.mrf.mxu0
    %v7830 = vadd.f32 0.0, %v7829
    %v7831 = vpop.f32.mrf.mxu0
    %v7832 = vadd.f32 0.0, %v7831
    %v7833 = vpop.f32.mrf.mxu0
    %v7834 = vadd.f32 0.0, %v7833
    %v7835 = vpop.f32.mrf.mxu0
    %v7836 = vadd.f32 0.0, %v7835
    %7837 = vmatprep.mubr.bf16.mxu0 0
    %7838 = vmatmul.mubr.bf16.gmra.mxu0 %v7656
    %v7839 = vpop.f32.mrf.mxu0
    %v7840 = vadd.f32 0.0, %v7839
    %v7841 = vpop.f32.mrf.mxu0
    %v7842 = vadd.f32 0.0, %v7841
    %v7843 = vpop.f32.mrf.mxu0
    %v7844 = vadd.f32 0.0, %v7843
    %v7845 = vpop.f32.mrf.mxu0
    %v7846 = vadd.f32 0.0, %v7845
    %7847 = vmatprep.mubr.bf16.mxu0 0
    %7848 = vmatmul.mubr.bf16.gmra.mxu0 %v7657
    %v7849 = vpop.f32.mrf.mxu0
    %v7850 = vadd.f32 0.0, %v7849
    %v7851 = vpop.f32.mrf.mxu0
    %v7852 = vadd.f32 0.0, %v7851
    %v7853 = vpop.f32.mrf.mxu0
    %v7854 = vadd.f32 0.0, %v7853
    %v7855 = vpop.f32.mrf.mxu0
    %v7856 = vadd.f32 0.0, %v7855
    %7857 = vmatprep.mubr.bf16.mxu0 0
    %7858 = vmatmul.mubr.bf16.gmra.mxu0 %v7658
    %v7859 = vpop.f32.mrf.mxu0
    %v7860 = vadd.f32 0.0, %v7859
    %v7861 = vpop.f32.mrf.mxu0
    %v7862 = vadd.f32 0.0, %v7861
    %v7863 = vpop.f32.mrf.mxu0
    %v7864 = vadd.f32 0.0, %v7863
    %v7865 = vpop.f32.mrf.mxu0
    %v7866 = vadd.f32 0.0, %v7865
    %7867 = vdwg.mxu0
    %v7900 = vunpack.c.l.b16 %v7619
    %v7901 = vunpack.c.h.b16 %v7619
    %v7902 = vunpack.c.l.b16 %v7620
    %v7903 = vunpack.c.h.b16 %v7620
    %v7904 = vunpack.c.l.b16 %v7621
    %v7905 = vunpack.c.h.b16 %v7621
    %v7906 = vunpack.c.l.b16 %v7622
    %v7907 = vunpack.c.h.b16 %v7622
    %v7908 = vunpack.c.l.b16 %v7623
    %v7909 = vunpack.c.h.b16 %v7623
    %v7910 = vunpack.c.l.b16 %v7624
    %v7911 = vunpack.c.h.b16 %v7624
    %v7912 = vunpack.c.l.b16 %v7625
    %v7913 = vunpack.c.h.b16 %v7625
    %v7914 = vunpack.c.l.b16 %v7626
    %v7915 = vunpack.c.h.b16 %v7626
    %v7916 = vunpack.c.l.b16 %v7627
    %v7917 = vunpack.c.h.b16 %v7627
    %v7918 = vunpack.c.l.b16 %v7628
    %v7919 = vunpack.c.h.b16 %v7628
    %v7920 = vunpack.c.l.b16 %v7629
    %v7921 = vunpack.c.h.b16 %v7629
    %v7922 = vunpack.c.l.b16 %v7630
    %v7923 = vunpack.c.h.b16 %v7630
    %v7924 = vunpack.c.l.b16 %v7631
    %v7925 = vunpack.c.h.b16 %v7631
    %v7926 = vunpack.c.l.b16 %v7632
    %v7927 = vunpack.c.h.b16 %v7632
    %v7928 = vunpack.c.l.b16 %v7633
    %v7929 = vunpack.c.h.b16 %v7633
    %v7930 = vunpack.c.l.b16 %v7634
    %v7931 = vunpack.c.h.b16 %v7634
    %v7932 = vunpack.c.l.b16 %v7635
    %v7933 = vunpack.c.h.b16 %v7635
    %v7934 = vunpack.c.l.b16 %v7636
    %v7935 = vunpack.c.h.b16 %v7636
    %v7936 = vunpack.c.l.b16 %v7637
    %v7937 = vunpack.c.h.b16 %v7637
    %v7938 = vunpack.c.l.b16 %v7638
    %v7939 = vunpack.c.h.b16 %v7638
    %v7940 = vunpack.c.l.b16 %v7639
    %v7941 = vunpack.c.h.b16 %v7639
    %v7942 = vunpack.c.l.b16 %v7640
    %v7943 = vunpack.c.h.b16 %v7640
    %v7944 = vunpack.c.l.b16 %v7641
    %v7945 = vunpack.c.h.b16 %v7641
    %v7946 = vunpack.c.l.b16 %v7642
    %v7947 = vunpack.c.h.b16 %v7642
    %v7948 = vunpack.c.l.b16 %v7643
    %v7949 = vunpack.c.h.b16 %v7643
    %v7950 = vunpack.c.l.b16 %v7644
    %v7951 = vunpack.c.h.b16 %v7644
    %v7952 = vunpack.c.l.b16 %v7645
    %v7953 = vunpack.c.h.b16 %v7645
    %v7954 = vunpack.c.l.b16 %v7646
    %v7955 = vunpack.c.h.b16 %v7646
    %v7956 = vunpack.c.l.b16 %v7647
    %v7957 = vunpack.c.h.b16 %v7647
    %v7958 = vunpack.c.l.b16 %v7648
    %v7959 = vunpack.c.h.b16 %v7648
    %v7960 = vunpack.c.l.b16 %v7649
    %v7961 = vunpack.c.h.b16 %v7649
    %v7962 = vunpack.c.l.b16 %v7650
    %v7963 = vunpack.c.h.b16 %v7650
    %v7964 = vpack.c.b16 %v7902, %v7900
    %v7965 = vpack.c.b16 %v7903, %v7901
    %v7966 = vpack.c.b16 %v7906, %v7904
    %v7967 = vpack.c.b16 %v7907, %v7905
    %v7968 = vpack.c.b16 %v7910, %v7908
    %v7969 = vpack.c.b16 %v7911, %v7909
    %v7970 = vpack.c.b16 %v7914, %v7912
    %v7971 = vpack.c.b16 %v7915, %v7913
    %v7972 = vpack.c.b16 %v7918, %v7916
    %v7973 = vpack.c.b16 %v7919, %v7917
    %v7974 = vpack.c.b16 %v7922, %v7920
    %v7975 = vpack.c.b16 %v7923, %v7921
    %v7976 = vpack.c.b16 %v7926, %v7924
    %v7977 = vpack.c.b16 %v7927, %v7925
    %v7978 = vpack.c.b16 %v7930, %v7928
    %v7979 = vpack.c.b16 %v7931, %v7929
    %v7980 = vpack.c.b16 %v7934, %v7932
    %v7981 = vpack.c.b16 %v7935, %v7933
    %v7982 = vpack.c.b16 %v7938, %v7936
    %v7983 = vpack.c.b16 %v7939, %v7937
    %v7984 = vpack.c.b16 %v7942, %v7940
    %v7985 = vpack.c.b16 %v7943, %v7941
    %v7986 = vpack.c.b16 %v7946, %v7944
    %v7987 = vpack.c.b16 %v7947, %v7945
    %v7988 = vpack.c.b16 %v7950, %v7948
    %v7989 = vpack.c.b16 %v7951, %v7949
    %v7990 = vpack.c.b16 %v7954, %v7952
    %v7991 = vpack.c.b16 %v7955, %v7953
    %v7992 = vpack.c.b16 %v7958, %v7956
    %v7993 = vpack.c.b16 %v7959, %v7957
    %v7994 = vpack.c.b16 %v7962, %v7960
    %v7995 = vpack.c.b16 %v7963, %v7961
    %8028 = vmatprep.subr.bf16.mxu0 %v7979
    %8029 = vmatpush1.bf16.msra.mxu0 %v7978
    %8030 = vmatprep.subr.bf16.mxu0 %v7977
    %8031 = vmatpush1.bf16.msra.mxu0 %v7976
    %8032 = vmatprep.subr.bf16.mxu0 %v7975
    %8033 = vmatpush1.bf16.msra.mxu0 %v7974
    %8034 = vmatprep.subr.bf16.mxu0 %v7973
    %8035 = vmatpush1.bf16.msra.mxu0 %v7972
    %8036 = vmatprep.subr.bf16.mxu0 %v7971
    %8037 = vmatpush1.bf16.msra.mxu0 %v7970
    %8038 = vmatprep.subr.bf16.mxu0 %v7969
    %8039 = vmatpush1.bf16.msra.mxu0 %v7968
    %8040 = vmatprep.subr.bf16.mxu0 %v7967
    %8041 = vmatpush1.bf16.msra.mxu0 %v7966
    %8042 = vmatprep.subr.bf16.mxu0 %v7965
    %8043 = vmatpush1.bf16.msra.mxu0 %v7964
    %8044 = vmatprep.subr.bf16.mxu0 %v7995
    %8045 = vmatpush2.bf16.msra.mxu0 %v7994
    %8046 = vmatprep.subr.bf16.mxu0 %v7993
    %8047 = vmatpush2.bf16.msra.mxu0 %v7992
    %8048 = vmatprep.subr.bf16.mxu0 %v7991
    %8049 = vmatpush2.bf16.msra.mxu0 %v7990
    %8050 = vmatprep.subr.bf16.mxu0 %v7989
    %8051 = vmatpush2.bf16.msra.mxu0 %v7988
    %8052 = vmatprep.subr.bf16.mxu0 %v7987
    %8053 = vmatpush2.bf16.msra.mxu0 %v7986
    %8054 = vmatprep.subr.bf16.mxu0 %v7985
    %8055 = vmatpush2.bf16.msra.mxu0 %v7984
    %8056 = vmatprep.subr.bf16.mxu0 %v7983
    %8057 = vmatpush2.bf16.msra.mxu0 %v7982
    %8058 = vmatprep.subr.bf16.mxu0 %v7981
    %8059 = vmatpush2.bf16.msra.mxu0 %v7980
    %8060 = vmatprep.mubr.bf16.mxu0 %v363
    %8061 = vmatmul.mubr.bf16.gmra.mxu0 %v362
    %v8062 = vpop.f32.mrf.mxu0
    %v8063 = vadd.f32 %v7790, %v8062
    %v8064 = vpop.f32.mrf.mxu0
    %v8065 = vadd.f32 %v7792, %v8064
    %v8066 = vpop.f32.mrf.mxu0
    %v8067 = vadd.f32 %v7794, %v8066
    %v8068 = vpop.f32.mrf.mxu0
    %v8069 = vadd.f32 %v7796, %v8068
    %8070 = vmatprep.mubr.bf16.mxu0 %v365
    %8071 = vmatmul.mubr.bf16.gmra.mxu0 %v364
    %v8072 = vpop.f32.mrf.mxu0
    %v8073 = vadd.f32 %v7800, %v8072
    %v8074 = vpop.f32.mrf.mxu0
    %v8075 = vadd.f32 %v7802, %v8074
    %v8076 = vpop.f32.mrf.mxu0
    %v8077 = vadd.f32 %v7804, %v8076
    %v8078 = vpop.f32.mrf.mxu0
    %v8079 = vadd.f32 %v7806, %v8078
    %8080 = vmatprep.mubr.bf16.mxu0 %v367
    %8081 = vmatmul.mubr.bf16.gmra.mxu0 %v366
    %v8082 = vpop.f32.mrf.mxu0
    %v8083 = vadd.f32 %v7810, %v8082
    %v8084 = vpop.f32.mrf.mxu0
    %v8085 = vadd.f32 %v7812, %v8084
    %v8086 = vpop.f32.mrf.mxu0
    %v8087 = vadd.f32 %v7814, %v8086
    %v8088 = vpop.f32.mrf.mxu0
    %v8089 = vadd.f32 %v7816, %v8088
    %8090 = vmatprep.mubr.bf16.mxu0 %v369
    %8091 = vmatmul.mubr.bf16.gmra.mxu0 %v368
    %v8092 = vpop.f32.mrf.mxu0
    %v8093 = vadd.f32 %v7820, %v8092
    %v8094 = vpop.f32.mrf.mxu0
    %v8095 = vadd.f32 %v7822, %v8094
    %v8096 = vpop.f32.mrf.mxu0
    %v8097 = vadd.f32 %v7824, %v8096
    %v8098 = vpop.f32.mrf.mxu0
    %v8099 = vadd.f32 %v7826, %v8098
    %8100 = vmatprep.mubr.bf16.mxu0 %v371
    %8101 = vmatmul.mubr.bf16.gmra.mxu0 %v370
    %v8102 = vpop.f32.mrf.mxu0
    %v8103 = vadd.f32 %v7830, %v8102
    %v8104 = vpop.f32.mrf.mxu0
    %v8105 = vadd.f32 %v7832, %v8104
    %v8106 = vpop.f32.mrf.mxu0
    %v8107 = vadd.f32 %v7834, %v8106
    %v8108 = vpop.f32.mrf.mxu0
    %v8109 = vadd.f32 %v7836, %v8108
    %8110 = vmatprep.mubr.bf16.mxu0 %v373
    %8111 = vmatmul.mubr.bf16.gmra.mxu0 %v372
    %v8112 = vpop.f32.mrf.mxu0
    %v8113 = vadd.f32 %v7840, %v8112
    %v8114 = vpop.f32.mrf.mxu0
    %v8115 = vadd.f32 %v7842, %v8114
    %v8116 = vpop.f32.mrf.mxu0
    %v8117 = vadd.f32 %v7844, %v8116
    %v8118 = vpop.f32.mrf.mxu0
    %v8119 = vadd.f32 %v7846, %v8118
    %8120 = vmatprep.mubr.bf16.mxu0 %v375
    %8121 = vmatmul.mubr.bf16.gmra.mxu0 %v374
    %v8122 = vpop.f32.mrf.mxu0
    %v8123 = vadd.f32 %v7850, %v8122
    %v8124 = vpop.f32.mrf.mxu0
    %v8125 = vadd.f32 %v7852, %v8124
    %v8126 = vpop.f32.mrf.mxu0
    %v8127 = vadd.f32 %v7854, %v8126
    %v8128 = vpop.f32.mrf.mxu0
    %v8129 = vadd.f32 %v7856, %v8128
    %8130 = vmatprep.mubr.bf16.mxu0 %v377
    %8131 = vmatmul.mubr.bf16.gmra.mxu0 %v376
    %v8132 = vpop.f32.mrf.mxu0
    %v8133 = vadd.f32 %v7860, %v8132
    %v8134 = vpop.f32.mrf.mxu0
    %v8135 = vadd.f32 %v7862, %v8134
    %v8136 = vpop.f32.mrf.mxu0
    %v8137 = vadd.f32 %v7864, %v8136
    %v8138 = vpop.f32.mrf.mxu0
    %v8139 = vadd.f32 %v7866, %v8138
    %8140 = vdwg.mxu0
    %v8141 = vlaneseq
    %v8142 = vshrl.u32 %v8141, 7
    %v8143 = vsub.s32 0, %v8142
    %v8144 = vrot.slane %v7617, %v8143
    %v8145 = vlaneseq
    %v8146 = vshrl.u32 %v8145, 7
    %v8147 = vsub.s32 0, %v8146
    %v8148 = vrot.slane %v7618, %v8147
    %v8149 = vadd.f32 %v8063, %v8144
    %v8150 = vadd.f32 %v8065, %v8148
    %v8151 = vadd.f32 %v8067, %v8144
    %v8152 = vadd.f32 %v8069, %v8148
    %v8153 = vadd.f32 %v8073, %v8144
    %v8154 = vadd.f32 %v8075, %v8148
    %v8155 = vadd.f32 %v8077, %v8144
    %v8156 = vadd.f32 %v8079, %v8148
    %v8157 = vadd.f32 %v8083, %v8144
    %v8158 = vadd.f32 %v8085, %v8148
    %v8159 = vadd.f32 %v8087, %v8144
    %v8160 = vadd.f32 %v8089, %v8148
    %v8161 = vadd.f32 %v8093, %v8144
    %v8162 = vadd.f32 %v8095, %v8148
    %v8163 = vadd.f32 %v8097, %v8144
    %v8164 = vadd.f32 %v8099, %v8148
    %v8165 = vadd.f32 %v8103, %v8144
    %v8166 = vadd.f32 %v8105, %v8148
    %v8167 = vadd.f32 %v8107, %v8144
    %v8168 = vadd.f32 %v8109, %v8148
    %v8169 = vadd.f32 %v8113, %v8144
    %v8170 = vadd.f32 %v8115, %v8148
    %v8171 = vadd.f32 %v8117, %v8144
    %v8172 = vadd.f32 %v8119, %v8148
    %v8173 = vadd.f32 %v8123, %v8144
    %v8174 = vadd.f32 %v8125, %v8148
    %v8175 = vadd.f32 %v8127, %v8144
    %v8176 = vadd.f32 %v8129, %v8148
    %v8177 = vadd.f32 %v8133, %v8144
    %v8178 = vadd.f32 %v8135, %v8148
    %v8179 = vadd.f32 %v8137, %v8144
    %v8180 = vadd.f32 %v8139, %v8148
    %v8181 = vadd.f32 %v8149, %v8150
    %8182 = vadd.xlane.f32.xlu0 %v8181
    %v8183 = vpop.xlane.xlu0 %8182
    %v8184 = vadd.f32 %v8151, %v8152
    %8185 = vadd.xlane.f32.xlu0 %v8184
    %v8186 = vpop.xlane.xlu0 %8185
    %v8187 = vadd.f32 %v8153, %v8154
    %8188 = vadd.xlane.f32.xlu0 %v8187
    %v8189 = vpop.xlane.xlu0 %8188
    %v8190 = vadd.f32 %v8155, %v8156
    %8191 = vadd.xlane.f32.xlu0 %v8190
    %v8192 = vpop.xlane.xlu0 %8191
    %v8193 = vadd.f32 %v8157, %v8158
    %8194 = vadd.xlane.f32.xlu0 %v8193
    %v8195 = vpop.xlane.xlu0 %8194
    %v8196 = vadd.f32 %v8159, %v8160
    %8197 = vadd.xlane.f32.xlu0 %v8196
    %v8198 = vpop.xlane.xlu0 %8197
    %v8199 = vadd.f32 %v8161, %v8162
    %8200 = vadd.xlane.f32.xlu0 %v8199
    %v8201 = vpop.xlane.xlu0 %8200
    %v8202 = vadd.f32 %v8163, %v8164
    %8203 = vadd.xlane.f32.xlu0 %v8202
    %v8204 = vpop.xlane.xlu0 %8203
    %v8205 = vadd.f32 %v8165, %v8166
    %8206 = vadd.xlane.f32.xlu0 %v8205
    %v8207 = vpop.xlane.xlu0 %8206
    %v8208 = vadd.f32 %v8167, %v8168
    %8209 = vadd.xlane.f32.xlu0 %v8208
    %v8210 = vpop.xlane.xlu0 %8209
    %v8211 = vadd.f32 %v8169, %v8170
    %8212 = vadd.xlane.f32.xlu0 %v8211
    %v8213 = vpop.xlane.xlu0 %8212
    %v8214 = vadd.f32 %v8171, %v8172
    %8215 = vadd.xlane.f32.xlu0 %v8214
    %v8216 = vpop.xlane.xlu0 %8215
    %v8217 = vadd.f32 %v8173, %v8174
    %8218 = vadd.xlane.f32.xlu0 %v8217
    %v8219 = vpop.xlane.xlu0 %8218
    %v8220 = vadd.f32 %v8175, %v8176
    %8221 = vadd.xlane.f32.xlu0 %v8220
    %v8222 = vpop.xlane.xlu0 %8221
    %v8223 = vadd.f32 %v8177, %v8178
    %8224 = vadd.xlane.f32.xlu0 %v8223
    %v8225 = vpop.xlane.xlu0 %8224
    %v8226 = vadd.f32 %v8179, %v8180
    %8227 = vadd.xlane.f32.xlu0 %v8226
    %v8228 = vpop.xlane.xlu0 %8227
    %v8229 = vrcp.pop 256.0
    %v8230 = vmul.f32 %v8183, %v8229
    %v8231 = vmul.f32 %v8186, %v8229
    %v8232 = vmul.f32 %v8189, %v8229
    %v8233 = vmul.f32 %v8192, %v8229
    %v8234 = vmul.f32 %v8195, %v8229
    %v8235 = vmul.f32 %v8198, %v8229
    %v8236 = vmul.f32 %v8201, %v8229
    %v8237 = vmul.f32 %v8204, %v8229
    %v8238 = vmul.f32 %v8207, %v8229
    %v8239 = vmul.f32 %v8210, %v8229
    %v8240 = vmul.f32 %v8213, %v8229
    %v8241 = vmul.f32 %v8216, %v8229
    %v8242 = vmul.f32 %v8219, %v8229
    %v8243 = vmul.f32 %v8222, %v8229
    %v8244 = vmul.f32 %v8225, %v8229
    %v8245 = vmul.f32 %v8228, %v8229
    %v8246 = vsub.f32 %v8149, %v8230
    %v8247 = vsub.f32 %v8150, %v8230
    %v8248 = vsub.f32 %v8151, %v8231
    %v8249 = vsub.f32 %v8152, %v8231
    %v8250 = vsub.f32 %v8153, %v8232
    %v8251 = vsub.f32 %v8154, %v8232
    %v8252 = vsub.f32 %v8155, %v8233
    %v8253 = vsub.f32 %v8156, %v8233
    %v8254 = vsub.f32 %v8157, %v8234
    %v8255 = vsub.f32 %v8158, %v8234
    %v8256 = vsub.f32 %v8159, %v8235
    %v8257 = vsub.f32 %v8160, %v8235
    %v8258 = vsub.f32 %v8161, %v8236
    %v8259 = vsub.f32 %v8162, %v8236
    %v8260 = vsub.f32 %v8163, %v8237
    %v8261 = vsub.f32 %v8164, %v8237
    %v8262 = vsub.f32 %v8165, %v8238
    %v8263 = vsub.f32 %v8166, %v8238
    %v8264 = vsub.f32 %v8167, %v8239
    %v8265 = vsub.f32 %v8168, %v8239
    %v8266 = vsub.f32 %v8169, %v8240
    %v8267 = vsub.f32 %v8170, %v8240
    %v8268 = vsub.f32 %v8171, %v8241
    %v8269 = vsub.f32 %v8172, %v8241
    %v8270 = vsub.f32 %v8173, %v8242
    %v8271 = vsub.f32 %v8174, %v8242
    %v8272 = vsub.f32 %v8175, %v8243
    %v8273 = vsub.f32 %v8176, %v8243
    %v8274 = vsub.f32 %v8177, %v8244
    %v8275 = vsub.f32 %v8178, %v8244
    %v8276 = vsub.f32 %v8179, %v8245
    %v8277 = vsub.f32 %v8180, %v8245
    %v8278 = vmul.f32 %v8246, %v8246
    %v8279 = vmul.f32 %v8247, %v8247
    %v8280 = vmul.f32 %v8248, %v8248
    %v8281 = vmul.f32 %v8249, %v8249
    %v8282 = vmul.f32 %v8250, %v8250
    %v8283 = vmul.f32 %v8251, %v8251
    %v8284 = vmul.f32 %v8252, %v8252
    %v8285 = vmul.f32 %v8253, %v8253
    %v8286 = vmul.f32 %v8254, %v8254
    %v8287 = vmul.f32 %v8255, %v8255
    %v8288 = vmul.f32 %v8256, %v8256
    %v8289 = vmul.f32 %v8257, %v8257
    %v8290 = vmul.f32 %v8258, %v8258
    %v8291 = vmul.f32 %v8259, %v8259
    %v8292 = vmul.f32 %v8260, %v8260
    %v8293 = vmul.f32 %v8261, %v8261
    %v8294 = vmul.f32 %v8262, %v8262
    %v8295 = vmul.f32 %v8263, %v8263
    %v8296 = vmul.f32 %v8264, %v8264
    %v8297 = vmul.f32 %v8265, %v8265
    %v8298 = vmul.f32 %v8266, %v8266
    %v8299 = vmul.f32 %v8267, %v8267
    %v8300 = vmul.f32 %v8268, %v8268
    %v8301 = vmul.f32 %v8269, %v8269
    %v8302 = vmul.f32 %v8270, %v8270
    %v8303 = vmul.f32 %v8271, %v8271
    %v8304 = vmul.f32 %v8272, %v8272
    %v8305 = vmul.f32 %v8273, %v8273
    %v8306 = vmul.f32 %v8274, %v8274
    %v8307 = vmul.f32 %v8275, %v8275
    %v8308 = vmul.f32 %v8276, %v8276
    %v8309 = vmul.f32 %v8277, %v8277
    %v8310 = vadd.f32 %v8278, %v8279
    %8311 = vadd.xlane.f32.xlu0 %v8310
    %v8312 = vpop.xlane.xlu0 %8311
    %v8313 = vadd.f32 %v8280, %v8281
    %8314 = vadd.xlane.f32.xlu0 %v8313
    %v8315 = vpop.xlane.xlu0 %8314
    %v8316 = vadd.f32 %v8282, %v8283
    %8317 = vadd.xlane.f32.xlu0 %v8316
    %v8318 = vpop.xlane.xlu0 %8317
    %v8319 = vadd.f32 %v8284, %v8285
    %8320 = vadd.xlane.f32.xlu0 %v8319
    %v8321 = vpop.xlane.xlu0 %8320
    %v8322 = vadd.f32 %v8286, %v8287
    %8323 = vadd.xlane.f32.xlu0 %v8322
    %v8324 = vpop.xlane.xlu0 %8323
    %v8325 = vadd.f32 %v8288, %v8289
    %8326 = vadd.xlane.f32.xlu0 %v8325
    %v8327 = vpop.xlane.xlu0 %8326
    %v8328 = vadd.f32 %v8290, %v8291
    %8329 = vadd.xlane.f32.xlu0 %v8328
    %v8330 = vpop.xlane.xlu0 %8329
    %v8331 = vadd.f32 %v8292, %v8293
    %8332 = vadd.xlane.f32.xlu0 %v8331
    %v8333 = vpop.xlane.xlu0 %8332
    %v8334 = vadd.f32 %v8294, %v8295
    %8335 = vadd.xlane.f32.xlu0 %v8334
    %v8336 = vpop.xlane.xlu0 %8335
    %v8337 = vadd.f32 %v8296, %v8297
    %8338 = vadd.xlane.f32.xlu0 %v8337
    %v8339 = vpop.xlane.xlu0 %8338
    %v8340 = vadd.f32 %v8298, %v8299
    %8341 = vadd.xlane.f32.xlu0 %v8340
    %v8342 = vpop.xlane.xlu0 %8341
    %v8343 = vadd.f32 %v8300, %v8301
    %8344 = vadd.xlane.f32.xlu0 %v8343
    %v8345 = vpop.xlane.xlu0 %8344
    %v8346 = vadd.f32 %v8302, %v8303
    %8347 = vadd.xlane.f32.xlu0 %v8346
    %v8348 = vpop.xlane.xlu0 %8347
    %v8349 = vadd.f32 %v8304, %v8305
    %8350 = vadd.xlane.f32.xlu0 %v8349
    %v8351 = vpop.xlane.xlu0 %8350
    %v8352 = vadd.f32 %v8306, %v8307
    %8353 = vadd.xlane.f32.xlu0 %v8352
    %v8354 = vpop.xlane.xlu0 %8353
    %v8355 = vadd.f32 %v8308, %v8309
    %8356 = vadd.xlane.f32.xlu0 %v8355
    %v8357 = vpop.xlane.xlu0 %8356
    %v8358 = vmul.f32 %v8312, %v8229
    %v8359 = vmul.f32 %v8315, %v8229
    %v8360 = vmul.f32 %v8318, %v8229
    %v8361 = vmul.f32 %v8321, %v8229
    %v8362 = vmul.f32 %v8324, %v8229
    %v8363 = vmul.f32 %v8327, %v8229
    %v8364 = vmul.f32 %v8330, %v8229
    %v8365 = vmul.f32 %v8333, %v8229
    %v8366 = vmul.f32 %v8336, %v8229
    %v8367 = vmul.f32 %v8339, %v8229
    %v8368 = vmul.f32 %v8342, %v8229
    %v8369 = vmul.f32 %v8345, %v8229
    %v8370 = vmul.f32 %v8348, %v8229
    %v8371 = vmul.f32 %v8351, %v8229
    %v8372 = vmul.f32 %v8354, %v8229
    %v8373 = vmul.f32 %v8357, %v8229
    %v8374 = vadd.f32 %v8358, 1e-05
    %v8375 = vadd.f32 %v8359, 1e-05
    %v8376 = vadd.f32 %v8360, 1e-05
    %v8377 = vadd.f32 %v8361, 1e-05
    %v8378 = vadd.f32 %v8362, 1e-05
    %v8379 = vadd.f32 %v8363, 1e-05
    %v8380 = vadd.f32 %v8364, 1e-05
    %v8381 = vadd.f32 %v8365, 1e-05
    %v8382 = vadd.f32 %v8366, 1e-05
    %v8383 = vadd.f32 %v8367, 1e-05
    %v8384 = vadd.f32 %v8368, 1e-05
    %v8385 = vadd.f32 %v8369, 1e-05
    %v8386 = vadd.f32 %v8370, 1e-05
    %v8387 = vadd.f32 %v8371, 1e-05
    %v8388 = vadd.f32 %v8372, 1e-05
    %v8389 = vadd.f32 %v8373, 1e-05
    %v8390 = vrsqrt.pop %v8374
    %v8391 = vrsqrt.pop %v8375
    %v8392 = vrsqrt.pop %v8376
    %v8393 = vrsqrt.pop %v8377
    %v8394 = vrsqrt.pop %v8378
    %v8395 = vrsqrt.pop %v8379
    %v8396 = vrsqrt.pop %v8380
    %v8397 = vrsqrt.pop %v8381
    %v8398 = vrsqrt.pop %v8382
    %v8399 = vrsqrt.pop %v8383
    %v8400 = vrsqrt.pop %v8384
    %v8401 = vrsqrt.pop %v8385
    %v8402 = vrsqrt.pop %v8386
    %v8403 = vrsqrt.pop %v8387
    %v8404 = vrsqrt.pop %v8388
    %v8405 = vrsqrt.pop %v8389
    %v8406 = vmul.f32 %v8246, %v8390
    %v8407 = vmul.f32 %v8247, %v8390
    %v8408 = vmul.f32 %v8248, %v8391
    %v8409 = vmul.f32 %v8249, %v8391
    %v8410 = vmul.f32 %v8250, %v8392
    %v8411 = vmul.f32 %v8251, %v8392
    %v8412 = vmul.f32 %v8252, %v8393
    %v8413 = vmul.f32 %v8253, %v8393
    %v8414 = vmul.f32 %v8254, %v8394
    %v8415 = vmul.f32 %v8255, %v8394
    %v8416 = vmul.f32 %v8256, %v8395
    %v8417 = vmul.f32 %v8257, %v8395
    %v8418 = vmul.f32 %v8258, %v8396
    %v8419 = vmul.f32 %v8259, %v8396
    %v8420 = vmul.f32 %v8260, %v8397
    %v8421 = vmul.f32 %v8261, %v8397
    %v8422 = vmul.f32 %v8262, %v8398
    %v8423 = vmul.f32 %v8263, %v8398
    %v8424 = vmul.f32 %v8264, %v8399
    %v8425 = vmul.f32 %v8265, %v8399
    %v8426 = vmul.f32 %v8266, %v8400
    %v8427 = vmul.f32 %v8267, %v8400
    %v8428 = vmul.f32 %v8268, %v8401
    %v8429 = vmul.f32 %v8269, %v8401
    %v8430 = vmul.f32 %v8270, %v8402
    %v8431 = vmul.f32 %v8271, %v8402
    %v8432 = vmul.f32 %v8272, %v8403
    %v8433 = vmul.f32 %v8273, %v8403
    %v8434 = vmul.f32 %v8274, %v8404
    %v8435 = vmul.f32 %v8275, %v8404
    %v8436 = vmul.f32 %v8276, %v8405
    %v8437 = vmul.f32 %v8277, %v8405
    %v8438 = vlaneseq
    %v8439 = vshrl.u32 %v8438, 7
    %v8440 = vsub.s32 1, %v8439
    %v8441 = vrot.slane %v7617, %v8440
    %v8442 = vlaneseq
    %v8443 = vshrl.u32 %v8442, 7
    %v8444 = vsub.s32 1, %v8443
    %v8445 = vrot.slane %v7618, %v8444
    %v8446 = vmul.f32 %v8406, %v8441
    %v8447 = vmul.f32 %v8407, %v8445
    %v8448 = vmul.f32 %v8408, %v8441
    %v8449 = vmul.f32 %v8409, %v8445
    %v8450 = vmul.f32 %v8410, %v8441
    %v8451 = vmul.f32 %v8411, %v8445
    %v8452 = vmul.f32 %v8412, %v8441
    %v8453 = vmul.f32 %v8413, %v8445
    %v8454 = vmul.f32 %v8414, %v8441
    %v8455 = vmul.f32 %v8415, %v8445
    %v8456 = vmul.f32 %v8416, %v8441
    %v8457 = vmul.f32 %v8417, %v8445
    %v8458 = vmul.f32 %v8418, %v8441
    %v8459 = vmul.f32 %v8419, %v8445
    %v8460 = vmul.f32 %v8420, %v8441
    %v8461 = vmul.f32 %v8421, %v8445
    %v8462 = vmul.f32 %v8422, %v8441
    %v8463 = vmul.f32 %v8423, %v8445
    %v8464 = vmul.f32 %v8424, %v8441
    %v8465 = vmul.f32 %v8425, %v8445
    %v8466 = vmul.f32 %v8426, %v8441
    %v8467 = vmul.f32 %v8427, %v8445
    %v8468 = vmul.f32 %v8428, %v8441
    %v8469 = vmul.f32 %v8429, %v8445
    %v8470 = vmul.f32 %v8430, %v8441
    %v8471 = vmul.f32 %v8431, %v8445
    %v8472 = vmul.f32 %v8432, %v8441
    %v8473 = vmul.f32 %v8433, %v8445
    %v8474 = vmul.f32 %v8434, %v8441
    %v8475 = vmul.f32 %v8435, %v8445
    %v8476 = vmul.f32 %v8436, %v8441
    %v8477 = vmul.f32 %v8437, %v8445
    %v8478 = vlaneseq
    %v8479 = vshrl.u32 %v8478, 7
    %v8480 = vsub.s32 2, %v8479
    %v8481 = vrot.slane %v7617, %v8480
    %v8482 = vlaneseq
    %v8483 = vshrl.u32 %v8482, 7
    %v8484 = vsub.s32 2, %v8483
    %v8485 = vrot.slane %v7618, %v8484
    %v8486 = vadd.f32 %v8446, %v8481
    %v8487 = vadd.f32 %v8447, %v8485
    %v8488 = vadd.f32 %v8448, %v8481
    %v8489 = vadd.f32 %v8449, %v8485
    %v8490 = vadd.f32 %v8450, %v8481
    %v8491 = vadd.f32 %v8451, %v8485
    %v8492 = vadd.f32 %v8452, %v8481
    %v8493 = vadd.f32 %v8453, %v8485
    %v8494 = vadd.f32 %v8454, %v8481
    %v8495 = vadd.f32 %v8455, %v8485
    %v8496 = vadd.f32 %v8456, %v8481
    %v8497 = vadd.f32 %v8457, %v8485
    %v8498 = vadd.f32 %v8458, %v8481
    %v8499 = vadd.f32 %v8459, %v8485
    %v8500 = vadd.f32 %v8460, %v8481
    %v8501 = vadd.f32 %v8461, %v8485
    %v8502 = vadd.f32 %v8462, %v8481
    %v8503 = vadd.f32 %v8463, %v8485
    %v8504 = vadd.f32 %v8464, %v8481
    %v8505 = vadd.f32 %v8465, %v8485
    %v8506 = vadd.f32 %v8466, %v8481
    %v8507 = vadd.f32 %v8467, %v8485
    %v8508 = vadd.f32 %v8468, %v8481
    %v8509 = vadd.f32 %v8469, %v8485
    %v8510 = vadd.f32 %v8470, %v8481
    %v8511 = vadd.f32 %v8471, %v8485
    %v8512 = vadd.f32 %v8472, %v8481
    %v8513 = vadd.f32 %v8473, %v8485
    %v8514 = vadd.f32 %v8474, %v8481
    %v8515 = vadd.f32 %v8475, %v8485
    %v8516 = vadd.f32 %v8476, %v8481
    %v8517 = vadd.f32 %v8477, %v8485
    %v8518 = vld [vmem:[%s6] sm:$0xff]
    %v8519 = vld [vmem:[%s6 + $0x8] sm:$0xff]
    %v8520 = vld [vmem:[%s6 + $0x10] sm:$0xff]
    %v8521 = vld [vmem:[%s6 + $0x18] sm:$0xff]
    %v8522 = vld [vmem:[%s6 + $0x20] sm:$0xff]
    %v8523 = vld [vmem:[%s6 + $0x28] sm:$0xff]
    %v8524 = vld [vmem:[%s6 + $0x30] sm:$0xff]
    %v8525 = vld [vmem:[%s6 + $0x38] sm:$0xff]
    %v8526 = vld [vmem:[%s6 + $0x40] sm:$0xff]
    %v8527 = vld [vmem:[%s6 + $0x48] sm:$0xff]
    %v8528 = vld [vmem:[%s6 + $0x50] sm:$0xff]
    %v8529 = vld [vmem:[%s6 + $0x58] sm:$0xff]
    %v8530 = vld [vmem:[%s6 + $0x60] sm:$0xff]
    %v8531 = vld [vmem:[%s6 + $0x68] sm:$0xff]
    %v8532 = vld [vmem:[%s6 + $0x70] sm:$0xff]
    %v8533 = vld [vmem:[%s6 + $0x78] sm:$0xff]
    %v8534 = vld [vmem:[%s6 + $0x80] sm:$0xff]
    %v8535 = vld [vmem:[%s6 + $0x88] sm:$0xff]
    %v8536 = vld [vmem:[%s6 + $0x90] sm:$0xff]
    %v8537 = vld [vmem:[%s6 + $0x98] sm:$0xff]
    %v8538 = vld [vmem:[%s6 + $0xa0] sm:$0xff]
    %v8539 = vld [vmem:[%s6 + $0xa8] sm:$0xff]
    %v8540 = vld [vmem:[%s6 + $0xb0] sm:$0xff]
    %v8541 = vld [vmem:[%s6 + $0xb8] sm:$0xff]
    %v8542 = vld [vmem:[%s6 + $0xc0] sm:$0xff]
    %v8543 = vld [vmem:[%s6 + $0xc8] sm:$0xff]
    %v8544 = vld [vmem:[%s6 + $0xd0] sm:$0xff]
    %v8545 = vld [vmem:[%s6 + $0xd8] sm:$0xff]
    %v8546 = vld [vmem:[%s6 + $0xe0] sm:$0xff]
    %v8547 = vld [vmem:[%s6 + $0xe8] sm:$0xff]
    %v8548 = vld [vmem:[%s6 + $0xf0] sm:$0xff]
    %v8549 = vld [vmem:[%s6 + $0xf8] sm:$0xff]
    %v8550 = vpack.c.bf16 %v4866, %v4865
    %v8551 = vpack.c.bf16 %v4868, %v4867
    %v8552 = vpack.c.bf16 %v4870, %v4869
    %v8553 = vpack.c.bf16 %v4872, %v4871
    %v8554 = vpack.c.bf16 %v7610, %v7609
    %v8555 = vpack.c.bf16 %v7612, %v7611
    %v8556 = vpack.c.bf16 %v7614, %v7613
    %v8557 = vpack.c.bf16 %v7616, %v7615
    %v8558 = vld [vmem:[#allocation6] sm:$0xff]
    %v8559 = vld [vmem:[#allocation6 + $0x8] sm:$0xff]
    %v8560 = vld [vmem:[#allocation6 + $0x10] sm:$0xff]
    %v8561 = vld [vmem:[#allocation6 + $0x18] sm:$0xff]
    %v8562 = vld [vmem:[#allocation6 + $0x20] sm:$0xff]
    %v8563 = vld [vmem:[#allocation6 + $0x28] sm:$0xff]
    %v8564 = vld [vmem:[#allocation6 + $0x30] sm:$0xff]
    %v8565 = vld [vmem:[#allocation6 + $0x38] sm:$0xff]
    %v8566 = vld [vmem:[#allocation6 + $0x40] sm:$0xff]
    %v8567 = vld [vmem:[#allocation6 + $0x48] sm:$0xff]
    %v8568 = vld [vmem:[#allocation6 + $0x50] sm:$0xff]
    %v8569 = vld [vmem:[#allocation6 + $0x58] sm:$0xff]
    %v8570 = vld [vmem:[#allocation6 + $0x60] sm:$0xff]
    %v8571 = vld [vmem:[#allocation6 + $0x68] sm:$0xff]
    %v8572 = vld [vmem:[#allocation6 + $0x70] sm:$0xff]
    %v8573 = vld [vmem:[#allocation6 + $0x78] sm:$0xff]
    %v8590 = vunpack.c.l.b16 %v8558
    %v8591 = vunpack.c.h.b16 %v8558
    %v8592 = vunpack.c.l.b16 %v8559
    %v8593 = vunpack.c.h.b16 %v8559
    %v8594 = vunpack.c.l.b16 %v8560
    %v8595 = vunpack.c.h.b16 %v8560
    %v8596 = vunpack.c.l.b16 %v8561
    %v8597 = vunpack.c.h.b16 %v8561
    %v8598 = vunpack.c.l.b16 %v8562
    %v8599 = vunpack.c.h.b16 %v8562
    %v8600 = vunpack.c.l.b16 %v8563
    %v8601 = vunpack.c.h.b16 %v8563
    %v8602 = vunpack.c.l.b16 %v8564
    %v8603 = vunpack.c.h.b16 %v8564
    %v8604 = vunpack.c.l.b16 %v8565
    %v8605 = vunpack.c.h.b16 %v8565
    %v8606 = vunpack.c.l.b16 %v8566
    %v8607 = vunpack.c.h.b16 %v8566
    %v8608 = vunpack.c.l.b16 %v8567
    %v8609 = vunpack.c.h.b16 %v8567
    %v8610 = vunpack.c.l.b16 %v8568
    %v8611 = vunpack.c.h.b16 %v8568
    %v8612 = vunpack.c.l.b16 %v8569
    %v8613 = vunpack.c.h.b16 %v8569
    %v8614 = vunpack.c.l.b16 %v8570
    %v8615 = vunpack.c.h.b16 %v8570
    %v8616 = vunpack.c.l.b16 %v8571
    %v8617 = vunpack.c.h.b16 %v8571
    %v8618 = vunpack.c.l.b16 %v8572
    %v8619 = vunpack.c.h.b16 %v8572
    %v8620 = vunpack.c.l.b16 %v8573
    %v8621 = vunpack.c.h.b16 %v8573
    %v8622 = vpack.c.b16 %v8592, %v8590
    %v8623 = vpack.c.b16 %v8593, %v8591
    %v8624 = vpack.c.b16 %v8596, %v8594
    %v8625 = vpack.c.b16 %v8597, %v8595
    %v8626 = vpack.c.b16 %v8600, %v8598
    %v8627 = vpack.c.b16 %v8601, %v8599
    %v8628 = vpack.c.b16 %v8604, %v8602
    %v8629 = vpack.c.b16 %v8605, %v8603
    %v8630 = vpack.c.b16 %v8608, %v8606
    %v8631 = vpack.c.b16 %v8609, %v8607
    %v8632 = vpack.c.b16 %v8612, %v8610
    %v8633 = vpack.c.b16 %v8613, %v8611
    %v8634 = vpack.c.b16 %v8616, %v8614
    %v8635 = vpack.c.b16 %v8617, %v8615
    %v8636 = vpack.c.b16 %v8620, %v8618
    %v8637 = vpack.c.b16 %v8621, %v8619
    %8654 = vmatprep.subr.bf16.mxu0 %v8637
    %8655 = vmatpush1.bf16.msra.mxu0 %v8636
    %8656 = vmatprep.subr.bf16.mxu0 %v8635
    %8657 = vmatpush1.bf16.msra.mxu0 %v8634
    %8658 = vmatprep.subr.bf16.mxu0 %v8633
    %8659 = vmatpush1.bf16.msra.mxu0 %v8632
    %8660 = vmatprep.subr.bf16.mxu0 %v8631
    %8661 = vmatpush1.bf16.msra.mxu0 %v8630
    %8662 = vmatprep.subr.bf16.mxu0 %v8629
    %8663 = vmatpush1.bf16.msra.mxu0 %v8628
    %8664 = vmatprep.subr.bf16.mxu0 %v8627
    %8665 = vmatpush1.bf16.msra.mxu0 %v8626
    %8666 = vmatprep.subr.bf16.mxu0 %v8625
    %8667 = vmatpush1.bf16.msra.mxu0 %v8624
    %8668 = vmatprep.subr.bf16.mxu0 %v8623
    %8669 = vmatpush1.bf16.msra.mxu0 %v8622
    %8670 = vmatprep.subr.bf16.mxu0 0
    %8671 = vmatpush2.bf16.msra.mxu0 0
    %8672 = vmatprep.subr.bf16.mxu0 0
    %8673 = vmatpush2.bf16.msra.mxu0 0
    %8674 = vmatprep.subr.bf16.mxu0 0
    %8675 = vmatpush2.bf16.msra.mxu0 0
    %8676 = vmatprep.subr.bf16.mxu0 0
    %8677 = vmatpush2.bf16.msra.mxu0 0
    %8678 = vmatprep.subr.bf16.mxu0 0
    %8679 = vmatpush2.bf16.msra.mxu0 0
    %8680 = vmatprep.subr.bf16.mxu0 0
    %8681 = vmatpush2.bf16.msra.mxu0 0
    %8682 = vmatprep.subr.bf16.mxu0 0
    %8683 = vmatpush2.bf16.msra.mxu0 0
    %8684 = vmatprep.subr.bf16.mxu0 0
    %8685 = vmatpush2.bf16.msra.mxu0 0
    %8686 = vmatprep.mubr.bf16.mxu0 0
    %8687 = vmatmul.mubr.bf16.gmra.mxu0 %v8550
    %v8688 = vpop.f32.mrf.mxu0
    %v8689 = vadd.f32 0.0, %v8688
    %v8690 = vpop.f32.mrf.mxu0
    %v8691 = vadd.f32 0.0, %v8690
    %v8692 = vpop.f32.mrf.mxu0
    %v8693 = vadd.f32 0.0, %v8692
    %v8694 = vpop.f32.mrf.mxu0
    %v8695 = vadd.f32 0.0, %v8694
    %8696 = vmatprep.mubr.bf16.mxu0 0
    %8697 = vmatmul.mubr.bf16.gmra.mxu0 %v8551
    %v8698 = vpop.f32.mrf.mxu0
    %v8699 = vadd.f32 0.0, %v8698
    %v8700 = vpop.f32.mrf.mxu0
    %v8701 = vadd.f32 0.0, %v8700
    %v8702 = vpop.f32.mrf.mxu0
    %v8703 = vadd.f32 0.0, %v8702
    %v8704 = vpop.f32.mrf.mxu0
    %v8705 = vadd.f32 0.0, %v8704
    %8706 = vmatprep.mubr.bf16.mxu0 0
    %8707 = vmatmul.mubr.bf16.gmra.mxu0 %v8552
    %v8708 = vpop.f32.mrf.mxu0
    %v8709 = vadd.f32 0.0, %v8708
    %v8710 = vpop.f32.mrf.mxu0
    %v8711 = vadd.f32 0.0, %v8710
    %v8712 = vpop.f32.mrf.mxu0
    %v8713 = vadd.f32 0.0, %v8712
    %v8714 = vpop.f32.mrf.mxu0
    %v8715 = vadd.f32 0.0, %v8714
    %8716 = vmatprep.mubr.bf16.mxu0 0
    %8717 = vmatmul.mubr.bf16.gmra.mxu0 %v8553
    %v8718 = vpop.f32.mrf.mxu0
    %v8719 = vadd.f32 0.0, %v8718
    %v8720 = vpop.f32.mrf.mxu0
    %v8721 = vadd.f32 0.0, %v8720
    %v8722 = vpop.f32.mrf.mxu0
    %v8723 = vadd.f32 0.0, %v8722
    %v8724 = vpop.f32.mrf.mxu0
    %v8725 = vadd.f32 0.0, %v8724
    %8726 = vmatprep.mubr.bf16.mxu0 0
    %8727 = vmatmul.mubr.bf16.gmra.mxu0 %v8554
    %v8728 = vpop.f32.mrf.mxu0
    %v8729 = vadd.f32 0.0, %v8728
    %v8730 = vpop.f32.mrf.mxu0
    %v8731 = vadd.f32 0.0, %v8730
    %v8732 = vpop.f32.mrf.mxu0
    %v8733 = vadd.f32 0.0, %v8732
    %v8734 = vpop.f32.mrf.mxu0
    %v8735 = vadd.f32 0.0, %v8734
    %8736 = vmatprep.mubr.bf16.mxu0 0
    %8737 = vmatmul.mubr.bf16.gmra.mxu0 %v8555
    %v8738 = vpop.f32.mrf.mxu0
    %v8739 = vadd.f32 0.0, %v8738
    %v8740 = vpop.f32.mrf.mxu0
    %v8741 = vadd.f32 0.0, %v8740
    %v8742 = vpop.f32.mrf.mxu0
    %v8743 = vadd.f32 0.0, %v8742
    %v8744 = vpop.f32.mrf.mxu0
    %v8745 = vadd.f32 0.0, %v8744
    %8746 = vmatprep.mubr.bf16.mxu0 0
    %8747 = vmatmul.mubr.bf16.gmra.mxu0 %v8556
    %v8748 = vpop.f32.mrf.mxu0
    %v8749 = vadd.f32 0.0, %v8748
    %v8750 = vpop.f32.mrf.mxu0
    %v8751 = vadd.f32 0.0, %v8750
    %v8752 = vpop.f32.mrf.mxu0
    %v8753 = vadd.f32 0.0, %v8752
    %v8754 = vpop.f32.mrf.mxu0
    %v8755 = vadd.f32 0.0, %v8754
    %8756 = vmatprep.mubr.bf16.mxu0 0
    %8757 = vmatmul.mubr.bf16.gmra.mxu0 %v8557
    %v8758 = vpop.f32.mrf.mxu0
    %v8759 = vadd.f32 0.0, %v8758
    %v8760 = vpop.f32.mrf.mxu0
    %v8761 = vadd.f32 0.0, %v8760
    %v8762 = vpop.f32.mrf.mxu0
    %v8763 = vadd.f32 0.0, %v8762
    %v8764 = vpop.f32.mrf.mxu0
    %v8765 = vadd.f32 0.0, %v8764
    %8766 = vdwg.mxu0
    %v8799 = vunpack.c.l.b16 %v8518
    %v8800 = vunpack.c.h.b16 %v8518
    %v8801 = vunpack.c.l.b16 %v8519
    %v8802 = vunpack.c.h.b16 %v8519
    %v8803 = vunpack.c.l.b16 %v8520
    %v8804 = vunpack.c.h.b16 %v8520
    %v8805 = vunpack.c.l.b16 %v8521
    %v8806 = vunpack.c.h.b16 %v8521
    %v8807 = vunpack.c.l.b16 %v8522
    %v8808 = vunpack.c.h.b16 %v8522
    %v8809 = vunpack.c.l.b16 %v8523
    %v8810 = vunpack.c.h.b16 %v8523
    %v8811 = vunpack.c.l.b16 %v8524
    %v8812 = vunpack.c.h.b16 %v8524
    %v8813 = vunpack.c.l.b16 %v8525
    %v8814 = vunpack.c.h.b16 %v8525
    %v8815 = vunpack.c.l.b16 %v8526
    %v8816 = vunpack.c.h.b16 %v8526
    %v8817 = vunpack.c.l.b16 %v8527
    %v8818 = vunpack.c.h.b16 %v8527
    %v8819 = vunpack.c.l.b16 %v8528
    %v8820 = vunpack.c.h.b16 %v8528
    %v8821 = vunpack.c.l.b16 %v8529
    %v8822 = vunpack.c.h.b16 %v8529
    %v8823 = vunpack.c.l.b16 %v8530
    %v8824 = vunpack.c.h.b16 %v8530
    %v8825 = vunpack.c.l.b16 %v8531
    %v8826 = vunpack.c.h.b16 %v8531
    %v8827 = vunpack.c.l.b16 %v8532
    %v8828 = vunpack.c.h.b16 %v8532
    %v8829 = vunpack.c.l.b16 %v8533
    %v8830 = vunpack.c.h.b16 %v8533
    %v8831 = vunpack.c.l.b16 %v8534
    %v8832 = vunpack.c.h.b16 %v8534
    %v8833 = vunpack.c.l.b16 %v8535
    %v8834 = vunpack.c.h.b16 %v8535
    %v8835 = vunpack.c.l.b16 %v8536
    %v8836 = vunpack.c.h.b16 %v8536
    %v8837 = vunpack.c.l.b16 %v8537
    %v8838 = vunpack.c.h.b16 %v8537
    %v8839 = vunpack.c.l.b16 %v8538
    %v8840 = vunpack.c.h.b16 %v8538
    %v8841 = vunpack.c.l.b16 %v8539
    %v8842 = vunpack.c.h.b16 %v8539
    %v8843 = vunpack.c.l.b16 %v8540
    %v8844 = vunpack.c.h.b16 %v8540
    %v8845 = vunpack.c.l.b16 %v8541
    %v8846 = vunpack.c.h.b16 %v8541
    %v8847 = vunpack.c.l.b16 %v8542
    %v8848 = vunpack.c.h.b16 %v8542
    %v8849 = vunpack.c.l.b16 %v8543
    %v8850 = vunpack.c.h.b16 %v8543
    %v8851 = vunpack.c.l.b16 %v8544
    %v8852 = vunpack.c.h.b16 %v8544
    %v8853 = vunpack.c.l.b16 %v8545
    %v8854 = vunpack.c.h.b16 %v8545
    %v8855 = vunpack.c.l.b16 %v8546
    %v8856 = vunpack.c.h.b16 %v8546
    %v8857 = vunpack.c.l.b16 %v8547
    %v8858 = vunpack.c.h.b16 %v8547
    %v8859 = vunpack.c.l.b16 %v8548
    %v8860 = vunpack.c.h.b16 %v8548
    %v8861 = vunpack.c.l.b16 %v8549
    %v8862 = vunpack.c.h.b16 %v8549
    %v8863 = vpack.c.b16 %v8801, %v8799
    %v8864 = vpack.c.b16 %v8802, %v8800
    %v8865 = vpack.c.b16 %v8805, %v8803
    %v8866 = vpack.c.b16 %v8806, %v8804
    %v8867 = vpack.c.b16 %v8809, %v8807
    %v8868 = vpack.c.b16 %v8810, %v8808
    %v8869 = vpack.c.b16 %v8813, %v8811
    %v8870 = vpack.c.b16 %v8814, %v8812
    %v8871 = vpack.c.b16 %v8817, %v8815
    %v8872 = vpack.c.b16 %v8818, %v8816
    %v8873 = vpack.c.b16 %v8821, %v8819
    %v8874 = vpack.c.b16 %v8822, %v8820
    %v8875 = vpack.c.b16 %v8825, %v8823
    %v8876 = vpack.c.b16 %v8826, %v8824
    %v8877 = vpack.c.b16 %v8829, %v8827
    %v8878 = vpack.c.b16 %v8830, %v8828
    %v8879 = vpack.c.b16 %v8833, %v8831
    %v8880 = vpack.c.b16 %v8834, %v8832
    %v8881 = vpack.c.b16 %v8837, %v8835
    %v8882 = vpack.c.b16 %v8838, %v8836
    %v8883 = vpack.c.b16 %v8841, %v8839
    %v8884 = vpack.c.b16 %v8842, %v8840
    %v8885 = vpack.c.b16 %v8845, %v8843
    %v8886 = vpack.c.b16 %v8846, %v8844
    %v8887 = vpack.c.b16 %v8849, %v8847
    %v8888 = vpack.c.b16 %v8850, %v8848
    %v8889 = vpack.c.b16 %v8853, %v8851
    %v8890 = vpack.c.b16 %v8854, %v8852
    %v8891 = vpack.c.b16 %v8857, %v8855
    %v8892 = vpack.c.b16 %v8858, %v8856
    %v8893 = vpack.c.b16 %v8861, %v8859
    %v8894 = vpack.c.b16 %v8862, %v8860
    %8927 = vmatprep.subr.bf16.mxu0 %v8878
    %8928 = vmatpush1.bf16.msra.mxu0 %v8877
    %8929 = vmatprep.subr.bf16.mxu0 %v8876
    %8930 = vmatpush1.bf16.msra.mxu0 %v8875
    %8931 = vmatprep.subr.bf16.mxu0 %v8874
    %8932 = vmatpush1.bf16.msra.mxu0 %v8873
    %8933 = vmatprep.subr.bf16.mxu0 %v8872
    %8934 = vmatpush1.bf16.msra.mxu0 %v8871
    %8935 = vmatprep.subr.bf16.mxu0 %v8870
    %8936 = vmatpush1.bf16.msra.mxu0 %v8869
    %8937 = vmatprep.subr.bf16.mxu0 %v8868
    %8938 = vmatpush1.bf16.msra.mxu0 %v8867
    %8939 = vmatprep.subr.bf16.mxu0 %v8866
    %8940 = vmatpush1.bf16.msra.mxu0 %v8865
    %8941 = vmatprep.subr.bf16.mxu0 %v8864
    %8942 = vmatpush1.bf16.msra.mxu0 %v8863
    %8943 = vmatprep.subr.bf16.mxu0 %v8894
    %8944 = vmatpush2.bf16.msra.mxu0 %v8893
    %8945 = vmatprep.subr.bf16.mxu0 %v8892
    %8946 = vmatpush2.bf16.msra.mxu0 %v8891
    %8947 = vmatprep.subr.bf16.mxu0 %v8890
    %8948 = vmatpush2.bf16.msra.mxu0 %v8889
    %8949 = vmatprep.subr.bf16.mxu0 %v8888
    %8950 = vmatpush2.bf16.msra.mxu0 %v8887
    %8951 = vmatprep.subr.bf16.mxu0 %v8886
    %8952 = vmatpush2.bf16.msra.mxu0 %v8885
    %8953 = vmatprep.subr.bf16.mxu0 %v8884
    %8954 = vmatpush2.bf16.msra.mxu0 %v8883
    %8955 = vmatprep.subr.bf16.mxu0 %v8882
    %8956 = vmatpush2.bf16.msra.mxu0 %v8881
    %8957 = vmatprep.subr.bf16.mxu0 %v8880
    %8958 = vmatpush2.bf16.msra.mxu0 %v8879
    %8959 = vmatprep.mubr.bf16.mxu0 %v668
    %8960 = vmatmul.mubr.bf16.gmra.mxu0 %v667
    %v8961 = vpop.f32.mrf.mxu0
    %v8962 = vadd.f32 %v8689, %v8961
    %v8963 = vpop.f32.mrf.mxu0
    %v8964 = vadd.f32 %v8691, %v8963
    %v8965 = vpop.f32.mrf.mxu0
    %v8966 = vadd.f32 %v8693, %v8965
    %v8967 = vpop.f32.mrf.mxu0
    %v8968 = vadd.f32 %v8695, %v8967
    %8969 = vmatprep.mubr.bf16.mxu0 %v670
    %8970 = vmatmul.mubr.bf16.gmra.mxu0 %v669
    %v8971 = vpop.f32.mrf.mxu0
    %v8972 = vadd.f32 %v8699, %v8971
    %v8973 = vpop.f32.mrf.mxu0
    %v8974 = vadd.f32 %v8701, %v8973
    %v8975 = vpop.f32.mrf.mxu0
    %v8976 = vadd.f32 %v8703, %v8975
    %v8977 = vpop.f32.mrf.mxu0
    %v8978 = vadd.f32 %v8705, %v8977
    %8979 = vmatprep.mubr.bf16.mxu0 %v672
    %8980 = vmatmul.mubr.bf16.gmra.mxu0 %v671
    %v8981 = vpop.f32.mrf.mxu0
    %v8982 = vadd.f32 %v8709, %v8981
    %v8983 = vpop.f32.mrf.mxu0
    %v8984 = vadd.f32 %v8711, %v8983
    %v8985 = vpop.f32.mrf.mxu0
    %v8986 = vadd.f32 %v8713, %v8985
    %v8987 = vpop.f32.mrf.mxu0
    %v8988 = vadd.f32 %v8715, %v8987
    %8989 = vmatprep.mubr.bf16.mxu0 %v674
    %8990 = vmatmul.mubr.bf16.gmra.mxu0 %v673
    %v8991 = vpop.f32.mrf.mxu0
    %v8992 = vadd.f32 %v8719, %v8991
    %v8993 = vpop.f32.mrf.mxu0
    %v8994 = vadd.f32 %v8721, %v8993
    %v8995 = vpop.f32.mrf.mxu0
    %v8996 = vadd.f32 %v8723, %v8995
    %v8997 = vpop.f32.mrf.mxu0
    %v8998 = vadd.f32 %v8725, %v8997
    %8999 = vmatprep.mubr.bf16.mxu0 %v676
    %9000 = vmatmul.mubr.bf16.gmra.mxu0 %v675
    %v9001 = vpop.f32.mrf.mxu0
    %v9002 = vadd.f32 %v8729, %v9001
    %v9003 = vpop.f32.mrf.mxu0
    %v9004 = vadd.f32 %v8731, %v9003
    %v9005 = vpop.f32.mrf.mxu0
    %v9006 = vadd.f32 %v8733, %v9005
    %v9007 = vpop.f32.mrf.mxu0
    %v9008 = vadd.f32 %v8735, %v9007
    %9009 = vmatprep.mubr.bf16.mxu0 %v678
    %9010 = vmatmul.mubr.bf16.gmra.mxu0 %v677
    %v9011 = vpop.f32.mrf.mxu0
    %v9012 = vadd.f32 %v8739, %v9011
    %v9013 = vpop.f32.mrf.mxu0
    %v9014 = vadd.f32 %v8741, %v9013
    %v9015 = vpop.f32.mrf.mxu0
    %v9016 = vadd.f32 %v8743, %v9015
    %v9017 = vpop.f32.mrf.mxu0
    %v9018 = vadd.f32 %v8745, %v9017
    %9019 = vmatprep.mubr.bf16.mxu0 %v680
    %9020 = vmatmul.mubr.bf16.gmra.mxu0 %v679
    %v9021 = vpop.f32.mrf.mxu0
    %v9022 = vadd.f32 %v8749, %v9021
    %v9023 = vpop.f32.mrf.mxu0
    %v9024 = vadd.f32 %v8751, %v9023
    %v9025 = vpop.f32.mrf.mxu0
    %v9026 = vadd.f32 %v8753, %v9025
    %v9027 = vpop.f32.mrf.mxu0
    %v9028 = vadd.f32 %v8755, %v9027
    %9029 = vmatprep.mubr.bf16.mxu0 %v682
    %9030 = vmatmul.mubr.bf16.gmra.mxu0 %v681
    %v9031 = vpop.f32.mrf.mxu0
    %v9032 = vadd.f32 %v8759, %v9031
    %v9033 = vpop.f32.mrf.mxu0
    %v9034 = vadd.f32 %v8761, %v9033
    %v9035 = vpop.f32.mrf.mxu0
    %v9036 = vadd.f32 %v8763, %v9035
    %v9037 = vpop.f32.mrf.mxu0
    %v9038 = vadd.f32 %v8765, %v9037
    %9039 = vdwg.mxu0
    %v9040 = vlaneseq
    %v9041 = vshrl.u32 %v9040, 7
    %v9042 = vsub.s32 3, %v9041
    %v9043 = vrot.slane %v7617, %v9042
    %v9044 = vlaneseq
    %v9045 = vshrl.u32 %v9044, 7
    %v9046 = vsub.s32 3, %v9045
    %v9047 = vrot.slane %v7618, %v9046
    %v9048 = vadd.f32 %v8962, %v9043
    %v9049 = vadd.f32 %v8964, %v9047
    %v9050 = vadd.f32 %v8966, %v9043
    %v9051 = vadd.f32 %v8968, %v9047
    %v9052 = vadd.f32 %v8972, %v9043
    %v9053 = vadd.f32 %v8974, %v9047
    %v9054 = vadd.f32 %v8976, %v9043
    %v9055 = vadd.f32 %v8978, %v9047
    %v9056 = vadd.f32 %v8982, %v9043
    %v9057 = vadd.f32 %v8984, %v9047
    %v9058 = vadd.f32 %v8986, %v9043
    %v9059 = vadd.f32 %v8988, %v9047
    %v9060 = vadd.f32 %v8992, %v9043
    %v9061 = vadd.f32 %v8994, %v9047
    %v9062 = vadd.f32 %v8996, %v9043
    %v9063 = vadd.f32 %v8998, %v9047
    %v9064 = vadd.f32 %v9002, %v9043
    %v9065 = vadd.f32 %v9004, %v9047
    %v9066 = vadd.f32 %v9006, %v9043
    %v9067 = vadd.f32 %v9008, %v9047
    %v9068 = vadd.f32 %v9012, %v9043
    %v9069 = vadd.f32 %v9014, %v9047
    %v9070 = vadd.f32 %v9016, %v9043
    %v9071 = vadd.f32 %v9018, %v9047
    %v9072 = vadd.f32 %v9022, %v9043
    %v9073 = vadd.f32 %v9024, %v9047
    %v9074 = vadd.f32 %v9026, %v9043
    %v9075 = vadd.f32 %v9028, %v9047
    %v9076 = vadd.f32 %v9032, %v9043
    %v9077 = vadd.f32 %v9034, %v9047
    %v9078 = vadd.f32 %v9036, %v9043
    %v9079 = vadd.f32 %v9038, %v9047
    %v9080 = vadd.f32 %v9048, %v9049
    %9081 = vadd.xlane.f32.xlu0 %v9080
    %v9082 = vpop.xlane.xlu0 %9081
    %v9083 = vadd.f32 %v9050, %v9051
    %9084 = vadd.xlane.f32.xlu0 %v9083
    %v9085 = vpop.xlane.xlu0 %9084
    %v9086 = vadd.f32 %v9052, %v9053
    %9087 = vadd.xlane.f32.xlu0 %v9086
    %v9088 = vpop.xlane.xlu0 %9087
    %v9089 = vadd.f32 %v9054, %v9055
    %9090 = vadd.xlane.f32.xlu0 %v9089
    %v9091 = vpop.xlane.xlu0 %9090
    %v9092 = vadd.f32 %v9056, %v9057
    %9093 = vadd.xlane.f32.xlu0 %v9092
    %v9094 = vpop.xlane.xlu0 %9093
    %v9095 = vadd.f32 %v9058, %v9059
    %9096 = vadd.xlane.f32.xlu0 %v9095
    %v9097 = vpop.xlane.xlu0 %9096
    %v9098 = vadd.f32 %v9060, %v9061
    %9099 = vadd.xlane.f32.xlu0 %v9098
    %v9100 = vpop.xlane.xlu0 %9099
    %v9101 = vadd.f32 %v9062, %v9063
    %9102 = vadd.xlane.f32.xlu0 %v9101
    %v9103 = vpop.xlane.xlu0 %9102
    %v9104 = vadd.f32 %v9064, %v9065
    %9105 = vadd.xlane.f32.xlu0 %v9104
    %v9106 = vpop.xlane.xlu0 %9105
    %v9107 = vadd.f32 %v9066, %v9067
    %9108 = vadd.xlane.f32.xlu0 %v9107
    %v9109 = vpop.xlane.xlu0 %9108
    %v9110 = vadd.f32 %v9068, %v9069
    %9111 = vadd.xlane.f32.xlu0 %v9110
    %v9112 = vpop.xlane.xlu0 %9111
    %v9113 = vadd.f32 %v9070, %v9071
    %9114 = vadd.xlane.f32.xlu0 %v9113
    %v9115 = vpop.xlane.xlu0 %9114
    %v9116 = vadd.f32 %v9072, %v9073
    %9117 = vadd.xlane.f32.xlu0 %v9116
    %v9118 = vpop.xlane.xlu0 %9117
    %v9119 = vadd.f32 %v9074, %v9075
    %9120 = vadd.xlane.f32.xlu0 %v9119
    %v9121 = vpop.xlane.xlu0 %9120
    %v9122 = vadd.f32 %v9076, %v9077
    %9123 = vadd.xlane.f32.xlu0 %v9122
    %v9124 = vpop.xlane.xlu0 %9123
    %v9125 = vadd.f32 %v9078, %v9079
    %9126 = vadd.xlane.f32.xlu0 %v9125
    %v9127 = vpop.xlane.xlu0 %9126
    %v9128 = vmul.f32 %v9082, %v8229
    %v9129 = vmul.f32 %v9085, %v8229
    %v9130 = vmul.f32 %v9088, %v8229
    %v9131 = vmul.f32 %v9091, %v8229
    %v9132 = vmul.f32 %v9094, %v8229
    %v9133 = vmul.f32 %v9097, %v8229
    %v9134 = vmul.f32 %v9100, %v8229
    %v9135 = vmul.f32 %v9103, %v8229
    %v9136 = vmul.f32 %v9106, %v8229
    %v9137 = vmul.f32 %v9109, %v8229
    %v9138 = vmul.f32 %v9112, %v8229
    %v9139 = vmul.f32 %v9115, %v8229
    %v9140 = vmul.f32 %v9118, %v8229
    %v9141 = vmul.f32 %v9121, %v8229
    %v9142 = vmul.f32 %v9124, %v8229
    %v9143 = vmul.f32 %v9127, %v8229
    %v9144 = vsub.f32 %v9048, %v9128
    %v9145 = vsub.f32 %v9049, %v9128
    %v9146 = vsub.f32 %v9050, %v9129
    %v9147 = vsub.f32 %v9051, %v9129
    %v9148 = vsub.f32 %v9052, %v9130
    %v9149 = vsub.f32 %v9053, %v9130
    %v9150 = vsub.f32 %v9054, %v9131
    %v9151 = vsub.f32 %v9055, %v9131
    %v9152 = vsub.f32 %v9056, %v9132
    %v9153 = vsub.f32 %v9057, %v9132
    %v9154 = vsub.f32 %v9058, %v9133
    %v9155 = vsub.f32 %v9059, %v9133
    %v9156 = vsub.f32 %v9060, %v9134
    %v9157 = vsub.f32 %v9061, %v9134
    %v9158 = vsub.f32 %v9062, %v9135
    %v9159 = vsub.f32 %v9063, %v9135
    %v9160 = vsub.f32 %v9064, %v9136
    %v9161 = vsub.f32 %v9065, %v9136
    %v9162 = vsub.f32 %v9066, %v9137
    %v9163 = vsub.f32 %v9067, %v9137
    %v9164 = vsub.f32 %v9068, %v9138
    %v9165 = vsub.f32 %v9069, %v9138
    %v9166 = vsub.f32 %v9070, %v9139
    %v9167 = vsub.f32 %v9071, %v9139
    %v9168 = vsub.f32 %v9072, %v9140
    %v9169 = vsub.f32 %v9073, %v9140
    %v9170 = vsub.f32 %v9074, %v9141
    %v9171 = vsub.f32 %v9075, %v9141
    %v9172 = vsub.f32 %v9076, %v9142
    %v9173 = vsub.f32 %v9077, %v9142
    %v9174 = vsub.f32 %v9078, %v9143
    %v9175 = vsub.f32 %v9079, %v9143
    %v9176 = vmul.f32 %v9144, %v9144
    %v9177 = vmul.f32 %v9145, %v9145
    %v9178 = vmul.f32 %v9146, %v9146
    %v9179 = vmul.f32 %v9147, %v9147
    %v9180 = vmul.f32 %v9148, %v9148
    %v9181 = vmul.f32 %v9149, %v9149
    %v9182 = vmul.f32 %v9150, %v9150
    %v9183 = vmul.f32 %v9151, %v9151
    %v9184 = vmul.f32 %v9152, %v9152
    %v9185 = vmul.f32 %v9153, %v9153
    %v9186 = vmul.f32 %v9154, %v9154
    %v9187 = vmul.f32 %v9155, %v9155
    %v9188 = vmul.f32 %v9156, %v9156
    %v9189 = vmul.f32 %v9157, %v9157
    %v9190 = vmul.f32 %v9158, %v9158
    %v9191 = vmul.f32 %v9159, %v9159
    %v9192 = vmul.f32 %v9160, %v9160
    %v9193 = vmul.f32 %v9161, %v9161
    %v9194 = vmul.f32 %v9162, %v9162
    %v9195 = vmul.f32 %v9163, %v9163
    %v9196 = vmul.f32 %v9164, %v9164
    %v9197 = vmul.f32 %v9165, %v9165
    %v9198 = vmul.f32 %v9166, %v9166
    %v9199 = vmul.f32 %v9167, %v9167
    %v9200 = vmul.f32 %v9168, %v9168
    %v9201 = vmul.f32 %v9169, %v9169
    %v9202 = vmul.f32 %v9170, %v9170
    %v9203 = vmul.f32 %v9171, %v9171
    %v9204 = vmul.f32 %v9172, %v9172
    %v9205 = vmul.f32 %v9173, %v9173
    %v9206 = vmul.f32 %v9174, %v9174
    %v9207 = vmul.f32 %v9175, %v9175
    %v9208 = vadd.f32 %v9176, %v9177
    %9209 = vadd.xlane.f32.xlu0 %v9208
    %v9210 = vpop.xlane.xlu0 %9209
    %v9211 = vadd.f32 %v9178, %v9179
    %9212 = vadd.xlane.f32.xlu0 %v9211
    %v9213 = vpop.xlane.xlu0 %9212
    %v9214 = vadd.f32 %v9180, %v9181
    %9215 = vadd.xlane.f32.xlu0 %v9214
    %v9216 = vpop.xlane.xlu0 %9215
    %v9217 = vadd.f32 %v9182, %v9183
    %9218 = vadd.xlane.f32.xlu0 %v9217
    %v9219 = vpop.xlane.xlu0 %9218
    %v9220 = vadd.f32 %v9184, %v9185
    %9221 = vadd.xlane.f32.xlu0 %v9220
    %v9222 = vpop.xlane.xlu0 %9221
    %v9223 = vadd.f32 %v9186, %v9187
    %9224 = vadd.xlane.f32.xlu0 %v9223
    %v9225 = vpop.xlane.xlu0 %9224
    %v9226 = vadd.f32 %v9188, %v9189
    %9227 = vadd.xlane.f32.xlu0 %v9226
    %v9228 = vpop.xlane.xlu0 %9227
    %v9229 = vadd.f32 %v9190, %v9191
    %9230 = vadd.xlane.f32.xlu0 %v9229
    %v9231 = vpop.xlane.xlu0 %9230
    %v9232 = vadd.f32 %v9192, %v9193
    %9233 = vadd.xlane.f32.xlu0 %v9232
    %v9234 = vpop.xlane.xlu0 %9233
    %v9235 = vadd.f32 %v9194, %v9195
    %9236 = vadd.xlane.f32.xlu0 %v9235
    %v9237 = vpop.xlane.xlu0 %9236
    %v9238 = vadd.f32 %v9196, %v9197
    %9239 = vadd.xlane.f32.xlu0 %v9238
    %v9240 = vpop.xlane.xlu0 %9239
    %v9241 = vadd.f32 %v9198, %v9199
    %9242 = vadd.xlane.f32.xlu0 %v9241
    %v9243 = vpop.xlane.xlu0 %9242
    %v9244 = vadd.f32 %v9200, %v9201
    %9245 = vadd.xlane.f32.xlu0 %v9244
    %v9246 = vpop.xlane.xlu0 %9245
    %v9247 = vadd.f32 %v9202, %v9203
    %9248 = vadd.xlane.f32.xlu0 %v9247
    %v9249 = vpop.xlane.xlu0 %9248
    %v9250 = vadd.f32 %v9204, %v9205
    %9251 = vadd.xlane.f32.xlu0 %v9250
    %v9252 = vpop.xlane.xlu0 %9251
    %v9253 = vadd.f32 %v9206, %v9207
    %9254 = vadd.xlane.f32.xlu0 %v9253
    %v9255 = vpop.xlane.xlu0 %9254
    %v9256 = vmul.f32 %v9210, %v8229
    %v9257 = vmul.f32 %v9213, %v8229
    %v9258 = vmul.f32 %v9216, %v8229
    %v9259 = vmul.f32 %v9219, %v8229
    %v9260 = vmul.f32 %v9222, %v8229
    %v9261 = vmul.f32 %v9225, %v8229
    %v9262 = vmul.f32 %v9228, %v8229
    %v9263 = vmul.f32 %v9231, %v8229
    %v9264 = vmul.f32 %v9234, %v8229
    %v9265 = vmul.f32 %v9237, %v8229
    %v9266 = vmul.f32 %v9240, %v8229
    %v9267 = vmul.f32 %v9243, %v8229
    %v9268 = vmul.f32 %v9246, %v8229
    %v9269 = vmul.f32 %v9249, %v8229
    %v9270 = vmul.f32 %v9252, %v8229
    %v9271 = vmul.f32 %v9255, %v8229
    %v9272 = vadd.f32 %v9256, 1e-05
    %v9273 = vadd.f32 %v9257, 1e-05
    %v9274 = vadd.f32 %v9258, 1e-05
    %v9275 = vadd.f32 %v9259, 1e-05
    %v9276 = vadd.f32 %v9260, 1e-05
    %v9277 = vadd.f32 %v9261, 1e-05
    %v9278 = vadd.f32 %v9262, 1e-05
    %v9279 = vadd.f32 %v9263, 1e-05
    %v9280 = vadd.f32 %v9264, 1e-05
    %v9281 = vadd.f32 %v9265, 1e-05
    %v9282 = vadd.f32 %v9266, 1e-05
    %v9283 = vadd.f32 %v9267, 1e-05
    %v9284 = vadd.f32 %v9268, 1e-05
    %v9285 = vadd.f32 %v9269, 1e-05
    %v9286 = vadd.f32 %v9270, 1e-05
    %v9287 = vadd.f32 %v9271, 1e-05
    %v9288 = vrsqrt.pop %v9272
    %v9289 = vrsqrt.pop %v9273
    %v9290 = vrsqrt.pop %v9274
    %v9291 = vrsqrt.pop %v9275
    %v9292 = vrsqrt.pop %v9276
    %v9293 = vrsqrt.pop %v9277
    %v9294 = vrsqrt.pop %v9278
    %v9295 = vrsqrt.pop %v9279
    %v9296 = vrsqrt.pop %v9280
    %v9297 = vrsqrt.pop %v9281
    %v9298 = vrsqrt.pop %v9282
    %v9299 = vrsqrt.pop %v9283
    %v9300 = vrsqrt.pop %v9284
    %v9301 = vrsqrt.pop %v9285
    %v9302 = vrsqrt.pop %v9286
    %v9303 = vrsqrt.pop %v9287
    %v9304 = vmul.f32 %v9144, %v9288
    %v9305 = vmul.f32 %v9145, %v9288
    %v9306 = vmul.f32 %v9146, %v9289
    %v9307 = vmul.f32 %v9147, %v9289
    %v9308 = vmul.f32 %v9148, %v9290
    %v9309 = vmul.f32 %v9149, %v9290
    %v9310 = vmul.f32 %v9150, %v9291
    %v9311 = vmul.f32 %v9151, %v9291
    %v9312 = vmul.f32 %v9152, %v9292
    %v9313 = vmul.f32 %v9153, %v9292
    %v9314 = vmul.f32 %v9154, %v9293
    %v9315 = vmul.f32 %v9155, %v9293
    %v9316 = vmul.f32 %v9156, %v9294
    %v9317 = vmul.f32 %v9157, %v9294
    %v9318 = vmul.f32 %v9158, %v9295
    %v9319 = vmul.f32 %v9159, %v9295
    %v9320 = vmul.f32 %v9160, %v9296
    %v9321 = vmul.f32 %v9161, %v9296
    %v9322 = vmul.f32 %v9162, %v9297
    %v9323 = vmul.f32 %v9163, %v9297
    %v9324 = vmul.f32 %v9164, %v9298
    %v9325 = vmul.f32 %v9165, %v9298
    %v9326 = vmul.f32 %v9166, %v9299
    %v9327 = vmul.f32 %v9167, %v9299
    %v9328 = vmul.f32 %v9168, %v9300
    %v9329 = vmul.f32 %v9169, %v9300
    %v9330 = vmul.f32 %v9170, %v9301
    %v9331 = vmul.f32 %v9171, %v9301
    %v9332 = vmul.f32 %v9172, %v9302
    %v9333 = vmul.f32 %v9173, %v9302
    %v9334 = vmul.f32 %v9174, %v9303
    %v9335 = vmul.f32 %v9175, %v9303
    %v9336 = vlaneseq
    %v9337 = vshrl.u32 %v9336, 7
    %v9338 = vsub.s32 4, %v9337
    %v9339 = vrot.slane %v7617, %v9338
    %v9340 = vlaneseq
    %v9341 = vshrl.u32 %v9340, 7
    %v9342 = vsub.s32 4, %v9341
    %v9343 = vrot.slane %v7618, %v9342
    %v9344 = vmul.f32 %v9304, %v9339
    %v9345 = vmul.f32 %v9305, %v9343
    %v9346 = vmul.f32 %v9306, %v9339
    %v9347 = vmul.f32 %v9307, %v9343
    %v9348 = vmul.f32 %v9308, %v9339
    %v9349 = vmul.f32 %v9309, %v9343
    %v9350 = vmul.f32 %v9310, %v9339
    %v9351 = vmul.f32 %v9311, %v9343
    %v9352 = vmul.f32 %v9312, %v9339
    %v9353 = vmul.f32 %v9313, %v9343
    %v9354 = vmul.f32 %v9314, %v9339
    %v9355 = vmul.f32 %v9315, %v9343
    %v9356 = vmul.f32 %v9316, %v9339
    %v9357 = vmul.f32 %v9317, %v9343
    %v9358 = vmul.f32 %v9318, %v9339
    %v9359 = vmul.f32 %v9319, %v9343
    %v9360 = vmul.f32 %v9320, %v9339
    %v9361 = vmul.f32 %v9321, %v9343
    %v9362 = vmul.f32 %v9322, %v9339
    %v9363 = vmul.f32 %v9323, %v9343
    %v9364 = vmul.f32 %v9324, %v9339
    %v9365 = vmul.f32 %v9325, %v9343
    %v9366 = vmul.f32 %v9326, %v9339
    %v9367 = vmul.f32 %v9327, %v9343
    %v9368 = vmul.f32 %v9328, %v9339
    %v9369 = vmul.f32 %v9329, %v9343
    %v9370 = vmul.f32 %v9330, %v9339
    %v9371 = vmul.f32 %v9331, %v9343
    %v9372 = vmul.f32 %v9332, %v9339
    %v9373 = vmul.f32 %v9333, %v9343
    %v9374 = vmul.f32 %v9334, %v9339
    %v9375 = vmul.f32 %v9335, %v9343
    %v9376 = vlaneseq
    %v9377 = vshrl.u32 %v9376, 7
    %v9378 = vsub.s32 5, %v9377
    %v9379 = vrot.slane %v7617, %v9378
    %v9380 = vlaneseq
    %v9381 = vshrl.u32 %v9380, 7
    %v9382 = vsub.s32 5, %v9381
    %v9383 = vrot.slane %v7618, %v9382
    %v9384 = vadd.f32 %v9344, %v9379
    %v9385 = vadd.f32 %v9345, %v9383
    %v9386 = vadd.f32 %v9346, %v9379
    %v9387 = vadd.f32 %v9347, %v9383
    %v9388 = vadd.f32 %v9348, %v9379
    %v9389 = vadd.f32 %v9349, %v9383
    %v9390 = vadd.f32 %v9350, %v9379
    %v9391 = vadd.f32 %v9351, %v9383
    %v9392 = vadd.f32 %v9352, %v9379
    %v9393 = vadd.f32 %v9353, %v9383
    %v9394 = vadd.f32 %v9354, %v9379
    %v9395 = vadd.f32 %v9355, %v9383
    %v9396 = vadd.f32 %v9356, %v9379
    %v9397 = vadd.f32 %v9357, %v9383
    %v9398 = vadd.f32 %v9358, %v9379
    %v9399 = vadd.f32 %v9359, %v9383
    %v9400 = vadd.f32 %v9360, %v9379
    %v9401 = vadd.f32 %v9361, %v9383
    %v9402 = vadd.f32 %v9362, %v9379
    %v9403 = vadd.f32 %v9363, %v9383
    %v9404 = vadd.f32 %v9364, %v9379
    %v9405 = vadd.f32 %v9365, %v9383
    %v9406 = vadd.f32 %v9366, %v9379
    %v9407 = vadd.f32 %v9367, %v9383
    %v9408 = vadd.f32 %v9368, %v9379
    %v9409 = vadd.f32 %v9369, %v9383
    %v9410 = vadd.f32 %v9370, %v9379
    %v9411 = vadd.f32 %v9371, %v9383
    %v9412 = vadd.f32 %v9372, %v9379
    %v9413 = vadd.f32 %v9373, %v9383
    %v9414 = vadd.f32 %v9374, %v9379
    %v9415 = vadd.f32 %v9375, %v9383
    %v9416 = vadd.f32 %v8486, %v9384
    %v9417 = vadd.f32 %v8487, %v9385
    %v9418 = vadd.f32 %v8488, %v9386
    %v9419 = vadd.f32 %v8489, %v9387
    %v9420 = vadd.f32 %v8490, %v9388
    %v9421 = vadd.f32 %v8491, %v9389
    %v9422 = vadd.f32 %v8492, %v9390
    %v9423 = vadd.f32 %v8493, %v9391
    %v9424 = vadd.f32 %v8494, %v9392
    %v9425 = vadd.f32 %v8495, %v9393
    %v9426 = vadd.f32 %v8496, %v9394
    %v9427 = vadd.f32 %v8497, %v9395
    %v9428 = vadd.f32 %v8498, %v9396
    %v9429 = vadd.f32 %v8499, %v9397
    %v9430 = vadd.f32 %v8500, %v9398
    %v9431 = vadd.f32 %v8501, %v9399
    %v9432 = vadd.f32 %v8502, %v9400
    %v9433 = vadd.f32 %v8503, %v9401
    %v9434 = vadd.f32 %v8504, %v9402
    %v9435 = vadd.f32 %v8505, %v9403
    %v9436 = vadd.f32 %v8506, %v9404
    %v9437 = vadd.f32 %v8507, %v9405
    %v9438 = vadd.f32 %v8508, %v9406
    %v9439 = vadd.f32 %v8509, %v9407
    %v9440 = vadd.f32 %v8510, %v9408
    %v9441 = vadd.f32 %v8511, %v9409
    %v9442 = vadd.f32 %v8512, %v9410
    %v9443 = vadd.f32 %v8513, %v9411
    %v9444 = vadd.f32 %v8514, %v9412
    %v9445 = vadd.f32 %v8515, %v9413
    %v9446 = vadd.f32 %v8516, %v9414
    %v9447 = vadd.f32 %v8517, %v9415
    %9448 = vxpose.xlu0.b32.start [1/16] %v9416, 128
    %9449 = vxpose.xlu0.b32.cont [2/16] %v9418, 128
    %9450 = vxpose.xlu0.b32.cont [3/16] %v9420, 128
    %9451 = vxpose.xlu0.b32.cont [4/16] %v9422, 128
    %9452 = vxpose.xlu0.b32.cont [5/16] %v9424, 128
    %9453 = vxpose.xlu0.b32.cont [6/16] %v9426, 128
    %9454 = vxpose.xlu0.b32.cont [7/16] %v9428, 128
    %9455 = vxpose.xlu0.b32.cont [8/16] %v9430, 128
    %9456 = vxpose.xlu0.b32.cont [9/16] %v9432, 128
    %9457 = vxpose.xlu0.b32.cont [10/16] %v9434, 128
    %9458 = vxpose.xlu0.b32.cont [11/16] %v9436, 128
    %9459 = vxpose.xlu0.b32.cont [12/16] %v9438, 128
    %9460 = vxpose.xlu0.b32.cont [13/16] %v9440, 128
    %9461 = vxpose.xlu0.b32.cont [14/16] %v9442, 128
    %9462 = vxpose.xlu0.b32.cont [15/16] %v9444, 128
    %9463 = vxpose.xlu0.b32.end [16/16] %v9446, 128
    %v9464 = vpop.trf.xlu0
    %v9465 = vpop.trf.xlu0
    %v9466 = vpop.trf.xlu0
    %v9467 = vpop.trf.xlu0
    %v9468 = vpop.trf.xlu0
    %v9469 = vpop.trf.xlu0
    %v9470 = vpop.trf.xlu0
    %v9471 = vpop.trf.xlu0
    %v9472 = vpop.trf.xlu0
    %v9473 = vpop.trf.xlu0
    %v9474 = vpop.trf.xlu0
    %v9475 = vpop.trf.xlu0
    %v9476 = vpop.trf.xlu0
    %v9477 = vpop.trf.xlu0
    %v9478 = vpop.trf.xlu0
    %v9479 = vpop.trf.xlu0
    %9480 = vxpose.xlu0.b32.start [1/16] %v9417, 128
    %9481 = vxpose.xlu0.b32.cont [2/16] %v9419, 128
    %9482 = vxpose.xlu0.b32.cont [3/16] %v9421, 128
    %9483 = vxpose.xlu0.b32.cont [4/16] %v9423, 128
    %9484 = vxpose.xlu0.b32.cont [5/16] %v9425, 128
    %9485 = vxpose.xlu0.b32.cont [6/16] %v9427, 128
    %9486 = vxpose.xlu0.b32.cont [7/16] %v9429, 128
    %9487 = vxpose.xlu0.b32.cont [8/16] %v9431, 128
    %9488 = vxpose.xlu0.b32.cont [9/16] %v9433, 128
    %9489 = vxpose.xlu0.b32.cont [10/16] %v9435, 128
    %9490 = vxpose.xlu0.b32.cont [11/16] %v9437, 128
    %9491 = vxpose.xlu0.b32.cont [12/16] %v9439, 128
    %9492 = vxpose.xlu0.b32.cont [13/16] %v9441, 128
    %9493 = vxpose.xlu0.b32.cont [14/16] %v9443, 128
    %9494 = vxpose.xlu0.b32.cont [15/16] %v9445, 128
    %9495 = vxpose.xlu0.b32.end [16/16] %v9447, 128
    %v9496 = vpop.trf.xlu0
    %v9497 = vpop.trf.xlu0
    %v9498 = vpop.trf.xlu0
    %v9499 = vpop.trf.xlu0
    %v9500 = vpop.trf.xlu0
    %v9501 = vpop.trf.xlu0
    %v9502 = vpop.trf.xlu0
    %v9503 = vpop.trf.xlu0
    %v9504 = vpop.trf.xlu0
    %v9505 = vpop.trf.xlu0
    %v9506 = vpop.trf.xlu0
    %v9507 = vpop.trf.xlu0
    %v9508 = vpop.trf.xlu0
    %v9509 = vpop.trf.xlu0
    %v9510 = vpop.trf.xlu0
    %v9511 = vpop.trf.xlu0
    %9512 = vst.msk [vmem:[%s9] sm:$0xff] %vm265, %v9464
    %9513 = vst.msk [vmem:[%s9 + $0x8] sm:$0xff] %vm265, %v9465
    %9514 = vst.msk [vmem:[%s9 + $0x10] sm:$0xff] %vm265, %v9466
    %9515 = vst.msk [vmem:[%s9 + $0x18] sm:$0xff] %vm265, %v9467
    %9516 = vst.msk [vmem:[%s9 + $0x20] sm:$0xff] %vm265, %v9468
    %9517 = vst.msk [vmem:[%s9 + $0x28] sm:$0xff] %vm265, %v9469
    %9518 = vst.msk [vmem:[%s9 + $0x30] sm:$0xff] %vm265, %v9470
    %9519 = vst.msk [vmem:[%s9 + $0x38] sm:$0xff] %vm265, %v9471
    %9520 = vst.msk [vmem:[%s9 + $0x40] sm:$0xff] %vm265, %v9472
    %9521 = vst.msk [vmem:[%s9 + $0x48] sm:$0xff] %vm265, %v9473
    %9522 = vst.msk [vmem:[%s9 + $0x50] sm:$0xff] %vm265, %v9474
    %9523 = vst.msk [vmem:[%s9 + $0x58] sm:$0xff] %vm265, %v9475
    %9524 = vst.msk [vmem:[%s9 + $0x60] sm:$0xff] %vm265, %v9476
    %9525 = vst.msk [vmem:[%s9 + $0x68] sm:$0xff] %vm265, %v9477
    %9526 = vst.msk [vmem:[%s9 + $0x70] sm:$0xff] %vm265, %v9478
    %9527 = vst.msk [vmem:[%s9 + $0x78] sm:$0xff] %vm265, %v9479
    %9528 = vst.msk [vmem:[%s9 + $0x80] sm:$0xff] %vm265, %v9496
    %9529 = vst.msk [vmem:[%s9 + $0x88] sm:$0xff] %vm265, %v9497
    %9530 = vst.msk [vmem:[%s9 + $0x90] sm:$0xff] %vm265, %v9498
    %9531 = vst.msk [vmem:[%s9 + $0x98] sm:$0xff] %vm265, %v9499
    %9532 = vst.msk [vmem:[%s9 + $0xa0] sm:$0xff] %vm265, %v9500
    %9533 = vst.msk [vmem:[%s9 + $0xa8] sm:$0xff] %vm265, %v9501
    %9534 = vst.msk [vmem:[%s9 + $0xb0] sm:$0xff] %vm265, %v9502
    %9535 = vst.msk [vmem:[%s9 + $0xb8] sm:$0xff] %vm265, %v9503
    %9536 = vst.msk [vmem:[%s9 + $0xc0] sm:$0xff] %vm265, %v9504
    %9537 = vst.msk [vmem:[%s9 + $0xc8] sm:$0xff] %vm265, %v9505
    %9538 = vst.msk [vmem:[%s9 + $0xd0] sm:$0xff] %vm265, %v9506
    %9539 = vst.msk [vmem:[%s9 + $0xd8] sm:$0xff] %vm265, %v9507
    %9540 = vst.msk [vmem:[%s9 + $0xe0] sm:$0xff] %vm265, %v9508
    %9541 = vst.msk [vmem:[%s9 + $0xe8] sm:$0xff] %vm265, %v9509
    %9542 = vst.msk [vmem:[%s9 + $0xf0] sm:$0xff] %vm265, %v9510
    %9543 = vst.msk [vmem:[%s9 + $0xf8] sm:$0xff] %vm265, %v9511
    %9576 = vrot.lane.b32.xlu0 %v9464, 64
    %v9577 = vpop.permute.xlu0 %9576
    %9578 = vrot.lane.b32.xlu0 %v9465, 64
    %v9579 = vpop.permute.xlu0 %9578
    %9580 = vrot.lane.b32.xlu0 %v9466, 64
    %v9581 = vpop.permute.xlu0 %9580
    %9582 = vrot.lane.b32.xlu0 %v9467, 64
    %v9583 = vpop.permute.xlu0 %9582
    %9584 = vrot.lane.b32.xlu0 %v9468, 64
    %v9585 = vpop.permute.xlu0 %9584
    %9586 = vrot.lane.b32.xlu0 %v9469, 64
    %v9587 = vpop.permute.xlu0 %9586
    %9588 = vrot.lane.b32.xlu0 %v9470, 64
    %v9589 = vpop.permute.xlu0 %9588
    %9590 = vrot.lane.b32.xlu0 %v9471, 64
    %v9591 = vpop.permute.xlu0 %9590
    %9592 = vrot.lane.b32.xlu0 %v9472, 64
    %v9593 = vpop.permute.xlu0 %9592
    %9594 = vrot.lane.b32.xlu0 %v9473, 64
    %v9595 = vpop.permute.xlu0 %9594
    %9596 = vrot.lane.b32.xlu0 %v9474, 64
    %v9597 = vpop.permute.xlu0 %9596
    %9598 = vrot.lane.b32.xlu0 %v9475, 64
    %v9599 = vpop.permute.xlu0 %9598
    %9600 = vrot.lane.b32.xlu0 %v9476, 64
    %v9601 = vpop.permute.xlu0 %9600
    %9602 = vrot.lane.b32.xlu0 %v9477, 64
    %v9603 = vpop.permute.xlu0 %9602
    %9604 = vrot.lane.b32.xlu0 %v9478, 64
    %v9605 = vpop.permute.xlu0 %9604
    %9606 = vrot.lane.b32.xlu0 %v9479, 64
    %v9607 = vpop.permute.xlu0 %9606
    %9608 = vrot.lane.b32.xlu0 %v9496, 64
    %v9609 = vpop.permute.xlu0 %9608
    %9610 = vrot.lane.b32.xlu0 %v9497, 64
    %v9611 = vpop.permute.xlu0 %9610
    %9612 = vrot.lane.b32.xlu0 %v9498, 64
    %v9613 = vpop.permute.xlu0 %9612
    %9614 = vrot.lane.b32.xlu0 %v9499, 64
    %v9615 = vpop.permute.xlu0 %9614
    %9616 = vrot.lane.b32.xlu0 %v9500, 64
    %v9617 = vpop.permute.xlu0 %9616
    %9618 = vrot.lane.b32.xlu0 %v9501, 64
    %v9619 = vpop.permute.xlu0 %9618
    %9620 = vrot.lane.b32.xlu0 %v9502, 64
    %v9621 = vpop.permute.xlu0 %9620
    %9622 = vrot.lane.b32.xlu0 %v9503, 64
    %v9623 = vpop.permute.xlu0 %9622
    %9624 = vrot.lane.b32.xlu0 %v9504, 64
    %v9625 = vpop.permute.xlu0 %9624
    %9626 = vrot.lane.b32.xlu0 %v9505, 64
    %v9627 = vpop.permute.xlu0 %9626
    %9628 = vrot.lane.b32.xlu0 %v9506, 64
    %v9629 = vpop.permute.xlu0 %9628
    %9630 = vrot.lane.b32.xlu0 %v9507, 64
    %v9631 = vpop.permute.xlu0 %9630
    %9632 = vrot.lane.b32.xlu0 %v9508, 64
    %v9633 = vpop.permute.xlu0 %9632
    %9634 = vrot.lane.b32.xlu0 %v9509, 64
    %v9635 = vpop.permute.xlu0 %9634
    %9636 = vrot.lane.b32.xlu0 %v9510, 64
    %v9637 = vpop.permute.xlu0 %9636
    %9638 = vrot.lane.b32.xlu0 %v9511, 64
    %v9639 = vpop.permute.xlu0 %9638
    %s9672 = scalar_lea.vmem %s9, 256
    %9673 = vst.msk [vmem:[%s9672] sm:$0xff] %vm265, %v9577
    %9674 = vst.msk [vmem:[%s9672 + $0x8] sm:$0xff] %vm265, %v9579
    %9675 = vst.msk [vmem:[%s9672 + $0x10] sm:$0xff] %vm265, %v9581
    %9676 = vst.msk [vmem:[%s9672 + $0x18] sm:$0xff] %vm265, %v9583
    %9677 = vst.msk [vmem:[%s9672 + $0x20] sm:$0xff] %vm265, %v9585
    %9678 = vst.msk [vmem:[%s9672 + $0x28] sm:$0xff] %vm265, %v9587
    %9679 = vst.msk [vmem:[%s9672 + $0x30] sm:$0xff] %vm265, %v9589
    %9680 = vst.msk [vmem:[%s9672 + $0x38] sm:$0xff] %vm265, %v9591
    %9681 = vst.msk [vmem:[%s9672 + $0x40] sm:$0xff] %vm265, %v9593
    %9682 = vst.msk [vmem:[%s9672 + $0x48] sm:$0xff] %vm265, %v9595
    %9683 = vst.msk [vmem:[%s9672 + $0x50] sm:$0xff] %vm265, %v9597
    %9684 = vst.msk [vmem:[%s9672 + $0x58] sm:$0xff] %vm265, %v9599
    %9685 = vst.msk [vmem:[%s9672 + $0x60] sm:$0xff] %vm265, %v9601
    %9686 = vst.msk [vmem:[%s9672 + $0x68] sm:$0xff] %vm265, %v9603
    %9687 = vst.msk [vmem:[%s9672 + $0x70] sm:$0xff] %vm265, %v9605
    %9688 = vst.msk [vmem:[%s9672 + $0x78] sm:$0xff] %vm265, %v9607
    %9689 = vst.msk [vmem:[%s9672 + $0x80] sm:$0xff] %vm265, %v9609
    %9690 = vst.msk [vmem:[%s9672 + $0x88] sm:$0xff] %vm265, %v9611
    %9691 = vst.msk [vmem:[%s9672 + $0x90] sm:$0xff] %vm265, %v9613
    %9692 = vst.msk [vmem:[%s9672 + $0x98] sm:$0xff] %vm265, %v9615
    %9693 = vst.msk [vmem:[%s9672 + $0xa0] sm:$0xff] %vm265, %v9617
    %9694 = vst.msk [vmem:[%s9672 + $0xa8] sm:$0xff] %vm265, %v9619
    %9695 = vst.msk [vmem:[%s9672 + $0xb0] sm:$0xff] %vm265, %v9621
    %9696 = vst.msk [vmem:[%s9672 + $0xb8] sm:$0xff] %vm265, %v9623
    %9697 = vst.msk [vmem:[%s9672 + $0xc0] sm:$0xff] %vm265, %v9625
    %9698 = vst.msk [vmem:[%s9672 + $0xc8] sm:$0xff] %vm265, %v9627
    %9699 = vst.msk [vmem:[%s9672 + $0xd0] sm:$0xff] %vm265, %v9629
    %9700 = vst.msk [vmem:[%s9672 + $0xd8] sm:$0xff] %vm265, %v9631
    %9701 = vst.msk [vmem:[%s9672 + $0xe0] sm:$0xff] %vm265, %v9633
    %9702 = vst.msk [vmem:[%s9672 + $0xe8] sm:$0xff] %vm265, %v9635
    %9703 = vst.msk [vmem:[%s9672 + $0xf0] sm:$0xff] %vm265, %v9637
    %9704 = vst.msk [vmem:[%s9672 + $0xf8] sm:$0xff] %vm265, %v9639
    // Predicated region
    $region50: #{tpu_custom_call.1} parent=1 // pred_check
      _
    $region51: #{tpu_custom_call.1} parent=1 // pred_check_branch
      %9706 = sbr.rel (0) target = $region53
    $region52: #{tpu_custom_call.1} parent=1 // pred_region
      _
    $region53: #{tpu_custom_call.1} parent=1 // pred_fallthru
      _
    // Predicated region
    $region54: #{tpu_custom_call.1} parent=1 // pred_check
      _
    $region55: #{tpu_custom_call.1} parent=1 // pred_check_branch
      %9708 = sbr.rel (0) target = $region57
    $region56: #{tpu_custom_call.1} parent=1 // pred_region
      _
    $region57: #{tpu_custom_call.1} parent=1 // pred_fallthru
      _
    %9709 = vsyncpa [#allocation5], 1
    %9710 = vsyncpa [#allocation7], 1

</llo_original>
